<compile_context>
chip_gen: v5e
topology: v5e:2x2
jax: 0.10.0
libtpu: 0.0.40
codegen_flags: <defaults>
</compile_context>

<pallas_src>
import functools

import jax
import jax.numpy as jnp
from jax.experimental import pallas as pl
from jax.experimental.pallas import tpu as pltpu


_VMEM_LIMIT = 32 * 1024 * 1024


# ----------------------------------------------------------------------------------
# Pallas kernel 1: offset/mask conv (3x3, stride 1, zero pad 1) as one deep im2col
# matmul.  bf16 operands, f32 accumulate, lane-dense (padded-Cout) output.
# ----------------------------------------------------------------------------------
def _offset_conv_kernel(H, W, Cin, Cout):
    K = 3

    def kernel(x_ref, w_ref, b_ref, o_ref, pad_ref, col_ref):
        # Zero only the 1-pixel halo; the interior is fully overwritten every step.
        # (Do NOT gate this on program_id==0: each TC owns its own scratch when the
        #  batch axis is "parallel".)
        zr = jnp.zeros((1, W + 2, Cin), jnp.float32)
        zc = jnp.zeros((H, 1, Cin), jnp.float32)
        pad_ref[0:1, :, :] = zr
        pad_ref[H + 1:H + 2, :, :] = zr
        pad_ref[1:H + 1, 0:1, :] = zc
        pad_ref[1:H + 1, W + 1:W + 2, :] = zc
        pad_ref[1:H + 1, 1:W + 1, :] = x_ref[0]
        # im2col in bf16 (halves tap-write store traffic); column order is tap-major
        # (kh,kw), channel-minor -> matches the (kh,kw,cin,cout) weight reshape.
        for kh in range(K):
            for kw in range(K):
                c0 = (kh * K + kw) * Cin
                col_ref[:, :, c0:c0 + Cin] = (
                    pad_ref[kh:kh + H, kw:kw + W, :].astype(jnp.bfloat16))
        col = col_ref[...].reshape(H * W, K * K * Cin)
        acc = jnp.dot(col, w_ref[...], preferred_element_type=jnp.float32)
        o_ref[0] = acc + b_ref[...]

    return kernel


def conv_offset_mask(x, w, b):
    """x: (N,H,W,Cin) f32; w: torch layout (Cout,Cin,3,3); b: (Cout,).
    Returns (N, H*W, Cout_pad) f32 with Cout zero-padded up to a multiple of 128 so the
    output stores are full-lane (unmasked) vst."""
    N, H, W, Cin = x.shape
    Cout = w.shape[0]
    K = 3
    Cout_p = ((Cout + 127) // 128) * 128
    w_flat = jnp.transpose(w, (2, 3, 1, 0)).reshape(K * K * Cin, Cout)
    w_flat = jnp.pad(w_flat, ((0, 0), (0, Cout_p - Cout))).astype(jnp.bfloat16)
    b_p = jnp.pad(b, (0, Cout_p - Cout)).reshape(1, Cout_p)
    return pl.pallas_call(
        _offset_conv_kernel(H, W, Cin, Cout_p),
        out_shape=jax.ShapeDtypeStruct((N, H * W, Cout_p), jnp.float32),
        grid=(N,),
        in_specs=[
            pl.BlockSpec((1, H, W, Cin), lambda n: (n, 0, 0, 0)),
            pl.BlockSpec((K * K * Cin, Cout_p), lambda n: (0, 0)),
            pl.BlockSpec((1, Cout_p), lambda n: (0, 0)),
        ],
        out_specs=pl.BlockSpec((1, H * W, Cout_p), lambda n: (n, 0, 0)),
        scratch_shapes=[
            pltpu.VMEM((H + 2, W + 2, Cin), jnp.float32),      # zero-padded activation
            pltpu.VMEM((H, W, K * K * Cin), jnp.bfloat16),     # im2col (bf16)
        ],
        compiler_params=pltpu.CompilerParams(
            dimension_semantics=("parallel",),
            vmem_limit_bytes=_VMEM_LIMIT),
    )(x, w_flat, b_p)


# ----------------------------------------------------------------------------------
# Pallas kernel 2: fused RSA tail
#   fea = LeakyReLU( deformable-im2col @ W_dcn + b_dcn )          (one deep bf16 dot)
#   out = conv1_3x3(fea) + b1 + x                                 (fea never leaves VMEM)
# conv1 uses 9 accumulated shallow dots (no im2col scratch / store pass).
# ----------------------------------------------------------------------------------
def _rsa_tail_kernel(H, W, C):
    K = 3

    def kernel(cold_ref, wd_ref, bd_ref, w1_ref, b1_ref, x_ref, o_ref, pad_ref):
        # DCN output channels: one deep matmul over the deformable, mask-modulated im2col.
        fea = jnp.dot(cold_ref[0], wd_ref[...], preferred_element_type=jnp.float32)
        fea = fea + bd_ref[...]
        fea = jnp.where(fea > 0, fea, 0.2 * fea)                  # LeakyReLU(0.2)
        # conv1 3x3 zero-pad entirely in VMEM; halo-only zeroing of the pad scratch.
        zr = jnp.zeros((1, W + 2, C), jnp.float32)
        zc = jnp.zeros((H, 1, C), jnp.float32)
        pad_ref[0:1, :, :] = zr
        pad_ref[H + 1:H + 2, :, :] = zr
        pad_ref[1:H + 1, 0:1, :] = zc
        pad_ref[1:H + 1, W + 1:W + 2, :] = zc
        pad_ref[1:H + 1, 1:W + 1, :] = fea.reshape(H, W, C)
        acc = x_ref[0] + b1_ref[...]                              # residual + conv1 bias
        for kh in range(K):
            for kw in range(K):
                t = kh * K + kw
                patch = pad_ref[kh:kh + H, kw:kw + W, :].astype(jnp.bfloat16)
                acc = acc + jnp.dot(patch.reshape(H * W, C), w1_ref[t],
                                    preferred_element_type=jnp.float32)
        o_ref[0] = acc

    return kernel


def rsa_tail(col_d, w_dcn, b_dcn, w1, b1, x_flat, H, W):
    """col_d: (N,H*W,9*C) bf16 deformable im2col; weights in torch (C,C,3,3) layout;
    x_flat: (N,H*W,C) f32 residual input."""
    N, HW, C = x_flat.shape
    K = 3
    wd_flat = jnp.transpose(w_dcn, (2, 3, 1, 0)).reshape(K * K * C, C).astype(jnp.bfloat16)
    w1_taps = jnp.transpose(w1, (2, 3, 1, 0)).reshape(K * K, C, C).astype(jnp.bfloat16)
    bd2 = b_dcn.reshape(1, C)
    b12 = b1.reshape(1, C)
    return pl.pallas_call(
        _rsa_tail_kernel(H, W, C),
        out_shape=jax.ShapeDtypeStruct((N, HW, C), jnp.float32),
        grid=(N,),
        in_specs=[
            pl.BlockSpec((1, HW, K * K * C), lambda n: (n, 0, 0)),
            pl.BlockSpec((K * K * C, C), lambda n: (0, 0)),
            pl.BlockSpec((1, C), lambda n: (0, 0)),
            pl.BlockSpec((K * K, C, C), lambda n: (0, 0, 0)),
            pl.BlockSpec((1, C), lambda n: (0, 0)),
            pl.BlockSpec((1, HW, C), lambda n: (n, 0, 0)),
        ],
        out_specs=pl.BlockSpec((1, HW, C), lambda n: (n, 0, 0)),
        scratch_shapes=[
            pltpu.VMEM((H + 2, W + 2, C), jnp.float32),           # zero-padded fea
        ],
        compiler_params=pltpu.CompilerParams(
            dimension_semantics=("parallel",),
            vmem_limit_bytes=_VMEM_LIMIT),
    )(col_d, wd_flat, bd2, w1_taps, b12, x_flat)


# ----------------------------------------------------------------------------------
# DCN v2 sampling (modulated deformable conv, k=3, s=1, p=1, extra_offset_mask=True).
# Offsets/mask come from the Pallas offset-mask conv; the contraction with the DCN
# weight happens inside the fused Pallas tail kernel.  Only the data-dependent
# bilinear gather runs in plain JAX.  Channel decoding follows the reference
# DCNv2 path: o1,o2,mask = chunk(out,3); offset = cat(o1,o2); per group g / tap k the
# CUDA kernel reads dy = offset[g*2*KK + 2k], dx = offset[g*2*KK + 2k + 1].
# ----------------------------------------------------------------------------------
def dcn_sample(x_flat, om, H, W, *, groups=8):
    """x_flat: (N,H*W,C) f32.  om: (N,H*W,>=3*G*9) f32 (extra padded channels ignored).
    Returns the deformable, mask-modulated im2col (N,H*W,9*C) in bf16, tap-major
    (kh,kw), channel-minor — matching the tail kernel's weight reshape."""
    N, HW, C = x_flat.shape
    K, G = 3, groups
    KK = K * K
    Cg = C // G
    GK = G * KK

    o1 = om[..., :GK]
    o2 = om[..., GK:2 * GK]
    msk = jax.nn.sigmoid(om[..., 2 * GK:3 * GK])
    off = jnp.concatenate([o1, o2], axis=-1).reshape(N, HW, G, KK, 2)
    dy, dx = off[..., 0], off[..., 1]                       # (N,HW,G,KK)
    m = msk.reshape(N, HW, G, KK)

    hh = (jnp.arange(HW, dtype=jnp.float32) // W)[None, :, None, None]
    ww = (jnp.arange(HW, dtype=jnp.float32) % W)[None, :, None, None]
    kk = jnp.arange(K, dtype=jnp.float32) - 1.0             # pad=1, dilation=1 taps
    ky, kx = jnp.repeat(kk, K), jnp.tile(kk, K)             # (KK,)
    py = hh + ky + dy                                       # (N,HW,G,KK)
    px = ww + kx + dx
    y0, x0 = jnp.floor(py), jnp.floor(px)
    ty, tx = py - y0, px - x0

    # All 4 bilinear corners in ONE batched gather.
    cy = jnp.stack([y0, y0, y0 + 1, y0 + 1], axis=-1)       # (N,HW,G,KK,4)
    cx = jnp.stack([x0, x0 + 1, x0, x0 + 1], axis=-1)
    wgt = jnp.stack([(1 - ty) * (1 - tx), (1 - ty) * tx,
                     ty * (1 - tx), ty * tx], axis=-1)
    valid = (cy >= 0) & (cy <= H - 1) & (cx >= 0) & (cx <= W - 1)
    wgt = jnp.where(valid, wgt, 0.0)                         # zero-pad OOB corners
    flat = (jnp.clip(cy, 0, H - 1).astype(jnp.int32) * W
            + jnp.clip(cx, 0, W - 1).astype(jnp.int32))      # (N,HW,G,KK,4)

    src = jnp.transpose(x_flat.reshape(N, HW, G, Cg), (0, 2, 1, 3))   # (N,G,HW,Cg)
    idx = jnp.transpose(flat, (0, 2, 1, 3, 4)).reshape(N, G, HW * KK * 4, 1)
    gat = jnp.take_along_axis(src, idx, axis=2).reshape(N, G, HW, KK, 4, Cg)
    wv = jnp.transpose(wgt, (0, 2, 1, 3, 4))                 # (N,G,HW,KK,4)
    samp = jnp.einsum('nghkr,nghkrc->nghkc', wv, gat)        # bilinear interpolation
    samp = samp * jnp.transpose(m, (0, 2, 1, 3))[..., None]  # modulation mask
    # (N,G,HW,KK,Cg) -> (N,HW,KK,G,Cg) -> (N,HW,KK*C): k-major, cin (=g*Cg+cg) minor
    col = jnp.transpose(samp, (0, 2, 3, 1, 4)).reshape(N, HW, KK * C)
    return col.astype(jnp.bfloat16)


# ----------------------------------------------------------------------------------
# RSABlock forward:  fea = lrelu(DCN([x, offset]));  out = conv1(fea) + x
# ----------------------------------------------------------------------------------
def rsa_block_forward(params, x, offset, *, groups=8):
    N, H, W, C = x.shape
    # Default RSABlock config has input_channel == output_channel (no conv0); fail loudly
    # otherwise instead of producing a wrong residual add.
    assert C == params['w_dcn'].shape[1] == params['w_dcn'].shape[0], \
        "conv0 (1x1) path not implemented: need input_channel == output_channel"
    om = conv_offset_mask(offset, params['w_om'], params['b_om'])   # Pallas (lane-dense)
    x_flat = x.reshape(N, H * W, C)
    col_d = dcn_sample(x_flat, om, H, W, groups=groups)             # JAX gather (bf16 out)
    out = rsa_tail(col_d, params['w_dcn'], params['b_dcn'],
                   params['w1'], params['b1'], x_flat, H, W)        # fused Pallas tail
    return out.reshape(N, H, W, C)


# ----------------------------------------------------------------------------------
# Parameters (deterministic synthetic, matching initialize_weights: xavier, zero bias)
# ----------------------------------------------------------------------------------
def build_params(key, *, channels=32, offset_channels=32, groups=8):
    ks = jax.random.split(key, 3)

    def xavier(k, cout, cin, kk):
        bound = (6.0 / (cin * kk * kk + cout * kk * kk)) ** 0.5
        return jax.random.uniform(k, (cout, cin, kk, kk), jnp.float32, -bound, bound)

    return dict(
        w_om=xavier(ks[0], 3 * groups * 9, offset_channels, 3),
        b_om=jnp.zeros((3 * groups * 9,), jnp.float32),
        w_dcn=xavier(ks[1], channels, channels, 3),
        b_dcn=jnp.zeros((channels,), jnp.float32),
        w1=xavier(ks[2], channels, channels, 3),
        b1=jnp.zeros((channels,), jnp.float32),
    )


# ----------------------------------------------------------------------------------
if __name__ == "__main__":
    N, H, W, C, COFF, G = 2, 16, 16, 32, 32, 8
    key = jax.random.PRNGKey(0)
    kp, kx, ko = jax.random.split(key, 3)

    params = build_params(kp, channels=C, offset_channels=COFF, groups=G)
    x = jax.random.normal(kx, (N, H, W, C), jnp.float32)
    offset = jax.random.normal(ko, (N, H, W, COFF), jnp.float32)

    fwd = jax.jit(functools.partial(rsa_block_forward, groups=G))
    out = jax.block_until_ready(fwd(params, x, offset))

    assert out.shape == (N, H, W, C)
    assert bool(jnp.isfinite(out).all())
    print("KERNEL_OK")
</pallas_src>

<mosaic_0001>
module attributes {stable_mosaic.version = 11 : i64} {
  func.func @kernel(%arg0: i32, %arg1: memref<1x16x16x32xf32, #tpu.memory_space<vmem>>, %arg2: memref<288x256xbf16, #tpu.memory_space<vmem>>, %arg3: memref<1x256xf32, #tpu.memory_space<vmem>>, %arg4: memref<1x256x256xf32, #tpu.memory_space<vmem>>, %arg5: memref<18x18x32xf32, #tpu.memory_space<vmem>>, %arg6: memref<16x16x288xbf16, #tpu.memory_space<vmem>>) attributes {dimension_semantics = [#tpu.dimension_semantics<parallel>], iteration_bounds = array<i64: 2>, scalar_prefetch = 0 : i64, scratch_operands = 2 : i64, tpu.core_type = #tpu.core_type<tc>, window_params = [{transform_indices = @transform_0, window_bounds = array<i64: 1, 16, 16, 32>}, {pipeline_mode = #tpu.pipeline_mode<synchronous>, transform_indices = @transform_1, window_bounds = array<i64: 288, 256>}, {pipeline_mode = #tpu.pipeline_mode<synchronous>, transform_indices = @transform_2, window_bounds = array<i64: 1, 256>}, {transform_indices = @transform_3, window_bounds = array<i64: 1, 256, 256>}]} {
    %cst = arith.constant 0.000000e+00 : f32
    %0 = vector.broadcast %cst : f32 to vector<1x18x32xf32>
    %cst_0 = arith.constant 0.000000e+00 : f32
    %1 = vector.broadcast %cst_0 : f32 to vector<16x1x32xf32>
    %c0 = arith.constant 0 : index
    %c0_1 = arith.constant 0 : index
    %c0_2 = arith.constant 0 : index
    %2 = vector.load %arg5[%c0, %c0_1, %c0_2] : memref<18x18x32xf32, #tpu.memory_space<vmem>>, vector<1x18x32xf32>
    tpu.vector_store %arg5[%c0, %c0_1, %c0_2], %0 {strides = array<i32>} : memref<18x18x32xf32, #tpu.memory_space<vmem>>, vector<1x18x32xf32>,
    %c17 = arith.constant 17 : index
    %c0_3 = arith.constant 0 : index
    %c0_4 = arith.constant 0 : index
    %3 = vector.load %arg5[%c17, %c0_3, %c0_4] : memref<18x18x32xf32, #tpu.memory_space<vmem>>, vector<1x18x32xf32>
    tpu.vector_store %arg5[%c17, %c0_3, %c0_4], %0 {strides = array<i32>} : memref<18x18x32xf32, #tpu.memory_space<vmem>>, vector<1x18x32xf32>,
    %c1 = arith.constant 1 : index
    %c0_5 = arith.constant 0 : index
    %c0_6 = arith.constant 0 : index
    %4 = vector.load %arg5[%c1, %c0_5, %c0_6] : memref<18x18x32xf32, #tpu.memory_space<vmem>>, vector<16x1x32xf32>
    tpu.vector_store %arg5[%c1, %c0_5, %c0_6], %1 {strides = array<i32>} : memref<18x18x32xf32, #tpu.memory_space<vmem>>, vector<16x1x32xf32>,
    %c1_7 = arith.constant 1 : index
    %c17_8 = arith.constant 17 : index
    %c0_9 = arith.constant 0 : index
    %5 = vector.load %arg5[%c1_7, %c17_8, %c0_9] : memref<18x18x32xf32, #tpu.memory_space<vmem>>, vector<16x1x32xf32>
    tpu.vector_store %arg5[%c1_7, %c17_8, %c0_9], %1 {strides = array<i32>} : memref<18x18x32xf32, #tpu.memory_space<vmem>>, vector<16x1x32xf32>,
    %c0_10 = arith.constant 0 : index
    %c0_11 = arith.constant 0 : index
    %c0_12 = arith.constant 0 : index
    %c0_13 = arith.constant 0 : index
    %6 = vector.load %arg1[%c0_10, %c0_11, %c0_12, %c0_13] : memref<1x16x16x32xf32, #tpu.memory_space<vmem>>, vector<1x16x16x32xf32>
    %7 = vector.shape_cast %6 : vector<1x16x16x32xf32> to vector<16x16x32xf32>
    %c1_14 = arith.constant 1 : index
    %c1_15 = arith.constant 1 : index
    %c0_16 = arith.constant 0 : index
    %8 = vector.load %arg5[%c1_14, %c1_15, %c0_16] : memref<18x18x32xf32, #tpu.memory_space<vmem>>, vector<16x16x32xf32>
    tpu.vector_store %arg5[%c1_14, %c1_15, %c0_16], %7 {strides = array<i32>} : memref<18x18x32xf32, #tpu.memory_space<vmem>>, vector<16x16x32xf32>,
    %c0_17 = arith.constant 0 : index
    %c0_18 = arith.constant 0 : index
    %c0_19 = arith.constant 0 : index
    %9 = vector.load %arg5[%c0_17, %c0_18, %c0_19] : memref<18x18x32xf32, #tpu.memory_space<vmem>>, vector<16x16x32xf32>
    %10 = arith.truncf %9 : vector<16x16x32xf32> to vector<16x16x32xbf16>
    %c0_20 = arith.constant 0 : index
    %c0_21 = arith.constant 0 : index
    %c0_22 = arith.constant 0 : index
    %11 = vector.load %arg6[%c0_20, %c0_21, %c0_22] : memref<16x16x288xbf16, #tpu.memory_space<vmem>>, vector<16x16x32xbf16>
    tpu.vector_store %arg6[%c0_20, %c0_21, %c0_22], %10 {strides = array<i32>} : memref<16x16x288xbf16, #tpu.memory_space<vmem>>, vector<16x16x32xbf16>,
    %c0_23 = arith.constant 0 : index
    %c1_24 = arith.constant 1 : index
    %c0_25 = arith.constant 0 : index
    %12 = vector.load %arg5[%c0_23, %c1_24, %c0_25] : memref<18x18x32xf32, #tpu.memory_space<vmem>>, vector<16x16x32xf32>
    %13 = arith.truncf %12 : vector<16x16x32xf32> to vector<16x16x32xbf16>
    %c0_26 = arith.constant 0 : index
    %c0_27 = arith.constant 0 : index
    %c32 = arith.constant 32 : index
    %14 = vector.load %arg6[%c0_26, %c0_27, %c32] : memref<16x16x288xbf16, #tpu.memory_space<vmem>>, vector<16x16x32xbf16>
    tpu.vector_store %arg6[%c0_26, %c0_27, %c32], %13 {strides = array<i32>} : memref<16x16x288xbf16, #tpu.memory_space<vmem>>, vector<16x16x32xbf16>,
    %c0_28 = arith.constant 0 : index
    %c2 = arith.constant 2 : index
    %c0_29 = arith.constant 0 : index
    %15 = vector.load %arg5[%c0_28, %c2, %c0_29] : memref<18x18x32xf32, #tpu.memory_space<vmem>>, vector<16x16x32xf32>
    %16 = arith.truncf %15 : vector<16x16x32xf32> to vector<16x16x32xbf16>
    %c0_30 = arith.constant 0 : index
    %c0_31 = arith.constant 0 : index
    %c64 = arith.constant 64 : index
    %17 = vector.load %arg6[%c0_30, %c0_31, %c64] : memref<16x16x288xbf16, #tpu.memory_space<vmem>>, vector<16x16x32xbf16>
    tpu.vector_store %arg6[%c0_30, %c0_31, %c64], %16 {strides = array<i32>} : memref<16x16x288xbf16, #tpu.memory_space<vmem>>, vector<16x16x32xbf16>,
    %c1_32 = arith.constant 1 : index
    %c0_33 = arith.constant 0 : index
    %c0_34 = arith.constant 0 : index
    %18 = vector.load %arg5[%c1_32, %c0_33, %c0_34] : memref<18x18x32xf32, #tpu.memory_space<vmem>>, vector<16x16x32xf32>
    %19 = arith.truncf %18 : vector<16x16x32xf32> to vector<16x16x32xbf16>
    %c0_35 = arith.constant 0 : index
    %c0_36 = arith.constant 0 : index
    %c96 = arith.constant 96 : index
    %20 = vector.load %arg6[%c0_35, %c0_36, %c96] : memref<16x16x288xbf16, #tpu.memory_space<vmem>>, vector<16x16x32xbf16>
    tpu.vector_store %arg6[%c0_35, %c0_36, %c96], %19 {strides = array<i32>} : memref<16x16x288xbf16, #tpu.memory_space<vmem>>, vector<16x16x32xbf16>,
    %c1_37 = arith.constant 1 : index
    %c1_38 = arith.constant 1 : index
    %c0_39 = arith.constant 0 : index
    %21 = vector.load %arg5[%c1_37, %c1_38, %c0_39] : memref<18x18x32xf32, #tpu.memory_space<vmem>>, vector<16x16x32xf32>
    %22 = arith.truncf %21 : vector<16x16x32xf32> to vector<16x16x32xbf16>
    %c0_40 = arith.constant 0 : index
    %c0_41 = arith.constant 0 : index
    %c128 = arith.constant 128 : index
    %23 = vector.load %arg6[%c0_40, %c0_41, %c128] : memref<16x16x288xbf16, #tpu.memory_space<vmem>>, vector<16x16x32xbf16>
    tpu.vector_store %arg6[%c0_40, %c0_41, %c128], %22 {strides = array<i32>} : memref<16x16x288xbf16, #tpu.memory_space<vmem>>, vector<16x16x32xbf16>,
    %c1_42 = arith.constant 1 : index
    %c2_43 = arith.constant 2 : index
    %c0_44 = arith.constant 0 : index
    %24 = vector.load %arg5[%c1_42, %c2_43, %c0_44] : memref<18x18x32xf32, #tpu.memory_space<vmem>>, vector<16x16x32xf32>
    %25 = arith.truncf %24 : vector<16x16x32xf32> to vector<16x16x32xbf16>
    %c0_45 = arith.constant 0 : index
    %c0_46 = arith.constant 0 : index
    %c160 = arith.constant 160 : index
    %26 = vector.load %arg6[%c0_45, %c0_46, %c160] : memref<16x16x288xbf16, #tpu.memory_space<vmem>>, vector<16x16x32xbf16>
    tpu.vector_store %arg6[%c0_45, %c0_46, %c160], %25 {strides = array<i32>} : memref<16x16x288xbf16, #tpu.memory_space<vmem>>, vector<16x16x32xbf16>,
    %c2_47 = arith.constant 2 : index
    %c0_48 = arith.constant 0 : index
    %c0_49 = arith.constant 0 : index
    %27 = vector.load %arg5[%c2_47, %c0_48, %c0_49] : memref<18x18x32xf32, #tpu.memory_space<vmem>>, vector<16x16x32xf32>
    %28 = arith.truncf %27 : vector<16x16x32xf32> to vector<16x16x32xbf16>
    %c0_50 = arith.constant 0 : index
    %c0_51 = arith.constant 0 : index
    %c192 = arith.constant 192 : index
    %29 = vector.load %arg6[%c0_50, %c0_51, %c192] : memref<16x16x288xbf16, #tpu.memory_space<vmem>>, vector<16x16x32xbf16>
    tpu.vector_store %arg6[%c0_50, %c0_51, %c192], %28 {strides = array<i32>} : memref<16x16x288xbf16, #tpu.memory_space<vmem>>, vector<16x16x32xbf16>,
    %c2_52 = arith.constant 2 : index
    %c1_53 = arith.constant 1 : index
    %c0_54 = arith.constant 0 : index
    %30 = vector.load %arg5[%c2_52, %c1_53, %c0_54] : memref<18x18x32xf32, #tpu.memory_space<vmem>>, vector<16x16x32xf32>
    %31 = arith.truncf %30 : vector<16x16x32xf32> to vector<16x16x32xbf16>
    %c0_55 = arith.constant 0 : index
    %c0_56 = arith.constant 0 : index
    %c224 = arith.constant 224 : index
    %32 = vector.load %arg6[%c0_55, %c0_56, %c224] : memref<16x16x288xbf16, #tpu.memory_space<vmem>>, vector<16x16x32xbf16>
    tpu.vector_store %arg6[%c0_55, %c0_56, %c224], %31 {strides = array<i32>} : memref<16x16x288xbf16, #tpu.memory_space<vmem>>, vector<16x16x32xbf16>,
    %c2_57 = arith.constant 2 : index
    %c2_58 = arith.constant 2 : index
    %c0_59 = arith.constant 0 : index
    %33 = vector.load %arg5[%c2_57, %c2_58, %c0_59] : memref<18x18x32xf32, #tpu.memory_space<vmem>>, vector<16x16x32xf32>
    %34 = arith.truncf %33 : vector<16x16x32xf32> to vector<16x16x32xbf16>
    %c0_60 = arith.constant 0 : index
    %c0_61 = arith.constant 0 : index
    %c256 = arith.constant 256 : index
    %35 = vector.load %arg6[%c0_60, %c0_61, %c256] : memref<16x16x288xbf16, #tpu.memory_space<vmem>>, vector<16x16x32xbf16>
    tpu.vector_store %arg6[%c0_60, %c0_61, %c256], %34 {strides = array<i32>} : memref<16x16x288xbf16, #tpu.memory_space<vmem>>, vector<16x16x32xbf16>,
    %c0_62 = arith.constant 0 : index
    %c0_63 = arith.constant 0 : index
    %c0_64 = arith.constant 0 : index
    %36 = vector.load %arg6[%c0_62, %c0_63, %c0_64] : memref<16x16x288xbf16, #tpu.memory_space<vmem>>, vector<16x16x288xbf16>
    %37 = vector.shape_cast %36 : vector<16x16x288xbf16> to vector<256x288xbf16>
    %c0_65 = arith.constant 0 : index
    %c0_66 = arith.constant 0 : index
    %38 = vector.load %arg2[%c0_65, %c0_66] : memref<288x256xbf16, #tpu.memory_space<vmem>>, vector<288x256xbf16>
    %cst_67 = arith.constant dense<0.000000e+00> : vector<256x256xf32>
    %39 = tpu.matmul %37, %38, %cst_67 {dimension_numbers = #tpu.dot_dimension_numbers<[1], [0], [0], [1], [0, 0, 1, 1], [], []>} : vector<256x288xbf16>, vector<288x256xbf16>, vector<256x256xf32> -> vector<256x256xf32>
    %c0_68 = arith.constant 0 : index
    %c0_69 = arith.constant 0 : index
    %40 = vector.load %arg3[%c0_68, %c0_69] : memref<1x256xf32, #tpu.memory_space<vmem>>, vector<1x256xf32>
    %41 = vector.broadcast %40 : vector<1x256xf32> to vector<256x256xf32>
    %42 = arith.addf %39, %41 : vector<256x256xf32>
    %c0_70 = arith.constant 0 : index
    %c0_71 = arith.constant 0 : index
    %c0_72 = arith.constant 0 : index
    %43 = vector.load %arg4[%c0_70, %c0_71, %c0_72] : memref<1x256x256xf32, #tpu.memory_space<vmem>>, vector<1x256x256xf32>
    %44 = vector.shape_cast %43 : vector<1x256x256xf32> to vector<256x256xf32>
    %45 = vector.shape_cast %42 : vector<256x256xf32> to vector<1x256x256xf32>
    tpu.vector_store %arg4[%c0_70, %c0_71, %c0_72], %45 {strides = array<i32>} : memref<1x256x256xf32, #tpu.memory_space<vmem>>, vector<1x256x256xf32>,
    return
  }
  func.func @transform_0(%arg0: i32) -> (i32, i32, i32, i32) {
    %c0_i32 = arith.constant 0 : i32
    %c0_i32_0 = arith.constant 0 : i32
    %c0_i32_1 = arith.constant 0 : i32
    %c0_i32_2 = arith.constant 0 : i32
    return %arg0, %c0_i32, %c0_i32_0, %c0_i32_1 : i32, i32, i32, i32
  }
  func.func @transform_1(%arg0: i32) -> (i32, i32) {
    %c0_i32 = arith.constant 0 : i32
    %c0_i32_0 = arith.constant 0 : i32
    %c0_i32_1 = arith.constant 0 : i32
    return %c0_i32, %c0_i32_0 : i32, i32
  }
  func.func @transform_2(%arg0: i32) -> (i32, i32) {
    %c0_i32 = arith.constant 0 : i32
    %c0_i32_0 = arith.constant 0 : i32
    %c0_i32_1 = arith.constant 0 : i32
    return %c0_i32, %c0_i32_0 : i32, i32
  }
  func.func @transform_3(%arg0: i32) -> (i32, i32, i32) {
    %c0_i32 = arith.constant 0 : i32
    %c0_i32_0 = arith.constant 0 : i32
    %c0_i32_1 = arith.constant 0 : i32
    return %arg0, %c0_i32, %c0_i32_0 : i32, i32, i32
  }
}

module attributes {stable_mosaic.version = 11 : i64} {
  func.func @kernel(%arg0: i32, %arg1: memref<1x256x288xbf16, #tpu.memory_space<vmem>>, %arg2: memref<288x32xbf16, #tpu.memory_space<vmem>>, %arg3: memref<1x32xf32, #tpu.memory_space<vmem>>, %arg4: memref<9x32x32xbf16, #tpu.memory_space<vmem>>, %arg5: memref<1x32xf32, #tpu.memory_space<vmem>>, %arg6: memref<1x256x32xf32, #tpu.memory_space<vmem>>, %arg7: memref<1x256x32xf32, #tpu.memory_space<vmem>>, %arg8: memref<18x18x32xf32, #tpu.memory_space<vmem>>) attributes {dimension_semantics = [#tpu.dimension_semantics<parallel>], iteration_bounds = array<i64: 2>, scalar_prefetch = 0 : i64, scratch_operands = 1 : i64, tpu.core_type = #tpu.core_type<tc>, window_params = [{transform_indices = @transform_0, window_bounds = array<i64: 1, 256, 288>}, {pipeline_mode = #tpu.pipeline_mode<synchronous>, transform_indices = @transform_1, window_bounds = array<i64: 288, 32>}, {pipeline_mode = #tpu.pipeline_mode<synchronous>, transform_indices = @transform_2, window_bounds = array<i64: 1, 32>}, {pipeline_mode = #tpu.pipeline_mode<synchronous>, transform_indices = @transform_3, window_bounds = array<i64: 9, 32, 32>}, {pipeline_mode = #tpu.pipeline_mode<synchronous>, transform_indices = @transform_4, window_bounds = array<i64: 1, 32>}, {transform_indices = @transform_5, window_bounds = array<i64: 1, 256, 32>}, {transform_indices = @transform_6, window_bounds = array<i64: 1, 256, 32>}]} {
    %c0 = arith.constant 0 : index
    %c0_0 = arith.constant 0 : index
    %c0_1 = arith.constant 0 : index
    %0 = vector.load %arg1[%c0, %c0_0, %c0_1] : memref<1x256x288xbf16, #tpu.memory_space<vmem>>, vector<1x256x288xbf16>
    %1 = vector.shape_cast %0 : vector<1x256x288xbf16> to vector<256x288xbf16>
    %c0_2 = arith.constant 0 : index
    %c0_3 = arith.constant 0 : index
    %2 = vector.load %arg2[%c0_2, %c0_3] : memref<288x32xbf16, #tpu.memory_space<vmem>>, vector<288x32xbf16>
    %cst = arith.constant dense<0.000000e+00> : vector<256x32xf32>
    %3 = tpu.matmul %1, %2, %cst {dimension_numbers = #tpu.dot_dimension_numbers<[1], [0], [0], [1], [0, 0, 1, 1], [], []>} : vector<256x288xbf16>, vector<288x32xbf16>, vector<256x32xf32> -> vector<256x32xf32>
    %c0_4 = arith.constant 0 : index
    %c0_5 = arith.constant 0 : index
    %4 = vector.load %arg3[%c0_4, %c0_5] : memref<1x32xf32, #tpu.memory_space<vmem>>, vector<1x32xf32>
    %5 = vector.broadcast %4 : vector<1x32xf32> to vector<256x32xf32>
    %6 = arith.addf %3, %5 : vector<256x32xf32>
    %cst_6 = arith.constant 0.000000e+00 : f32
    %7 = vector.broadcast %cst_6 : f32 to vector<256x32xf32>
    %8 = arith.cmpf ogt, %6, %7 : vector<256x32xf32>
    %cst_7 = arith.constant 2.000000e-01 : f32
    %9 = vector.broadcast %cst_7 : f32 to vector<256x32xf32>
    %10 = arith.mulf %9, %6 : vector<256x32xf32>
    %11 = arith.select %8, %6, %10 : vector<256x32xi1>, vector<256x32xf32>
    %cst_8 = arith.constant 0.000000e+00 : f32
    %12 = vector.broadcast %cst_8 : f32 to vector<1x18x32xf32>
    %cst_9 = arith.constant 0.000000e+00 : f32
    %13 = vector.broadcast %cst_9 : f32 to vector<16x1x32xf32>
    %c0_10 = arith.constant 0 : index
    %c0_11 = arith.constant 0 : index
    %c0_12 = arith.constant 0 : index
    %14 = vector.load %arg8[%c0_10, %c0_11, %c0_12] : memref<18x18x32xf32, #tpu.memory_space<vmem>>, vector<1x18x32xf32>
    tpu.vector_store %arg8[%c0_10, %c0_11, %c0_12], %12 {strides = array<i32>} : memref<18x18x32xf32, #tpu.memory_space<vmem>>, vector<1x18x32xf32>,
    %c17 = arith.constant 17 : index
    %c0_13 = arith.constant 0 : index
    %c0_14 = arith.constant 0 : index
    %15 = vector.load %arg8[%c17, %c0_13, %c0_14] : memref<18x18x32xf32, #tpu.memory_space<vmem>>, vector<1x18x32xf32>
    tpu.vector_store %arg8[%c17, %c0_13, %c0_14], %12 {strides = array<i32>} : memref<18x18x32xf32, #tpu.memory_space<vmem>>, vector<1x18x32xf32>,
    %c1 = arith.constant 1 : index
    %c0_15 = arith.constant 0 : index
    %c0_16 = arith.constant 0 : index
    %16 = vector.load %arg8[%c1, %c0_15, %c0_16] : memref<18x18x32xf32, #tpu.memory_space<vmem>>, vector<16x1x32xf32>
    tpu.vector_store %arg8[%c1, %c0_15, %c0_16], %13 {strides = array<i32>} : memref<18x18x32xf32, #tpu.memory_space<vmem>>, vector<16x1x32xf32>,
    %c1_17 = arith.constant 1 : index
    %c17_18 = arith.constant 17 : index
    %c0_19 = arith.constant 0 : index
    %17 = vector.load %arg8[%c1_17, %c17_18, %c0_19] : memref<18x18x32xf32, #tpu.memory_space<vmem>>, vector<16x1x32xf32>
    tpu.vector_store %arg8[%c1_17, %c17_18, %c0_19], %13 {strides = array<i32>} : memref<18x18x32xf32, #tpu.memory_space<vmem>>, vector<16x1x32xf32>,
    %18 = vector.shape_cast %11 : vector<256x32xf32> to vector<16x16x32xf32>
    %c1_20 = arith.constant 1 : index
    %c1_21 = arith.constant 1 : index
    %c0_22 = arith.constant 0 : index
    %19 = vector.load %arg8[%c1_20, %c1_21, %c0_22] : memref<18x18x32xf32, #tpu.memory_space<vmem>>, vector<16x16x32xf32>
    tpu.vector_store %arg8[%c1_20, %c1_21, %c0_22], %18 {strides = array<i32>} : memref<18x18x32xf32, #tpu.memory_space<vmem>>, vector<16x16x32xf32>,
    %c0_23 = arith.constant 0 : index
    %c0_24 = arith.constant 0 : index
    %c0_25 = arith.constant 0 : index
    %20 = vector.load %arg6[%c0_23, %c0_24, %c0_25] : memref<1x256x32xf32, #tpu.memory_space<vmem>>, vector<1x256x32xf32>
    %21 = vector.shape_cast %20 : vector<1x256x32xf32> to vector<256x32xf32>
    %c0_26 = arith.constant 0 : index
    %c0_27 = arith.constant 0 : index
    %22 = vector.load %arg5[%c0_26, %c0_27] : memref<1x32xf32, #tpu.memory_space<vmem>>, vector<1x32xf32>
    %23 = vector.broadcast %22 : vector<1x32xf32> to vector<256x32xf32>
    %24 = arith.addf %21, %23 : vector<256x32xf32>
    %c0_28 = arith.constant 0 : index
    %c0_29 = arith.constant 0 : index
    %c0_30 = arith.constant 0 : index
    %25 = vector.load %arg8[%c0_28, %c0_29, %c0_30] : memref<18x18x32xf32, #tpu.memory_space<vmem>>, vector<16x16x32xf32>
    %26 = arith.truncf %25 : vector<16x16x32xf32> to vector<16x16x32xbf16>
    %27 = vector.shape_cast %26 : vector<16x16x32xbf16> to vector<256x32xbf16>
    %c0_31 = arith.constant 0 : index
    %c0_32 = arith.constant 0 : index
    %c0_33 = arith.constant 0 : index
    %28 = vector.load %arg4[%c0_31, %c0_32, %c0_33] : memref<9x32x32xbf16, #tpu.memory_space<vmem>>, vector<1x32x32xbf16>
    %29 = vector.shape_cast %28 : vector<1x32x32xbf16> to vector<32x32xbf16>
    %cst_34 = arith.constant dense<0.000000e+00> : vector<256x32xf32>
    %30 = tpu.matmul %27, %29, %cst_34 {dimension_numbers = #tpu.dot_dimension_numbers<[1], [0], [0], [1], [0, 0, 1, 1], [], []>} : vector<256x32xbf16>, vector<32x32xbf16>, vector<256x32xf32> -> vector<256x32xf32>
    %31 = arith.addf %24, %30 : vector<256x32xf32>
    %c0_35 = arith.constant 0 : index
    %c1_36 = arith.constant 1 : index
    %c0_37 = arith.constant 0 : index
    %32 = vector.load %arg8[%c0_35, %c1_36, %c0_37] : memref<18x18x32xf32, #tpu.memory_space<vmem>>, vector<16x16x32xf32>
    %33 = arith.truncf %32 : vector<16x16x32xf32> to vector<16x16x32xbf16>
    %34 = vector.shape_cast %33 : vector<16x16x32xbf16> to vector<256x32xbf16>
    %c1_38 = arith.constant 1 : index
    %c0_39 = arith.constant 0 : index
    %c0_40 = arith.constant 0 : index
    %35 = vector.load %arg4[%c1_38, %c0_39, %c0_40] : memref<9x32x32xbf16, #tpu.memory_space<vmem>>, vector<1x32x32xbf16>
    %36 = vector.shape_cast %35 : vector<1x32x32xbf16> to vector<32x32xbf16>
    %cst_41 = arith.constant dense<0.000000e+00> : vector<256x32xf32>
    %37 = tpu.matmul %34, %36, %cst_41 {dimension_numbers = #tpu.dot_dimension_numbers<[1], [0], [0], [1], [0, 0, 1, 1], [], []>} : vector<256x32xbf16>, vector<32x32xbf16>, vector<256x32xf32> -> vector<256x32xf32>
    %38 = arith.addf %31, %37 : vector<256x32xf32>
    %c0_42 = arith.constant 0 : index
    %c2 = arith.constant 2 : index
    %c0_43 = arith.constant 0 : index
    %39 = vector.load %arg8[%c0_42, %c2, %c0_43] : memref<18x18x32xf32, #tpu.memory_space<vmem>>, vector<16x16x32xf32>
    %40 = arith.truncf %39 : vector<16x16x32xf32> to vector<16x16x32xbf16>
    %41 = vector.shape_cast %40 : vector<16x16x32xbf16> to vector<256x32xbf16>
    %c2_44 = arith.constant 2 : index
    %c0_45 = arith.constant 0 : index
    %c0_46 = arith.constant 0 : index
    %42 = vector.load %arg4[%c2_44, %c0_45, %c0_46] : memref<9x32x32xbf16, #tpu.memory_space<vmem>>, vector<1x32x32xbf16>
    %43 = vector.shape_cast %42 : vector<1x32x32xbf16> to vector<32x32xbf16>
    %cst_47 = arith.constant dense<0.000000e+00> : vector<256x32xf32>
    %44 = tpu.matmul %41, %43, %cst_47 {dimension_numbers = #tpu.dot_dimension_numbers<[1], [0], [0], [1], [0, 0, 1, 1], [], []>} : vector<256x32xbf16>, vector<32x32xbf16>, vector<256x32xf32> -> vector<256x32xf32>
    %45 = arith.addf %38, %44 : vector<256x32xf32>
    %c1_48 = arith.constant 1 : index
    %c0_49 = arith.constant 0 : index
    %c0_50 = arith.constant 0 : index
    %46 = vector.load %arg8[%c1_48, %c0_49, %c0_50] : memref<18x18x32xf32, #tpu.memory_space<vmem>>, vector<16x16x32xf32>
    %47 = arith.truncf %46 : vector<16x16x32xf32> to vector<16x16x32xbf16>
    %48 = vector.shape_cast %47 : vector<16x16x32xbf16> to vector<256x32xbf16>
    %c3 = arith.constant 3 : index
    %c0_51 = arith.constant 0 : index
    %c0_52 = arith.constant 0 : index
    %49 = vector.load %arg4[%c3, %c0_51, %c0_52] : memref<9x32x32xbf16, #tpu.memory_space<vmem>>, vector<1x32x32xbf16>
    %50 = vector.shape_cast %49 : vector<1x32x32xbf16> to vector<32x32xbf16>
    %cst_53 = arith.constant dense<0.000000e+00> : vector<256x32xf32>
    %51 = tpu.matmul %48, %50, %cst_53 {dimension_numbers = #tpu.dot_dimension_numbers<[1], [0], [0], [1], [0, 0, 1, 1], [], []>} : vector<256x32xbf16>, vector<32x32xbf16>, vector<256x32xf32> -> vector<256x32xf32>
    %52 = arith.addf %45, %51 : vector<256x32xf32>
    %c1_54 = arith.constant 1 : index
    %c1_55 = arith.constant 1 : index
    %c0_56 = arith.constant 0 : index
    %53 = vector.load %arg8[%c1_54, %c1_55, %c0_56] : memref<18x18x32xf32, #tpu.memory_space<vmem>>, vector<16x16x32xf32>
    %54 = arith.truncf %53 : vector<16x16x32xf32> to vector<16x16x32xbf16>
    %55 = vector.shape_cast %54 : vector<16x16x32xbf16> to vector<256x32xbf16>
    %c4 = arith.constant 4 : index
    %c0_57 = arith.constant 0 : index
    %c0_58 = arith.constant 0 : index
    %56 = vector.load %arg4[%c4, %c0_57, %c0_58] : memref<9x32x32xbf16, #tpu.memory_space<vmem>>, vector<1x32x32xbf16>
    %57 = vector.shape_cast %56 : vector<1x32x32xbf16> to vector<32x32xbf16>
    %cst_59 = arith.constant dense<0.000000e+00> : vector<256x32xf32>
    %58 = tpu.matmul %55, %57, %cst_59 {dimension_numbers = #tpu.dot_dimension_numbers<[1], [0], [0], [1], [0, 0, 1, 1], [], []>} : vector<256x32xbf16>, vector<32x32xbf16>, vector<256x32xf32> -> vector<256x32xf32>
    %59 = arith.addf %52, %58 : vector<256x32xf32>
    %c1_60 = arith.constant 1 : index
    %c2_61 = arith.constant 2 : index
    %c0_62 = arith.constant 0 : index
    %60 = vector.load %arg8[%c1_60, %c2_61, %c0_62] : memref<18x18x32xf32, #tpu.memory_space<vmem>>, vector<16x16x32xf32>
    %61 = arith.truncf %60 : vector<16x16x32xf32> to vector<16x16x32xbf16>
    %62 = vector.shape_cast %61 : vector<16x16x32xbf16> to vector<256x32xbf16>
    %c5 = arith.constant 5 : index
    %c0_63 = arith.constant 0 : index
    %c0_64 = arith.constant 0 : index
    %63 = vector.load %arg4[%c5, %c0_63, %c0_64] : memref<9x32x32xbf16, #tpu.memory_space<vmem>>, vector<1x32x32xbf16>
    %64 = vector.shape_cast %63 : vector<1x32x32xbf16> to vector<32x32xbf16>
    %cst_65 = arith.constant dense<0.000000e+00> : vector<256x32xf32>
    %65 = tpu.matmul %62, %64, %cst_65 {dimension_numbers = #tpu.dot_dimension_numbers<[1], [0], [0], [1], [0, 0, 1, 1], [], []>} : vector<256x32xbf16>, vector<32x32xbf16>, vector<256x32xf32> -> vector<256x32xf32>
    %66 = arith.addf %59, %65 : vector<256x32xf32>
    %c2_66 = arith.constant 2 : index
    %c0_67 = arith.constant 0 : index
    %c0_68 = arith.constant 0 : index
    %67 = vector.load %arg8[%c2_66, %c0_67, %c0_68] : memref<18x18x32xf32, #tpu.memory_space<vmem>>, vector<16x16x32xf32>
    %68 = arith.truncf %67 : vector<16x16x32xf32> to vector<16x16x32xbf16>
    %69 = vector.shape_cast %68 : vector<16x16x32xbf16> to vector<256x32xbf16>
    %c6 = arith.constant 6 : index
    %c0_69 = arith.constant 0 : index
    %c0_70 = arith.constant 0 : index
    %70 = vector.load %arg4[%c6, %c0_69, %c0_70] : memref<9x32x32xbf16, #tpu.memory_space<vmem>>, vector<1x32x32xbf16>
    %71 = vector.shape_cast %70 : vector<1x32x32xbf16> to vector<32x32xbf16>
    %cst_71 = arith.constant dense<0.000000e+00> : vector<256x32xf32>
    %72 = tpu.matmul %69, %71, %cst_71 {dimension_numbers = #tpu.dot_dimension_numbers<[1], [0], [0], [1], [0, 0, 1, 1], [], []>} : vector<256x32xbf16>, vector<32x32xbf16>, vector<256x32xf32> -> vector<256x32xf32>
    %73 = arith.addf %66, %72 : vector<256x32xf32>
    %c2_72 = arith.constant 2 : index
    %c1_73 = arith.constant 1 : index
    %c0_74 = arith.constant 0 : index
    %74 = vector.load %arg8[%c2_72, %c1_73, %c0_74] : memref<18x18x32xf32, #tpu.memory_space<vmem>>, vector<16x16x32xf32>
    %75 = arith.truncf %74 : vector<16x16x32xf32> to vector<16x16x32xbf16>
    %76 = vector.shape_cast %75 : vector<16x16x32xbf16> to vector<256x32xbf16>
    %c7 = arith.constant 7 : index
    %c0_75 = arith.constant 0 : index
    %c0_76 = arith.constant 0 : index
    %77 = vector.load %arg4[%c7, %c0_75, %c0_76] : memref<9x32x32xbf16, #tpu.memory_space<vmem>>, vector<1x32x32xbf16>
    %78 = vector.shape_cast %77 : vector<1x32x32xbf16> to vector<32x32xbf16>
    %cst_77 = arith.constant dense<0.000000e+00> : vector<256x32xf32>
    %79 = tpu.matmul %76, %78, %cst_77 {dimension_numbers = #tpu.dot_dimension_numbers<[1], [0], [0], [1], [0, 0, 1, 1], [], []>} : vector<256x32xbf16>, vector<32x32xbf16>, vector<256x32xf32> -> vector<256x32xf32>
    %80 = arith.addf %73, %79 : vector<256x32xf32>
    %c2_78 = arith.constant 2 : index
    %c2_79 = arith.constant 2 : index
    %c0_80 = arith.constant 0 : index
    %81 = vector.load %arg8[%c2_78, %c2_79, %c0_80] : memref<18x18x32xf32, #tpu.memory_space<vmem>>, vector<16x16x32xf32>
    %82 = arith.truncf %81 : vector<16x16x32xf32> to vector<16x16x32xbf16>
    %83 = vector.shape_cast %82 : vector<16x16x32xbf16> to vector<256x32xbf16>
    %c8 = arith.constant 8 : index
    %c0_81 = arith.constant 0 : index
    %c0_82 = arith.constant 0 : index
    %84 = vector.load %arg4[%c8, %c0_81, %c0_82] : memref<9x32x32xbf16, #tpu.memory_space<vmem>>, vector<1x32x32xbf16>
    %85 = vector.shape_cast %84 : vector<1x32x32xbf16> to vector<32x32xbf16>
    %cst_83 = arith.constant dense<0.000000e+00> : vector<256x32xf32>
    %86 = tpu.matmul %83, %85, %cst_83 {dimension_numbers = #tpu.dot_dimension_numbers<[1], [0], [0], [1], [0, 0, 1, 1], [], []>} : vector<256x32xbf16>, vector<32x32xbf16>, vector<256x32xf32> -> vector<256x32xf32>
    %87 = arith.addf %80, %86 : vector<256x32xf32>
    %c0_84 = arith.constant 0 : index
    %c0_85 = arith.constant 0 : index
    %c0_86 = arith.constant 0 : index
    %88 = vector.load %arg7[%c0_84, %c0_85, %c0_86] : memref<1x256x32xf32, #tpu.memory_space<vmem>>, vector<1x256x32xf32>
    %89 = vector.shape_cast %88 : vector<1x256x32xf32> to vector<256x32xf32>
    %90 = vector.shape_cast %87 : vector<256x32xf32> to vector<1x256x32xf32>
    tpu.vector_store %arg7[%c0_84, %c0_85, %c0_86], %90 {strides = array<i32>} : memref<1x256x32xf32, #tpu.memory_space<vmem>>, vector<1x256x32xf32>,
    return
  }
  func.func @transform_0(%arg0: i32) -> (i32, i32, i32) {
    %c0_i32 = arith.constant 0 : i32
    %c0_i32_0 = arith.constant 0 : i32
    %c0_i32_1 = arith.constant 0 : i32
    return %arg0, %c0_i32, %c0_i32_0 : i32, i32, i32
  }
  func.func @transform_1(%arg0: i32) -> (i32, i32) {
    %c0_i32 = arith.constant 0 : i32
    %c0_i32_0 = arith.constant 0 : i32
    %c0_i32_1 = arith.constant 0 : i32
    return %c0_i32, %c0_i32_0 : i32, i32
  }
  func.func @transform_2(%arg0: i32) -> (i32, i32) {
    %c0_i32 = arith.constant 0 : i32
    %c0_i32_0 = arith.constant 0 : i32
    %c0_i32_1 = arith.constant 0 : i32
    return %c0_i32, %c0_i32_0 : i32, i32
  }
  func.func @transform_3(%arg0: i32) -> (i32, i32, i32) {
    %c0_i32 = arith.constant 0 : i32
    %c0_i32_0 = arith.constant 0 : i32
    %c0_i32_1 = arith.constant 0 : i32
    %c0_i32_2 = arith.constant 0 : i32
    return %c0_i32, %c0_i32_0, %c0_i32_1 : i32, i32, i32
  }
  func.func @transform_4(%arg0: i32) -> (i32, i32) {
    %c0_i32 = arith.constant 0 : i32
    %c0_i32_0 = arith.constant 0 : i32
    %c0_i32_1 = arith.constant 0 : i32
    return %c0_i32, %c0_i32_0 : i32, i32
  }
  func.func @transform_5(%arg0: i32) -> (i32, i32, i32) {
    %c0_i32 = arith.constant 0 : i32
    %c0_i32_0 = arith.constant 0 : i32
    %c0_i32_1 = arith.constant 0 : i32
    return %arg0, %c0_i32, %c0_i32_0 : i32, i32, i32
  }
  func.func @transform_6(%arg0: i32) -> (i32, i32, i32) {
    %c0_i32 = arith.constant 0 : i32
    %c0_i32_0 = arith.constant 0 : i32
    %c0_i32_1 = arith.constant 0 : i32
    return %arg0, %c0_i32, %c0_i32_0 : i32, i32, i32
  }
}

</mosaic_0001>

<llo_original>
// kernel: tile.8
$region0: #{tile.8}
  #allocation0 [shape = 's32[1]{0}', space=sflag, size = 0x4, scoped, tag = 'scoped memory for tile.8']
  %s0 = inlined_call_operand.vmem [shape: f32[3], index: 0, kind: input, shape index: {}]
  %s1 = inlined_call_operand.vmem [shape: f32[3,3], index: 1, kind: output, shape index: {}]
  // Predicated region
  $region2: #{tile.8} parent=0 // pred_check
    _
  $region3: #{tile.8} parent=0 // pred_check_branch
    %3 = sbr.rel (0) target = $region5
  $region4: #{tile.8} parent=0 // pred_region
    _
  $region5: #{tile.8} parent=0 // pred_fallthru
    _
  %v4 = vld [vmem:[%s0] ss:$0 sm:$0xff]
  %5 = vst [vmem:[%s1] sm:$0xf] %v4

// kernel: rsa_block_forward.2
$region0: #{rsa_block_forward.2}
  #allocation0 [shape = 'u32[]', space=smem, size = 0x4, offset = 0x4, fixed_abs, tag = 'smem constant byte address 0x4 - core index']
  #allocation1 [shape = 'u32[72,128]{1,0:T(1,128)}', space=vmem, size = 0x9000, scoped, tag = 'internal scratch']
  #allocation2 [shape = 'f32[18,18,32]{2,1,0:T(8,128)}', space=vmem, size = 0x36000, scoped, tag = 'scratch operand']
  #allocation3 [shape = 'bf16[16,16,288]{2,1,0:T(8,128)(2,1)}', space=vmem, size = 0x30000, scoped, tag = 'scratch operand']
  %s0 = inlined_call_operand.hbm [shape: f32[2,16,16,32], index: 0, kind: input, shape index: {}]
  %s1 = inlined_call_operand.vmem [shape: bf16[288,256], index: 1, kind: input, shape index: {}]
  %s2 = inlined_call_operand.vmem [shape: f32[1,256], index: 2, kind: input, shape index: {}]
  %s3 = inlined_call_operand.vmem [shape: f32[2,256,256], index: 3, kind: output, shape index: {}]
  %s4 = sld [smem:[#allocation0]]
  $region49: #{rsa_block_forward.2} parent=0
    _
  %s6 = ssub.s32 1, %s4
  %s7 = scalar_select 0, %s6, %s4
  $region1: #{rsa_block_forward.2} parent=0
    #allocation4 [shape = 'u8[262144]{0}', space=vmem, size = 0x40000, scoped, tag = 'input window, operand 0']
    #allocation5 [shape = 's32[2]{0}', space=sflag, size = 0x8, scoped, tag = 'scoped memory for rsa_block_forward.2']
    %8 = vsyncpa [#allocation5], 0
    %s9 = scalar_lea.sflag [#allocation5], 1
    %10 = vsyncpa %s9, 0
    loop: start=0, step=1, limit=4
    $region2: #{rsa_block_forward.2} parent=1 // loop_pre_header
      _
    $region3: #{rsa_block_forward.2} parent=1 // loop_header
      %s12 = sphi 0, %s16
      %p13 = scmp.ge.s32.totalorder %s12, 4
      %s22 = sphi 0, %s24
      %s25 = sphi 0, %s22
      %s26 = sphi 0, %s25
      %s42 = sphi 0, %s26
      %s46 = sphi 0, %s46
      %s48 = sphi 0, %s46
      %s49 = sphi 0, %s48
      %s63 = sphi 0, %s49
      %s67 = sphi 0, %s67
      %s69 = sphi 0, %s67
      %s70 = sphi 0, %s69
      %s84 = sphi 0, %s70
      %s90 = sphi 0, %s92
      %s93 = sphi 0, %s90
      %s94 = sphi 0, %s93
      %s110 = sphi 0, %s94
    $region4: #{rsa_block_forward.2} parent=1 // loop_header_branch
      %15 = sbr.rel (%p13) target = $region8
    $region5: #{rsa_block_forward.2} parent=1 // loop_body
      %s17 = ssub.s32 %s12, 1
      %s18 = ssub.s32 %s12, 2
      %s19 = sadd.s32 %s12, 1
      %s20 = ssub.s32 %s12, %s19
      %p21 = scmp.eq.s32.totalorder %s20, 0
      %s23 = sadd.s32 %s22, 1
      %s24 = scalar_select %p21, %s22, %s23
      %p27 = pneg %p21
      %p28 = scmp.eq.s32.totalorder %s12, 1
      %p29 = por %p27, %p28
      %p30 = scmp.ne.s32.totalorder %s22, %s25
      %p31 = scmp.eq.s32.totalorder %s12, 0
      %p32 = por %p30, %p31
      %p33 = scmp.ne.s32.totalorder %s22, %s25
      %p34 = scmp.eq.s32.totalorder %s17, 1
      %p35 = por %p33, %p34
      %p36 = scmp.ne.s32.totalorder %s25, %s26
      %p37 = scmp.eq.s32.totalorder %s17, 0
      %p38 = por %p36, %p37
      %p39 = scmp.ne.s32.totalorder %s25, %s26
      %p40 = scmp.eq.s32.totalorder %s18, 1
      %p41 = por %p39, %p40
      %p43 = scmp.ne.s32.totalorder %s26, %s42
      %p44 = scmp.eq.s32.totalorder %s18, 0
      %p45 = por %p43, %p44
      %s47 = sadd.s32 %s46, 1
      %p50 = scmp.eq.s32.totalorder %s12, 1
      %p51 = scmp.ne.s32.totalorder %s46, %s48
      %p52 = scmp.eq.s32.totalorder %s12, 0
      %p53 = por %p51, %p52
      %p54 = scmp.ne.s32.totalorder %s46, %s48
      %p55 = scmp.eq.s32.totalorder %s17, 1
      %p56 = por %p54, %p55
      %p57 = scmp.ne.s32.totalorder %s48, %s49
      %p58 = scmp.eq.s32.totalorder %s17, 0
      %p59 = por %p57, %p58
      %p60 = scmp.ne.s32.totalorder %s48, %s49
      %p61 = scmp.eq.s32.totalorder %s18, 1
      %p62 = por %p60, %p61
      %p64 = scmp.ne.s32.totalorder %s49, %s63
      %p65 = scmp.eq.s32.totalorder %s18, 0
      %p66 = por %p64, %p65
      %s68 = sadd.s32 %s67, 1
      %p71 = scmp.eq.s32.totalorder %s12, 1
      %p72 = scmp.ne.s32.totalorder %s67, %s69
      %p73 = scmp.eq.s32.totalorder %s12, 0
      %p74 = por %p72, %p73
      %p75 = scmp.ne.s32.totalorder %s67, %s69
      %p76 = scmp.eq.s32.totalorder %s17, 1
      %p77 = por %p75, %p76
      %p78 = scmp.ne.s32.totalorder %s69, %s70
      %p79 = scmp.eq.s32.totalorder %s17, 0
      %p80 = por %p78, %p79
      %p81 = scmp.ne.s32.totalorder %s69, %s70
      %p82 = scmp.eq.s32.totalorder %s18, 1
      %p83 = por %p81, %p82
      %p85 = scmp.ne.s32.totalorder %s70, %s84
      %p86 = scmp.eq.s32.totalorder %s18, 0
      %p87 = por %p85, %p86
      %s88 = ssub.s32 %s12, %s19
      %p89 = scmp.eq.s32.totalorder %s88, 0
      %s91 = sadd.s32 %s90, 1
      %s92 = scalar_select %p89, %s90, %s91
      %p95 = pneg %p89
      %p96 = scmp.eq.s32.totalorder %s12, 1
      %p97 = por %p95, %p96
      %p98 = scmp.ne.s32.totalorder %s90, %s93
      %p99 = scmp.eq.s32.totalorder %s12, 0
      %p100 = por %p98, %p99
      %p101 = scmp.ne.s32.totalorder %s90, %s93
      %p102 = scmp.eq.s32.totalorder %s17, 1
      %p103 = por %p101, %p102
      %p104 = scmp.ne.s32.totalorder %s93, %s94
      %p105 = scmp.eq.s32.totalorder %s17, 0
      %p106 = por %p104, %p105
      %p107 = scmp.ne.s32.totalorder %s93, %s94
      %p108 = scmp.eq.s32.totalorder %s18, 1
      %p109 = por %p107, %p108
      %p111 = scmp.ne.s32.totalorder %s94, %s110
      %p112 = scmp.eq.s32.totalorder %s18, 0
      %p113 = por %p111, %p112
      %p114 = scmp.le.s32.totalorder 1, %s12
      %p115 = scmp.lt.s32.totalorder %s12, 3
      %p116 = pnand %p114, %p115
      %p117 = pneg %p116
      // Predicated region
      $region9: #{rsa_block_forward.2} parent=5 // pred_check
        _
      $region10: #{rsa_block_forward.2} parent=5 // pred_check_branch
        %119 = sbr.rel (%p116) target = $region12
      $region11: #{rsa_block_forward.2} parent=5 // pred_region
        %s120 = ssub.s32 %s12, 1
        // Predicated region
        $region13: #{rsa_block_forward.2} parent=11 // pred_check
          %p121 = pneg %p59
        $region14: #{rsa_block_forward.2} parent=11 // pred_check_branch
          %123 = sbr.rel (%p121) target = $region16
        $region15: #{rsa_block_forward.2} parent=11 // pred_region
          _
        $region16: #{rsa_block_forward.2} parent=11 // pred_fallthru
          _
        // Predicated region
        $region17: #{rsa_block_forward.2} parent=11 // pred_check
          %p124 = pneg %p80
        $region18: #{rsa_block_forward.2} parent=11 // pred_check_branch
          %126 = sbr.rel (%p124) target = $region20
        $region19: #{rsa_block_forward.2} parent=11 // pred_region
          _
        $region20: #{rsa_block_forward.2} parent=11 // pred_fallthru
          _
      $region12: #{rsa_block_forward.2} parent=5 // pred_fallthru
        _
      %p127 = scmp.lt.s32.totalorder %s12, 2
      // Predicated region
      $region21: #{rsa_block_forward.2} parent=5 // pred_check
        %p128 = pneg %p127
      $region22: #{rsa_block_forward.2} parent=5 // pred_check_branch
        %130 = sbr.rel (%p128) target = $region24
      $region23: #{rsa_block_forward.2} parent=5 // pred_region
        // Predicated region
        $region25: #{rsa_block_forward.2} parent=23 // pred_check
          %p131 = pneg %p32
        $region26: #{rsa_block_forward.2} parent=23 // pred_check_branch
          %133 = sbr.rel (%p131) target = $region28
        $region27: #{rsa_block_forward.2} parent=23 // pred_region
          %s134 = sand.u32 %s22, 1
          %s135 = scalar_lea.sflag [#allocation5], %s134
          %s136 = sand.u32 %s22, 1
          %s137 = smul.addr %s136, 256
          %s138 = scalar_lea.vmem [#allocation4], %s137
          %140 = vsyncadd %s135, 0
          %s141 = smul.addr %s12, 32
          %s142 = smul.addr %s141, 8
          %s143 = scalar_lea.hbm %s0, %s142
          %s144 = sshll.u32 %s143, 4
          %s145 = int_to_ptr.hbm [resolvable:$true] %s144
          %s146 = sshll.u32 %s138, 4
          %s147 = int_to_ptr.vmem [resolvable:$true] %s146
          %152 = dma.hbm_to_vmem [thread:$0]  %s145, 4096, %s147, %s135, 128, 128, 8
        $region28: #{rsa_block_forward.2} parent=23 // pred_fallthru
          _
      $region24: #{rsa_block_forward.2} parent=5 // pred_fallthru
        _
      %p153 = scmp.le.s32.totalorder 1, %s12
      %p154 = scmp.lt.s32.totalorder %s12, 3
      %p155 = pnand %p153, %p154
      %p156 = pneg %p155
      // Predicated region
      $region29: #{rsa_block_forward.2} parent=5 // pred_check
        _
      $region30: #{rsa_block_forward.2} parent=5 // pred_check_branch
        %158 = sbr.rel (%p155) target = $region32
      $region31: #{rsa_block_forward.2} parent=5 // pred_region
        %s159 = ssub.s32 %s12, 1
        %s160 = sand.u32 %s25, 1
        %s161 = scalar_lea.sflag [#allocation5], %s160
        %s162 = sand.u32 %s25, 1
        %s163 = smul.addr %s162, 256
        %s164 = scalar_lea.vmem [#allocation4], %s163
        // Predicated region
        $region33: #{rsa_block_forward.2} parent=31 // pred_check
          %p165 = pneg %p38
        $region34: #{rsa_block_forward.2} parent=31 // pred_check_branch
          %167 = sbr.rel (%p165) target = $region36
        $region35: #{rsa_block_forward.2} parent=31 // pred_region
          %169 = dma.done %s161, 4096
        $region36: #{rsa_block_forward.2} parent=31 // pred_fallthru
          _
        %s170 = sand.u32 %s25, 1
        %s171 = scalar_lea.sflag [#allocation5], %s170
        %s172 = sand.u32 %s25, 1
        %s173 = smul.addr %s172, 256
        %s174 = scalar_lea.vmem [#allocation4], %s173
        %p175 = pneg %p38
        %p176 = pneg %p35
        %p177 = pneg %p59
        %p178 = pneg %p56
        %p179 = pneg %p80
        %p180 = pneg %p77
        %p181 = pneg %p106
        %p182 = pneg %p103
        %p183 = scmp.lt.s32.totalorder %s17, 1
        %s184 = scalar_select %p183, %s17, 1
        %s185 = smul.addr %s184, 64
        %s186 = smul.addr %s185, 8
        %s187 = scalar_lea.vmem %s3, %s186
        %p188 = scmp.lt.s32.totalorder %s17, 1
        %s189 = scalar_select %p188, %s17, 1
        %s190 = smul.addr %s189, 64
        %s191 = smul.addr %s190, 8
        %s192 = scalar_lea.vmem %s3, %s191
        %vm194 = vcmask 261120
        %195 = vst.msk [vmem:[#allocation2] sm:$0xff] %vm194, 0.0
        %196 = vst.msk [vmem:[#allocation2 + $0x8] sm:$0xff] %vm194, 0.0
        %vm197 = vcmask 254976
        %198 = vst.msk [vmem:[#allocation2 + $0x10] sm:$0x3] %vm197, 0.0
        %s199 = scalar_lea.vmem [#allocation2], 408
        %200 = vst.msk [vmem:[%s199] sm:$0xff] %vm194, 0.0
        %201 = vst.msk [vmem:[%s199 + $0x8] sm:$0xff] %vm194, 0.0
        %202 = vst.msk [vmem:[%s199 + $0x10] sm:$0x3] %vm197, 0.0
        %s203 = scalar_lea.vmem [#allocation2], 24
        %vm204 = vcmask 253952
        %205 = vst.msk [vmem:[%s203] sm:$0x1] %vm204, 0.0
        %206 = vst.msk [vmem:[%s203 + $0x18] sm:$0x1] %vm204, 0.0
        %207 = vst.msk [vmem:[%s203 + $0x30] sm:$0x1] %vm204, 0.0
        %208 = vst.msk [vmem:[%s203 + $0x48] sm:$0x1] %vm204, 0.0
        %209 = vst.msk [vmem:[%s203 + $0x60] sm:$0x1] %vm204, 0.0
        %210 = vst.msk [vmem:[%s203 + $0x78] sm:$0x1] %vm204, 0.0
        %211 = vst.msk [vmem:[%s203 + $0x90] sm:$0x1] %vm204, 0.0
        %212 = vst.msk [vmem:[%s203 + $0xa8] sm:$0x1] %vm204, 0.0
        %213 = vst.msk [vmem:[%s203 + $0xc0] sm:$0x1] %vm204, 0.0
        %214 = vst.msk [vmem:[%s203 + $0xd8] sm:$0x1] %vm204, 0.0
        %215 = vst.msk [vmem:[%s203 + $0xf0] sm:$0x1] %vm204, 0.0
        %216 = vst.msk [vmem:[%s203 + $0x108] sm:$0x1] %vm204, 0.0
        %217 = vst.msk [vmem:[%s203 + $0x120] sm:$0x1] %vm204, 0.0
        %218 = vst.msk [vmem:[%s203 + $0x138] sm:$0x1] %vm204, 0.0
        %219 = vst.msk [vmem:[%s203 + $0x150] sm:$0x1] %vm204, 0.0
        %220 = vst.msk [vmem:[%s203 + $0x168] sm:$0x1] %vm204, 0.0
        %221 = vst.msk [vmem:[%s203 + $0x11] sm:$0x1] %vm204, 0.0
        %222 = vst.msk [vmem:[%s203 + $0x29] sm:$0x1] %vm204, 0.0
        %223 = vst.msk [vmem:[%s203 + $0x41] sm:$0x1] %vm204, 0.0
        %224 = vst.msk [vmem:[%s203 + $0x59] sm:$0x1] %vm204, 0.0
        %225 = vst.msk [vmem:[%s203 + $0x71] sm:$0x1] %vm204, 0.0
        %226 = vst.msk [vmem:[%s203 + $0x89] sm:$0x1] %vm204, 0.0
        %227 = vst.msk [vmem:[%s203 + $0xa1] sm:$0x1] %vm204, 0.0
        %228 = vst.msk [vmem:[%s203 + $0xb9] sm:$0x1] %vm204, 0.0
        %229 = vst.msk [vmem:[%s203 + $0xd1] sm:$0x1] %vm204, 0.0
        %230 = vst.msk [vmem:[%s203 + $0xe9] sm:$0x1] %vm204, 0.0
        %231 = vst.msk [vmem:[%s203 + $0x101] sm:$0x1] %vm204, 0.0
        %232 = vst.msk [vmem:[%s203 + $0x119] sm:$0x1] %vm204, 0.0
        %233 = vst.msk [vmem:[%s203 + $0x131] sm:$0x1] %vm204, 0.0
        %234 = vst.msk [vmem:[%s203 + $0x149] sm:$0x1] %vm204, 0.0
        %235 = vst.msk [vmem:[%s203 + $0x161] sm:$0x1] %vm204, 0.0
        %236 = vst.msk [vmem:[%s203 + $0x179] sm:$0x1] %vm204, 0.0
        %v237 = vld [vmem:[%s164] sm:$0xff]
        %v238 = vld [vmem:[%s164 + $0x8] sm:$0xff]
        %v239 = vld [vmem:[%s164 + $0x10] sm:$0xff]
        %v240 = vld [vmem:[%s164 + $0x18] sm:$0xff]
        %v241 = vld [vmem:[%s164 + $0x20] sm:$0xff]
        %v242 = vld [vmem:[%s164 + $0x28] sm:$0xff]
        %v243 = vld [vmem:[%s164 + $0x30] sm:$0xff]
        %v244 = vld [vmem:[%s164 + $0x38] sm:$0xff]
        %v245 = vld [vmem:[%s164 + $0x40] sm:$0xff]
        %v246 = vld [vmem:[%s164 + $0x48] sm:$0xff]
        %v247 = vld [vmem:[%s164 + $0x50] sm:$0xff]
        %v248 = vld [vmem:[%s164 + $0x58] sm:$0xff]
        %v249 = vld [vmem:[%s164 + $0x60] sm:$0xff]
        %v250 = vld [vmem:[%s164 + $0x68] sm:$0xff]
        %v251 = vld [vmem:[%s164 + $0x70] sm:$0xff]
        %v252 = vld [vmem:[%s164 + $0x78] sm:$0xff]
        %v253 = vld [vmem:[%s164 + $0x80] sm:$0xff]
        %v254 = vld [vmem:[%s164 + $0x88] sm:$0xff]
        %v255 = vld [vmem:[%s164 + $0x90] sm:$0xff]
        %v256 = vld [vmem:[%s164 + $0x98] sm:$0xff]
        %v257 = vld [vmem:[%s164 + $0xa0] sm:$0xff]
        %v258 = vld [vmem:[%s164 + $0xa8] sm:$0xff]
        %v259 = vld [vmem:[%s164 + $0xb0] sm:$0xff]
        %v260 = vld [vmem:[%s164 + $0xb8] sm:$0xff]
        %v261 = vld [vmem:[%s164 + $0xc0] sm:$0xff]
        %v262 = vld [vmem:[%s164 + $0xc8] sm:$0xff]
        %v263 = vld [vmem:[%s164 + $0xd0] sm:$0xff]
        %v264 = vld [vmem:[%s164 + $0xd8] sm:$0xff]
        %v265 = vld [vmem:[%s164 + $0xe0] sm:$0xff]
        %v266 = vld [vmem:[%s164 + $0xe8] sm:$0xff]
        %v267 = vld [vmem:[%s164 + $0xf0] sm:$0xff]
        %v268 = vld [vmem:[%s164 + $0xf8] sm:$0xff]
        %269 = vst.msk [vmem:[%s203 + $0x1] sm:$0xff] %vm194, %v237
        %270 = vst.msk [vmem:[%s203 + $0x9] sm:$0xff] %vm194, %v238
        %271 = vst.msk [vmem:[%s203 + $0x19] sm:$0xff] %vm194, %v239
        %272 = vst.msk [vmem:[%s203 + $0x21] sm:$0xff] %vm194, %v240
        %273 = vst.msk [vmem:[%s203 + $0x31] sm:$0xff] %vm194, %v241
        %274 = vst.msk [vmem:[%s203 + $0x39] sm:$0xff] %vm194, %v242
        %275 = vst.msk [vmem:[%s203 + $0x49] sm:$0xff] %vm194, %v243
        %276 = vst.msk [vmem:[%s203 + $0x51] sm:$0xff] %vm194, %v244
        %277 = vst.msk [vmem:[%s203 + $0x61] sm:$0xff] %vm194, %v245
        %278 = vst.msk [vmem:[%s203 + $0x69] sm:$0xff] %vm194, %v246
        %279 = vst.msk [vmem:[%s203 + $0x79] sm:$0xff] %vm194, %v247
        %280 = vst.msk [vmem:[%s203 + $0x81] sm:$0xff] %vm194, %v248
        %281 = vst.msk [vmem:[%s203 + $0x91] sm:$0xff] %vm194, %v249
        %282 = vst.msk [vmem:[%s203 + $0x99] sm:$0xff] %vm194, %v250
        %283 = vst.msk [vmem:[%s203 + $0xa9] sm:$0xff] %vm194, %v251
        %284 = vst.msk [vmem:[%s203 + $0xb1] sm:$0xff] %vm194, %v252
        %285 = vst.msk [vmem:[%s203 + $0xc1] sm:$0xff] %vm194, %v253
        %286 = vst.msk [vmem:[%s203 + $0xc9] sm:$0xff] %vm194, %v254
        %287 = vst.msk [vmem:[%s203 + $0xd9] sm:$0xff] %vm194, %v255
        %288 = vst.msk [vmem:[%s203 + $0xe1] sm:$0xff] %vm194, %v256
        %289 = vst.msk [vmem:[%s203 + $0xf1] sm:$0xff] %vm194, %v257
        %290 = vst.msk [vmem:[%s203 + $0xf9] sm:$0xff] %vm194, %v258
        %291 = vst.msk [vmem:[%s203 + $0x109] sm:$0xff] %vm194, %v259
        %292 = vst.msk [vmem:[%s203 + $0x111] sm:$0xff] %vm194, %v260
        %293 = vst.msk [vmem:[%s203 + $0x121] sm:$0xff] %vm194, %v261
        %294 = vst.msk [vmem:[%s203 + $0x129] sm:$0xff] %vm194, %v262
        %295 = vst.msk [vmem:[%s203 + $0x139] sm:$0xff] %vm194, %v263
        %296 = vst.msk [vmem:[%s203 + $0x141] sm:$0xff] %vm194, %v264
        %297 = vst.msk [vmem:[%s203 + $0x151] sm:$0xff] %vm194, %v265
        %298 = vst.msk [vmem:[%s203 + $0x159] sm:$0xff] %vm194, %v266
        %299 = vst.msk [vmem:[%s203 + $0x169] sm:$0xff] %vm194, %v267
        %300 = vst.msk [vmem:[%s203 + $0x171] sm:$0xff] %vm194, %v268
        %v301 = vld [vmem:[#allocation2] sm:$0xff]
        %v302 = vld [vmem:[#allocation2 + $0x8] sm:$0xff]
        %v303 = vld [vmem:[#allocation2 + $0x18] sm:$0xff]
        %v304 = vld [vmem:[#allocation2 + $0x20] sm:$0xff]
        %v305 = vld [vmem:[#allocation2 + $0x30] sm:$0xff]
        %v306 = vld [vmem:[#allocation2 + $0x38] sm:$0xff]
        %v307 = vld [vmem:[#allocation2 + $0x48] sm:$0xff]
        %v308 = vld [vmem:[#allocation2 + $0x50] sm:$0xff]
        %v309 = vld [vmem:[#allocation2 + $0x60] sm:$0xff]
        %v310 = vld [vmem:[#allocation2 + $0x68] sm:$0xff]
        %v311 = vld [vmem:[#allocation2 + $0x78] sm:$0xff]
        %v312 = vld [vmem:[#allocation2 + $0x80] sm:$0xff]
        %v313 = vld [vmem:[#allocation2 + $0x90] sm:$0xff]
        %v314 = vld [vmem:[#allocation2 + $0x98] sm:$0xff]
        %v315 = vld [vmem:[#allocation2 + $0xa8] sm:$0xff]
        %v316 = vld [vmem:[#allocation2 + $0xb0] sm:$0xff]
        %v317 = vld [vmem:[#allocation2 + $0xc0] sm:$0xff]
        %v318 = vld [vmem:[#allocation2 + $0xc8] sm:$0xff]
        %v319 = vld [vmem:[#allocation2 + $0xd8] sm:$0xff]
        %v320 = vld [vmem:[#allocation2 + $0xe0] sm:$0xff]
        %v321 = vld [vmem:[#allocation2 + $0xf0] sm:$0xff]
        %v322 = vld [vmem:[#allocation2 + $0xf8] sm:$0xff]
        %v323 = vld [vmem:[#allocation2 + $0x108] sm:$0xff]
        %v324 = vld [vmem:[#allocation2 + $0x110] sm:$0xff]
        %v325 = vld [vmem:[#allocation2 + $0x120] sm:$0xff]
        %v326 = vld [vmem:[#allocation2 + $0x128] sm:$0xff]
        %v327 = vld [vmem:[#allocation2 + $0x138] sm:$0xff]
        %v328 = vld [vmem:[#allocation2 + $0x140] sm:$0xff]
        %v329 = vld [vmem:[#allocation2 + $0x150] sm:$0xff]
        %v330 = vld [vmem:[#allocation2 + $0x158] sm:$0xff]
        %v331 = vld [vmem:[#allocation2 + $0x168] sm:$0xff]
        %v332 = vld [vmem:[#allocation2 + $0x170] sm:$0xff]
        %v333 = vpack.c.bf16 %v301, %v301
        %v334 = vpack.c.bf16 %v302, %v302
        %v335 = vpack.c.bf16 %v303, %v303
        %v336 = vpack.c.bf16 %v304, %v304
        %v337 = vpack.c.bf16 %v305, %v305
        %v338 = vpack.c.bf16 %v306, %v306
        %v339 = vpack.c.bf16 %v307, %v307
        %v340 = vpack.c.bf16 %v308, %v308
        %v341 = vpack.c.bf16 %v309, %v309
        %v342 = vpack.c.bf16 %v310, %v310
        %v343 = vpack.c.bf16 %v311, %v311
        %v344 = vpack.c.bf16 %v312, %v312
        %v345 = vpack.c.bf16 %v313, %v313
        %v346 = vpack.c.bf16 %v314, %v314
        %v347 = vpack.c.bf16 %v315, %v315
        %v348 = vpack.c.bf16 %v316, %v316
        %v349 = vpack.c.bf16 %v317, %v317
        %v350 = vpack.c.bf16 %v318, %v318
        %v351 = vpack.c.bf16 %v319, %v319
        %v352 = vpack.c.bf16 %v320, %v320
        %v353 = vpack.c.bf16 %v321, %v321
        %v354 = vpack.c.bf16 %v322, %v322
        %v355 = vpack.c.bf16 %v323, %v323
        %v356 = vpack.c.bf16 %v324, %v324
        %v357 = vpack.c.bf16 %v325, %v325
        %v358 = vpack.c.bf16 %v326, %v326
        %v359 = vpack.c.bf16 %v327, %v327
        %v360 = vpack.c.bf16 %v328, %v328
        %v361 = vpack.c.bf16 %v329, %v329
        %v362 = vpack.c.bf16 %v330, %v330
        %v363 = vpack.c.bf16 %v331, %v331
        %v364 = vpack.c.bf16 %v332, %v332
        %vm365 = vcmask 257024
        %366 = vst.msk [vmem:[#allocation3] sm:$0xf] %vm365, %v333
        %367 = vst.msk [vmem:[#allocation3 + $0xc] sm:$0xf] %vm365, %v334
        %368 = vst.msk [vmem:[#allocation3 + $0x18] sm:$0xf] %vm365, %v335
        %369 = vst.msk [vmem:[#allocation3 + $0x24] sm:$0xf] %vm365, %v336
        %370 = vst.msk [vmem:[#allocation3 + $0x30] sm:$0xf] %vm365, %v337
        %371 = vst.msk [vmem:[#allocation3 + $0x3c] sm:$0xf] %vm365, %v338
        %372 = vst.msk [vmem:[#allocation3 + $0x48] sm:$0xf] %vm365, %v339
        %373 = vst.msk [vmem:[#allocation3 + $0x54] sm:$0xf] %vm365, %v340
        %374 = vst.msk [vmem:[#allocation3 + $0x60] sm:$0xf] %vm365, %v341
        %375 = vst.msk [vmem:[#allocation3 + $0x6c] sm:$0xf] %vm365, %v342
        %376 = vst.msk [vmem:[#allocation3 + $0x78] sm:$0xf] %vm365, %v343
        %377 = vst.msk [vmem:[#allocation3 + $0x84] sm:$0xf] %vm365, %v344
        %378 = vst.msk [vmem:[#allocation3 + $0x90] sm:$0xf] %vm365, %v345
        %379 = vst.msk [vmem:[#allocation3 + $0x9c] sm:$0xf] %vm365, %v346
        %380 = vst.msk [vmem:[#allocation3 + $0xa8] sm:$0xf] %vm365, %v347
        %381 = vst.msk [vmem:[#allocation3 + $0xb4] sm:$0xf] %vm365, %v348
        %382 = vst.msk [vmem:[#allocation3 + $0xc0] sm:$0xf] %vm365, %v349
        %383 = vst.msk [vmem:[#allocation3 + $0xcc] sm:$0xf] %vm365, %v350
        %384 = vst.msk [vmem:[#allocation3 + $0xd8] sm:$0xf] %vm365, %v351
        %385 = vst.msk [vmem:[#allocation3 + $0xe4] sm:$0xf] %vm365, %v352
        %386 = vst.msk [vmem:[#allocation3 + $0xf0] sm:$0xf] %vm365, %v353
        %387 = vst.msk [vmem:[#allocation3 + $0xfc] sm:$0xf] %vm365, %v354
        %388 = vst.msk [vmem:[#allocation3 + $0x108] sm:$0xf] %vm365, %v355
        %389 = vst.msk [vmem:[#allocation3 + $0x114] sm:$0xf] %vm365, %v356
        %390 = vst.msk [vmem:[#allocation3 + $0x120] sm:$0xf] %vm365, %v357
        %391 = vst.msk [vmem:[#allocation3 + $0x12c] sm:$0xf] %vm365, %v358
        %392 = vst.msk [vmem:[#allocation3 + $0x138] sm:$0xf] %vm365, %v359
        %393 = vst.msk [vmem:[#allocation3 + $0x144] sm:$0xf] %vm365, %v360
        %394 = vst.msk [vmem:[#allocation3 + $0x150] sm:$0xf] %vm365, %v361
        %395 = vst.msk [vmem:[#allocation3 + $0x15c] sm:$0xf] %vm365, %v362
        %396 = vst.msk [vmem:[#allocation3 + $0x168] sm:$0xf] %vm365, %v363
        %397 = vst.msk [vmem:[#allocation3 + $0x174] sm:$0xf] %vm365, %v364
        %v398 = vld [vmem:[#allocation2 + $0x1] sm:$0xff]
        %v399 = vld [vmem:[#allocation2 + $0x9] sm:$0xff]
        %v400 = vld [vmem:[#allocation2 + $0x19] sm:$0xff]
        %v401 = vld [vmem:[#allocation2 + $0x21] sm:$0xff]
        %v402 = vld [vmem:[#allocation2 + $0x31] sm:$0xff]
        %v403 = vld [vmem:[#allocation2 + $0x39] sm:$0xff]
        %v404 = vld [vmem:[#allocation2 + $0x49] sm:$0xff]
        %v405 = vld [vmem:[#allocation2 + $0x51] sm:$0xff]
        %v406 = vld [vmem:[#allocation2 + $0x61] sm:$0xff]
        %v407 = vld [vmem:[#allocation2 + $0x69] sm:$0xff]
        %v408 = vld [vmem:[#allocation2 + $0x79] sm:$0xff]
        %v409 = vld [vmem:[#allocation2 + $0x81] sm:$0xff]
        %v410 = vld [vmem:[#allocation2 + $0x91] sm:$0xff]
        %v411 = vld [vmem:[#allocation2 + $0x99] sm:$0xff]
        %v412 = vld [vmem:[#allocation2 + $0xa9] sm:$0xff]
        %v413 = vld [vmem:[#allocation2 + $0xb1] sm:$0xff]
        %v414 = vld [vmem:[#allocation2 + $0xc1] sm:$0xff]
        %v415 = vld [vmem:[#allocation2 + $0xc9] sm:$0xff]
        %v416 = vld [vmem:[#allocation2 + $0xd9] sm:$0xff]
        %v417 = vld [vmem:[#allocation2 + $0xe1] sm:$0xff]
        %v418 = vld [vmem:[#allocation2 + $0xf1] sm:$0xff]
        %v419 = vld [vmem:[#allocation2 + $0xf9] sm:$0xff]
        %v420 = vld [vmem:[#allocation2 + $0x109] sm:$0xff]
        %v421 = vld [vmem:[#allocation2 + $0x111] sm:$0xff]
        %v422 = vld [vmem:[#allocation2 + $0x121] sm:$0xff]
        %v423 = vld [vmem:[#allocation2 + $0x129] sm:$0xff]
        %v424 = vld [vmem:[#allocation2 + $0x139] sm:$0xff]
        %v425 = vld [vmem:[#allocation2 + $0x141] sm:$0xff]
        %v426 = vld [vmem:[#allocation2 + $0x151] sm:$0xff]
        %v427 = vld [vmem:[#allocation2 + $0x159] sm:$0xff]
        %v428 = vld [vmem:[#allocation2 + $0x169] sm:$0xff]
        %v429 = vld [vmem:[#allocation2 + $0x171] sm:$0xff]
        %v430 = vpack.c.bf16 %v398, %v398
        %v431 = vpack.c.bf16 %v399, %v399
        %v432 = vpack.c.bf16 %v400, %v400
        %v433 = vpack.c.bf16 %v401, %v401
        %v434 = vpack.c.bf16 %v402, %v402
        %v435 = vpack.c.bf16 %v403, %v403
        %v436 = vpack.c.bf16 %v404, %v404
        %v437 = vpack.c.bf16 %v405, %v405
        %v438 = vpack.c.bf16 %v406, %v406
        %v439 = vpack.c.bf16 %v407, %v407
        %v440 = vpack.c.bf16 %v408, %v408
        %v441 = vpack.c.bf16 %v409, %v409
        %v442 = vpack.c.bf16 %v410, %v410
        %v443 = vpack.c.bf16 %v411, %v411
        %v444 = vpack.c.bf16 %v412, %v412
        %v445 = vpack.c.bf16 %v413, %v413
        %v446 = vpack.c.bf16 %v414, %v414
        %v447 = vpack.c.bf16 %v415, %v415
        %v448 = vpack.c.bf16 %v416, %v416
        %v449 = vpack.c.bf16 %v417, %v417
        %v450 = vpack.c.bf16 %v418, %v418
        %v451 = vpack.c.bf16 %v419, %v419
        %v452 = vpack.c.bf16 %v420, %v420
        %v453 = vpack.c.bf16 %v421, %v421
        %v454 = vpack.c.bf16 %v422, %v422
        %v455 = vpack.c.bf16 %v423, %v423
        %v456 = vpack.c.bf16 %v424, %v424
        %v457 = vpack.c.bf16 %v425, %v425
        %v458 = vpack.c.bf16 %v426, %v426
        %v459 = vpack.c.bf16 %v427, %v427
        %v460 = vpack.c.bf16 %v428, %v428
        %v461 = vpack.c.bf16 %v429, %v429
        %494 = vrot.lane.b32.xlu0 %v430, 32
        %v495 = vpop.permute.xlu0 %494
        %496 = vrot.lane.b32.xlu0 %v431, 32
        %v497 = vpop.permute.xlu0 %496
        %498 = vrot.lane.b32.xlu0 %v432, 32
        %v499 = vpop.permute.xlu0 %498
        %500 = vrot.lane.b32.xlu0 %v433, 32
        %v501 = vpop.permute.xlu0 %500
        %502 = vrot.lane.b32.xlu0 %v434, 32
        %v503 = vpop.permute.xlu0 %502
        %504 = vrot.lane.b32.xlu0 %v435, 32
        %v505 = vpop.permute.xlu0 %504
        %506 = vrot.lane.b32.xlu0 %v436, 32
        %v507 = vpop.permute.xlu0 %506
        %508 = vrot.lane.b32.xlu0 %v437, 32
        %v509 = vpop.permute.xlu0 %508
        %510 = vrot.lane.b32.xlu0 %v438, 32
        %v511 = vpop.permute.xlu0 %510
        %512 = vrot.lane.b32.xlu0 %v439, 32
        %v513 = vpop.permute.xlu0 %512
        %514 = vrot.lane.b32.xlu0 %v440, 32
        %v515 = vpop.permute.xlu0 %514
        %516 = vrot.lane.b32.xlu0 %v441, 32
        %v517 = vpop.permute.xlu0 %516
        %518 = vrot.lane.b32.xlu0 %v442, 32
        %v519 = vpop.permute.xlu0 %518
        %520 = vrot.lane.b32.xlu0 %v443, 32
        %v521 = vpop.permute.xlu0 %520
        %522 = vrot.lane.b32.xlu0 %v444, 32
        %v523 = vpop.permute.xlu0 %522
        %524 = vrot.lane.b32.xlu0 %v445, 32
        %v525 = vpop.permute.xlu0 %524
        %526 = vrot.lane.b32.xlu0 %v446, 32
        %v527 = vpop.permute.xlu0 %526
        %528 = vrot.lane.b32.xlu0 %v447, 32
        %v529 = vpop.permute.xlu0 %528
        %530 = vrot.lane.b32.xlu0 %v448, 32
        %v531 = vpop.permute.xlu0 %530
        %532 = vrot.lane.b32.xlu0 %v449, 32
        %v533 = vpop.permute.xlu0 %532
        %534 = vrot.lane.b32.xlu0 %v450, 32
        %v535 = vpop.permute.xlu0 %534
        %536 = vrot.lane.b32.xlu0 %v451, 32
        %v537 = vpop.permute.xlu0 %536
        %538 = vrot.lane.b32.xlu0 %v452, 32
        %v539 = vpop.permute.xlu0 %538
        %540 = vrot.lane.b32.xlu0 %v453, 32
        %v541 = vpop.permute.xlu0 %540
        %542 = vrot.lane.b32.xlu0 %v454, 32
        %v543 = vpop.permute.xlu0 %542
        %544 = vrot.lane.b32.xlu0 %v455, 32
        %v545 = vpop.permute.xlu0 %544
        %546 = vrot.lane.b32.xlu0 %v456, 32
        %v547 = vpop.permute.xlu0 %546
        %548 = vrot.lane.b32.xlu0 %v457, 32
        %v549 = vpop.permute.xlu0 %548
        %550 = vrot.lane.b32.xlu0 %v458, 32
        %v551 = vpop.permute.xlu0 %550
        %552 = vrot.lane.b32.xlu0 %v459, 32
        %v553 = vpop.permute.xlu0 %552
        %554 = vrot.lane.b32.xlu0 %v460, 32
        %v555 = vpop.permute.xlu0 %554
        %556 = vrot.lane.b32.xlu0 %v461, 32
        %v557 = vpop.permute.xlu0 %556
        %vm590 = vcmask 519424
        %591 = vst.msk [vmem:[#allocation3] sm:$0xf] %vm590, %v495
        %592 = vst.msk [vmem:[#allocation3 + $0xc] sm:$0xf] %vm590, %v497
        %593 = vst.msk [vmem:[#allocation3 + $0x18] sm:$0xf] %vm590, %v499
        %594 = vst.msk [vmem:[#allocation3 + $0x24] sm:$0xf] %vm590, %v501
        %595 = vst.msk [vmem:[#allocation3 + $0x30] sm:$0xf] %vm590, %v503
        %596 = vst.msk [vmem:[#allocation3 + $0x3c] sm:$0xf] %vm590, %v505
        %597 = vst.msk [vmem:[#allocation3 + $0x48] sm:$0xf] %vm590, %v507
        %598 = vst.msk [vmem:[#allocation3 + $0x54] sm:$0xf] %vm590, %v509
        %599 = vst.msk [vmem:[#allocation3 + $0x60] sm:$0xf] %vm590, %v511
        %600 = vst.msk [vmem:[#allocation3 + $0x6c] sm:$0xf] %vm590, %v513
        %601 = vst.msk [vmem:[#allocation3 + $0x78] sm:$0xf] %vm590, %v515
        %602 = vst.msk [vmem:[#allocation3 + $0x84] sm:$0xf] %vm590, %v517
        %603 = vst.msk [vmem:[#allocation3 + $0x90] sm:$0xf] %vm590, %v519
        %604 = vst.msk [vmem:[#allocation3 + $0x9c] sm:$0xf] %vm590, %v521
        %605 = vst.msk [vmem:[#allocation3 + $0xa8] sm:$0xf] %vm590, %v523
        %606 = vst.msk [vmem:[#allocation3 + $0xb4] sm:$0xf] %vm590, %v525
        %607 = vst.msk [vmem:[#allocation3 + $0xc0] sm:$0xf] %vm590, %v527
        %608 = vst.msk [vmem:[#allocation3 + $0xcc] sm:$0xf] %vm590, %v529
        %609 = vst.msk [vmem:[#allocation3 + $0xd8] sm:$0xf] %vm590, %v531
        %610 = vst.msk [vmem:[#allocation3 + $0xe4] sm:$0xf] %vm590, %v533
        %611 = vst.msk [vmem:[#allocation3 + $0xf0] sm:$0xf] %vm590, %v535
        %612 = vst.msk [vmem:[#allocation3 + $0xfc] sm:$0xf] %vm590, %v537
        %613 = vst.msk [vmem:[#allocation3 + $0x108] sm:$0xf] %vm590, %v539
        %614 = vst.msk [vmem:[#allocation3 + $0x114] sm:$0xf] %vm590, %v541
        %615 = vst.msk [vmem:[#allocation3 + $0x120] sm:$0xf] %vm590, %v543
        %616 = vst.msk [vmem:[#allocation3 + $0x12c] sm:$0xf] %vm590, %v545
        %617 = vst.msk [vmem:[#allocation3 + $0x138] sm:$0xf] %vm590, %v547
        %618 = vst.msk [vmem:[#allocation3 + $0x144] sm:$0xf] %vm590, %v549
        %619 = vst.msk [vmem:[#allocation3 + $0x150] sm:$0xf] %vm590, %v551
        %620 = vst.msk [vmem:[#allocation3 + $0x15c] sm:$0xf] %vm590, %v553
        %621 = vst.msk [vmem:[#allocation3 + $0x168] sm:$0xf] %vm590, %v555
        %622 = vst.msk [vmem:[#allocation3 + $0x174] sm:$0xf] %vm590, %v557
        %v623 = vld [vmem:[#allocation2 + $0x2] sm:$0xff]
        %v624 = vld [vmem:[#allocation2 + $0xa] sm:$0xff]
        %v625 = vld [vmem:[#allocation2 + $0x1a] sm:$0xff]
        %v626 = vld [vmem:[#allocation2 + $0x22] sm:$0xff]
        %v627 = vld [vmem:[#allocation2 + $0x32] sm:$0xff]
        %v628 = vld [vmem:[#allocation2 + $0x3a] sm:$0xff]
        %v629 = vld [vmem:[#allocation2 + $0x4a] sm:$0xff]
        %v630 = vld [vmem:[#allocation2 + $0x52] sm:$0xff]
        %v631 = vld [vmem:[#allocation2 + $0x62] sm:$0xff]
        %v632 = vld [vmem:[#allocation2 + $0x6a] sm:$0xff]
        %v633 = vld [vmem:[#allocation2 + $0x7a] sm:$0xff]
        %v634 = vld [vmem:[#allocation2 + $0x82] sm:$0xff]
        %v635 = vld [vmem:[#allocation2 + $0x92] sm:$0xff]
        %v636 = vld [vmem:[#allocation2 + $0x9a] sm:$0xff]
        %v637 = vld [vmem:[#allocation2 + $0xaa] sm:$0xff]
        %v638 = vld [vmem:[#allocation2 + $0xb2] sm:$0xff]
        %v639 = vld [vmem:[#allocation2 + $0xc2] sm:$0xff]
        %v640 = vld [vmem:[#allocation2 + $0xca] sm:$0xff]
        %v641 = vld [vmem:[#allocation2 + $0xda] sm:$0xff]
        %v642 = vld [vmem:[#allocation2 + $0xe2] sm:$0xff]
        %v643 = vld [vmem:[#allocation2 + $0xf2] sm:$0xff]
        %v644 = vld [vmem:[#allocation2 + $0xfa] sm:$0xff]
        %v645 = vld [vmem:[#allocation2 + $0x10a] sm:$0xff]
        %v646 = vld [vmem:[#allocation2 + $0x112] sm:$0xff]
        %v647 = vld [vmem:[#allocation2 + $0x122] sm:$0xff]
        %v648 = vld [vmem:[#allocation2 + $0x12a] sm:$0xff]
        %v649 = vld [vmem:[#allocation2 + $0x13a] sm:$0xff]
        %v650 = vld [vmem:[#allocation2 + $0x142] sm:$0xff]
        %v651 = vld [vmem:[#allocation2 + $0x152] sm:$0xff]
        %v652 = vld [vmem:[#allocation2 + $0x15a] sm:$0xff]
        %v653 = vld [vmem:[#allocation2 + $0x16a] sm:$0xff]
        %v654 = vld [vmem:[#allocation2 + $0x172] sm:$0xff]
        %v655 = vpack.c.bf16 %v623, %v623
        %v656 = vpack.c.bf16 %v624, %v624
        %v657 = vpack.c.bf16 %v625, %v625
        %v658 = vpack.c.bf16 %v626, %v626
        %v659 = vpack.c.bf16 %v627, %v627
        %v660 = vpack.c.bf16 %v628, %v628
        %v661 = vpack.c.bf16 %v629, %v629
        %v662 = vpack.c.bf16 %v630, %v630
        %v663 = vpack.c.bf16 %v631, %v631
        %v664 = vpack.c.bf16 %v632, %v632
        %v665 = vpack.c.bf16 %v633, %v633
        %v666 = vpack.c.bf16 %v634, %v634
        %v667 = vpack.c.bf16 %v635, %v635
        %v668 = vpack.c.bf16 %v636, %v636
        %v669 = vpack.c.bf16 %v637, %v637
        %v670 = vpack.c.bf16 %v638, %v638
        %v671 = vpack.c.bf16 %v639, %v639
        %v672 = vpack.c.bf16 %v640, %v640
        %v673 = vpack.c.bf16 %v641, %v641
        %v674 = vpack.c.bf16 %v642, %v642
        %v675 = vpack.c.bf16 %v643, %v643
        %v676 = vpack.c.bf16 %v644, %v644
        %v677 = vpack.c.bf16 %v645, %v645
        %v678 = vpack.c.bf16 %v646, %v646
        %v679 = vpack.c.bf16 %v647, %v647
        %v680 = vpack.c.bf16 %v648, %v648
        %v681 = vpack.c.bf16 %v649, %v649
        %v682 = vpack.c.bf16 %v650, %v650
        %v683 = vpack.c.bf16 %v651, %v651
        %v684 = vpack.c.bf16 %v652, %v652
        %v685 = vpack.c.bf16 %v653, %v653
        %v686 = vpack.c.bf16 %v654, %v654
        %719 = vrot.lane.b32.xlu0 %v655, 64
        %v720 = vpop.permute.xlu0 %719
        %721 = vrot.lane.b32.xlu0 %v656, 64
        %v722 = vpop.permute.xlu0 %721
        %723 = vrot.lane.b32.xlu0 %v657, 64
        %v724 = vpop.permute.xlu0 %723
        %725 = vrot.lane.b32.xlu0 %v658, 64
        %v726 = vpop.permute.xlu0 %725
        %727 = vrot.lane.b32.xlu0 %v659, 64
        %v728 = vpop.permute.xlu0 %727
        %729 = vrot.lane.b32.xlu0 %v660, 64
        %v730 = vpop.permute.xlu0 %729
        %731 = vrot.lane.b32.xlu0 %v661, 64
        %v732 = vpop.permute.xlu0 %731
        %733 = vrot.lane.b32.xlu0 %v662, 64
        %v734 = vpop.permute.xlu0 %733
        %735 = vrot.lane.b32.xlu0 %v663, 64
        %v736 = vpop.permute.xlu0 %735
        %737 = vrot.lane.b32.xlu0 %v664, 64
        %v738 = vpop.permute.xlu0 %737
        %739 = vrot.lane.b32.xlu0 %v665, 64
        %v740 = vpop.permute.xlu0 %739
        %741 = vrot.lane.b32.xlu0 %v666, 64
        %v742 = vpop.permute.xlu0 %741
        %743 = vrot.lane.b32.xlu0 %v667, 64
        %v744 = vpop.permute.xlu0 %743
        %745 = vrot.lane.b32.xlu0 %v668, 64
        %v746 = vpop.permute.xlu0 %745
        %747 = vrot.lane.b32.xlu0 %v669, 64
        %v748 = vpop.permute.xlu0 %747
        %749 = vrot.lane.b32.xlu0 %v670, 64
        %v750 = vpop.permute.xlu0 %749
        %751 = vrot.lane.b32.xlu0 %v671, 64
        %v752 = vpop.permute.xlu0 %751
        %753 = vrot.lane.b32.xlu0 %v672, 64
        %v754 = vpop.permute.xlu0 %753
        %755 = vrot.lane.b32.xlu0 %v673, 64
        %v756 = vpop.permute.xlu0 %755
        %757 = vrot.lane.b32.xlu0 %v674, 64
        %v758 = vpop.permute.xlu0 %757
        %759 = vrot.lane.b32.xlu0 %v675, 64
        %v760 = vpop.permute.xlu0 %759
        %761 = vrot.lane.b32.xlu0 %v676, 64
        %v762 = vpop.permute.xlu0 %761
        %763 = vrot.lane.b32.xlu0 %v677, 64
        %v764 = vpop.permute.xlu0 %763
        %765 = vrot.lane.b32.xlu0 %v678, 64
        %v766 = vpop.permute.xlu0 %765
        %767 = vrot.lane.b32.xlu0 %v679, 64
        %v768 = vpop.permute.xlu0 %767
        %769 = vrot.lane.b32.xlu0 %v680, 64
        %v770 = vpop.permute.xlu0 %769
        %771 = vrot.lane.b32.xlu0 %v681, 64
        %v772 = vpop.permute.xlu0 %771
        %773 = vrot.lane.b32.xlu0 %v682, 64
        %v774 = vpop.permute.xlu0 %773
        %775 = vrot.lane.b32.xlu0 %v683, 64
        %v776 = vpop.permute.xlu0 %775
        %777 = vrot.lane.b32.xlu0 %v684, 64
        %v778 = vpop.permute.xlu0 %777
        %779 = vrot.lane.b32.xlu0 %v685, 64
        %v780 = vpop.permute.xlu0 %779
        %781 = vrot.lane.b32.xlu0 %v686, 64
        %v782 = vpop.permute.xlu0 %781
        %vm815 = vcmask 781824
        %816 = vst.msk [vmem:[#allocation3] sm:$0xf] %vm815, %v720
        %817 = vst.msk [vmem:[#allocation3 + $0xc] sm:$0xf] %vm815, %v722
        %818 = vst.msk [vmem:[#allocation3 + $0x18] sm:$0xf] %vm815, %v724
        %819 = vst.msk [vmem:[#allocation3 + $0x24] sm:$0xf] %vm815, %v726
        %820 = vst.msk [vmem:[#allocation3 + $0x30] sm:$0xf] %vm815, %v728
        %821 = vst.msk [vmem:[#allocation3 + $0x3c] sm:$0xf] %vm815, %v730
        %822 = vst.msk [vmem:[#allocation3 + $0x48] sm:$0xf] %vm815, %v732
        %823 = vst.msk [vmem:[#allocation3 + $0x54] sm:$0xf] %vm815, %v734
        %824 = vst.msk [vmem:[#allocation3 + $0x60] sm:$0xf] %vm815, %v736
        %825 = vst.msk [vmem:[#allocation3 + $0x6c] sm:$0xf] %vm815, %v738
        %826 = vst.msk [vmem:[#allocation3 + $0x78] sm:$0xf] %vm815, %v740
        %827 = vst.msk [vmem:[#allocation3 + $0x84] sm:$0xf] %vm815, %v742
        %828 = vst.msk [vmem:[#allocation3 + $0x90] sm:$0xf] %vm815, %v744
        %829 = vst.msk [vmem:[#allocation3 + $0x9c] sm:$0xf] %vm815, %v746
        %830 = vst.msk [vmem:[#allocation3 + $0xa8] sm:$0xf] %vm815, %v748
        %831 = vst.msk [vmem:[#allocation3 + $0xb4] sm:$0xf] %vm815, %v750
        %832 = vst.msk [vmem:[#allocation3 + $0xc0] sm:$0xf] %vm815, %v752
        %833 = vst.msk [vmem:[#allocation3 + $0xcc] sm:$0xf] %vm815, %v754
        %834 = vst.msk [vmem:[#allocation3 + $0xd8] sm:$0xf] %vm815, %v756
        %835 = vst.msk [vmem:[#allocation3 + $0xe4] sm:$0xf] %vm815, %v758
        %836 = vst.msk [vmem:[#allocation3 + $0xf0] sm:$0xf] %vm815, %v760
        %837 = vst.msk [vmem:[#allocation3 + $0xfc] sm:$0xf] %vm815, %v762
        %838 = vst.msk [vmem:[#allocation3 + $0x108] sm:$0xf] %vm815, %v764
        %839 = vst.msk [vmem:[#allocation3 + $0x114] sm:$0xf] %vm815, %v766
        %840 = vst.msk [vmem:[#allocation3 + $0x120] sm:$0xf] %vm815, %v768
        %841 = vst.msk [vmem:[#allocation3 + $0x12c] sm:$0xf] %vm815, %v770
        %842 = vst.msk [vmem:[#allocation3 + $0x138] sm:$0xf] %vm815, %v772
        %843 = vst.msk [vmem:[#allocation3 + $0x144] sm:$0xf] %vm815, %v774
        %844 = vst.msk [vmem:[#allocation3 + $0x150] sm:$0xf] %vm815, %v776
        %845 = vst.msk [vmem:[#allocation3 + $0x15c] sm:$0xf] %vm815, %v778
        %846 = vst.msk [vmem:[#allocation3 + $0x168] sm:$0xf] %vm815, %v780
        %847 = vst.msk [vmem:[#allocation3 + $0x174] sm:$0xf] %vm815, %v782
        %v848 = vld [vmem:[%s203] sm:$0xff]
        %v849 = vld [vmem:[%s203 + $0x8] sm:$0xff]
        %v850 = vld [vmem:[%s203 + $0x18] sm:$0xff]
        %v851 = vld [vmem:[%s203 + $0x20] sm:$0xff]
        %v852 = vld [vmem:[%s203 + $0x30] sm:$0xff]
        %v853 = vld [vmem:[%s203 + $0x38] sm:$0xff]
        %v854 = vld [vmem:[%s203 + $0x48] sm:$0xff]
        %v855 = vld [vmem:[%s203 + $0x50] sm:$0xff]
        %v856 = vld [vmem:[%s203 + $0x60] sm:$0xff]
        %v857 = vld [vmem:[%s203 + $0x68] sm:$0xff]
        %v858 = vld [vmem:[%s203 + $0x78] sm:$0xff]
        %v859 = vld [vmem:[%s203 + $0x80] sm:$0xff]
        %v860 = vld [vmem:[%s203 + $0x90] sm:$0xff]
        %v861 = vld [vmem:[%s203 + $0x98] sm:$0xff]
        %v862 = vld [vmem:[%s203 + $0xa8] sm:$0xff]
        %v863 = vld [vmem:[%s203 + $0xb0] sm:$0xff]
        %v864 = vld [vmem:[%s203 + $0xc0] sm:$0xff]
        %v865 = vld [vmem:[%s203 + $0xc8] sm:$0xff]
        %v866 = vld [vmem:[%s203 + $0xd8] sm:$0xff]
        %v867 = vld [vmem:[%s203 + $0xe0] sm:$0xff]
        %v868 = vld [vmem:[%s203 + $0xf0] sm:$0xff]
        %v869 = vld [vmem:[%s203 + $0xf8] sm:$0xff]
        %v870 = vld [vmem:[%s203 + $0x108] sm:$0xff]
        %v871 = vld [vmem:[%s203 + $0x110] sm:$0xff]
        %v872 = vld [vmem:[%s203 + $0x120] sm:$0xff]
        %v873 = vld [vmem:[%s203 + $0x128] sm:$0xff]
        %v874 = vld [vmem:[%s203 + $0x138] sm:$0xff]
        %v875 = vld [vmem:[%s203 + $0x140] sm:$0xff]
        %v876 = vld [vmem:[%s203 + $0x150] sm:$0xff]
        %v877 = vld [vmem:[%s203 + $0x158] sm:$0xff]
        %v878 = vld [vmem:[%s203 + $0x168] sm:$0xff]
        %v879 = vld [vmem:[%s203 + $0x170] sm:$0xff]
        %v880 = vpack.c.bf16 %v848, %v848
        %v881 = vpack.c.bf16 %v849, %v849
        %v882 = vpack.c.bf16 %v850, %v850
        %v883 = vpack.c.bf16 %v851, %v851
        %v884 = vpack.c.bf16 %v852, %v852
        %v885 = vpack.c.bf16 %v853, %v853
        %v886 = vpack.c.bf16 %v854, %v854
        %v887 = vpack.c.bf16 %v855, %v855
        %v888 = vpack.c.bf16 %v856, %v856
        %v889 = vpack.c.bf16 %v857, %v857
        %v890 = vpack.c.bf16 %v858, %v858
        %v891 = vpack.c.bf16 %v859, %v859
        %v892 = vpack.c.bf16 %v860, %v860
        %v893 = vpack.c.bf16 %v861, %v861
        %v894 = vpack.c.bf16 %v862, %v862
        %v895 = vpack.c.bf16 %v863, %v863
        %v896 = vpack.c.bf16 %v864, %v864
        %v897 = vpack.c.bf16 %v865, %v865
        %v898 = vpack.c.bf16 %v866, %v866
        %v899 = vpack.c.bf16 %v867, %v867
        %v900 = vpack.c.bf16 %v868, %v868
        %v901 = vpack.c.bf16 %v869, %v869
        %v902 = vpack.c.bf16 %v870, %v870
        %v903 = vpack.c.bf16 %v871, %v871
        %v904 = vpack.c.bf16 %v872, %v872
        %v905 = vpack.c.bf16 %v873, %v873
        %v906 = vpack.c.bf16 %v874, %v874
        %v907 = vpack.c.bf16 %v875, %v875
        %v908 = vpack.c.bf16 %v876, %v876
        %v909 = vpack.c.bf16 %v877, %v877
        %v910 = vpack.c.bf16 %v878, %v878
        %v911 = vpack.c.bf16 %v879, %v879
        %944 = vrot.lane.b32.xlu0 %v880, 96
        %v945 = vpop.permute.xlu0 %944
        %946 = vrot.lane.b32.xlu0 %v881, 96
        %v947 = vpop.permute.xlu0 %946
        %948 = vrot.lane.b32.xlu0 %v882, 96
        %v949 = vpop.permute.xlu0 %948
        %950 = vrot.lane.b32.xlu0 %v883, 96
        %v951 = vpop.permute.xlu0 %950
        %952 = vrot.lane.b32.xlu0 %v884, 96
        %v953 = vpop.permute.xlu0 %952
        %954 = vrot.lane.b32.xlu0 %v885, 96
        %v955 = vpop.permute.xlu0 %954
        %956 = vrot.lane.b32.xlu0 %v886, 96
        %v957 = vpop.permute.xlu0 %956
        %958 = vrot.lane.b32.xlu0 %v887, 96
        %v959 = vpop.permute.xlu0 %958
        %960 = vrot.lane.b32.xlu0 %v888, 96
        %v961 = vpop.permute.xlu0 %960
        %962 = vrot.lane.b32.xlu0 %v889, 96
        %v963 = vpop.permute.xlu0 %962
        %964 = vrot.lane.b32.xlu0 %v890, 96
        %v965 = vpop.permute.xlu0 %964
        %966 = vrot.lane.b32.xlu0 %v891, 96
        %v967 = vpop.permute.xlu0 %966
        %968 = vrot.lane.b32.xlu0 %v892, 96
        %v969 = vpop.permute.xlu0 %968
        %970 = vrot.lane.b32.xlu0 %v893, 96
        %v971 = vpop.permute.xlu0 %970
        %972 = vrot.lane.b32.xlu0 %v894, 96
        %v973 = vpop.permute.xlu0 %972
        %974 = vrot.lane.b32.xlu0 %v895, 96
        %v975 = vpop.permute.xlu0 %974
        %976 = vrot.lane.b32.xlu0 %v896, 96
        %v977 = vpop.permute.xlu0 %976
        %978 = vrot.lane.b32.xlu0 %v897, 96
        %v979 = vpop.permute.xlu0 %978
        %980 = vrot.lane.b32.xlu0 %v898, 96
        %v981 = vpop.permute.xlu0 %980
        %982 = vrot.lane.b32.xlu0 %v899, 96
        %v983 = vpop.permute.xlu0 %982
        %984 = vrot.lane.b32.xlu0 %v900, 96
        %v985 = vpop.permute.xlu0 %984
        %986 = vrot.lane.b32.xlu0 %v901, 96
        %v987 = vpop.permute.xlu0 %986
        %988 = vrot.lane.b32.xlu0 %v902, 96
        %v989 = vpop.permute.xlu0 %988
        %990 = vrot.lane.b32.xlu0 %v903, 96
        %v991 = vpop.permute.xlu0 %990
        %992 = vrot.lane.b32.xlu0 %v904, 96
        %v993 = vpop.permute.xlu0 %992
        %994 = vrot.lane.b32.xlu0 %v905, 96
        %v995 = vpop.permute.xlu0 %994
        %996 = vrot.lane.b32.xlu0 %v906, 96
        %v997 = vpop.permute.xlu0 %996
        %998 = vrot.lane.b32.xlu0 %v907, 96
        %v999 = vpop.permute.xlu0 %998
        %1000 = vrot.lane.b32.xlu0 %v908, 96
        %v1001 = vpop.permute.xlu0 %1000
        %1002 = vrot.lane.b32.xlu0 %v909, 96
        %v1003 = vpop.permute.xlu0 %1002
        %1004 = vrot.lane.b32.xlu0 %v910, 96
        %v1005 = vpop.permute.xlu0 %1004
        %1006 = vrot.lane.b32.xlu0 %v911, 96
        %v1007 = vpop.permute.xlu0 %1006
        %vm1040 = vcmask 1044224
        %1041 = vst.msk [vmem:[#allocation3] sm:$0xf] %vm1040, %v945
        %1042 = vst.msk [vmem:[#allocation3 + $0xc] sm:$0xf] %vm1040, %v947
        %1043 = vst.msk [vmem:[#allocation3 + $0x18] sm:$0xf] %vm1040, %v949
        %1044 = vst.msk [vmem:[#allocation3 + $0x24] sm:$0xf] %vm1040, %v951
        %1045 = vst.msk [vmem:[#allocation3 + $0x30] sm:$0xf] %vm1040, %v953
        %1046 = vst.msk [vmem:[#allocation3 + $0x3c] sm:$0xf] %vm1040, %v955
        %1047 = vst.msk [vmem:[#allocation3 + $0x48] sm:$0xf] %vm1040, %v957
        %1048 = vst.msk [vmem:[#allocation3 + $0x54] sm:$0xf] %vm1040, %v959
        %1049 = vst.msk [vmem:[#allocation3 + $0x60] sm:$0xf] %vm1040, %v961
        %1050 = vst.msk [vmem:[#allocation3 + $0x6c] sm:$0xf] %vm1040, %v963
        %1051 = vst.msk [vmem:[#allocation3 + $0x78] sm:$0xf] %vm1040, %v965
        %1052 = vst.msk [vmem:[#allocation3 + $0x84] sm:$0xf] %vm1040, %v967
        %1053 = vst.msk [vmem:[#allocation3 + $0x90] sm:$0xf] %vm1040, %v969
        %1054 = vst.msk [vmem:[#allocation3 + $0x9c] sm:$0xf] %vm1040, %v971
        %1055 = vst.msk [vmem:[#allocation3 + $0xa8] sm:$0xf] %vm1040, %v973
        %1056 = vst.msk [vmem:[#allocation3 + $0xb4] sm:$0xf] %vm1040, %v975
        %1057 = vst.msk [vmem:[#allocation3 + $0xc0] sm:$0xf] %vm1040, %v977
        %1058 = vst.msk [vmem:[#allocation3 + $0xcc] sm:$0xf] %vm1040, %v979
        %1059 = vst.msk [vmem:[#allocation3 + $0xd8] sm:$0xf] %vm1040, %v981
        %1060 = vst.msk [vmem:[#allocation3 + $0xe4] sm:$0xf] %vm1040, %v983
        %1061 = vst.msk [vmem:[#allocation3 + $0xf0] sm:$0xf] %vm1040, %v985
        %1062 = vst.msk [vmem:[#allocation3 + $0xfc] sm:$0xf] %vm1040, %v987
        %1063 = vst.msk [vmem:[#allocation3 + $0x108] sm:$0xf] %vm1040, %v989
        %1064 = vst.msk [vmem:[#allocation3 + $0x114] sm:$0xf] %vm1040, %v991
        %1065 = vst.msk [vmem:[#allocation3 + $0x120] sm:$0xf] %vm1040, %v993
        %1066 = vst.msk [vmem:[#allocation3 + $0x12c] sm:$0xf] %vm1040, %v995
        %1067 = vst.msk [vmem:[#allocation3 + $0x138] sm:$0xf] %vm1040, %v997
        %1068 = vst.msk [vmem:[#allocation3 + $0x144] sm:$0xf] %vm1040, %v999
        %1069 = vst.msk [vmem:[#allocation3 + $0x150] sm:$0xf] %vm1040, %v1001
        %1070 = vst.msk [vmem:[#allocation3 + $0x15c] sm:$0xf] %vm1040, %v1003
        %1071 = vst.msk [vmem:[#allocation3 + $0x168] sm:$0xf] %vm1040, %v1005
        %1072 = vst.msk [vmem:[#allocation3 + $0x174] sm:$0xf] %vm1040, %v1007
        %v1073 = vld [vmem:[%s203 + $0x1] sm:$0xff]
        %v1074 = vld [vmem:[%s203 + $0x9] sm:$0xff]
        %v1075 = vld [vmem:[%s203 + $0x19] sm:$0xff]
        %v1076 = vld [vmem:[%s203 + $0x21] sm:$0xff]
        %v1077 = vld [vmem:[%s203 + $0x31] sm:$0xff]
        %v1078 = vld [vmem:[%s203 + $0x39] sm:$0xff]
        %v1079 = vld [vmem:[%s203 + $0x49] sm:$0xff]
        %v1080 = vld [vmem:[%s203 + $0x51] sm:$0xff]
        %v1081 = vld [vmem:[%s203 + $0x61] sm:$0xff]
        %v1082 = vld [vmem:[%s203 + $0x69] sm:$0xff]
        %v1083 = vld [vmem:[%s203 + $0x79] sm:$0xff]
        %v1084 = vld [vmem:[%s203 + $0x81] sm:$0xff]
        %v1085 = vld [vmem:[%s203 + $0x91] sm:$0xff]
        %v1086 = vld [vmem:[%s203 + $0x99] sm:$0xff]
        %v1087 = vld [vmem:[%s203 + $0xa9] sm:$0xff]
        %v1088 = vld [vmem:[%s203 + $0xb1] sm:$0xff]
        %v1089 = vld [vmem:[%s203 + $0xc1] sm:$0xff]
        %v1090 = vld [vmem:[%s203 + $0xc9] sm:$0xff]
        %v1091 = vld [vmem:[%s203 + $0xd9] sm:$0xff]
        %v1092 = vld [vmem:[%s203 + $0xe1] sm:$0xff]
        %v1093 = vld [vmem:[%s203 + $0xf1] sm:$0xff]
        %v1094 = vld [vmem:[%s203 + $0xf9] sm:$0xff]
        %v1095 = vld [vmem:[%s203 + $0x109] sm:$0xff]
        %v1096 = vld [vmem:[%s203 + $0x111] sm:$0xff]
        %v1097 = vld [vmem:[%s203 + $0x121] sm:$0xff]
        %v1098 = vld [vmem:[%s203 + $0x129] sm:$0xff]
        %v1099 = vld [vmem:[%s203 + $0x139] sm:$0xff]
        %v1100 = vld [vmem:[%s203 + $0x141] sm:$0xff]
        %v1101 = vld [vmem:[%s203 + $0x151] sm:$0xff]
        %v1102 = vld [vmem:[%s203 + $0x159] sm:$0xff]
        %v1103 = vld [vmem:[%s203 + $0x169] sm:$0xff]
        %v1104 = vld [vmem:[%s203 + $0x171] sm:$0xff]
        %v1105 = vpack.c.bf16 %v1073, %v1073
        %v1106 = vpack.c.bf16 %v1074, %v1074
        %v1107 = vpack.c.bf16 %v1075, %v1075
        %v1108 = vpack.c.bf16 %v1076, %v1076
        %v1109 = vpack.c.bf16 %v1077, %v1077
        %v1110 = vpack.c.bf16 %v1078, %v1078
        %v1111 = vpack.c.bf16 %v1079, %v1079
        %v1112 = vpack.c.bf16 %v1080, %v1080
        %v1113 = vpack.c.bf16 %v1081, %v1081
        %v1114 = vpack.c.bf16 %v1082, %v1082
        %v1115 = vpack.c.bf16 %v1083, %v1083
        %v1116 = vpack.c.bf16 %v1084, %v1084
        %v1117 = vpack.c.bf16 %v1085, %v1085
        %v1118 = vpack.c.bf16 %v1086, %v1086
        %v1119 = vpack.c.bf16 %v1087, %v1087
        %v1120 = vpack.c.bf16 %v1088, %v1088
        %v1121 = vpack.c.bf16 %v1089, %v1089
        %v1122 = vpack.c.bf16 %v1090, %v1090
        %v1123 = vpack.c.bf16 %v1091, %v1091
        %v1124 = vpack.c.bf16 %v1092, %v1092
        %v1125 = vpack.c.bf16 %v1093, %v1093
        %v1126 = vpack.c.bf16 %v1094, %v1094
        %v1127 = vpack.c.bf16 %v1095, %v1095
        %v1128 = vpack.c.bf16 %v1096, %v1096
        %v1129 = vpack.c.bf16 %v1097, %v1097
        %v1130 = vpack.c.bf16 %v1098, %v1098
        %v1131 = vpack.c.bf16 %v1099, %v1099
        %v1132 = vpack.c.bf16 %v1100, %v1100
        %v1133 = vpack.c.bf16 %v1101, %v1101
        %v1134 = vpack.c.bf16 %v1102, %v1102
        %v1135 = vpack.c.bf16 %v1103, %v1103
        %v1136 = vpack.c.bf16 %v1104, %v1104
        %1137 = vst.msk [vmem:[#allocation3 + $0x4] sm:$0xf] %vm365, %v1105
        %1138 = vst.msk [vmem:[#allocation3 + $0x10] sm:$0xf] %vm365, %v1106
        %1139 = vst.msk [vmem:[#allocation3 + $0x1c] sm:$0xf] %vm365, %v1107
        %1140 = vst.msk [vmem:[#allocation3 + $0x28] sm:$0xf] %vm365, %v1108
        %1141 = vst.msk [vmem:[#allocation3 + $0x34] sm:$0xf] %vm365, %v1109
        %1142 = vst.msk [vmem:[#allocation3 + $0x40] sm:$0xf] %vm365, %v1110
        %1143 = vst.msk [vmem:[#allocation3 + $0x4c] sm:$0xf] %vm365, %v1111
        %1144 = vst.msk [vmem:[#allocation3 + $0x58] sm:$0xf] %vm365, %v1112
        %1145 = vst.msk [vmem:[#allocation3 + $0x64] sm:$0xf] %vm365, %v1113
        %1146 = vst.msk [vmem:[#allocation3 + $0x70] sm:$0xf] %vm365, %v1114
        %1147 = vst.msk [vmem:[#allocation3 + $0x7c] sm:$0xf] %vm365, %v1115
        %1148 = vst.msk [vmem:[#allocation3 + $0x88] sm:$0xf] %vm365, %v1116
        %1149 = vst.msk [vmem:[#allocation3 + $0x94] sm:$0xf] %vm365, %v1117
        %1150 = vst.msk [vmem:[#allocation3 + $0xa0] sm:$0xf] %vm365, %v1118
        %1151 = vst.msk [vmem:[#allocation3 + $0xac] sm:$0xf] %vm365, %v1119
        %1152 = vst.msk [vmem:[#allocation3 + $0xb8] sm:$0xf] %vm365, %v1120
        %1153 = vst.msk [vmem:[#allocation3 + $0xc4] sm:$0xf] %vm365, %v1121
        %1154 = vst.msk [vmem:[#allocation3 + $0xd0] sm:$0xf] %vm365, %v1122
        %1155 = vst.msk [vmem:[#allocation3 + $0xdc] sm:$0xf] %vm365, %v1123
        %1156 = vst.msk [vmem:[#allocation3 + $0xe8] sm:$0xf] %vm365, %v1124
        %1157 = vst.msk [vmem:[#allocation3 + $0xf4] sm:$0xf] %vm365, %v1125
        %1158 = vst.msk [vmem:[#allocation3 + $0x100] sm:$0xf] %vm365, %v1126
        %1159 = vst.msk [vmem:[#allocation3 + $0x10c] sm:$0xf] %vm365, %v1127
        %1160 = vst.msk [vmem:[#allocation3 + $0x118] sm:$0xf] %vm365, %v1128
        %1161 = vst.msk [vmem:[#allocation3 + $0x124] sm:$0xf] %vm365, %v1129
        %1162 = vst.msk [vmem:[#allocation3 + $0x130] sm:$0xf] %vm365, %v1130
        %1163 = vst.msk [vmem:[#allocation3 + $0x13c] sm:$0xf] %vm365, %v1131
        %1164 = vst.msk [vmem:[#allocation3 + $0x148] sm:$0xf] %vm365, %v1132
        %1165 = vst.msk [vmem:[#allocation3 + $0x154] sm:$0xf] %vm365, %v1133
        %1166 = vst.msk [vmem:[#allocation3 + $0x160] sm:$0xf] %vm365, %v1134
        %1167 = vst.msk [vmem:[#allocation3 + $0x16c] sm:$0xf] %vm365, %v1135
        %1168 = vst.msk [vmem:[#allocation3 + $0x178] sm:$0xf] %vm365, %v1136
        %v1169 = vld [vmem:[%s203 + $0x2] sm:$0xff]
        %v1170 = vld [vmem:[%s203 + $0xa] sm:$0xff]
        %v1171 = vld [vmem:[%s203 + $0x1a] sm:$0xff]
        %v1172 = vld [vmem:[%s203 + $0x22] sm:$0xff]
        %v1173 = vld [vmem:[%s203 + $0x32] sm:$0xff]
        %v1174 = vld [vmem:[%s203 + $0x3a] sm:$0xff]
        %v1175 = vld [vmem:[%s203 + $0x4a] sm:$0xff]
        %v1176 = vld [vmem:[%s203 + $0x52] sm:$0xff]
        %v1177 = vld [vmem:[%s203 + $0x62] sm:$0xff]
        %v1178 = vld [vmem:[%s203 + $0x6a] sm:$0xff]
        %v1179 = vld [vmem:[%s203 + $0x7a] sm:$0xff]
        %v1180 = vld [vmem:[%s203 + $0x82] sm:$0xff]
        %v1181 = vld [vmem:[%s203 + $0x92] sm:$0xff]
        %v1182 = vld [vmem:[%s203 + $0x9a] sm:$0xff]
        %v1183 = vld [vmem:[%s203 + $0xaa] sm:$0xff]
        %v1184 = vld [vmem:[%s203 + $0xb2] sm:$0xff]
        %v1185 = vld [vmem:[%s203 + $0xc2] sm:$0xff]
        %v1186 = vld [vmem:[%s203 + $0xca] sm:$0xff]
        %v1187 = vld [vmem:[%s203 + $0xda] sm:$0xff]
        %v1188 = vld [vmem:[%s203 + $0xe2] sm:$0xff]
        %v1189 = vld [vmem:[%s203 + $0xf2] sm:$0xff]
        %v1190 = vld [vmem:[%s203 + $0xfa] sm:$0xff]
        %v1191 = vld [vmem:[%s203 + $0x10a] sm:$0xff]
        %v1192 = vld [vmem:[%s203 + $0x112] sm:$0xff]
        %v1193 = vld [vmem:[%s203 + $0x122] sm:$0xff]
        %v1194 = vld [vmem:[%s203 + $0x12a] sm:$0xff]
        %v1195 = vld [vmem:[%s203 + $0x13a] sm:$0xff]
        %v1196 = vld [vmem:[%s203 + $0x142] sm:$0xff]
        %v1197 = vld [vmem:[%s203 + $0x152] sm:$0xff]
        %v1198 = vld [vmem:[%s203 + $0x15a] sm:$0xff]
        %v1199 = vld [vmem:[%s203 + $0x16a] sm:$0xff]
        %v1200 = vld [vmem:[%s203 + $0x172] sm:$0xff]
        %v1201 = vpack.c.bf16 %v1169, %v1169
        %v1202 = vpack.c.bf16 %v1170, %v1170
        %v1203 = vpack.c.bf16 %v1171, %v1171
        %v1204 = vpack.c.bf16 %v1172, %v1172
        %v1205 = vpack.c.bf16 %v1173, %v1173
        %v1206 = vpack.c.bf16 %v1174, %v1174
        %v1207 = vpack.c.bf16 %v1175, %v1175
        %v1208 = vpack.c.bf16 %v1176, %v1176
        %v1209 = vpack.c.bf16 %v1177, %v1177
        %v1210 = vpack.c.bf16 %v1178, %v1178
        %v1211 = vpack.c.bf16 %v1179, %v1179
        %v1212 = vpack.c.bf16 %v1180, %v1180
        %v1213 = vpack.c.bf16 %v1181, %v1181
        %v1214 = vpack.c.bf16 %v1182, %v1182
        %v1215 = vpack.c.bf16 %v1183, %v1183
        %v1216 = vpack.c.bf16 %v1184, %v1184
        %v1217 = vpack.c.bf16 %v1185, %v1185
        %v1218 = vpack.c.bf16 %v1186, %v1186
        %v1219 = vpack.c.bf16 %v1187, %v1187
        %v1220 = vpack.c.bf16 %v1188, %v1188
        %v1221 = vpack.c.bf16 %v1189, %v1189
        %v1222 = vpack.c.bf16 %v1190, %v1190
        %v1223 = vpack.c.bf16 %v1191, %v1191
        %v1224 = vpack.c.bf16 %v1192, %v1192
        %v1225 = vpack.c.bf16 %v1193, %v1193
        %v1226 = vpack.c.bf16 %v1194, %v1194
        %v1227 = vpack.c.bf16 %v1195, %v1195
        %v1228 = vpack.c.bf16 %v1196, %v1196
        %v1229 = vpack.c.bf16 %v1197, %v1197
        %v1230 = vpack.c.bf16 %v1198, %v1198
        %v1231 = vpack.c.bf16 %v1199, %v1199
        %v1232 = vpack.c.bf16 %v1200, %v1200
        %1265 = vrot.lane.b32.xlu0 %v1201, 32
        %v1266 = vpop.permute.xlu0 %1265
        %1267 = vrot.lane.b32.xlu0 %v1202, 32
        %v1268 = vpop.permute.xlu0 %1267
        %1269 = vrot.lane.b32.xlu0 %v1203, 32
        %v1270 = vpop.permute.xlu0 %1269
        %1271 = vrot.lane.b32.xlu0 %v1204, 32
        %v1272 = vpop.permute.xlu0 %1271
        %1273 = vrot.lane.b32.xlu0 %v1205, 32
        %v1274 = vpop.permute.xlu0 %1273
        %1275 = vrot.lane.b32.xlu0 %v1206, 32
        %v1276 = vpop.permute.xlu0 %1275
        %1277 = vrot.lane.b32.xlu0 %v1207, 32
        %v1278 = vpop.permute.xlu0 %1277
        %1279 = vrot.lane.b32.xlu0 %v1208, 32
        %v1280 = vpop.permute.xlu0 %1279
        %1281 = vrot.lane.b32.xlu0 %v1209, 32
        %v1282 = vpop.permute.xlu0 %1281
        %1283 = vrot.lane.b32.xlu0 %v1210, 32
        %v1284 = vpop.permute.xlu0 %1283
        %1285 = vrot.lane.b32.xlu0 %v1211, 32
        %v1286 = vpop.permute.xlu0 %1285
        %1287 = vrot.lane.b32.xlu0 %v1212, 32
        %v1288 = vpop.permute.xlu0 %1287
        %1289 = vrot.lane.b32.xlu0 %v1213, 32
        %v1290 = vpop.permute.xlu0 %1289
        %1291 = vrot.lane.b32.xlu0 %v1214, 32
        %v1292 = vpop.permute.xlu0 %1291
        %1293 = vrot.lane.b32.xlu0 %v1215, 32
        %v1294 = vpop.permute.xlu0 %1293
        %1295 = vrot.lane.b32.xlu0 %v1216, 32
        %v1296 = vpop.permute.xlu0 %1295
        %1297 = vrot.lane.b32.xlu0 %v1217, 32
        %v1298 = vpop.permute.xlu0 %1297
        %1299 = vrot.lane.b32.xlu0 %v1218, 32
        %v1300 = vpop.permute.xlu0 %1299
        %1301 = vrot.lane.b32.xlu0 %v1219, 32
        %v1302 = vpop.permute.xlu0 %1301
        %1303 = vrot.lane.b32.xlu0 %v1220, 32
        %v1304 = vpop.permute.xlu0 %1303
        %1305 = vrot.lane.b32.xlu0 %v1221, 32
        %v1306 = vpop.permute.xlu0 %1305
        %1307 = vrot.lane.b32.xlu0 %v1222, 32
        %v1308 = vpop.permute.xlu0 %1307
        %1309 = vrot.lane.b32.xlu0 %v1223, 32
        %v1310 = vpop.permute.xlu0 %1309
        %1311 = vrot.lane.b32.xlu0 %v1224, 32
        %v1312 = vpop.permute.xlu0 %1311
        %1313 = vrot.lane.b32.xlu0 %v1225, 32
        %v1314 = vpop.permute.xlu0 %1313
        %1315 = vrot.lane.b32.xlu0 %v1226, 32
        %v1316 = vpop.permute.xlu0 %1315
        %1317 = vrot.lane.b32.xlu0 %v1227, 32
        %v1318 = vpop.permute.xlu0 %1317
        %1319 = vrot.lane.b32.xlu0 %v1228, 32
        %v1320 = vpop.permute.xlu0 %1319
        %1321 = vrot.lane.b32.xlu0 %v1229, 32
        %v1322 = vpop.permute.xlu0 %1321
        %1323 = vrot.lane.b32.xlu0 %v1230, 32
        %v1324 = vpop.permute.xlu0 %1323
        %1325 = vrot.lane.b32.xlu0 %v1231, 32
        %v1326 = vpop.permute.xlu0 %1325
        %1327 = vrot.lane.b32.xlu0 %v1232, 32
        %v1328 = vpop.permute.xlu0 %1327
        %1361 = vst.msk [vmem:[#allocation3 + $0x4] sm:$0xf] %vm590, %v1266
        %1362 = vst.msk [vmem:[#allocation3 + $0x10] sm:$0xf] %vm590, %v1268
        %1363 = vst.msk [vmem:[#allocation3 + $0x1c] sm:$0xf] %vm590, %v1270
        %1364 = vst.msk [vmem:[#allocation3 + $0x28] sm:$0xf] %vm590, %v1272
        %1365 = vst.msk [vmem:[#allocation3 + $0x34] sm:$0xf] %vm590, %v1274
        %1366 = vst.msk [vmem:[#allocation3 + $0x40] sm:$0xf] %vm590, %v1276
        %1367 = vst.msk [vmem:[#allocation3 + $0x4c] sm:$0xf] %vm590, %v1278
        %1368 = vst.msk [vmem:[#allocation3 + $0x58] sm:$0xf] %vm590, %v1280
        %1369 = vst.msk [vmem:[#allocation3 + $0x64] sm:$0xf] %vm590, %v1282
        %1370 = vst.msk [vmem:[#allocation3 + $0x70] sm:$0xf] %vm590, %v1284
        %1371 = vst.msk [vmem:[#allocation3 + $0x7c] sm:$0xf] %vm590, %v1286
        %1372 = vst.msk [vmem:[#allocation3 + $0x88] sm:$0xf] %vm590, %v1288
        %1373 = vst.msk [vmem:[#allocation3 + $0x94] sm:$0xf] %vm590, %v1290
        %1374 = vst.msk [vmem:[#allocation3 + $0xa0] sm:$0xf] %vm590, %v1292
        %1375 = vst.msk [vmem:[#allocation3 + $0xac] sm:$0xf] %vm590, %v1294
        %1376 = vst.msk [vmem:[#allocation3 + $0xb8] sm:$0xf] %vm590, %v1296
        %1377 = vst.msk [vmem:[#allocation3 + $0xc4] sm:$0xf] %vm590, %v1298
        %1378 = vst.msk [vmem:[#allocation3 + $0xd0] sm:$0xf] %vm590, %v1300
        %1379 = vst.msk [vmem:[#allocation3 + $0xdc] sm:$0xf] %vm590, %v1302
        %1380 = vst.msk [vmem:[#allocation3 + $0xe8] sm:$0xf] %vm590, %v1304
        %1381 = vst.msk [vmem:[#allocation3 + $0xf4] sm:$0xf] %vm590, %v1306
        %1382 = vst.msk [vmem:[#allocation3 + $0x100] sm:$0xf] %vm590, %v1308
        %1383 = vst.msk [vmem:[#allocation3 + $0x10c] sm:$0xf] %vm590, %v1310
        %1384 = vst.msk [vmem:[#allocation3 + $0x118] sm:$0xf] %vm590, %v1312
        %1385 = vst.msk [vmem:[#allocation3 + $0x124] sm:$0xf] %vm590, %v1314
        %1386 = vst.msk [vmem:[#allocation3 + $0x130] sm:$0xf] %vm590, %v1316
        %1387 = vst.msk [vmem:[#allocation3 + $0x13c] sm:$0xf] %vm590, %v1318
        %1388 = vst.msk [vmem:[#allocation3 + $0x148] sm:$0xf] %vm590, %v1320
        %1389 = vst.msk [vmem:[#allocation3 + $0x154] sm:$0xf] %vm590, %v1322
        %1390 = vst.msk [vmem:[#allocation3 + $0x160] sm:$0xf] %vm590, %v1324
        %1391 = vst.msk [vmem:[#allocation3 + $0x16c] sm:$0xf] %vm590, %v1326
        %1392 = vst.msk [vmem:[#allocation3 + $0x178] sm:$0xf] %vm590, %v1328
        %s1393 = scalar_lea.vmem [#allocation2], 48
        %v1394 = vld [vmem:[%s1393] sm:$0xff]
        %v1395 = vld [vmem:[%s1393 + $0x8] sm:$0xff]
        %v1396 = vld [vmem:[%s1393 + $0x18] sm:$0xff]
        %v1397 = vld [vmem:[%s1393 + $0x20] sm:$0xff]
        %v1398 = vld [vmem:[%s1393 + $0x30] sm:$0xff]
        %v1399 = vld [vmem:[%s1393 + $0x38] sm:$0xff]
        %v1400 = vld [vmem:[%s1393 + $0x48] sm:$0xff]
        %v1401 = vld [vmem:[%s1393 + $0x50] sm:$0xff]
        %v1402 = vld [vmem:[%s1393 + $0x60] sm:$0xff]
        %v1403 = vld [vmem:[%s1393 + $0x68] sm:$0xff]
        %v1404 = vld [vmem:[%s1393 + $0x78] sm:$0xff]
        %v1405 = vld [vmem:[%s1393 + $0x80] sm:$0xff]
        %v1406 = vld [vmem:[%s1393 + $0x90] sm:$0xff]
        %v1407 = vld [vmem:[%s1393 + $0x98] sm:$0xff]
        %v1408 = vld [vmem:[%s1393 + $0xa8] sm:$0xff]
        %v1409 = vld [vmem:[%s1393 + $0xb0] sm:$0xff]
        %v1410 = vld [vmem:[%s1393 + $0xc0] sm:$0xff]
        %v1411 = vld [vmem:[%s1393 + $0xc8] sm:$0xff]
        %v1412 = vld [vmem:[%s1393 + $0xd8] sm:$0xff]
        %v1413 = vld [vmem:[%s1393 + $0xe0] sm:$0xff]
        %v1414 = vld [vmem:[%s1393 + $0xf0] sm:$0xff]
        %v1415 = vld [vmem:[%s1393 + $0xf8] sm:$0xff]
        %v1416 = vld [vmem:[%s1393 + $0x108] sm:$0xff]
        %v1417 = vld [vmem:[%s1393 + $0x110] sm:$0xff]
        %v1418 = vld [vmem:[%s1393 + $0x120] sm:$0xff]
        %v1419 = vld [vmem:[%s1393 + $0x128] sm:$0xff]
        %v1420 = vld [vmem:[%s1393 + $0x138] sm:$0xff]
        %v1421 = vld [vmem:[%s1393 + $0x140] sm:$0xff]
        %v1422 = vld [vmem:[%s1393 + $0x150] sm:$0xff]
        %v1423 = vld [vmem:[%s1393 + $0x158] sm:$0xff]
        %v1424 = vld [vmem:[%s1393 + $0x168] sm:$0xff]
        %v1425 = vld [vmem:[%s1393 + $0x170] sm:$0xff]
        %v1426 = vpack.c.bf16 %v1394, %v1394
        %v1427 = vpack.c.bf16 %v1395, %v1395
        %v1428 = vpack.c.bf16 %v1396, %v1396
        %v1429 = vpack.c.bf16 %v1397, %v1397
        %v1430 = vpack.c.bf16 %v1398, %v1398
        %v1431 = vpack.c.bf16 %v1399, %v1399
        %v1432 = vpack.c.bf16 %v1400, %v1400
        %v1433 = vpack.c.bf16 %v1401, %v1401
        %v1434 = vpack.c.bf16 %v1402, %v1402
        %v1435 = vpack.c.bf16 %v1403, %v1403
        %v1436 = vpack.c.bf16 %v1404, %v1404
        %v1437 = vpack.c.bf16 %v1405, %v1405
        %v1438 = vpack.c.bf16 %v1406, %v1406
        %v1439 = vpack.c.bf16 %v1407, %v1407
        %v1440 = vpack.c.bf16 %v1408, %v1408
        %v1441 = vpack.c.bf16 %v1409, %v1409
        %v1442 = vpack.c.bf16 %v1410, %v1410
        %v1443 = vpack.c.bf16 %v1411, %v1411
        %v1444 = vpack.c.bf16 %v1412, %v1412
        %v1445 = vpack.c.bf16 %v1413, %v1413
        %v1446 = vpack.c.bf16 %v1414, %v1414
        %v1447 = vpack.c.bf16 %v1415, %v1415
        %v1448 = vpack.c.bf16 %v1416, %v1416
        %v1449 = vpack.c.bf16 %v1417, %v1417
        %v1450 = vpack.c.bf16 %v1418, %v1418
        %v1451 = vpack.c.bf16 %v1419, %v1419
        %v1452 = vpack.c.bf16 %v1420, %v1420
        %v1453 = vpack.c.bf16 %v1421, %v1421
        %v1454 = vpack.c.bf16 %v1422, %v1422
        %v1455 = vpack.c.bf16 %v1423, %v1423
        %v1456 = vpack.c.bf16 %v1424, %v1424
        %v1457 = vpack.c.bf16 %v1425, %v1425
        %1490 = vrot.lane.b32.xlu0 %v1426, 64
        %v1491 = vpop.permute.xlu0 %1490
        %1492 = vrot.lane.b32.xlu0 %v1427, 64
        %v1493 = vpop.permute.xlu0 %1492
        %1494 = vrot.lane.b32.xlu0 %v1428, 64
        %v1495 = vpop.permute.xlu0 %1494
        %1496 = vrot.lane.b32.xlu0 %v1429, 64
        %v1497 = vpop.permute.xlu0 %1496
        %1498 = vrot.lane.b32.xlu0 %v1430, 64
        %v1499 = vpop.permute.xlu0 %1498
        %1500 = vrot.lane.b32.xlu0 %v1431, 64
        %v1501 = vpop.permute.xlu0 %1500
        %1502 = vrot.lane.b32.xlu0 %v1432, 64
        %v1503 = vpop.permute.xlu0 %1502
        %1504 = vrot.lane.b32.xlu0 %v1433, 64
        %v1505 = vpop.permute.xlu0 %1504
        %1506 = vrot.lane.b32.xlu0 %v1434, 64
        %v1507 = vpop.permute.xlu0 %1506
        %1508 = vrot.lane.b32.xlu0 %v1435, 64
        %v1509 = vpop.permute.xlu0 %1508
        %1510 = vrot.lane.b32.xlu0 %v1436, 64
        %v1511 = vpop.permute.xlu0 %1510
        %1512 = vrot.lane.b32.xlu0 %v1437, 64
        %v1513 = vpop.permute.xlu0 %1512
        %1514 = vrot.lane.b32.xlu0 %v1438, 64
        %v1515 = vpop.permute.xlu0 %1514
        %1516 = vrot.lane.b32.xlu0 %v1439, 64
        %v1517 = vpop.permute.xlu0 %1516
        %1518 = vrot.lane.b32.xlu0 %v1440, 64
        %v1519 = vpop.permute.xlu0 %1518
        %1520 = vrot.lane.b32.xlu0 %v1441, 64
        %v1521 = vpop.permute.xlu0 %1520
        %1522 = vrot.lane.b32.xlu0 %v1442, 64
        %v1523 = vpop.permute.xlu0 %1522
        %1524 = vrot.lane.b32.xlu0 %v1443, 64
        %v1525 = vpop.permute.xlu0 %1524
        %1526 = vrot.lane.b32.xlu0 %v1444, 64
        %v1527 = vpop.permute.xlu0 %1526
        %1528 = vrot.lane.b32.xlu0 %v1445, 64
        %v1529 = vpop.permute.xlu0 %1528
        %1530 = vrot.lane.b32.xlu0 %v1446, 64
        %v1531 = vpop.permute.xlu0 %1530
        %1532 = vrot.lane.b32.xlu0 %v1447, 64
        %v1533 = vpop.permute.xlu0 %1532
        %1534 = vrot.lane.b32.xlu0 %v1448, 64
        %v1535 = vpop.permute.xlu0 %1534
        %1536 = vrot.lane.b32.xlu0 %v1449, 64
        %v1537 = vpop.permute.xlu0 %1536
        %1538 = vrot.lane.b32.xlu0 %v1450, 64
        %v1539 = vpop.permute.xlu0 %1538
        %1540 = vrot.lane.b32.xlu0 %v1451, 64
        %v1541 = vpop.permute.xlu0 %1540
        %1542 = vrot.lane.b32.xlu0 %v1452, 64
        %v1543 = vpop.permute.xlu0 %1542
        %1544 = vrot.lane.b32.xlu0 %v1453, 64
        %v1545 = vpop.permute.xlu0 %1544
        %1546 = vrot.lane.b32.xlu0 %v1454, 64
        %v1547 = vpop.permute.xlu0 %1546
        %1548 = vrot.lane.b32.xlu0 %v1455, 64
        %v1549 = vpop.permute.xlu0 %1548
        %1550 = vrot.lane.b32.xlu0 %v1456, 64
        %v1551 = vpop.permute.xlu0 %1550
        %1552 = vrot.lane.b32.xlu0 %v1457, 64
        %v1553 = vpop.permute.xlu0 %1552
        %1586 = vst.msk [vmem:[#allocation3 + $0x4] sm:$0xf] %vm815, %v1491
        %1587 = vst.msk [vmem:[#allocation3 + $0x10] sm:$0xf] %vm815, %v1493
        %1588 = vst.msk [vmem:[#allocation3 + $0x1c] sm:$0xf] %vm815, %v1495
        %1589 = vst.msk [vmem:[#allocation3 + $0x28] sm:$0xf] %vm815, %v1497
        %1590 = vst.msk [vmem:[#allocation3 + $0x34] sm:$0xf] %vm815, %v1499
        %1591 = vst.msk [vmem:[#allocation3 + $0x40] sm:$0xf] %vm815, %v1501
        %1592 = vst.msk [vmem:[#allocation3 + $0x4c] sm:$0xf] %vm815, %v1503
        %1593 = vst.msk [vmem:[#allocation3 + $0x58] sm:$0xf] %vm815, %v1505
        %1594 = vst.msk [vmem:[#allocation3 + $0x64] sm:$0xf] %vm815, %v1507
        %1595 = vst.msk [vmem:[#allocation3 + $0x70] sm:$0xf] %vm815, %v1509
        %1596 = vst.msk [vmem:[#allocation3 + $0x7c] sm:$0xf] %vm815, %v1511
        %1597 = vst.msk [vmem:[#allocation3 + $0x88] sm:$0xf] %vm815, %v1513
        %1598 = vst.msk [vmem:[#allocation3 + $0x94] sm:$0xf] %vm815, %v1515
        %1599 = vst.msk [vmem:[#allocation3 + $0xa0] sm:$0xf] %vm815, %v1517
        %1600 = vst.msk [vmem:[#allocation3 + $0xac] sm:$0xf] %vm815, %v1519
        %1601 = vst.msk [vmem:[#allocation3 + $0xb8] sm:$0xf] %vm815, %v1521
        %1602 = vst.msk [vmem:[#allocation3 + $0xc4] sm:$0xf] %vm815, %v1523
        %1603 = vst.msk [vmem:[#allocation3 + $0xd0] sm:$0xf] %vm815, %v1525
        %1604 = vst.msk [vmem:[#allocation3 + $0xdc] sm:$0xf] %vm815, %v1527
        %1605 = vst.msk [vmem:[#allocation3 + $0xe8] sm:$0xf] %vm815, %v1529
        %1606 = vst.msk [vmem:[#allocation3 + $0xf4] sm:$0xf] %vm815, %v1531
        %1607 = vst.msk [vmem:[#allocation3 + $0x100] sm:$0xf] %vm815, %v1533
        %1608 = vst.msk [vmem:[#allocation3 + $0x10c] sm:$0xf] %vm815, %v1535
        %1609 = vst.msk [vmem:[#allocation3 + $0x118] sm:$0xf] %vm815, %v1537
        %1610 = vst.msk [vmem:[#allocation3 + $0x124] sm:$0xf] %vm815, %v1539
        %1611 = vst.msk [vmem:[#allocation3 + $0x130] sm:$0xf] %vm815, %v1541
        %1612 = vst.msk [vmem:[#allocation3 + $0x13c] sm:$0xf] %vm815, %v1543
        %1613 = vst.msk [vmem:[#allocation3 + $0x148] sm:$0xf] %vm815, %v1545
        %1614 = vst.msk [vmem:[#allocation3 + $0x154] sm:$0xf] %vm815, %v1547
        %1615 = vst.msk [vmem:[#allocation3 + $0x160] sm:$0xf] %vm815, %v1549
        %1616 = vst.msk [vmem:[#allocation3 + $0x16c] sm:$0xf] %vm815, %v1551
        %1617 = vst.msk [vmem:[#allocation3 + $0x178] sm:$0xf] %vm815, %v1553
        %v1618 = vld [vmem:[%s1393 + $0x1] sm:$0xff]
        %v1619 = vld [vmem:[%s1393 + $0x9] sm:$0xff]
        %v1620 = vld [vmem:[%s1393 + $0x19] sm:$0xff]
        %v1621 = vld [vmem:[%s1393 + $0x21] sm:$0xff]
        %v1622 = vld [vmem:[%s1393 + $0x31] sm:$0xff]
        %v1623 = vld [vmem:[%s1393 + $0x39] sm:$0xff]
        %v1624 = vld [vmem:[%s1393 + $0x49] sm:$0xff]
        %v1625 = vld [vmem:[%s1393 + $0x51] sm:$0xff]
        %v1626 = vld [vmem:[%s1393 + $0x61] sm:$0xff]
        %v1627 = vld [vmem:[%s1393 + $0x69] sm:$0xff]
        %v1628 = vld [vmem:[%s1393 + $0x79] sm:$0xff]
        %v1629 = vld [vmem:[%s1393 + $0x81] sm:$0xff]
        %v1630 = vld [vmem:[%s1393 + $0x91] sm:$0xff]
        %v1631 = vld [vmem:[%s1393 + $0x99] sm:$0xff]
        %v1632 = vld [vmem:[%s1393 + $0xa9] sm:$0xff]
        %v1633 = vld [vmem:[%s1393 + $0xb1] sm:$0xff]
        %v1634 = vld [vmem:[%s1393 + $0xc1] sm:$0xff]
        %v1635 = vld [vmem:[%s1393 + $0xc9] sm:$0xff]
        %v1636 = vld [vmem:[%s1393 + $0xd9] sm:$0xff]
        %v1637 = vld [vmem:[%s1393 + $0xe1] sm:$0xff]
        %v1638 = vld [vmem:[%s1393 + $0xf1] sm:$0xff]
        %v1639 = vld [vmem:[%s1393 + $0xf9] sm:$0xff]
        %v1640 = vld [vmem:[%s1393 + $0x109] sm:$0xff]
        %v1641 = vld [vmem:[%s1393 + $0x111] sm:$0xff]
        %v1642 = vld [vmem:[%s1393 + $0x121] sm:$0xff]
        %v1643 = vld [vmem:[%s1393 + $0x129] sm:$0xff]
        %v1644 = vld [vmem:[%s1393 + $0x139] sm:$0xff]
        %v1645 = vld [vmem:[%s1393 + $0x141] sm:$0xff]
        %v1646 = vld [vmem:[%s1393 + $0x151] sm:$0xff]
        %v1647 = vld [vmem:[%s1393 + $0x159] sm:$0xff]
        %v1648 = vld [vmem:[%s1393 + $0x169] sm:$0xff]
        %v1649 = vld [vmem:[%s1393 + $0x171] sm:$0xff]
        %v1650 = vpack.c.bf16 %v1618, %v1618
        %v1651 = vpack.c.bf16 %v1619, %v1619
        %v1652 = vpack.c.bf16 %v1620, %v1620
        %v1653 = vpack.c.bf16 %v1621, %v1621
        %v1654 = vpack.c.bf16 %v1622, %v1622
        %v1655 = vpack.c.bf16 %v1623, %v1623
        %v1656 = vpack.c.bf16 %v1624, %v1624
        %v1657 = vpack.c.bf16 %v1625, %v1625
        %v1658 = vpack.c.bf16 %v1626, %v1626
        %v1659 = vpack.c.bf16 %v1627, %v1627
        %v1660 = vpack.c.bf16 %v1628, %v1628
        %v1661 = vpack.c.bf16 %v1629, %v1629
        %v1662 = vpack.c.bf16 %v1630, %v1630
        %v1663 = vpack.c.bf16 %v1631, %v1631
        %v1664 = vpack.c.bf16 %v1632, %v1632
        %v1665 = vpack.c.bf16 %v1633, %v1633
        %v1666 = vpack.c.bf16 %v1634, %v1634
        %v1667 = vpack.c.bf16 %v1635, %v1635
        %v1668 = vpack.c.bf16 %v1636, %v1636
        %v1669 = vpack.c.bf16 %v1637, %v1637
        %v1670 = vpack.c.bf16 %v1638, %v1638
        %v1671 = vpack.c.bf16 %v1639, %v1639
        %v1672 = vpack.c.bf16 %v1640, %v1640
        %v1673 = vpack.c.bf16 %v1641, %v1641
        %v1674 = vpack.c.bf16 %v1642, %v1642
        %v1675 = vpack.c.bf16 %v1643, %v1643
        %v1676 = vpack.c.bf16 %v1644, %v1644
        %v1677 = vpack.c.bf16 %v1645, %v1645
        %v1678 = vpack.c.bf16 %v1646, %v1646
        %v1679 = vpack.c.bf16 %v1647, %v1647
        %v1680 = vpack.c.bf16 %v1648, %v1648
        %v1681 = vpack.c.bf16 %v1649, %v1649
        %1714 = vrot.lane.b32.xlu0 %v1650, 96
        %v1715 = vpop.permute.xlu0 %1714
        %1716 = vrot.lane.b32.xlu0 %v1651, 96
        %v1717 = vpop.permute.xlu0 %1716
        %1718 = vrot.lane.b32.xlu0 %v1652, 96
        %v1719 = vpop.permute.xlu0 %1718
        %1720 = vrot.lane.b32.xlu0 %v1653, 96
        %v1721 = vpop.permute.xlu0 %1720
        %1722 = vrot.lane.b32.xlu0 %v1654, 96
        %v1723 = vpop.permute.xlu0 %1722
        %1724 = vrot.lane.b32.xlu0 %v1655, 96
        %v1725 = vpop.permute.xlu0 %1724
        %1726 = vrot.lane.b32.xlu0 %v1656, 96
        %v1727 = vpop.permute.xlu0 %1726
        %1728 = vrot.lane.b32.xlu0 %v1657, 96
        %v1729 = vpop.permute.xlu0 %1728
        %1730 = vrot.lane.b32.xlu0 %v1658, 96
        %v1731 = vpop.permute.xlu0 %1730
        %1732 = vrot.lane.b32.xlu0 %v1659, 96
        %v1733 = vpop.permute.xlu0 %1732
        %1734 = vrot.lane.b32.xlu0 %v1660, 96
        %v1735 = vpop.permute.xlu0 %1734
        %1736 = vrot.lane.b32.xlu0 %v1661, 96
        %v1737 = vpop.permute.xlu0 %1736
        %1738 = vrot.lane.b32.xlu0 %v1662, 96
        %v1739 = vpop.permute.xlu0 %1738
        %1740 = vrot.lane.b32.xlu0 %v1663, 96
        %v1741 = vpop.permute.xlu0 %1740
        %1742 = vrot.lane.b32.xlu0 %v1664, 96
        %v1743 = vpop.permute.xlu0 %1742
        %1744 = vrot.lane.b32.xlu0 %v1665, 96
        %v1745 = vpop.permute.xlu0 %1744
        %1746 = vrot.lane.b32.xlu0 %v1666, 96
        %v1747 = vpop.permute.xlu0 %1746
        %1748 = vrot.lane.b32.xlu0 %v1667, 96
        %v1749 = vpop.permute.xlu0 %1748
        %1750 = vrot.lane.b32.xlu0 %v1668, 96
        %v1751 = vpop.permute.xlu0 %1750
        %1752 = vrot.lane.b32.xlu0 %v1669, 96
        %v1753 = vpop.permute.xlu0 %1752
        %1754 = vrot.lane.b32.xlu0 %v1670, 96
        %v1755 = vpop.permute.xlu0 %1754
        %1756 = vrot.lane.b32.xlu0 %v1671, 96
        %v1757 = vpop.permute.xlu0 %1756
        %1758 = vrot.lane.b32.xlu0 %v1672, 96
        %v1759 = vpop.permute.xlu0 %1758
        %1760 = vrot.lane.b32.xlu0 %v1673, 96
        %v1761 = vpop.permute.xlu0 %1760
        %1762 = vrot.lane.b32.xlu0 %v1674, 96
        %v1763 = vpop.permute.xlu0 %1762
        %1764 = vrot.lane.b32.xlu0 %v1675, 96
        %v1765 = vpop.permute.xlu0 %1764
        %1766 = vrot.lane.b32.xlu0 %v1676, 96
        %v1767 = vpop.permute.xlu0 %1766
        %1768 = vrot.lane.b32.xlu0 %v1677, 96
        %v1769 = vpop.permute.xlu0 %1768
        %1770 = vrot.lane.b32.xlu0 %v1678, 96
        %v1771 = vpop.permute.xlu0 %1770
        %1772 = vrot.lane.b32.xlu0 %v1679, 96
        %v1773 = vpop.permute.xlu0 %1772
        %1774 = vrot.lane.b32.xlu0 %v1680, 96
        %v1775 = vpop.permute.xlu0 %1774
        %1776 = vrot.lane.b32.xlu0 %v1681, 96
        %v1777 = vpop.permute.xlu0 %1776
        %1810 = vst.msk [vmem:[#allocation3 + $0x4] sm:$0xf] %vm1040, %v1715
        %1811 = vst.msk [vmem:[#allocation3 + $0x10] sm:$0xf] %vm1040, %v1717
        %1812 = vst.msk [vmem:[#allocation3 + $0x1c] sm:$0xf] %vm1040, %v1719
        %1813 = vst.msk [vmem:[#allocation3 + $0x28] sm:$0xf] %vm1040, %v1721
        %1814 = vst.msk [vmem:[#allocation3 + $0x34] sm:$0xf] %vm1040, %v1723
        %1815 = vst.msk [vmem:[#allocation3 + $0x40] sm:$0xf] %vm1040, %v1725
        %1816 = vst.msk [vmem:[#allocation3 + $0x4c] sm:$0xf] %vm1040, %v1727
        %1817 = vst.msk [vmem:[#allocation3 + $0x58] sm:$0xf] %vm1040, %v1729
        %1818 = vst.msk [vmem:[#allocation3 + $0x64] sm:$0xf] %vm1040, %v1731
        %1819 = vst.msk [vmem:[#allocation3 + $0x70] sm:$0xf] %vm1040, %v1733
        %1820 = vst.msk [vmem:[#allocation3 + $0x7c] sm:$0xf] %vm1040, %v1735
        %1821 = vst.msk [vmem:[#allocation3 + $0x88] sm:$0xf] %vm1040, %v1737
        %1822 = vst.msk [vmem:[#allocation3 + $0x94] sm:$0xf] %vm1040, %v1739
        %1823 = vst.msk [vmem:[#allocation3 + $0xa0] sm:$0xf] %vm1040, %v1741
        %1824 = vst.msk [vmem:[#allocation3 + $0xac] sm:$0xf] %vm1040, %v1743
        %1825 = vst.msk [vmem:[#allocation3 + $0xb8] sm:$0xf] %vm1040, %v1745
        %1826 = vst.msk [vmem:[#allocation3 + $0xc4] sm:$0xf] %vm1040, %v1747
        %1827 = vst.msk [vmem:[#allocation3 + $0xd0] sm:$0xf] %vm1040, %v1749
        %1828 = vst.msk [vmem:[#allocation3 + $0xdc] sm:$0xf] %vm1040, %v1751
        %1829 = vst.msk [vmem:[#allocation3 + $0xe8] sm:$0xf] %vm1040, %v1753
        %1830 = vst.msk [vmem:[#allocation3 + $0xf4] sm:$0xf] %vm1040, %v1755
        %1831 = vst.msk [vmem:[#allocation3 + $0x100] sm:$0xf] %vm1040, %v1757
        %1832 = vst.msk [vmem:[#allocation3 + $0x10c] sm:$0xf] %vm1040, %v1759
        %1833 = vst.msk [vmem:[#allocation3 + $0x118] sm:$0xf] %vm1040, %v1761
        %1834 = vst.msk [vmem:[#allocation3 + $0x124] sm:$0xf] %vm1040, %v1763
        %1835 = vst.msk [vmem:[#allocation3 + $0x130] sm:$0xf] %vm1040, %v1765
        %1836 = vst.msk [vmem:[#allocation3 + $0x13c] sm:$0xf] %vm1040, %v1767
        %1837 = vst.msk [vmem:[#allocation3 + $0x148] sm:$0xf] %vm1040, %v1769
        %1838 = vst.msk [vmem:[#allocation3 + $0x154] sm:$0xf] %vm1040, %v1771
        %1839 = vst.msk [vmem:[#allocation3 + $0x160] sm:$0xf] %vm1040, %v1773
        %1840 = vst.msk [vmem:[#allocation3 + $0x16c] sm:$0xf] %vm1040, %v1775
        %1841 = vst.msk [vmem:[#allocation3 + $0x178] sm:$0xf] %vm1040, %v1777
        %v1842 = vld [vmem:[%s1393 + $0x2] sm:$0xff]
        %v1843 = vld [vmem:[%s1393 + $0xa] sm:$0xff]
        %v1844 = vld [vmem:[%s1393 + $0x1a] sm:$0xff]
        %v1845 = vld [vmem:[%s1393 + $0x22] sm:$0xff]
        %v1846 = vld [vmem:[%s1393 + $0x32] sm:$0xff]
        %v1847 = vld [vmem:[%s1393 + $0x3a] sm:$0xff]
        %v1848 = vld [vmem:[%s1393 + $0x4a] sm:$0xff]
        %v1849 = vld [vmem:[%s1393 + $0x52] sm:$0xff]
        %v1850 = vld [vmem:[%s1393 + $0x62] sm:$0xff]
        %v1851 = vld [vmem:[%s1393 + $0x6a] sm:$0xff]
        %v1852 = vld [vmem:[%s1393 + $0x7a] sm:$0xff]
        %v1853 = vld [vmem:[%s1393 + $0x82] sm:$0xff]
        %v1854 = vld [vmem:[%s1393 + $0x92] sm:$0xff]
        %v1855 = vld [vmem:[%s1393 + $0x9a] sm:$0xff]
        %v1856 = vld [vmem:[%s1393 + $0xaa] sm:$0xff]
        %v1857 = vld [vmem:[%s1393 + $0xb2] sm:$0xff]
        %v1858 = vld [vmem:[%s1393 + $0xc2] sm:$0xff]
        %v1859 = vld [vmem:[%s1393 + $0xca] sm:$0xff]
        %v1860 = vld [vmem:[%s1393 + $0xda] sm:$0xff]
        %v1861 = vld [vmem:[%s1393 + $0xe2] sm:$0xff]
        %v1862 = vld [vmem:[%s1393 + $0xf2] sm:$0xff]
        %v1863 = vld [vmem:[%s1393 + $0xfa] sm:$0xff]
        %v1864 = vld [vmem:[%s1393 + $0x10a] sm:$0xff]
        %v1865 = vld [vmem:[%s1393 + $0x112] sm:$0xff]
        %v1866 = vld [vmem:[%s1393 + $0x122] sm:$0xff]
        %v1867 = vld [vmem:[%s1393 + $0x12a] sm:$0xff]
        %v1868 = vld [vmem:[%s1393 + $0x13a] sm:$0xff]
        %v1869 = vld [vmem:[%s1393 + $0x142] sm:$0xff]
        %v1870 = vld [vmem:[%s1393 + $0x152] sm:$0xff]
        %v1871 = vld [vmem:[%s1393 + $0x15a] sm:$0xff]
        %v1872 = vld [vmem:[%s1393 + $0x16a] sm:$0xff]
        %v1873 = vld [vmem:[%s1393 + $0x172] sm:$0xff]
        %v1874 = vpack.c.bf16 %v1842, %v1842
        %v1875 = vpack.c.bf16 %v1843, %v1843
        %v1876 = vpack.c.bf16 %v1844, %v1844
        %v1877 = vpack.c.bf16 %v1845, %v1845
        %v1878 = vpack.c.bf16 %v1846, %v1846
        %v1879 = vpack.c.bf16 %v1847, %v1847
        %v1880 = vpack.c.bf16 %v1848, %v1848
        %v1881 = vpack.c.bf16 %v1849, %v1849
        %v1882 = vpack.c.bf16 %v1850, %v1850
        %v1883 = vpack.c.bf16 %v1851, %v1851
        %v1884 = vpack.c.bf16 %v1852, %v1852
        %v1885 = vpack.c.bf16 %v1853, %v1853
        %v1886 = vpack.c.bf16 %v1854, %v1854
        %v1887 = vpack.c.bf16 %v1855, %v1855
        %v1888 = vpack.c.bf16 %v1856, %v1856
        %v1889 = vpack.c.bf16 %v1857, %v1857
        %v1890 = vpack.c.bf16 %v1858, %v1858
        %v1891 = vpack.c.bf16 %v1859, %v1859
        %v1892 = vpack.c.bf16 %v1860, %v1860
        %v1893 = vpack.c.bf16 %v1861, %v1861
        %v1894 = vpack.c.bf16 %v1862, %v1862
        %v1895 = vpack.c.bf16 %v1863, %v1863
        %v1896 = vpack.c.bf16 %v1864, %v1864
        %v1897 = vpack.c.bf16 %v1865, %v1865
        %v1898 = vpack.c.bf16 %v1866, %v1866
        %v1899 = vpack.c.bf16 %v1867, %v1867
        %v1900 = vpack.c.bf16 %v1868, %v1868
        %v1901 = vpack.c.bf16 %v1869, %v1869
        %v1902 = vpack.c.bf16 %v1870, %v1870
        %v1903 = vpack.c.bf16 %v1871, %v1871
        %v1904 = vpack.c.bf16 %v1872, %v1872
        %v1905 = vpack.c.bf16 %v1873, %v1873
        %1906 = vst.msk [vmem:[#allocation3 + $0x8] sm:$0xf] %vm365, %v1874
        %1907 = vst.msk [vmem:[#allocation3 + $0x14] sm:$0xf] %vm365, %v1875
        %1908 = vst.msk [vmem:[#allocation3 + $0x20] sm:$0xf] %vm365, %v1876
        %1909 = vst.msk [vmem:[#allocation3 + $0x2c] sm:$0xf] %vm365, %v1877
        %1910 = vst.msk [vmem:[#allocation3 + $0x38] sm:$0xf] %vm365, %v1878
        %1911 = vst.msk [vmem:[#allocation3 + $0x44] sm:$0xf] %vm365, %v1879
        %1912 = vst.msk [vmem:[#allocation3 + $0x50] sm:$0xf] %vm365, %v1880
        %1913 = vst.msk [vmem:[#allocation3 + $0x5c] sm:$0xf] %vm365, %v1881
        %1914 = vst.msk [vmem:[#allocation3 + $0x68] sm:$0xf] %vm365, %v1882
        %1915 = vst.msk [vmem:[#allocation3 + $0x74] sm:$0xf] %vm365, %v1883
        %1916 = vst.msk [vmem:[#allocation3 + $0x80] sm:$0xf] %vm365, %v1884
        %1917 = vst.msk [vmem:[#allocation3 + $0x8c] sm:$0xf] %vm365, %v1885
        %1918 = vst.msk [vmem:[#allocation3 + $0x98] sm:$0xf] %vm365, %v1886
        %1919 = vst.msk [vmem:[#allocation3 + $0xa4] sm:$0xf] %vm365, %v1887
        %1920 = vst.msk [vmem:[#allocation3 + $0xb0] sm:$0xf] %vm365, %v1888
        %1921 = vst.msk [vmem:[#allocation3 + $0xbc] sm:$0xf] %vm365, %v1889
        %1922 = vst.msk [vmem:[#allocation3 + $0xc8] sm:$0xf] %vm365, %v1890
        %1923 = vst.msk [vmem:[#allocation3 + $0xd4] sm:$0xf] %vm365, %v1891
        %1924 = vst.msk [vmem:[#allocation3 + $0xe0] sm:$0xf] %vm365, %v1892
        %1925 = vst.msk [vmem:[#allocation3 + $0xec] sm:$0xf] %vm365, %v1893
        %1926 = vst.msk [vmem:[#allocation3 + $0xf8] sm:$0xf] %vm365, %v1894
        %1927 = vst.msk [vmem:[#allocation3 + $0x104] sm:$0xf] %vm365, %v1895
        %1928 = vst.msk [vmem:[#allocation3 + $0x110] sm:$0xf] %vm365, %v1896
        %1929 = vst.msk [vmem:[#allocation3 + $0x11c] sm:$0xf] %vm365, %v1897
        %1930 = vst.msk [vmem:[#allocation3 + $0x128] sm:$0xf] %vm365, %v1898
        %1931 = vst.msk [vmem:[#allocation3 + $0x134] sm:$0xf] %vm365, %v1899
        %1932 = vst.msk [vmem:[#allocation3 + $0x140] sm:$0xf] %vm365, %v1900
        %1933 = vst.msk [vmem:[#allocation3 + $0x14c] sm:$0xf] %vm365, %v1901
        %1934 = vst.msk [vmem:[#allocation3 + $0x158] sm:$0xf] %vm365, %v1902
        %1935 = vst.msk [vmem:[#allocation3 + $0x164] sm:$0xf] %vm365, %v1903
        %1936 = vst.msk [vmem:[#allocation3 + $0x170] sm:$0xf] %vm365, %v1904
        %1937 = vst.msk [vmem:[#allocation3 + $0x17c] sm:$0xf] %vm365, %v1905
        %v1938 = vld [vmem:[#allocation3] sm:$0xff]
        %v1939 = vld [vmem:[#allocation3 + $0x8] sm:$0xf]
        %v1940 = vld [vmem:[#allocation3 + $0xc] sm:$0xff]
        %v1941 = vld [vmem:[#allocation3 + $0x14] sm:$0xf]
        %v1942 = vld [vmem:[#allocation3 + $0x18] sm:$0xff]
        %v1943 = vld [vmem:[#allocation3 + $0x20] sm:$0xf]
        %v1944 = vld [vmem:[#allocation3 + $0x24] sm:$0xff]
        %v1945 = vld [vmem:[#allocation3 + $0x2c] sm:$0xf]
        %v1946 = vld [vmem:[#allocation3 + $0x30] sm:$0xff]
        %v1947 = vld [vmem:[#allocation3 + $0x38] sm:$0xf]
        %v1948 = vld [vmem:[#allocation3 + $0x3c] sm:$0xff]
        %v1949 = vld [vmem:[#allocation3 + $0x44] sm:$0xf]
        %v1950 = vld [vmem:[#allocation3 + $0x48] sm:$0xff]
        %v1951 = vld [vmem:[#allocation3 + $0x50] sm:$0xf]
        %v1952 = vld [vmem:[#allocation3 + $0x54] sm:$0xff]
        %v1953 = vld [vmem:[#allocation3 + $0x5c] sm:$0xf]
        %v1954 = vld [vmem:[#allocation3 + $0x60] sm:$0xff]
        %v1955 = vld [vmem:[#allocation3 + $0x68] sm:$0xf]
        %v1956 = vld [vmem:[#allocation3 + $0x6c] sm:$0xff]
        %v1957 = vld [vmem:[#allocation3 + $0x74] sm:$0xf]
        %v1958 = vld [vmem:[#allocation3 + $0x78] sm:$0xff]
        %v1959 = vld [vmem:[#allocation3 + $0x80] sm:$0xf]
        %v1960 = vld [vmem:[#allocation3 + $0x84] sm:$0xff]
        %v1961 = vld [vmem:[#allocation3 + $0x8c] sm:$0xf]
        %v1962 = vld [vmem:[#allocation3 + $0x90] sm:$0xff]
        %v1963 = vld [vmem:[#allocation3 + $0x98] sm:$0xf]
        %v1964 = vld [vmem:[#allocation3 + $0x9c] sm:$0xff]
        %v1965 = vld [vmem:[#allocation3 + $0xa4] sm:$0xf]
        %v1966 = vld [vmem:[#allocation3 + $0xa8] sm:$0xff]
        %v1967 = vld [vmem:[#allocation3 + $0xb0] sm:$0xf]
        %v1968 = vld [vmem:[#allocation3 + $0xb4] sm:$0xff]
        %v1969 = vld [vmem:[#allocation3 + $0xbc] sm:$0xf]
        %v1970 = vld [vmem:[#allocation3 + $0xc0] sm:$0xff]
        %v1971 = vld [vmem:[#allocation3 + $0xc8] sm:$0xf]
        %v1972 = vld [vmem:[#allocation3 + $0xcc] sm:$0xff]
        %v1973 = vld [vmem:[#allocation3 + $0xd4] sm:$0xf]
        %v1974 = vld [vmem:[#allocation3 + $0xd8] sm:$0xff]
        %v1975 = vld [vmem:[#allocation3 + $0xe0] sm:$0xf]
        %v1976 = vld [vmem:[#allocation3 + $0xe4] sm:$0xff]
        %v1977 = vld [vmem:[#allocation3 + $0xec] sm:$0xf]
        %v1978 = vld [vmem:[#allocation3 + $0xf0] sm:$0xff]
        %v1979 = vld [vmem:[#allocation3 + $0xf8] sm:$0xf]
        %v1980 = vld [vmem:[#allocation3 + $0xfc] sm:$0xff]
        %v1981 = vld [vmem:[#allocation3 + $0x104] sm:$0xf]
        %v1982 = vld [vmem:[#allocation3 + $0x108] sm:$0xff]
        %v1983 = vld [vmem:[#allocation3 + $0x110] sm:$0xf]
        %v1984 = vld [vmem:[#allocation3 + $0x114] sm:$0xff]
        %v1985 = vld [vmem:[#allocation3 + $0x11c] sm:$0xf]
        %v1986 = vld [vmem:[#allocation3 + $0x120] sm:$0xff]
        %v1987 = vld [vmem:[#allocation3 + $0x128] sm:$0xf]
        %v1988 = vld [vmem:[#allocation3 + $0x12c] sm:$0xff]
        %v1989 = vld [vmem:[#allocation3 + $0x134] sm:$0xf]
        %v1990 = vld [vmem:[#allocation3 + $0x138] sm:$0xff]
        %v1991 = vld [vmem:[#allocation3 + $0x140] sm:$0xf]
        %v1992 = vld [vmem:[#allocation3 + $0x144] sm:$0xff]
        %v1993 = vld [vmem:[#allocation3 + $0x14c] sm:$0xf]
        %v1994 = vld [vmem:[#allocation3 + $0x150] sm:$0xff]
        %v1995 = vld [vmem:[#allocation3 + $0x158] sm:$0xf]
        %v1996 = vld [vmem:[#allocation3 + $0x15c] sm:$0xff]
        %v1997 = vld [vmem:[#allocation3 + $0x164] sm:$0xf]
        %v1998 = vld [vmem:[#allocation3 + $0x168] sm:$0xff]
        %v1999 = vld [vmem:[#allocation3 + $0x170] sm:$0xf]
        %v2000 = vld [vmem:[#allocation3 + $0x174] sm:$0xff]
        %v2001 = vld [vmem:[#allocation3 + $0x17c] sm:$0xf]
        %v2002 = vld [vmem:[%s1] sm:$0xff]
        %v2003 = vld [vmem:[%s1 + $0x8] sm:$0xff]
        %v2004 = vld [vmem:[%s1 + $0x10] sm:$0xff]
        %v2005 = vld [vmem:[%s1 + $0x18] sm:$0xff]
        %v2006 = vld [vmem:[%s1 + $0x20] sm:$0xff]
        %v2007 = vld [vmem:[%s1 + $0x28] sm:$0xff]
        %v2008 = vld [vmem:[%s1 + $0x30] sm:$0xff]
        %v2009 = vld [vmem:[%s1 + $0x38] sm:$0xff]
        %v2010 = vld [vmem:[%s1 + $0x40] sm:$0xff]
        %v2011 = vld [vmem:[%s1 + $0x48] sm:$0xff]
        %v2012 = vld [vmem:[%s1 + $0x50] sm:$0xff]
        %v2013 = vld [vmem:[%s1 + $0x58] sm:$0xff]
        %v2014 = vld [vmem:[%s1 + $0x60] sm:$0xff]
        %v2015 = vld [vmem:[%s1 + $0x68] sm:$0xff]
        %v2016 = vld [vmem:[%s1 + $0x70] sm:$0xff]
        %v2017 = vld [vmem:[%s1 + $0x78] sm:$0xff]
        %v2018 = vld [vmem:[%s1 + $0x80] sm:$0xff]
        %v2019 = vld [vmem:[%s1 + $0x88] sm:$0xff]
        %v2020 = vld [vmem:[%s1 + $0x90] sm:$0xff]
        %v2021 = vld [vmem:[%s1 + $0x98] sm:$0xff]
        %v2022 = vld [vmem:[%s1 + $0xa0] sm:$0xff]
        %v2023 = vld [vmem:[%s1 + $0xa8] sm:$0xff]
        %v2024 = vld [vmem:[%s1 + $0xb0] sm:$0xff]
        %v2025 = vld [vmem:[%s1 + $0xb8] sm:$0xff]
        %v2026 = vld [vmem:[%s1 + $0xc0] sm:$0xff]
        %v2027 = vld [vmem:[%s1 + $0xc8] sm:$0xff]
        %v2028 = vld [vmem:[%s1 + $0xd0] sm:$0xff]
        %v2029 = vld [vmem:[%s1 + $0xd8] sm:$0xff]
        %v2030 = vld [vmem:[%s1 + $0xe0] sm:$0xff]
        %v2031 = vld [vmem:[%s1 + $0xe8] sm:$0xff]
        %v2032 = vld [vmem:[%s1 + $0xf0] sm:$0xff]
        %v2033 = vld [vmem:[%s1 + $0xf8] sm:$0xff]
        %v2034 = vld [vmem:[%s1 + $0x100] sm:$0xff]
        %v2035 = vld [vmem:[%s1 + $0x108] sm:$0xff]
        %v2036 = vld [vmem:[%s1 + $0x110] sm:$0xff]
        %v2037 = vld [vmem:[%s1 + $0x118] sm:$0xff]
        %v2038 = vld [vmem:[%s2] sm:$0x3]
        %v2040 = vperm.slane %v2038, 0
        %v2041 = vperm.slane %v2038, 1
        %v2108 = vunpack.c.l.b16 %v1938
        %v2109 = vunpack.c.h.b16 %v1938
        %v2110 = vunpack.c.l.b16 %v1939
        %v2111 = vunpack.c.l.b16 %v1940
        %v2112 = vunpack.c.h.b16 %v1940
        %v2113 = vunpack.c.l.b16 %v1941
        %v2114 = vunpack.c.l.b16 %v1942
        %v2115 = vunpack.c.h.b16 %v1942
        %v2116 = vunpack.c.l.b16 %v1943
        %v2117 = vunpack.c.l.b16 %v1944
        %v2118 = vunpack.c.h.b16 %v1944
        %v2119 = vunpack.c.l.b16 %v1945
        %v2120 = vunpack.c.l.b16 %v1946
        %v2121 = vunpack.c.h.b16 %v1946
        %v2122 = vunpack.c.l.b16 %v1947
        %v2123 = vunpack.c.l.b16 %v1948
        %v2124 = vunpack.c.h.b16 %v1948
        %v2125 = vunpack.c.l.b16 %v1949
        %v2126 = vunpack.c.l.b16 %v1950
        %v2127 = vunpack.c.h.b16 %v1950
        %v2128 = vunpack.c.l.b16 %v1951
        %v2129 = vunpack.c.l.b16 %v1952
        %v2130 = vunpack.c.h.b16 %v1952
        %v2131 = vunpack.c.l.b16 %v1953
        %v2132 = vunpack.c.l.b16 %v1954
        %v2133 = vunpack.c.h.b16 %v1954
        %v2134 = vunpack.c.l.b16 %v1955
        %v2135 = vunpack.c.l.b16 %v1956
        %v2136 = vunpack.c.h.b16 %v1956
        %v2137 = vunpack.c.l.b16 %v1957
        %v2138 = vunpack.c.l.b16 %v1958
        %v2139 = vunpack.c.h.b16 %v1958
        %v2140 = vunpack.c.l.b16 %v1959
        %v2141 = vunpack.c.l.b16 %v1960
        %v2142 = vunpack.c.h.b16 %v1960
        %v2143 = vunpack.c.l.b16 %v1961
        %v2144 = vunpack.c.l.b16 %v1962
        %v2145 = vunpack.c.h.b16 %v1962
        %v2146 = vunpack.c.l.b16 %v1963
        %v2147 = vunpack.c.l.b16 %v1964
        %v2148 = vunpack.c.h.b16 %v1964
        %v2149 = vunpack.c.l.b16 %v1965
        %v2150 = vunpack.c.l.b16 %v1966
        %v2151 = vunpack.c.h.b16 %v1966
        %v2152 = vunpack.c.l.b16 %v1967
        %v2153 = vunpack.c.l.b16 %v1968
        %v2154 = vunpack.c.h.b16 %v1968
        %v2155 = vunpack.c.l.b16 %v1969
        %v2156 = vunpack.c.l.b16 %v1970
        %v2157 = vunpack.c.h.b16 %v1970
        %v2158 = vunpack.c.l.b16 %v1971
        %v2159 = vunpack.c.l.b16 %v1972
        %v2160 = vunpack.c.h.b16 %v1972
        %v2161 = vunpack.c.l.b16 %v1973
        %v2162 = vunpack.c.l.b16 %v1974
        %v2163 = vunpack.c.h.b16 %v1974
        %v2164 = vunpack.c.l.b16 %v1975
        %v2165 = vunpack.c.l.b16 %v1976
        %v2166 = vunpack.c.h.b16 %v1976
        %v2167 = vunpack.c.l.b16 %v1977
        %v2168 = vunpack.c.l.b16 %v1978
        %v2169 = vunpack.c.h.b16 %v1978
        %v2170 = vunpack.c.l.b16 %v1979
        %v2171 = vunpack.c.l.b16 %v1980
        %v2172 = vunpack.c.h.b16 %v1980
        %v2173 = vunpack.c.l.b16 %v1981
        %v2174 = vunpack.c.l.b16 %v1982
        %v2175 = vunpack.c.h.b16 %v1982
        %v2176 = vunpack.c.l.b16 %v1983
        %v2177 = vunpack.c.l.b16 %v1984
        %v2178 = vunpack.c.h.b16 %v1984
        %v2179 = vunpack.c.l.b16 %v1985
        %v2180 = vunpack.c.l.b16 %v1986
        %v2181 = vunpack.c.h.b16 %v1986
        %v2182 = vunpack.c.l.b16 %v1987
        %v2183 = vunpack.c.l.b16 %v1988
        %v2184 = vunpack.c.h.b16 %v1988
        %v2185 = vunpack.c.l.b16 %v1989
        %v2186 = vunpack.c.l.b16 %v1990
        %v2187 = vunpack.c.h.b16 %v1990
        %v2188 = vunpack.c.l.b16 %v1991
        %v2189 = vunpack.c.l.b16 %v1992
        %v2190 = vunpack.c.h.b16 %v1992
        %v2191 = vunpack.c.l.b16 %v1993
        %v2192 = vunpack.c.l.b16 %v1994
        %v2193 = vunpack.c.h.b16 %v1994
        %v2194 = vunpack.c.l.b16 %v1995
        %v2195 = vunpack.c.l.b16 %v1996
        %v2196 = vunpack.c.h.b16 %v1996
        %v2197 = vunpack.c.l.b16 %v1997
        %v2198 = vunpack.c.l.b16 %v1998
        %v2199 = vunpack.c.h.b16 %v1998
        %v2200 = vunpack.c.l.b16 %v1999
        %v2201 = vunpack.c.l.b16 %v2000
        %v2202 = vunpack.c.h.b16 %v2000
        %v2203 = vunpack.c.l.b16 %v2001
        %v2204 = vpack.c.b16 %v2111, %v2108
        %v2205 = vpack.c.b16 %v2112, %v2109
        %v2206 = vpack.c.b16 %v2113, %v2110
        %v2207 = vpack.c.b16 %v2117, %v2114
        %v2208 = vpack.c.b16 %v2118, %v2115
        %v2209 = vpack.c.b16 %v2119, %v2116
        %v2210 = vpack.c.b16 %v2123, %v2120
        %v2211 = vpack.c.b16 %v2124, %v2121
        %v2212 = vpack.c.b16 %v2125, %v2122
        %v2213 = vpack.c.b16 %v2129, %v2126
        %v2214 = vpack.c.b16 %v2130, %v2127
        %v2215 = vpack.c.b16 %v2131, %v2128
        %v2216 = vpack.c.b16 %v2135, %v2132
        %v2217 = vpack.c.b16 %v2136, %v2133
        %v2218 = vpack.c.b16 %v2137, %v2134
        %v2219 = vpack.c.b16 %v2141, %v2138
        %v2220 = vpack.c.b16 %v2142, %v2139
        %v2221 = vpack.c.b16 %v2143, %v2140
        %v2222 = vpack.c.b16 %v2147, %v2144
        %v2223 = vpack.c.b16 %v2148, %v2145
        %v2224 = vpack.c.b16 %v2149, %v2146
        %v2225 = vpack.c.b16 %v2153, %v2150
        %v2226 = vpack.c.b16 %v2154, %v2151
        %v2227 = vpack.c.b16 %v2155, %v2152
        %v2228 = vpack.c.b16 %v2159, %v2156
        %v2229 = vpack.c.b16 %v2160, %v2157
        %v2230 = vpack.c.b16 %v2161, %v2158
        %v2231 = vpack.c.b16 %v2165, %v2162
        %v2232 = vpack.c.b16 %v2166, %v2163
        %v2233 = vpack.c.b16 %v2167, %v2164
        %v2234 = vpack.c.b16 %v2171, %v2168
        %v2235 = vpack.c.b16 %v2172, %v2169
        %v2236 = vpack.c.b16 %v2173, %v2170
        %v2237 = vpack.c.b16 %v2177, %v2174
        %v2238 = vpack.c.b16 %v2178, %v2175
        %v2239 = vpack.c.b16 %v2179, %v2176
        %v2240 = vpack.c.b16 %v2183, %v2180
        %v2241 = vpack.c.b16 %v2184, %v2181
        %v2242 = vpack.c.b16 %v2185, %v2182
        %v2243 = vpack.c.b16 %v2189, %v2186
        %v2244 = vpack.c.b16 %v2190, %v2187
        %v2245 = vpack.c.b16 %v2191, %v2188
        %v2246 = vpack.c.b16 %v2195, %v2192
        %v2247 = vpack.c.b16 %v2196, %v2193
        %v2248 = vpack.c.b16 %v2197, %v2194
        %v2249 = vpack.c.b16 %v2201, %v2198
        %v2250 = vpack.c.b16 %v2202, %v2199
        %v2251 = vpack.c.b16 %v2203, %v2200
        %v2320 = vunpack.c.l.b16 %v2002
        %v2321 = vunpack.c.h.b16 %v2002
        %v2322 = vunpack.c.l.b16 %v2003
        %v2323 = vunpack.c.h.b16 %v2003
        %v2324 = vunpack.c.l.b16 %v2004
        %v2325 = vunpack.c.h.b16 %v2004
        %v2326 = vunpack.c.l.b16 %v2005
        %v2327 = vunpack.c.h.b16 %v2005
        %v2328 = vunpack.c.l.b16 %v2006
        %v2329 = vunpack.c.h.b16 %v2006
        %v2330 = vunpack.c.l.b16 %v2007
        %v2331 = vunpack.c.h.b16 %v2007
        %v2332 = vunpack.c.l.b16 %v2008
        %v2333 = vunpack.c.h.b16 %v2008
        %v2334 = vunpack.c.l.b16 %v2009
        %v2335 = vunpack.c.h.b16 %v2009
        %v2336 = vunpack.c.l.b16 %v2010
        %v2337 = vunpack.c.h.b16 %v2010
        %v2338 = vunpack.c.l.b16 %v2011
        %v2339 = vunpack.c.h.b16 %v2011
        %v2340 = vunpack.c.l.b16 %v2012
        %v2341 = vunpack.c.h.b16 %v2012
        %v2342 = vunpack.c.l.b16 %v2013
        %v2343 = vunpack.c.h.b16 %v2013
        %v2344 = vunpack.c.l.b16 %v2014
        %v2345 = vunpack.c.h.b16 %v2014
        %v2346 = vunpack.c.l.b16 %v2015
        %v2347 = vunpack.c.h.b16 %v2015
        %v2348 = vunpack.c.l.b16 %v2016
        %v2349 = vunpack.c.h.b16 %v2016
        %v2350 = vunpack.c.l.b16 %v2017
        %v2351 = vunpack.c.h.b16 %v2017
        %v2352 = vunpack.c.l.b16 %v2018
        %v2353 = vunpack.c.h.b16 %v2018
        %v2354 = vunpack.c.l.b16 %v2019
        %v2355 = vunpack.c.h.b16 %v2019
        %v2356 = vunpack.c.l.b16 %v2020
        %v2357 = vunpack.c.h.b16 %v2020
        %v2358 = vunpack.c.l.b16 %v2021
        %v2359 = vunpack.c.h.b16 %v2021
        %v2360 = vunpack.c.l.b16 %v2022
        %v2361 = vunpack.c.h.b16 %v2022
        %v2362 = vunpack.c.l.b16 %v2023
        %v2363 = vunpack.c.h.b16 %v2023
        %v2364 = vunpack.c.l.b16 %v2024
        %v2365 = vunpack.c.h.b16 %v2024
        %v2366 = vunpack.c.l.b16 %v2025
        %v2367 = vunpack.c.h.b16 %v2025
        %v2368 = vunpack.c.l.b16 %v2026
        %v2369 = vunpack.c.h.b16 %v2026
        %v2370 = vunpack.c.l.b16 %v2027
        %v2371 = vunpack.c.h.b16 %v2027
        %v2372 = vunpack.c.l.b16 %v2028
        %v2373 = vunpack.c.h.b16 %v2028
        %v2374 = vunpack.c.l.b16 %v2029
        %v2375 = vunpack.c.h.b16 %v2029
        %v2376 = vunpack.c.l.b16 %v2030
        %v2377 = vunpack.c.h.b16 %v2030
        %v2378 = vunpack.c.l.b16 %v2031
        %v2379 = vunpack.c.h.b16 %v2031
        %v2380 = vunpack.c.l.b16 %v2032
        %v2381 = vunpack.c.h.b16 %v2032
        %v2382 = vunpack.c.l.b16 %v2033
        %v2383 = vunpack.c.h.b16 %v2033
        %v2384 = vunpack.c.l.b16 %v2034
        %v2385 = vunpack.c.h.b16 %v2034
        %v2386 = vunpack.c.l.b16 %v2035
        %v2387 = vunpack.c.h.b16 %v2035
        %v2388 = vunpack.c.l.b16 %v2036
        %v2389 = vunpack.c.h.b16 %v2036
        %v2390 = vunpack.c.l.b16 %v2037
        %v2391 = vunpack.c.h.b16 %v2037
        %v2392 = vpack.c.b16 %v2322, %v2320
        %v2393 = vpack.c.b16 %v2323, %v2321
        %v2394 = vpack.c.b16 %v2326, %v2324
        %v2395 = vpack.c.b16 %v2327, %v2325
        %v2396 = vpack.c.b16 %v2330, %v2328
        %v2397 = vpack.c.b16 %v2331, %v2329
        %v2398 = vpack.c.b16 %v2334, %v2332
        %v2399 = vpack.c.b16 %v2335, %v2333
        %v2400 = vpack.c.b16 %v2338, %v2336
        %v2401 = vpack.c.b16 %v2339, %v2337
        %v2402 = vpack.c.b16 %v2342, %v2340
        %v2403 = vpack.c.b16 %v2343, %v2341
        %v2404 = vpack.c.b16 %v2346, %v2344
        %v2405 = vpack.c.b16 %v2347, %v2345
        %v2406 = vpack.c.b16 %v2350, %v2348
        %v2407 = vpack.c.b16 %v2351, %v2349
        %v2408 = vpack.c.b16 %v2354, %v2352
        %v2409 = vpack.c.b16 %v2355, %v2353
        %v2410 = vpack.c.b16 %v2358, %v2356
        %v2411 = vpack.c.b16 %v2359, %v2357
        %v2412 = vpack.c.b16 %v2362, %v2360
        %v2413 = vpack.c.b16 %v2363, %v2361
        %v2414 = vpack.c.b16 %v2366, %v2364
        %v2415 = vpack.c.b16 %v2367, %v2365
        %v2416 = vpack.c.b16 %v2370, %v2368
        %v2417 = vpack.c.b16 %v2371, %v2369
        %v2418 = vpack.c.b16 %v2374, %v2372
        %v2419 = vpack.c.b16 %v2375, %v2373
        %v2420 = vpack.c.b16 %v2378, %v2376
        %v2421 = vpack.c.b16 %v2379, %v2377
        %v2422 = vpack.c.b16 %v2382, %v2380
        %v2423 = vpack.c.b16 %v2383, %v2381
        %v2424 = vpack.c.b16 %v2386, %v2384
        %v2425 = vpack.c.b16 %v2387, %v2385
        %v2426 = vpack.c.b16 %v2390, %v2388
        %v2427 = vpack.c.b16 %v2391, %v2389
        %v2465 = vsel %vm194, %v2206, 0
        %v2468 = vsel %vm194, %v2209, 0
        %v2471 = vsel %vm194, %v2212, 0
        %v2474 = vsel %vm194, %v2215, 0
        %v2477 = vsel %vm194, %v2218, 0
        %v2480 = vsel %vm194, %v2221, 0
        %v2483 = vsel %vm194, %v2224, 0
        %v2486 = vsel %vm194, %v2227, 0
        %v2489 = vsel %vm194, %v2230, 0
        %v2492 = vsel %vm194, %v2233, 0
        %v2495 = vsel %vm194, %v2236, 0
        %v2498 = vsel %vm194, %v2239, 0
        %v2501 = vsel %vm194, %v2242, 0
        %v2504 = vsel %vm194, %v2245, 0
        %v2507 = vsel %vm194, %v2248, 0
        %v2510 = vsel %vm194, %v2251, 0
        %2512 = vmatpush.bf16.msra.mxu0 %v2406
        %2513 = vmatpush.bf16.msra.mxu0 %v2404
        %2514 = vmatpush.bf16.msra.mxu0 %v2402
        %2515 = vmatpush.bf16.msra.mxu0 %v2400
        %2516 = vmatpush.bf16.msra.mxu0 %v2398
        %2517 = vmatpush.bf16.msra.mxu0 %v2396
        %2518 = vmatpush.bf16.msra.mxu0 %v2394
        %2519 = vmatpush.bf16.msra.mxu0 %v2392
        %2520 = vmatmul.bf16.gmra.mxu0 %v2204
        %v2521 = vpop.f32.mrf.mxu0
        %v2522 = vadd.f32 %v2040, %v2521
        %v2523 = vpop.f32.mrf.mxu0
        %v2524 = vadd.f32 %v2040, %v2523
        %2525 = vmatmul.bf16.gmra.mxu0 %v2207
        %v2526 = vpop.f32.mrf.mxu0
        %v2527 = vadd.f32 %v2040, %v2526
        %v2528 = vpop.f32.mrf.mxu0
        %v2529 = vadd.f32 %v2040, %v2528
        %2530 = vmatmul.bf16.gmra.mxu0 %v2210
        %v2531 = vpop.f32.mrf.mxu0
        %v2532 = vadd.f32 %v2040, %v2531
        %v2533 = vpop.f32.mrf.mxu0
        %v2534 = vadd.f32 %v2040, %v2533
        %2535 = vmatmul.bf16.gmra.mxu0 %v2213
        %v2536 = vpop.f32.mrf.mxu0
        %v2537 = vadd.f32 %v2040, %v2536
        %v2538 = vpop.f32.mrf.mxu0
        %v2539 = vadd.f32 %v2040, %v2538
        %2540 = vmatmul.bf16.gmra.mxu0 %v2216
        %v2541 = vpop.f32.mrf.mxu0
        %v2542 = vadd.f32 %v2040, %v2541
        %v2543 = vpop.f32.mrf.mxu0
        %v2544 = vadd.f32 %v2040, %v2543
        %2545 = vmatmul.bf16.gmra.mxu0 %v2219
        %v2546 = vpop.f32.mrf.mxu0
        %v2547 = vadd.f32 %v2040, %v2546
        %v2548 = vpop.f32.mrf.mxu0
        %v2549 = vadd.f32 %v2040, %v2548
        %2550 = vmatmul.bf16.gmra.mxu0 %v2222
        %v2551 = vpop.f32.mrf.mxu0
        %v2552 = vadd.f32 %v2040, %v2551
        %v2553 = vpop.f32.mrf.mxu0
        %v2554 = vadd.f32 %v2040, %v2553
        %2555 = vmatmul.bf16.gmra.mxu0 %v2225
        %v2556 = vpop.f32.mrf.mxu0
        %v2557 = vadd.f32 %v2040, %v2556
        %v2558 = vpop.f32.mrf.mxu0
        %v2559 = vadd.f32 %v2040, %v2558
        %2560 = vmatmul.bf16.gmra.mxu0 %v2228
        %v2561 = vpop.f32.mrf.mxu0
        %v2562 = vadd.f32 %v2040, %v2561
        %v2563 = vpop.f32.mrf.mxu0
        %v2564 = vadd.f32 %v2040, %v2563
        %2565 = vmatmul.bf16.gmra.mxu0 %v2231
        %v2566 = vpop.f32.mrf.mxu0
        %v2567 = vadd.f32 %v2040, %v2566
        %v2568 = vpop.f32.mrf.mxu0
        %v2569 = vadd.f32 %v2040, %v2568
        %2570 = vmatmul.bf16.gmra.mxu0 %v2234
        %v2571 = vpop.f32.mrf.mxu0
        %v2572 = vadd.f32 %v2040, %v2571
        %v2573 = vpop.f32.mrf.mxu0
        %v2574 = vadd.f32 %v2040, %v2573
        %2575 = vmatmul.bf16.gmra.mxu0 %v2237
        %v2576 = vpop.f32.mrf.mxu0
        %v2577 = vadd.f32 %v2040, %v2576
        %v2578 = vpop.f32.mrf.mxu0
        %v2579 = vadd.f32 %v2040, %v2578
        %2580 = vmatmul.bf16.gmra.mxu0 %v2240
        %v2581 = vpop.f32.mrf.mxu0
        %v2582 = vadd.f32 %v2040, %v2581
        %v2583 = vpop.f32.mrf.mxu0
        %v2584 = vadd.f32 %v2040, %v2583
        %2585 = vmatmul.bf16.gmra.mxu0 %v2243
        %v2586 = vpop.f32.mrf.mxu0
        %v2587 = vadd.f32 %v2040, %v2586
        %v2588 = vpop.f32.mrf.mxu0
        %v2589 = vadd.f32 %v2040, %v2588
        %2590 = vmatmul.bf16.gmra.mxu0 %v2246
        %v2591 = vpop.f32.mrf.mxu0
        %v2592 = vadd.f32 %v2040, %v2591
        %v2593 = vpop.f32.mrf.mxu0
        %v2594 = vadd.f32 %v2040, %v2593
        %2595 = vmatmul.bf16.gmra.mxu0 %v2249
        %v2596 = vpop.f32.mrf.mxu0
        %v2597 = vadd.f32 %v2040, %v2596
        %v2598 = vpop.f32.mrf.mxu0
        %v2599 = vadd.f32 %v2040, %v2598
        %2600 = vdwg.mxu0
        %2601 = vmatpush.bf16.msra.mxu0 %v2422
        %2602 = vmatpush.bf16.msra.mxu0 %v2420
        %2603 = vmatpush.bf16.msra.mxu0 %v2418
        %2604 = vmatpush.bf16.msra.mxu0 %v2416
        %2605 = vmatpush.bf16.msra.mxu0 %v2414
        %2606 = vmatpush.bf16.msra.mxu0 %v2412
        %2607 = vmatpush.bf16.msra.mxu0 %v2410
        %2608 = vmatpush.bf16.msra.mxu0 %v2408
        %2609 = vmatmul.bf16.gmra.mxu0 %v2205
        %v2610 = vpop.f32.mrf.mxu0
        %v2611 = vadd.f32 %v2522, %v2610
        %v2612 = vpop.f32.mrf.mxu0
        %v2613 = vadd.f32 %v2524, %v2612
        %2614 = vmatmul.bf16.gmra.mxu0 %v2208
        %v2615 = vpop.f32.mrf.mxu0
        %v2616 = vadd.f32 %v2527, %v2615
        %v2617 = vpop.f32.mrf.mxu0
        %v2618 = vadd.f32 %v2529, %v2617
        %2619 = vmatmul.bf16.gmra.mxu0 %v2211
        %v2620 = vpop.f32.mrf.mxu0
        %v2621 = vadd.f32 %v2532, %v2620
        %v2622 = vpop.f32.mrf.mxu0
        %v2623 = vadd.f32 %v2534, %v2622
        %2624 = vmatmul.bf16.gmra.mxu0 %v2214
        %v2625 = vpop.f32.mrf.mxu0
        %v2626 = vadd.f32 %v2537, %v2625
        %v2627 = vpop.f32.mrf.mxu0
        %v2628 = vadd.f32 %v2539, %v2627
        %2629 = vmatmul.bf16.gmra.mxu0 %v2217
        %v2630 = vpop.f32.mrf.mxu0
        %v2631 = vadd.f32 %v2542, %v2630
        %v2632 = vpop.f32.mrf.mxu0
        %v2633 = vadd.f32 %v2544, %v2632
        %2634 = vmatmul.bf16.gmra.mxu0 %v2220
        %v2635 = vpop.f32.mrf.mxu0
        %v2636 = vadd.f32 %v2547, %v2635
        %v2637 = vpop.f32.mrf.mxu0
        %v2638 = vadd.f32 %v2549, %v2637
        %2639 = vmatmul.bf16.gmra.mxu0 %v2223
        %v2640 = vpop.f32.mrf.mxu0
        %v2641 = vadd.f32 %v2552, %v2640
        %v2642 = vpop.f32.mrf.mxu0
        %v2643 = vadd.f32 %v2554, %v2642
        %2644 = vmatmul.bf16.gmra.mxu0 %v2226
        %v2645 = vpop.f32.mrf.mxu0
        %v2646 = vadd.f32 %v2557, %v2645
        %v2647 = vpop.f32.mrf.mxu0
        %v2648 = vadd.f32 %v2559, %v2647
        %2649 = vmatmul.bf16.gmra.mxu0 %v2229
        %v2650 = vpop.f32.mrf.mxu0
        %v2651 = vadd.f32 %v2562, %v2650
        %v2652 = vpop.f32.mrf.mxu0
        %v2653 = vadd.f32 %v2564, %v2652
        %2654 = vmatmul.bf16.gmra.mxu0 %v2232
        %v2655 = vpop.f32.mrf.mxu0
        %v2656 = vadd.f32 %v2567, %v2655
        %v2657 = vpop.f32.mrf.mxu0
        %v2658 = vadd.f32 %v2569, %v2657
        %2659 = vmatmul.bf16.gmra.mxu0 %v2235
        %v2660 = vpop.f32.mrf.mxu0
        %v2661 = vadd.f32 %v2572, %v2660
        %v2662 = vpop.f32.mrf.mxu0
        %v2663 = vadd.f32 %v2574, %v2662
        %2664 = vmatmul.bf16.gmra.mxu0 %v2238
        %v2665 = vpop.f32.mrf.mxu0
        %v2666 = vadd.f32 %v2577, %v2665
        %v2667 = vpop.f32.mrf.mxu0
        %v2668 = vadd.f32 %v2579, %v2667
        %2669 = vmatmul.bf16.gmra.mxu0 %v2241
        %v2670 = vpop.f32.mrf.mxu0
        %v2671 = vadd.f32 %v2582, %v2670
        %v2672 = vpop.f32.mrf.mxu0
        %v2673 = vadd.f32 %v2584, %v2672
        %2674 = vmatmul.bf16.gmra.mxu0 %v2244
        %v2675 = vpop.f32.mrf.mxu0
        %v2676 = vadd.f32 %v2587, %v2675
        %v2677 = vpop.f32.mrf.mxu0
        %v2678 = vadd.f32 %v2589, %v2677
        %2679 = vmatmul.bf16.gmra.mxu0 %v2247
        %v2680 = vpop.f32.mrf.mxu0
        %v2681 = vadd.f32 %v2592, %v2680
        %v2682 = vpop.f32.mrf.mxu0
        %v2683 = vadd.f32 %v2594, %v2682
        %2684 = vmatmul.bf16.gmra.mxu0 %v2250
        %v2685 = vpop.f32.mrf.mxu0
        %v2686 = vadd.f32 %v2597, %v2685
        %v2687 = vpop.f32.mrf.mxu0
        %v2688 = vadd.f32 %v2599, %v2687
        %2689 = vdwg.mxu0
        %2690 = vmatpush.bf16.msra.mxu0 0
        %2691 = vmatpush.bf16.msra.mxu0 0
        %2692 = vmatpush.bf16.msra.mxu0 0
        %2693 = vmatpush.bf16.msra.mxu0 0
        %2694 = vmatpush.bf16.msra.mxu0 0
        %2695 = vmatpush.bf16.msra.mxu0 0
        %2696 = vmatpush.bf16.msra.mxu0 %v2426
        %2697 = vmatpush.bf16.msra.mxu0 %v2424
        %2698 = vmatmul.bf16.gmra.mxu0 %v2465
        %v2699 = vpop.f32.mrf.mxu0
        %v2700 = vadd.f32 %v2611, %v2699
        %v2701 = vpop.f32.mrf.mxu0
        %v2702 = vadd.f32 %v2613, %v2701
        %2703 = vmatmul.bf16.gmra.mxu0 %v2468
        %v2704 = vpop.f32.mrf.mxu0
        %v2705 = vadd.f32 %v2616, %v2704
        %v2706 = vpop.f32.mrf.mxu0
        %v2707 = vadd.f32 %v2618, %v2706
        %2708 = vmatmul.bf16.gmra.mxu0 %v2471
        %v2709 = vpop.f32.mrf.mxu0
        %v2710 = vadd.f32 %v2621, %v2709
        %v2711 = vpop.f32.mrf.mxu0
        %v2712 = vadd.f32 %v2623, %v2711
        %2713 = vmatmul.bf16.gmra.mxu0 %v2474
        %v2714 = vpop.f32.mrf.mxu0
        %v2715 = vadd.f32 %v2626, %v2714
        %v2716 = vpop.f32.mrf.mxu0
        %v2717 = vadd.f32 %v2628, %v2716
        %2718 = vmatmul.bf16.gmra.mxu0 %v2477
        %v2719 = vpop.f32.mrf.mxu0
        %v2720 = vadd.f32 %v2631, %v2719
        %v2721 = vpop.f32.mrf.mxu0
        %v2722 = vadd.f32 %v2633, %v2721
        %2723 = vmatmul.bf16.gmra.mxu0 %v2480
        %v2724 = vpop.f32.mrf.mxu0
        %v2725 = vadd.f32 %v2636, %v2724
        %v2726 = vpop.f32.mrf.mxu0
        %v2727 = vadd.f32 %v2638, %v2726
        %2728 = vmatmul.bf16.gmra.mxu0 %v2483
        %v2729 = vpop.f32.mrf.mxu0
        %v2730 = vadd.f32 %v2641, %v2729
        %v2731 = vpop.f32.mrf.mxu0
        %v2732 = vadd.f32 %v2643, %v2731
        %2733 = vmatmul.bf16.gmra.mxu0 %v2486
        %v2734 = vpop.f32.mrf.mxu0
        %v2735 = vadd.f32 %v2646, %v2734
        %v2736 = vpop.f32.mrf.mxu0
        %v2737 = vadd.f32 %v2648, %v2736
        %2738 = vmatmul.bf16.gmra.mxu0 %v2489
        %v2739 = vpop.f32.mrf.mxu0
        %v2740 = vadd.f32 %v2651, %v2739
        %v2741 = vpop.f32.mrf.mxu0
        %v2742 = vadd.f32 %v2653, %v2741
        %2743 = vmatmul.bf16.gmra.mxu0 %v2492
        %v2744 = vpop.f32.mrf.mxu0
        %v2745 = vadd.f32 %v2656, %v2744
        %v2746 = vpop.f32.mrf.mxu0
        %v2747 = vadd.f32 %v2658, %v2746
        %2748 = vmatmul.bf16.gmra.mxu0 %v2495
        %v2749 = vpop.f32.mrf.mxu0
        %v2750 = vadd.f32 %v2661, %v2749
        %v2751 = vpop.f32.mrf.mxu0
        %v2752 = vadd.f32 %v2663, %v2751
        %2753 = vmatmul.bf16.gmra.mxu0 %v2498
        %v2754 = vpop.f32.mrf.mxu0
        %v2755 = vadd.f32 %v2666, %v2754
        %v2756 = vpop.f32.mrf.mxu0
        %v2757 = vadd.f32 %v2668, %v2756
        %2758 = vmatmul.bf16.gmra.mxu0 %v2501
        %v2759 = vpop.f32.mrf.mxu0
        %v2760 = vadd.f32 %v2671, %v2759
        %v2761 = vpop.f32.mrf.mxu0
        %v2762 = vadd.f32 %v2673, %v2761
        %2763 = vmatmul.bf16.gmra.mxu0 %v2504
        %v2764 = vpop.f32.mrf.mxu0
        %v2765 = vadd.f32 %v2676, %v2764
        %v2766 = vpop.f32.mrf.mxu0
        %v2767 = vadd.f32 %v2678, %v2766
        %2768 = vmatmul.bf16.gmra.mxu0 %v2507
        %v2769 = vpop.f32.mrf.mxu0
        %v2770 = vadd.f32 %v2681, %v2769
        %v2771 = vpop.f32.mrf.mxu0
        %v2772 = vadd.f32 %v2683, %v2771
        %2773 = vmatmul.bf16.gmra.mxu0 %v2510
        %v2774 = vpop.f32.mrf.mxu0
        %v2775 = vadd.f32 %v2686, %v2774
        %v2776 = vpop.f32.mrf.mxu0
        %v2777 = vadd.f32 %v2688, %v2776
        %2778 = vdwg.mxu0
        %2779 = vmatpush.bf16.msra.mxu0 %v2407
        %2780 = vmatpush.bf16.msra.mxu0 %v2405
        %2781 = vmatpush.bf16.msra.mxu0 %v2403
        %2782 = vmatpush.bf16.msra.mxu0 %v2401
        %2783 = vmatpush.bf16.msra.mxu0 %v2399
        %2784 = vmatpush.bf16.msra.mxu0 %v2397
        %2785 = vmatpush.bf16.msra.mxu0 %v2395
        %2786 = vmatpush.bf16.msra.mxu0 %v2393
        %2787 = vmatmul.bf16.gmra.mxu0 %v2204
        %v2788 = vpop.f32.mrf.mxu0
        %v2789 = vadd.f32 %v2041, %v2788
        %v2790 = vpop.f32.mrf.mxu0
        %v2791 = vadd.f32 %v2041, %v2790
        %2792 = vmatmul.bf16.gmra.mxu0 %v2207
        %v2793 = vpop.f32.mrf.mxu0
        %v2794 = vadd.f32 %v2041, %v2793
        %v2795 = vpop.f32.mrf.mxu0
        %v2796 = vadd.f32 %v2041, %v2795
        %2797 = vmatmul.bf16.gmra.mxu0 %v2210
        %v2798 = vpop.f32.mrf.mxu0
        %v2799 = vadd.f32 %v2041, %v2798
        %v2800 = vpop.f32.mrf.mxu0
        %v2801 = vadd.f32 %v2041, %v2800
        %2802 = vmatmul.bf16.gmra.mxu0 %v2213
        %v2803 = vpop.f32.mrf.mxu0
        %v2804 = vadd.f32 %v2041, %v2803
        %v2805 = vpop.f32.mrf.mxu0
        %v2806 = vadd.f32 %v2041, %v2805
        %2807 = vmatmul.bf16.gmra.mxu0 %v2216
        %v2808 = vpop.f32.mrf.mxu0
        %v2809 = vadd.f32 %v2041, %v2808
        %v2810 = vpop.f32.mrf.mxu0
        %v2811 = vadd.f32 %v2041, %v2810
        %2812 = vmatmul.bf16.gmra.mxu0 %v2219
        %v2813 = vpop.f32.mrf.mxu0
        %v2814 = vadd.f32 %v2041, %v2813
        %v2815 = vpop.f32.mrf.mxu0
        %v2816 = vadd.f32 %v2041, %v2815
        %2817 = vmatmul.bf16.gmra.mxu0 %v2222
        %v2818 = vpop.f32.mrf.mxu0
        %v2819 = vadd.f32 %v2041, %v2818
        %v2820 = vpop.f32.mrf.mxu0
        %v2821 = vadd.f32 %v2041, %v2820
        %2822 = vmatmul.bf16.gmra.mxu0 %v2225
        %v2823 = vpop.f32.mrf.mxu0
        %v2824 = vadd.f32 %v2041, %v2823
        %v2825 = vpop.f32.mrf.mxu0
        %v2826 = vadd.f32 %v2041, %v2825
        %2827 = vmatmul.bf16.gmra.mxu0 %v2228
        %v2828 = vpop.f32.mrf.mxu0
        %v2829 = vadd.f32 %v2041, %v2828
        %v2830 = vpop.f32.mrf.mxu0
        %v2831 = vadd.f32 %v2041, %v2830
        %2832 = vmatmul.bf16.gmra.mxu0 %v2231
        %v2833 = vpop.f32.mrf.mxu0
        %v2834 = vadd.f32 %v2041, %v2833
        %v2835 = vpop.f32.mrf.mxu0
        %v2836 = vadd.f32 %v2041, %v2835
        %2837 = vmatmul.bf16.gmra.mxu0 %v2234
        %v2838 = vpop.f32.mrf.mxu0
        %v2839 = vadd.f32 %v2041, %v2838
        %v2840 = vpop.f32.mrf.mxu0
        %v2841 = vadd.f32 %v2041, %v2840
        %2842 = vmatmul.bf16.gmra.mxu0 %v2237
        %v2843 = vpop.f32.mrf.mxu0
        %v2844 = vadd.f32 %v2041, %v2843
        %v2845 = vpop.f32.mrf.mxu0
        %v2846 = vadd.f32 %v2041, %v2845
        %2847 = vmatmul.bf16.gmra.mxu0 %v2240
        %v2848 = vpop.f32.mrf.mxu0
        %v2849 = vadd.f32 %v2041, %v2848
        %v2850 = vpop.f32.mrf.mxu0
        %v2851 = vadd.f32 %v2041, %v2850
        %2852 = vmatmul.bf16.gmra.mxu0 %v2243
        %v2853 = vpop.f32.mrf.mxu0
        %v2854 = vadd.f32 %v2041, %v2853
        %v2855 = vpop.f32.mrf.mxu0
        %v2856 = vadd.f32 %v2041, %v2855
        %2857 = vmatmul.bf16.gmra.mxu0 %v2246
        %v2858 = vpop.f32.mrf.mxu0
        %v2859 = vadd.f32 %v2041, %v2858
        %v2860 = vpop.f32.mrf.mxu0
        %v2861 = vadd.f32 %v2041, %v2860
        %2862 = vmatmul.bf16.gmra.mxu0 %v2249
        %v2863 = vpop.f32.mrf.mxu0
        %v2864 = vadd.f32 %v2041, %v2863
        %v2865 = vpop.f32.mrf.mxu0
        %v2866 = vadd.f32 %v2041, %v2865
        %2867 = vdwg.mxu0
        %2868 = vmatpush.bf16.msra.mxu0 %v2423
        %2869 = vmatpush.bf16.msra.mxu0 %v2421
        %2870 = vmatpush.bf16.msra.mxu0 %v2419
        %2871 = vmatpush.bf16.msra.mxu0 %v2417
        %2872 = vmatpush.bf16.msra.mxu0 %v2415
        %2873 = vmatpush.bf16.msra.mxu0 %v2413
        %2874 = vmatpush.bf16.msra.mxu0 %v2411
        %2875 = vmatpush.bf16.msra.mxu0 %v2409
        %2876 = vmatmul.bf16.gmra.mxu0 %v2205
        %v2877 = vpop.f32.mrf.mxu0
        %v2878 = vadd.f32 %v2789, %v2877
        %v2879 = vpop.f32.mrf.mxu0
        %v2880 = vadd.f32 %v2791, %v2879
        %2881 = vmatmul.bf16.gmra.mxu0 %v2208
        %v2882 = vpop.f32.mrf.mxu0
        %v2883 = vadd.f32 %v2794, %v2882
        %v2884 = vpop.f32.mrf.mxu0
        %v2885 = vadd.f32 %v2796, %v2884
        %2886 = vmatmul.bf16.gmra.mxu0 %v2211
        %v2887 = vpop.f32.mrf.mxu0
        %v2888 = vadd.f32 %v2799, %v2887
        %v2889 = vpop.f32.mrf.mxu0
        %v2890 = vadd.f32 %v2801, %v2889
        %2891 = vmatmul.bf16.gmra.mxu0 %v2214
        %v2892 = vpop.f32.mrf.mxu0
        %v2893 = vadd.f32 %v2804, %v2892
        %v2894 = vpop.f32.mrf.mxu0
        %v2895 = vadd.f32 %v2806, %v2894
        %2896 = vmatmul.bf16.gmra.mxu0 %v2217
        %v2897 = vpop.f32.mrf.mxu0
        %v2898 = vadd.f32 %v2809, %v2897
        %v2899 = vpop.f32.mrf.mxu0
        %v2900 = vadd.f32 %v2811, %v2899
        %2901 = vmatmul.bf16.gmra.mxu0 %v2220
        %v2902 = vpop.f32.mrf.mxu0
        %v2903 = vadd.f32 %v2814, %v2902
        %v2904 = vpop.f32.mrf.mxu0
        %v2905 = vadd.f32 %v2816, %v2904
        %2906 = vmatmul.bf16.gmra.mxu0 %v2223
        %v2907 = vpop.f32.mrf.mxu0
        %v2908 = vadd.f32 %v2819, %v2907
        %v2909 = vpop.f32.mrf.mxu0
        %v2910 = vadd.f32 %v2821, %v2909
        %2911 = vmatmul.bf16.gmra.mxu0 %v2226
        %v2912 = vpop.f32.mrf.mxu0
        %v2913 = vadd.f32 %v2824, %v2912
        %v2914 = vpop.f32.mrf.mxu0
        %v2915 = vadd.f32 %v2826, %v2914
        %2916 = vmatmul.bf16.gmra.mxu0 %v2229
        %v2917 = vpop.f32.mrf.mxu0
        %v2918 = vadd.f32 %v2829, %v2917
        %v2919 = vpop.f32.mrf.mxu0
        %v2920 = vadd.f32 %v2831, %v2919
        %2921 = vmatmul.bf16.gmra.mxu0 %v2232
        %v2922 = vpop.f32.mrf.mxu0
        %v2923 = vadd.f32 %v2834, %v2922
        %v2924 = vpop.f32.mrf.mxu0
        %v2925 = vadd.f32 %v2836, %v2924
        %2926 = vmatmul.bf16.gmra.mxu0 %v2235
        %v2927 = vpop.f32.mrf.mxu0
        %v2928 = vadd.f32 %v2839, %v2927
        %v2929 = vpop.f32.mrf.mxu0
        %v2930 = vadd.f32 %v2841, %v2929
        %2931 = vmatmul.bf16.gmra.mxu0 %v2238
        %v2932 = vpop.f32.mrf.mxu0
        %v2933 = vadd.f32 %v2844, %v2932
        %v2934 = vpop.f32.mrf.mxu0
        %v2935 = vadd.f32 %v2846, %v2934
        %2936 = vmatmul.bf16.gmra.mxu0 %v2241
        %v2937 = vpop.f32.mrf.mxu0
        %v2938 = vadd.f32 %v2849, %v2937
        %v2939 = vpop.f32.mrf.mxu0
        %v2940 = vadd.f32 %v2851, %v2939
        %2941 = vmatmul.bf16.gmra.mxu0 %v2244
        %v2942 = vpop.f32.mrf.mxu0
        %v2943 = vadd.f32 %v2854, %v2942
        %v2944 = vpop.f32.mrf.mxu0
        %v2945 = vadd.f32 %v2856, %v2944
        %2946 = vmatmul.bf16.gmra.mxu0 %v2247
        %v2947 = vpop.f32.mrf.mxu0
        %v2948 = vadd.f32 %v2859, %v2947
        %v2949 = vpop.f32.mrf.mxu0
        %v2950 = vadd.f32 %v2861, %v2949
        %2951 = vmatmul.bf16.gmra.mxu0 %v2250
        %v2952 = vpop.f32.mrf.mxu0
        %v2953 = vadd.f32 %v2864, %v2952
        %v2954 = vpop.f32.mrf.mxu0
        %v2955 = vadd.f32 %v2866, %v2954
        %2956 = vdwg.mxu0
        %2957 = vmatpush.bf16.msra.mxu0 0
        %2958 = vmatpush.bf16.msra.mxu0 0
        %2959 = vmatpush.bf16.msra.mxu0 0
        %2960 = vmatpush.bf16.msra.mxu0 0
        %2961 = vmatpush.bf16.msra.mxu0 0
        %2962 = vmatpush.bf16.msra.mxu0 0
        %2963 = vmatpush.bf16.msra.mxu0 %v2427
        %2964 = vmatpush.bf16.msra.mxu0 %v2425
        %2965 = vmatmul.bf16.gmra.mxu0 %v2465
        %v2966 = vpop.f32.mrf.mxu0
        %v2967 = vadd.f32 %v2878, %v2966
        %v2968 = vpop.f32.mrf.mxu0
        %v2969 = vadd.f32 %v2880, %v2968
        %2970 = vmatmul.bf16.gmra.mxu0 %v2468
        %v2971 = vpop.f32.mrf.mxu0
        %v2972 = vadd.f32 %v2883, %v2971
        %v2973 = vpop.f32.mrf.mxu0
        %v2974 = vadd.f32 %v2885, %v2973
        %2975 = vmatmul.bf16.gmra.mxu0 %v2471
        %v2976 = vpop.f32.mrf.mxu0
        %v2977 = vadd.f32 %v2888, %v2976
        %v2978 = vpop.f32.mrf.mxu0
        %v2979 = vadd.f32 %v2890, %v2978
        %2980 = vmatmul.bf16.gmra.mxu0 %v2474
        %v2981 = vpop.f32.mrf.mxu0
        %v2982 = vadd.f32 %v2893, %v2981
        %v2983 = vpop.f32.mrf.mxu0
        %v2984 = vadd.f32 %v2895, %v2983
        %2985 = vmatmul.bf16.gmra.mxu0 %v2477
        %v2986 = vpop.f32.mrf.mxu0
        %v2987 = vadd.f32 %v2898, %v2986
        %v2988 = vpop.f32.mrf.mxu0
        %v2989 = vadd.f32 %v2900, %v2988
        %2990 = vmatmul.bf16.gmra.mxu0 %v2480
        %v2991 = vpop.f32.mrf.mxu0
        %v2992 = vadd.f32 %v2903, %v2991
        %v2993 = vpop.f32.mrf.mxu0
        %v2994 = vadd.f32 %v2905, %v2993
        %2995 = vmatmul.bf16.gmra.mxu0 %v2483
        %v2996 = vpop.f32.mrf.mxu0
        %v2997 = vadd.f32 %v2908, %v2996
        %v2998 = vpop.f32.mrf.mxu0
        %v2999 = vadd.f32 %v2910, %v2998
        %3000 = vmatmul.bf16.gmra.mxu0 %v2486
        %v3001 = vpop.f32.mrf.mxu0
        %v3002 = vadd.f32 %v2913, %v3001
        %v3003 = vpop.f32.mrf.mxu0
        %v3004 = vadd.f32 %v2915, %v3003
        %3005 = vmatmul.bf16.gmra.mxu0 %v2489
        %v3006 = vpop.f32.mrf.mxu0
        %v3007 = vadd.f32 %v2918, %v3006
        %v3008 = vpop.f32.mrf.mxu0
        %v3009 = vadd.f32 %v2920, %v3008
        %3010 = vmatmul.bf16.gmra.mxu0 %v2492
        %v3011 = vpop.f32.mrf.mxu0
        %v3012 = vadd.f32 %v2923, %v3011
        %v3013 = vpop.f32.mrf.mxu0
        %v3014 = vadd.f32 %v2925, %v3013
        %3015 = vmatmul.bf16.gmra.mxu0 %v2495
        %v3016 = vpop.f32.mrf.mxu0
        %v3017 = vadd.f32 %v2928, %v3016
        %v3018 = vpop.f32.mrf.mxu0
        %v3019 = vadd.f32 %v2930, %v3018
        %3020 = vmatmul.bf16.gmra.mxu0 %v2498
        %v3021 = vpop.f32.mrf.mxu0
        %v3022 = vadd.f32 %v2933, %v3021
        %v3023 = vpop.f32.mrf.mxu0
        %v3024 = vadd.f32 %v2935, %v3023
        %3025 = vmatmul.bf16.gmra.mxu0 %v2501
        %v3026 = vpop.f32.mrf.mxu0
        %v3027 = vadd.f32 %v2938, %v3026
        %v3028 = vpop.f32.mrf.mxu0
        %v3029 = vadd.f32 %v2940, %v3028
        %3030 = vmatmul.bf16.gmra.mxu0 %v2504
        %v3031 = vpop.f32.mrf.mxu0
        %v3032 = vadd.f32 %v2943, %v3031
        %v3033 = vpop.f32.mrf.mxu0
        %v3034 = vadd.f32 %v2945, %v3033
        %3035 = vmatmul.bf16.gmra.mxu0 %v2507
        %v3036 = vpop.f32.mrf.mxu0
        %v3037 = vadd.f32 %v2948, %v3036
        %v3038 = vpop.f32.mrf.mxu0
        %v3039 = vadd.f32 %v2950, %v3038
        %3040 = vmatmul.bf16.gmra.mxu0 %v2510
        %v3041 = vpop.f32.mrf.mxu0
        %v3042 = vadd.f32 %v2953, %v3041
        %v3043 = vpop.f32.mrf.mxu0
        %v3044 = vadd.f32 %v2955, %v3043
        %3045 = vdwg.mxu0
        %3046 = vst [vmem:[%s192] sm:$0xff] %v2700
        %3047 = vst [vmem:[%s192 + $0x8] sm:$0xff] %v2967
        %3048 = vst [vmem:[%s192 + $0x10] sm:$0xff] %v2702
        %3049 = vst [vmem:[%s192 + $0x18] sm:$0xff] %v2969
        %3050 = vst [vmem:[%s192 + $0x20] sm:$0xff] %v2705
        %3051 = vst [vmem:[%s192 + $0x28] sm:$0xff] %v2972
        %3052 = vst [vmem:[%s192 + $0x30] sm:$0xff] %v2707
        %3053 = vst [vmem:[%s192 + $0x38] sm:$0xff] %v2974
        %3054 = vst [vmem:[%s192 + $0x40] sm:$0xff] %v2710
        %3055 = vst [vmem:[%s192 + $0x48] sm:$0xff] %v2977
        %3056 = vst [vmem:[%s192 + $0x50] sm:$0xff] %v2712
        %3057 = vst [vmem:[%s192 + $0x58] sm:$0xff] %v2979
        %3058 = vst [vmem:[%s192 + $0x60] sm:$0xff] %v2715
        %3059 = vst [vmem:[%s192 + $0x68] sm:$0xff] %v2982
        %3060 = vst [vmem:[%s192 + $0x70] sm:$0xff] %v2717
        %3061 = vst [vmem:[%s192 + $0x78] sm:$0xff] %v2984
        %3062 = vst [vmem:[%s192 + $0x80] sm:$0xff] %v2720
        %3063 = vst [vmem:[%s192 + $0x88] sm:$0xff] %v2987
        %3064 = vst [vmem:[%s192 + $0x90] sm:$0xff] %v2722
        %3065 = vst [vmem:[%s192 + $0x98] sm:$0xff] %v2989
        %3066 = vst [vmem:[%s192 + $0xa0] sm:$0xff] %v2725
        %3067 = vst [vmem:[%s192 + $0xa8] sm:$0xff] %v2992
        %3068 = vst [vmem:[%s192 + $0xb0] sm:$0xff] %v2727
        %3069 = vst [vmem:[%s192 + $0xb8] sm:$0xff] %v2994
        %3070 = vst [vmem:[%s192 + $0xc0] sm:$0xff] %v2730
        %3071 = vst [vmem:[%s192 + $0xc8] sm:$0xff] %v2997
        %3072 = vst [vmem:[%s192 + $0xd0] sm:$0xff] %v2732
        %3073 = vst [vmem:[%s192 + $0xd8] sm:$0xff] %v2999
        %3074 = vst [vmem:[%s192 + $0xe0] sm:$0xff] %v2735
        %3075 = vst [vmem:[%s192 + $0xe8] sm:$0xff] %v3002
        %3076 = vst [vmem:[%s192 + $0xf0] sm:$0xff] %v2737
        %3077 = vst [vmem:[%s192 + $0xf8] sm:$0xff] %v3004
        %3078 = vst [vmem:[%s192 + $0x100] sm:$0xff] %v2740
        %3079 = vst [vmem:[%s192 + $0x108] sm:$0xff] %v3007
        %3080 = vst [vmem:[%s192 + $0x110] sm:$0xff] %v2742
        %3081 = vst [vmem:[%s192 + $0x118] sm:$0xff] %v3009
        %3082 = vst [vmem:[%s192 + $0x120] sm:$0xff] %v2745
        %3083 = vst [vmem:[%s192 + $0x128] sm:$0xff] %v3012
        %3084 = vst [vmem:[%s192 + $0x130] sm:$0xff] %v2747
        %3085 = vst [vmem:[%s192 + $0x138] sm:$0xff] %v3014
        %3086 = vst [vmem:[%s192 + $0x140] sm:$0xff] %v2750
        %3087 = vst [vmem:[%s192 + $0x148] sm:$0xff] %v3017
        %3088 = vst [vmem:[%s192 + $0x150] sm:$0xff] %v2752
        %3089 = vst [vmem:[%s192 + $0x158] sm:$0xff] %v3019
        %3090 = vst [vmem:[%s192 + $0x160] sm:$0xff] %v2755
        %3091 = vst [vmem:[%s192 + $0x168] sm:$0xff] %v3022
        %3092 = vst [vmem:[%s192 + $0x170] sm:$0xff] %v2757
        %3093 = vst [vmem:[%s192 + $0x178] sm:$0xff] %v3024
        %3094 = vst [vmem:[%s192 + $0x180] sm:$0xff] %v2760
        %3095 = vst [vmem:[%s192 + $0x188] sm:$0xff] %v3027
        %3096 = vst [vmem:[%s192 + $0x190] sm:$0xff] %v2762
        %3097 = vst [vmem:[%s192 + $0x198] sm:$0xff] %v3029
        %3098 = vst [vmem:[%s192 + $0x1a0] sm:$0xff] %v2765
        %3099 = vst [vmem:[%s192 + $0x1a8] sm:$0xff] %v3032
        %3100 = vst [vmem:[%s192 + $0x1b0] sm:$0xff] %v2767
        %3101 = vst [vmem:[%s192 + $0x1b8] sm:$0xff] %v3034
        %3102 = vst [vmem:[%s192 + $0x1c0] sm:$0xff] %v2770
        %3103 = vst [vmem:[%s192 + $0x1c8] sm:$0xff] %v3037
        %3104 = vst [vmem:[%s192 + $0x1d0] sm:$0xff] %v2772
        %3105 = vst [vmem:[%s192 + $0x1d8] sm:$0xff] %v3039
        %3106 = vst [vmem:[%s192 + $0x1e0] sm:$0xff] %v2775
        %3107 = vst [vmem:[%s192 + $0x1e8] sm:$0xff] %v3042
        %3108 = vst [vmem:[%s192 + $0x1f0] sm:$0xff] %v2777
        %3109 = vst [vmem:[%s192 + $0x1f8] sm:$0xff] %v3044
        %p3110 = scmp.lt.s32.totalorder %s17, 1
        %s3111 = scalar_select %p3110, %s17, 1
        %s3112 = smul.addr %s3111, 64
        %s3113 = smul.addr %s3112, 8
        %s3114 = scalar_lea.vmem %s3, %s3113
        // Predicated region
        $region37: #{rsa_block_forward.2} parent=31 // pred_check
          %p3115 = pneg %p103
        $region38: #{rsa_block_forward.2} parent=31 // pred_check_branch
          %3117 = sbr.rel (%p3115) target = $region40
        $region39: #{rsa_block_forward.2} parent=31 // pred_region
          _
        $region40: #{rsa_block_forward.2} parent=31 // pred_fallthru
          _
      $region32: #{rsa_block_forward.2} parent=5 // pred_fallthru
        _
      %p3118 = scmp.le.s32.totalorder 2, %s12
      // Predicated region
      $region41: #{rsa_block_forward.2} parent=5 // pred_check
        %p3119 = pneg %p3118
      $region42: #{rsa_block_forward.2} parent=5 // pred_check_branch
        %3121 = sbr.rel (%p3119) target = $region44
      $region43: #{rsa_block_forward.2} parent=5 // pred_region
        %s3122 = ssub.s32 %s12, 2
        // Predicated region
        $region45: #{rsa_block_forward.2} parent=43 // pred_check
          %p3123 = pneg %p109
        $region46: #{rsa_block_forward.2} parent=43 // pred_check_branch
          %3125 = sbr.rel (%p3123) target = $region48
        $region47: #{rsa_block_forward.2} parent=43 // pred_region
          %p3126 = scmp.lt.s32.totalorder %s18, 1
          %s3127 = scalar_select %p3126, %s18, 1
          %s3128 = smul.addr %s3127, 64
          %s3129 = smul.addr %s3128, 8
          %s3130 = scalar_lea.vmem %s3, %s3129
        $region48: #{rsa_block_forward.2} parent=43 // pred_fallthru
          _
      $region44: #{rsa_block_forward.2} parent=5 // pred_fallthru
        _
    $region6: #{rsa_block_forward.2} parent=1 // loop_footer
      %s16 = sadd.s32 1, %s12
    $region7: #{rsa_block_forward.2} parent=1 // loop_footer_branch
      %11 = sbr.rel target = $region3
    $region8: #{rsa_block_forward.2} parent=1 // loop_exit
      _
    %3131 = vsyncpa [#allocation5], 1
    %s3132 = scalar_lea.sflag [#allocation5], 1
    %3133 = vsyncpa %s3132, 1

// kernel: rsa_block_forward.3
$region0: #{rsa_block_forward.3}
  #allocation0 [shape = 'u32[]', space=smem, size = 0x4, offset = 0x4, fixed_abs, tag = 'smem constant byte address 0x4 - core index']
  #allocation1 [shape = 'u32[72,128]{1,0:T(1,128)}', space=vmem, size = 0x9000, scoped, tag = 'internal scratch']
  #allocation2 [shape = 'f32[18,18,32]{2,1,0:T(8,128)}', space=vmem, size = 0x36000, scoped, tag = 'scratch operand']
  %s0 = inlined_call_operand.vmem [shape: bf16[2,256,288], index: 0, kind: input, shape index: {}]
  %s1 = inlined_call_operand.vmem [shape: bf16[288,32], index: 1, kind: input, shape index: {}]
  %s2 = inlined_call_operand.vmem [shape: f32[1,32], index: 2, kind: input, shape index: {}]
  %s3 = inlined_call_operand.vmem [shape: bf16[9,32,32], index: 3, kind: input, shape index: {}]
  %s4 = inlined_call_operand.vmem [shape: f32[1,32], index: 4, kind: input, shape index: {}]
  %s5 = inlined_call_operand.vmem [shape: f32[2,256,32], index: 5, kind: input, shape index: {}]
  %s6 = inlined_call_operand.hbm [shape: f32[2,256,32], index: 6, kind: output, shape index: {}]
  %s7 = sld [smem:[#allocation0]]
  $region57: #{rsa_block_forward.3} parent=0
    _
  %s9 = ssub.s32 1, %s7
  %s10 = scalar_select 0, %s9, %s7
  $region1: #{rsa_block_forward.3} parent=0
    #allocation3 [shape = 'u8[262144]{0}', space=vmem, size = 0x40000, scoped, tag = 'output window, operand 0']
    #allocation4 [shape = 's32[2]{0}', space=sflag, size = 0x8, scoped, tag = 'scoped memory for rsa_block_forward.3']
    %11 = vsyncpa [#allocation4], 0
    %s12 = scalar_lea.sflag [#allocation4], 1
    %13 = vsyncpa %s12, 0
    loop: start=0, step=1, limit=4
    $region2: #{rsa_block_forward.3} parent=1 // loop_pre_header
      _
    $region3: #{rsa_block_forward.3} parent=1 // loop_header
      %s15 = sphi 0, %s19
      %p16 = scmp.ge.s32.totalorder %s15, 4
      %s25 = sphi 0, %s27
      %s28 = sphi 0, %s25
      %s29 = sphi 0, %s28
      %s45 = sphi 0, %s29
      %s49 = sphi 0, %s49
      %s51 = sphi 0, %s49
      %s52 = sphi 0, %s51
      %s66 = sphi 0, %s52
      %s70 = sphi 0, %s70
      %s72 = sphi 0, %s70
      %s73 = sphi 0, %s72
      %s87 = sphi 0, %s73
      %s91 = sphi 0, %s91
      %s93 = sphi 0, %s91
      %s94 = sphi 0, %s93
      %s108 = sphi 0, %s94
      %s112 = sphi 0, %s112
      %s114 = sphi 0, %s112
      %s115 = sphi 0, %s114
      %s129 = sphi 0, %s115
      %s135 = sphi 0, %s137
      %s138 = sphi 0, %s135
      %s139 = sphi 0, %s138
      %s155 = sphi 0, %s139
      %s161 = sphi 0, %s163
      %s164 = sphi 0, %s161
      %s165 = sphi 0, %s164
      %s181 = sphi 0, %s165
    $region4: #{rsa_block_forward.3} parent=1 // loop_header_branch
      %18 = sbr.rel (%p16) target = $region8
    $region5: #{rsa_block_forward.3} parent=1 // loop_body
      %s20 = ssub.s32 %s15, 1
      %s21 = ssub.s32 %s15, 2
      %s22 = sadd.s32 %s15, 1
      %s23 = ssub.s32 %s15, %s22
      %p24 = scmp.eq.s32.totalorder %s23, 0
      %s26 = sadd.s32 %s25, 1
      %s27 = scalar_select %p24, %s25, %s26
      %p30 = pneg %p24
      %p31 = scmp.eq.s32.totalorder %s15, 1
      %p32 = por %p30, %p31
      %p33 = scmp.ne.s32.totalorder %s25, %s28
      %p34 = scmp.eq.s32.totalorder %s15, 0
      %p35 = por %p33, %p34
      %p36 = scmp.ne.s32.totalorder %s25, %s28
      %p37 = scmp.eq.s32.totalorder %s20, 1
      %p38 = por %p36, %p37
      %p39 = scmp.ne.s32.totalorder %s28, %s29
      %p40 = scmp.eq.s32.totalorder %s20, 0
      %p41 = por %p39, %p40
      %p42 = scmp.ne.s32.totalorder %s28, %s29
      %p43 = scmp.eq.s32.totalorder %s21, 1
      %p44 = por %p42, %p43
      %p46 = scmp.ne.s32.totalorder %s29, %s45
      %p47 = scmp.eq.s32.totalorder %s21, 0
      %p48 = por %p46, %p47
      %s50 = sadd.s32 %s49, 1
      %p53 = scmp.eq.s32.totalorder %s15, 1
      %p54 = scmp.ne.s32.totalorder %s49, %s51
      %p55 = scmp.eq.s32.totalorder %s15, 0
      %p56 = por %p54, %p55
      %p57 = scmp.ne.s32.totalorder %s49, %s51
      %p58 = scmp.eq.s32.totalorder %s20, 1
      %p59 = por %p57, %p58
      %p60 = scmp.ne.s32.totalorder %s51, %s52
      %p61 = scmp.eq.s32.totalorder %s20, 0
      %p62 = por %p60, %p61
      %p63 = scmp.ne.s32.totalorder %s51, %s52
      %p64 = scmp.eq.s32.totalorder %s21, 1
      %p65 = por %p63, %p64
      %p67 = scmp.ne.s32.totalorder %s52, %s66
      %p68 = scmp.eq.s32.totalorder %s21, 0
      %p69 = por %p67, %p68
      %s71 = sadd.s32 %s70, 1
      %p74 = scmp.eq.s32.totalorder %s15, 1
      %p75 = scmp.ne.s32.totalorder %s70, %s72
      %p76 = scmp.eq.s32.totalorder %s15, 0
      %p77 = por %p75, %p76
      %p78 = scmp.ne.s32.totalorder %s70, %s72
      %p79 = scmp.eq.s32.totalorder %s20, 1
      %p80 = por %p78, %p79
      %p81 = scmp.ne.s32.totalorder %s72, %s73
      %p82 = scmp.eq.s32.totalorder %s20, 0
      %p83 = por %p81, %p82
      %p84 = scmp.ne.s32.totalorder %s72, %s73
      %p85 = scmp.eq.s32.totalorder %s21, 1
      %p86 = por %p84, %p85
      %p88 = scmp.ne.s32.totalorder %s73, %s87
      %p89 = scmp.eq.s32.totalorder %s21, 0
      %p90 = por %p88, %p89
      %s92 = sadd.s32 %s91, 1
      %p95 = scmp.eq.s32.totalorder %s15, 1
      %p96 = scmp.ne.s32.totalorder %s91, %s93
      %p97 = scmp.eq.s32.totalorder %s15, 0
      %p98 = por %p96, %p97
      %p99 = scmp.ne.s32.totalorder %s91, %s93
      %p100 = scmp.eq.s32.totalorder %s20, 1
      %p101 = por %p99, %p100
      %p102 = scmp.ne.s32.totalorder %s93, %s94
      %p103 = scmp.eq.s32.totalorder %s20, 0
      %p104 = por %p102, %p103
      %p105 = scmp.ne.s32.totalorder %s93, %s94
      %p106 = scmp.eq.s32.totalorder %s21, 1
      %p107 = por %p105, %p106
      %p109 = scmp.ne.s32.totalorder %s94, %s108
      %p110 = scmp.eq.s32.totalorder %s21, 0
      %p111 = por %p109, %p110
      %s113 = sadd.s32 %s112, 1
      %p116 = scmp.eq.s32.totalorder %s15, 1
      %p117 = scmp.ne.s32.totalorder %s112, %s114
      %p118 = scmp.eq.s32.totalorder %s15, 0
      %p119 = por %p117, %p118
      %p120 = scmp.ne.s32.totalorder %s112, %s114
      %p121 = scmp.eq.s32.totalorder %s20, 1
      %p122 = por %p120, %p121
      %p123 = scmp.ne.s32.totalorder %s114, %s115
      %p124 = scmp.eq.s32.totalorder %s20, 0
      %p125 = por %p123, %p124
      %p126 = scmp.ne.s32.totalorder %s114, %s115
      %p127 = scmp.eq.s32.totalorder %s21, 1
      %p128 = por %p126, %p127
      %p130 = scmp.ne.s32.totalorder %s115, %s129
      %p131 = scmp.eq.s32.totalorder %s21, 0
      %p132 = por %p130, %p131
      %s133 = ssub.s32 %s15, %s22
      %p134 = scmp.eq.s32.totalorder %s133, 0
      %s136 = sadd.s32 %s135, 1
      %s137 = scalar_select %p134, %s135, %s136
      %p140 = pneg %p134
      %p141 = scmp.eq.s32.totalorder %s15, 1
      %p142 = por %p140, %p141
      %p143 = scmp.ne.s32.totalorder %s135, %s138
      %p144 = scmp.eq.s32.totalorder %s15, 0
      %p145 = por %p143, %p144
      %p146 = scmp.ne.s32.totalorder %s135, %s138
      %p147 = scmp.eq.s32.totalorder %s20, 1
      %p148 = por %p146, %p147
      %p149 = scmp.ne.s32.totalorder %s138, %s139
      %p150 = scmp.eq.s32.totalorder %s20, 0
      %p151 = por %p149, %p150
      %p152 = scmp.ne.s32.totalorder %s138, %s139
      %p153 = scmp.eq.s32.totalorder %s21, 1
      %p154 = por %p152, %p153
      %p156 = scmp.ne.s32.totalorder %s139, %s155
      %p157 = scmp.eq.s32.totalorder %s21, 0
      %p158 = por %p156, %p157
      %s159 = ssub.s32 %s15, %s22
      %p160 = scmp.eq.s32.totalorder %s159, 0
      %s162 = sadd.s32 %s161, 1
      %s163 = scalar_select %p160, %s161, %s162
      %p166 = pneg %p160
      %p167 = scmp.eq.s32.totalorder %s15, 1
      %p168 = por %p166, %p167
      %p169 = scmp.ne.s32.totalorder %s161, %s164
      %p170 = scmp.eq.s32.totalorder %s15, 0
      %p171 = por %p169, %p170
      %p172 = scmp.ne.s32.totalorder %s161, %s164
      %p173 = scmp.eq.s32.totalorder %s20, 1
      %p174 = por %p172, %p173
      %p175 = scmp.ne.s32.totalorder %s164, %s165
      %p176 = scmp.eq.s32.totalorder %s20, 0
      %p177 = por %p175, %p176
      %p178 = scmp.ne.s32.totalorder %s164, %s165
      %p179 = scmp.eq.s32.totalorder %s21, 1
      %p180 = por %p178, %p179
      %p182 = scmp.ne.s32.totalorder %s165, %s181
      %p183 = scmp.eq.s32.totalorder %s21, 0
      %p184 = por %p182, %p183
      %p185 = scmp.le.s32.totalorder 1, %s15
      %p186 = scmp.lt.s32.totalorder %s15, 3
      %p187 = pnand %p185, %p186
      %p188 = pneg %p187
      // Predicated region
      $region9: #{rsa_block_forward.3} parent=5 // pred_check
        _
      $region10: #{rsa_block_forward.3} parent=5 // pred_check_branch
        %190 = sbr.rel (%p187) target = $region12
      $region11: #{rsa_block_forward.3} parent=5 // pred_region
        %s191 = ssub.s32 %s15, 1
        // Predicated region
        $region13: #{rsa_block_forward.3} parent=11 // pred_check
          %p192 = pneg %p62
        $region14: #{rsa_block_forward.3} parent=11 // pred_check_branch
          %194 = sbr.rel (%p192) target = $region16
        $region15: #{rsa_block_forward.3} parent=11 // pred_region
          _
        $region16: #{rsa_block_forward.3} parent=11 // pred_fallthru
          _
        // Predicated region
        $region17: #{rsa_block_forward.3} parent=11 // pred_check
          %p195 = pneg %p83
        $region18: #{rsa_block_forward.3} parent=11 // pred_check_branch
          %197 = sbr.rel (%p195) target = $region20
        $region19: #{rsa_block_forward.3} parent=11 // pred_region
          _
        $region20: #{rsa_block_forward.3} parent=11 // pred_fallthru
          _
        // Predicated region
        $region21: #{rsa_block_forward.3} parent=11 // pred_check
          %p198 = pneg %p104
        $region22: #{rsa_block_forward.3} parent=11 // pred_check_branch
          %200 = sbr.rel (%p198) target = $region24
        $region23: #{rsa_block_forward.3} parent=11 // pred_region
          _
        $region24: #{rsa_block_forward.3} parent=11 // pred_fallthru
          _
        // Predicated region
        $region25: #{rsa_block_forward.3} parent=11 // pred_check
          %p201 = pneg %p125
        $region26: #{rsa_block_forward.3} parent=11 // pred_check_branch
          %203 = sbr.rel (%p201) target = $region28
        $region27: #{rsa_block_forward.3} parent=11 // pred_region
          _
        $region28: #{rsa_block_forward.3} parent=11 // pred_fallthru
          _
      $region12: #{rsa_block_forward.3} parent=5 // pred_fallthru
        _
      %p204 = scmp.lt.s32.totalorder %s15, 2
      // Predicated region
      $region29: #{rsa_block_forward.3} parent=5 // pred_check
        %p205 = pneg %p204
      $region30: #{rsa_block_forward.3} parent=5 // pred_check_branch
        %207 = sbr.rel (%p205) target = $region32
      $region31: #{rsa_block_forward.3} parent=5 // pred_region
        // Predicated region
        $region33: #{rsa_block_forward.3} parent=31 // pred_check
          %p208 = pneg %p35
        $region34: #{rsa_block_forward.3} parent=31 // pred_check_branch
          %210 = sbr.rel (%p208) target = $region36
        $region35: #{rsa_block_forward.3} parent=31 // pred_region
          %p211 = scmp.lt.s32.totalorder %s15, 1
          %s212 = scalar_select %p211, %s15, 1
          %s213 = smul.addr %s212, 96
          %s214 = smul.addr %s213, 4
          %s215 = scalar_lea.vmem %s0, %s214
        $region36: #{rsa_block_forward.3} parent=31 // pred_fallthru
          _
        // Predicated region
        $region37: #{rsa_block_forward.3} parent=31 // pred_check
          %p216 = pneg %p145
        $region38: #{rsa_block_forward.3} parent=31 // pred_check_branch
          %218 = sbr.rel (%p216) target = $region40
        $region39: #{rsa_block_forward.3} parent=31 // pred_region
          %p219 = scmp.lt.s32.totalorder %s15, 1
          %s220 = scalar_select %p219, %s15, 1
          %s221 = smul.addr %s220, 32
          %s222 = smul.addr %s221, 8
          %s223 = scalar_lea.vmem %s5, %s222
        $region40: #{rsa_block_forward.3} parent=31 // pred_fallthru
          _
      $region32: #{rsa_block_forward.3} parent=5 // pred_fallthru
        _
      %p224 = scmp.le.s32.totalorder 1, %s15
      %p225 = scmp.lt.s32.totalorder %s15, 3
      %p226 = pnand %p224, %p225
      %p227 = pneg %p226
      // Predicated region
      $region41: #{rsa_block_forward.3} parent=5 // pred_check
        _
      $region42: #{rsa_block_forward.3} parent=5 // pred_check_branch
        %229 = sbr.rel (%p226) target = $region44
      $region43: #{rsa_block_forward.3} parent=5 // pred_region
        %s230 = ssub.s32 %s15, 1
        %p231 = scmp.lt.s32.totalorder %s20, 1
        %s232 = scalar_select %p231, %s20, 1
        %s233 = smul.addr %s232, 96
        %s234 = smul.addr %s233, 4
        %s235 = scalar_lea.vmem %s0, %s234
        %p236 = pneg %p41
        %p237 = pneg %p38
        %p238 = pneg %p62
        %p239 = pneg %p59
        %p240 = pneg %p83
        %p241 = pneg %p80
        %p242 = pneg %p104
        %p243 = pneg %p101
        %p244 = pneg %p125
        %p245 = pneg %p122
        %p246 = scmp.lt.s32.totalorder %s20, 1
        %s247 = scalar_select %p246, %s20, 1
        %s248 = smul.addr %s247, 32
        %s249 = smul.addr %s248, 8
        %s250 = scalar_lea.vmem %s5, %s249
        %p251 = pneg %p151
        %p252 = pneg %p148
        %p253 = pneg %p177
        %p254 = pneg %p174
        %s255 = sand.u32 %s164, 1
        %s256 = scalar_lea.sflag [#allocation4], %s255
        %s257 = sand.u32 %s164, 1
        %s258 = smul.addr %s257, 256
        %s259 = scalar_lea.vmem [#allocation3], %s258
        %p260 = scmp.lt.s32.totalorder %s20, 1
        %s261 = scalar_select %p260, %s20, 1
        %s262 = smul.addr %s261, 96
        %s263 = smul.addr %s262, 4
        %s264 = scalar_lea.vmem %s0, %s263
        %p265 = scmp.lt.s32.totalorder %s20, 1
        %s266 = scalar_select %p265, %s20, 1
        %s267 = smul.addr %s266, 32
        %s268 = smul.addr %s267, 8
        %s269 = scalar_lea.vmem %s5, %s268
        %v271 = vld [vmem:[%s264] sm:$0xff]
        %v272 = vld [vmem:[%s264 + $0x8] sm:$0xf]
        %v273 = vld [vmem:[%s264 + $0xc] sm:$0xff]
        %v274 = vld [vmem:[%s264 + $0x14] sm:$0xf]
        %v275 = vld [vmem:[%s264 + $0x18] sm:$0xff]
        %v276 = vld [vmem:[%s264 + $0x20] sm:$0xf]
        %v277 = vld [vmem:[%s264 + $0x24] sm:$0xff]
        %v278 = vld [vmem:[%s264 + $0x2c] sm:$0xf]
        %v279 = vld [vmem:[%s264 + $0x30] sm:$0xff]
        %v280 = vld [vmem:[%s264 + $0x38] sm:$0xf]
        %v281 = vld [vmem:[%s264 + $0x3c] sm:$0xff]
        %v282 = vld [vmem:[%s264 + $0x44] sm:$0xf]
        %v283 = vld [vmem:[%s264 + $0x48] sm:$0xff]
        %v284 = vld [vmem:[%s264 + $0x50] sm:$0xf]
        %v285 = vld [vmem:[%s264 + $0x54] sm:$0xff]
        %v286 = vld [vmem:[%s264 + $0x5c] sm:$0xf]
        %v287 = vld [vmem:[%s264 + $0x60] sm:$0xff]
        %v288 = vld [vmem:[%s264 + $0x68] sm:$0xf]
        %v289 = vld [vmem:[%s264 + $0x6c] sm:$0xff]
        %v290 = vld [vmem:[%s264 + $0x74] sm:$0xf]
        %v291 = vld [vmem:[%s264 + $0x78] sm:$0xff]
        %v292 = vld [vmem:[%s264 + $0x80] sm:$0xf]
        %v293 = vld [vmem:[%s264 + $0x84] sm:$0xff]
        %v294 = vld [vmem:[%s264 + $0x8c] sm:$0xf]
        %v295 = vld [vmem:[%s264 + $0x90] sm:$0xff]
        %v296 = vld [vmem:[%s264 + $0x98] sm:$0xf]
        %v297 = vld [vmem:[%s264 + $0x9c] sm:$0xff]
        %v298 = vld [vmem:[%s264 + $0xa4] sm:$0xf]
        %v299 = vld [vmem:[%s264 + $0xa8] sm:$0xff]
        %v300 = vld [vmem:[%s264 + $0xb0] sm:$0xf]
        %v301 = vld [vmem:[%s264 + $0xb4] sm:$0xff]
        %v302 = vld [vmem:[%s264 + $0xbc] sm:$0xf]
        %v303 = vld [vmem:[%s264 + $0xc0] sm:$0xff]
        %v304 = vld [vmem:[%s264 + $0xc8] sm:$0xf]
        %v305 = vld [vmem:[%s264 + $0xcc] sm:$0xff]
        %v306 = vld [vmem:[%s264 + $0xd4] sm:$0xf]
        %v307 = vld [vmem:[%s264 + $0xd8] sm:$0xff]
        %v308 = vld [vmem:[%s264 + $0xe0] sm:$0xf]
        %v309 = vld [vmem:[%s264 + $0xe4] sm:$0xff]
        %v310 = vld [vmem:[%s264 + $0xec] sm:$0xf]
        %v311 = vld [vmem:[%s264 + $0xf0] sm:$0xff]
        %v312 = vld [vmem:[%s264 + $0xf8] sm:$0xf]
        %v313 = vld [vmem:[%s264 + $0xfc] sm:$0xff]
        %v314 = vld [vmem:[%s264 + $0x104] sm:$0xf]
        %v315 = vld [vmem:[%s264 + $0x108] sm:$0xff]
        %v316 = vld [vmem:[%s264 + $0x110] sm:$0xf]
        %v317 = vld [vmem:[%s264 + $0x114] sm:$0xff]
        %v318 = vld [vmem:[%s264 + $0x11c] sm:$0xf]
        %v319 = vld [vmem:[%s264 + $0x120] sm:$0xff]
        %v320 = vld [vmem:[%s264 + $0x128] sm:$0xf]
        %v321 = vld [vmem:[%s264 + $0x12c] sm:$0xff]
        %v322 = vld [vmem:[%s264 + $0x134] sm:$0xf]
        %v323 = vld [vmem:[%s264 + $0x138] sm:$0xff]
        %v324 = vld [vmem:[%s264 + $0x140] sm:$0xf]
        %v325 = vld [vmem:[%s264 + $0x144] sm:$0xff]
        %v326 = vld [vmem:[%s264 + $0x14c] sm:$0xf]
        %v327 = vld [vmem:[%s264 + $0x150] sm:$0xff]
        %v328 = vld [vmem:[%s264 + $0x158] sm:$0xf]
        %v329 = vld [vmem:[%s264 + $0x15c] sm:$0xff]
        %v330 = vld [vmem:[%s264 + $0x164] sm:$0xf]
        %v331 = vld [vmem:[%s264 + $0x168] sm:$0xff]
        %v332 = vld [vmem:[%s264 + $0x170] sm:$0xf]
        %v333 = vld [vmem:[%s264 + $0x174] sm:$0xff]
        %v334 = vld [vmem:[%s264 + $0x17c] sm:$0xf]
        %v335 = vld [vmem:[%s1] sm:$0xf]
        %v336 = vld [vmem:[%s1 + $0x4] sm:$0xf]
        %v337 = vld [vmem:[%s1 + $0x8] sm:$0xf]
        %v338 = vld [vmem:[%s1 + $0xc] sm:$0xf]
        %v339 = vld [vmem:[%s1 + $0x10] sm:$0xf]
        %v340 = vld [vmem:[%s1 + $0x14] sm:$0xf]
        %v341 = vld [vmem:[%s1 + $0x18] sm:$0xf]
        %v342 = vld [vmem:[%s1 + $0x1c] sm:$0xf]
        %v343 = vld [vmem:[%s1 + $0x20] sm:$0xf]
        %v344 = vld [vmem:[%s1 + $0x24] sm:$0xf]
        %v345 = vld [vmem:[%s1 + $0x28] sm:$0xf]
        %v346 = vld [vmem:[%s1 + $0x2c] sm:$0xf]
        %v347 = vld [vmem:[%s1 + $0x30] sm:$0xf]
        %v348 = vld [vmem:[%s1 + $0x34] sm:$0xf]
        %v349 = vld [vmem:[%s1 + $0x38] sm:$0xf]
        %v350 = vld [vmem:[%s1 + $0x3c] sm:$0xf]
        %v351 = vld [vmem:[%s1 + $0x40] sm:$0xf]
        %v352 = vld [vmem:[%s1 + $0x44] sm:$0xf]
        %v353 = vld [vmem:[%s1 + $0x48] sm:$0xf]
        %v354 = vld [vmem:[%s1 + $0x4c] sm:$0xf]
        %v355 = vld [vmem:[%s1 + $0x50] sm:$0xf]
        %v356 = vld [vmem:[%s1 + $0x54] sm:$0xf]
        %v357 = vld [vmem:[%s1 + $0x58] sm:$0xf]
        %v358 = vld [vmem:[%s1 + $0x5c] sm:$0xf]
        %v359 = vld [vmem:[%s1 + $0x60] sm:$0xf]
        %v360 = vld [vmem:[%s1 + $0x64] sm:$0xf]
        %v361 = vld [vmem:[%s1 + $0x68] sm:$0xf]
        %v362 = vld [vmem:[%s1 + $0x6c] sm:$0xf]
        %v363 = vld [vmem:[%s1 + $0x70] sm:$0xf]
        %v364 = vld [vmem:[%s1 + $0x74] sm:$0xf]
        %v365 = vld [vmem:[%s1 + $0x78] sm:$0xf]
        %v366 = vld [vmem:[%s1 + $0x7c] sm:$0xf]
        %v367 = vld [vmem:[%s1 + $0x80] sm:$0xf]
        %v368 = vld [vmem:[%s1 + $0x84] sm:$0xf]
        %v369 = vld [vmem:[%s1 + $0x88] sm:$0xf]
        %v370 = vld [vmem:[%s1 + $0x8c] sm:$0xf]
        %v371 = vld [vmem:[%s2] sm:$0x1]
        %v373 = vperm.slane %v371, 0
        %v439 = vunpack.c.l.b16 %v271
        %v440 = vunpack.c.h.b16 %v271
        %v441 = vunpack.c.l.b16 %v272
        %v442 = vunpack.c.l.b16 %v273
        %v443 = vunpack.c.h.b16 %v273
        %v444 = vunpack.c.l.b16 %v274
        %v445 = vunpack.c.l.b16 %v275
        %v446 = vunpack.c.h.b16 %v275
        %v447 = vunpack.c.l.b16 %v276
        %v448 = vunpack.c.l.b16 %v277
        %v449 = vunpack.c.h.b16 %v277
        %v450 = vunpack.c.l.b16 %v278
        %v451 = vunpack.c.l.b16 %v279
        %v452 = vunpack.c.h.b16 %v279
        %v453 = vunpack.c.l.b16 %v280
        %v454 = vunpack.c.l.b16 %v281
        %v455 = vunpack.c.h.b16 %v281
        %v456 = vunpack.c.l.b16 %v282
        %v457 = vunpack.c.l.b16 %v283
        %v458 = vunpack.c.h.b16 %v283
        %v459 = vunpack.c.l.b16 %v284
        %v460 = vunpack.c.l.b16 %v285
        %v461 = vunpack.c.h.b16 %v285
        %v462 = vunpack.c.l.b16 %v286
        %v463 = vunpack.c.l.b16 %v287
        %v464 = vunpack.c.h.b16 %v287
        %v465 = vunpack.c.l.b16 %v288
        %v466 = vunpack.c.l.b16 %v289
        %v467 = vunpack.c.h.b16 %v289
        %v468 = vunpack.c.l.b16 %v290
        %v469 = vunpack.c.l.b16 %v291
        %v470 = vunpack.c.h.b16 %v291
        %v471 = vunpack.c.l.b16 %v292
        %v472 = vunpack.c.l.b16 %v293
        %v473 = vunpack.c.h.b16 %v293
        %v474 = vunpack.c.l.b16 %v294
        %v475 = vunpack.c.l.b16 %v295
        %v476 = vunpack.c.h.b16 %v295
        %v477 = vunpack.c.l.b16 %v296
        %v478 = vunpack.c.l.b16 %v297
        %v479 = vunpack.c.h.b16 %v297
        %v480 = vunpack.c.l.b16 %v298
        %v481 = vunpack.c.l.b16 %v299
        %v482 = vunpack.c.h.b16 %v299
        %v483 = vunpack.c.l.b16 %v300
        %v484 = vunpack.c.l.b16 %v301
        %v485 = vunpack.c.h.b16 %v301
        %v486 = vunpack.c.l.b16 %v302
        %v487 = vunpack.c.l.b16 %v303
        %v488 = vunpack.c.h.b16 %v303
        %v489 = vunpack.c.l.b16 %v304
        %v490 = vunpack.c.l.b16 %v305
        %v491 = vunpack.c.h.b16 %v305
        %v492 = vunpack.c.l.b16 %v306
        %v493 = vunpack.c.l.b16 %v307
        %v494 = vunpack.c.h.b16 %v307
        %v495 = vunpack.c.l.b16 %v308
        %v496 = vunpack.c.l.b16 %v309
        %v497 = vunpack.c.h.b16 %v309
        %v498 = vunpack.c.l.b16 %v310
        %v499 = vunpack.c.l.b16 %v311
        %v500 = vunpack.c.h.b16 %v311
        %v501 = vunpack.c.l.b16 %v312
        %v502 = vunpack.c.l.b16 %v313
        %v503 = vunpack.c.h.b16 %v313
        %v504 = vunpack.c.l.b16 %v314
        %v505 = vunpack.c.l.b16 %v315
        %v506 = vunpack.c.h.b16 %v315
        %v507 = vunpack.c.l.b16 %v316
        %v508 = vunpack.c.l.b16 %v317
        %v509 = vunpack.c.h.b16 %v317
        %v510 = vunpack.c.l.b16 %v318
        %v511 = vunpack.c.l.b16 %v319
        %v512 = vunpack.c.h.b16 %v319
        %v513 = vunpack.c.l.b16 %v320
        %v514 = vunpack.c.l.b16 %v321
        %v515 = vunpack.c.h.b16 %v321
        %v516 = vunpack.c.l.b16 %v322
        %v517 = vunpack.c.l.b16 %v323
        %v518 = vunpack.c.h.b16 %v323
        %v519 = vunpack.c.l.b16 %v324
        %v520 = vunpack.c.l.b16 %v325
        %v521 = vunpack.c.h.b16 %v325
        %v522 = vunpack.c.l.b16 %v326
        %v523 = vunpack.c.l.b16 %v327
        %v524 = vunpack.c.h.b16 %v327
        %v525 = vunpack.c.l.b16 %v328
        %v526 = vunpack.c.l.b16 %v329
        %v527 = vunpack.c.h.b16 %v329
        %v528 = vunpack.c.l.b16 %v330
        %v529 = vunpack.c.l.b16 %v331
        %v530 = vunpack.c.h.b16 %v331
        %v531 = vunpack.c.l.b16 %v332
        %v532 = vunpack.c.l.b16 %v333
        %v533 = vunpack.c.h.b16 %v333
        %v534 = vunpack.c.l.b16 %v334
        %v535 = vpack.c.b16 %v442, %v439
        %v536 = vpack.c.b16 %v443, %v440
        %v537 = vpack.c.b16 %v444, %v441
        %v538 = vpack.c.b16 %v448, %v445
        %v539 = vpack.c.b16 %v449, %v446
        %v540 = vpack.c.b16 %v450, %v447
        %v541 = vpack.c.b16 %v454, %v451
        %v542 = vpack.c.b16 %v455, %v452
        %v543 = vpack.c.b16 %v456, %v453
        %v544 = vpack.c.b16 %v460, %v457
        %v545 = vpack.c.b16 %v461, %v458
        %v546 = vpack.c.b16 %v462, %v459
        %v547 = vpack.c.b16 %v466, %v463
        %v548 = vpack.c.b16 %v467, %v464
        %v549 = vpack.c.b16 %v468, %v465
        %v550 = vpack.c.b16 %v472, %v469
        %v551 = vpack.c.b16 %v473, %v470
        %v552 = vpack.c.b16 %v474, %v471
        %v553 = vpack.c.b16 %v478, %v475
        %v554 = vpack.c.b16 %v479, %v476
        %v555 = vpack.c.b16 %v480, %v477
        %v556 = vpack.c.b16 %v484, %v481
        %v557 = vpack.c.b16 %v485, %v482
        %v558 = vpack.c.b16 %v486, %v483
        %v559 = vpack.c.b16 %v490, %v487
        %v560 = vpack.c.b16 %v491, %v488
        %v561 = vpack.c.b16 %v492, %v489
        %v562 = vpack.c.b16 %v496, %v493
        %v563 = vpack.c.b16 %v497, %v494
        %v564 = vpack.c.b16 %v498, %v495
        %v565 = vpack.c.b16 %v502, %v499
        %v566 = vpack.c.b16 %v503, %v500
        %v567 = vpack.c.b16 %v504, %v501
        %v568 = vpack.c.b16 %v508, %v505
        %v569 = vpack.c.b16 %v509, %v506
        %v570 = vpack.c.b16 %v510, %v507
        %v571 = vpack.c.b16 %v514, %v511
        %v572 = vpack.c.b16 %v515, %v512
        %v573 = vpack.c.b16 %v516, %v513
        %v574 = vpack.c.b16 %v520, %v517
        %v575 = vpack.c.b16 %v521, %v518
        %v576 = vpack.c.b16 %v522, %v519
        %v577 = vpack.c.b16 %v526, %v523
        %v578 = vpack.c.b16 %v527, %v524
        %v579 = vpack.c.b16 %v528, %v525
        %v580 = vpack.c.b16 %v532, %v529
        %v581 = vpack.c.b16 %v533, %v530
        %v582 = vpack.c.b16 %v534, %v531
        %v651 = vunpack.c.l.b16 %v335
        %v652 = vunpack.c.l.b16 %v336
        %v653 = vunpack.c.l.b16 %v337
        %v654 = vunpack.c.l.b16 %v338
        %v655 = vunpack.c.l.b16 %v339
        %v656 = vunpack.c.l.b16 %v340
        %v657 = vunpack.c.l.b16 %v341
        %v658 = vunpack.c.l.b16 %v342
        %v659 = vunpack.c.l.b16 %v343
        %v660 = vunpack.c.l.b16 %v344
        %v661 = vunpack.c.l.b16 %v345
        %v662 = vunpack.c.l.b16 %v346
        %v663 = vunpack.c.l.b16 %v347
        %v664 = vunpack.c.l.b16 %v348
        %v665 = vunpack.c.l.b16 %v349
        %v666 = vunpack.c.l.b16 %v350
        %v667 = vunpack.c.l.b16 %v351
        %v668 = vunpack.c.l.b16 %v352
        %v669 = vunpack.c.l.b16 %v353
        %v670 = vunpack.c.l.b16 %v354
        %v671 = vunpack.c.l.b16 %v355
        %v672 = vunpack.c.l.b16 %v356
        %v673 = vunpack.c.l.b16 %v357
        %v674 = vunpack.c.l.b16 %v358
        %v675 = vunpack.c.l.b16 %v359
        %v676 = vunpack.c.l.b16 %v360
        %v677 = vunpack.c.l.b16 %v361
        %v678 = vunpack.c.l.b16 %v362
        %v679 = vunpack.c.l.b16 %v363
        %v680 = vunpack.c.l.b16 %v364
        %v681 = vunpack.c.l.b16 %v365
        %v682 = vunpack.c.l.b16 %v366
        %v683 = vunpack.c.l.b16 %v367
        %v684 = vunpack.c.l.b16 %v368
        %v685 = vunpack.c.l.b16 %v369
        %v686 = vunpack.c.l.b16 %v370
        %v687 = vpack.c.b16 %v652, %v651
        %v688 = vpack.c.b16 %v654, %v653
        %v689 = vpack.c.b16 %v656, %v655
        %v690 = vpack.c.b16 %v658, %v657
        %v691 = vpack.c.b16 %v660, %v659
        %v692 = vpack.c.b16 %v662, %v661
        %v693 = vpack.c.b16 %v664, %v663
        %v694 = vpack.c.b16 %v666, %v665
        %v695 = vpack.c.b16 %v668, %v667
        %v696 = vpack.c.b16 %v670, %v669
        %v697 = vpack.c.b16 %v672, %v671
        %v698 = vpack.c.b16 %v674, %v673
        %v699 = vpack.c.b16 %v676, %v675
        %v700 = vpack.c.b16 %v678, %v677
        %v701 = vpack.c.b16 %v680, %v679
        %v702 = vpack.c.b16 %v682, %v681
        %v703 = vpack.c.b16 %v684, %v683
        %v704 = vpack.c.b16 %v686, %v685
        %vm723 = vcmask 261120
        %v725 = vsel %vm723, %v537, 0
        %v728 = vsel %vm723, %v540, 0
        %v731 = vsel %vm723, %v543, 0
        %v734 = vsel %vm723, %v546, 0
        %v737 = vsel %vm723, %v549, 0
        %v740 = vsel %vm723, %v552, 0
        %v743 = vsel %vm723, %v555, 0
        %v746 = vsel %vm723, %v558, 0
        %v749 = vsel %vm723, %v561, 0
        %v752 = vsel %vm723, %v564, 0
        %v755 = vsel %vm723, %v567, 0
        %v758 = vsel %vm723, %v570, 0
        %v761 = vsel %vm723, %v573, 0
        %v764 = vsel %vm723, %v576, 0
        %v767 = vsel %vm723, %v579, 0
        %v770 = vsel %vm723, %v582, 0
        %772 = vmatpush.bf16.msra.mxu0 %v694
        %773 = vmatpush.bf16.msra.mxu0 %v693
        %774 = vmatpush.bf16.msra.mxu0 %v692
        %775 = vmatpush.bf16.msra.mxu0 %v691
        %776 = vmatpush.bf16.msra.mxu0 %v690
        %777 = vmatpush.bf16.msra.mxu0 %v689
        %778 = vmatpush.bf16.msra.mxu0 %v688
        %779 = vmatpush.bf16.msra.mxu0 %v687
        %780 = vmatmul.bf16.gmra.mxu0 %v535
        %v781 = vpop.f32.mrf.mxu0
        %v782 = vadd.f32 %v373, %v781
        %v783 = vpop.f32.mrf.mxu0
        %v784 = vadd.f32 %v373, %v783
        %785 = vmatmul.bf16.gmra.mxu0 %v538
        %v786 = vpop.f32.mrf.mxu0
        %v787 = vadd.f32 %v373, %v786
        %v788 = vpop.f32.mrf.mxu0
        %v789 = vadd.f32 %v373, %v788
        %790 = vmatmul.bf16.gmra.mxu0 %v541
        %v791 = vpop.f32.mrf.mxu0
        %v792 = vadd.f32 %v373, %v791
        %v793 = vpop.f32.mrf.mxu0
        %v794 = vadd.f32 %v373, %v793
        %795 = vmatmul.bf16.gmra.mxu0 %v544
        %v796 = vpop.f32.mrf.mxu0
        %v797 = vadd.f32 %v373, %v796
        %v798 = vpop.f32.mrf.mxu0
        %v799 = vadd.f32 %v373, %v798
        %800 = vmatmul.bf16.gmra.mxu0 %v547
        %v801 = vpop.f32.mrf.mxu0
        %v802 = vadd.f32 %v373, %v801
        %v803 = vpop.f32.mrf.mxu0
        %v804 = vadd.f32 %v373, %v803
        %805 = vmatmul.bf16.gmra.mxu0 %v550
        %v806 = vpop.f32.mrf.mxu0
        %v807 = vadd.f32 %v373, %v806
        %v808 = vpop.f32.mrf.mxu0
        %v809 = vadd.f32 %v373, %v808
        %810 = vmatmul.bf16.gmra.mxu0 %v553
        %v811 = vpop.f32.mrf.mxu0
        %v812 = vadd.f32 %v373, %v811
        %v813 = vpop.f32.mrf.mxu0
        %v814 = vadd.f32 %v373, %v813
        %815 = vmatmul.bf16.gmra.mxu0 %v556
        %v816 = vpop.f32.mrf.mxu0
        %v817 = vadd.f32 %v373, %v816
        %v818 = vpop.f32.mrf.mxu0
        %v819 = vadd.f32 %v373, %v818
        %820 = vmatmul.bf16.gmra.mxu0 %v559
        %v821 = vpop.f32.mrf.mxu0
        %v822 = vadd.f32 %v373, %v821
        %v823 = vpop.f32.mrf.mxu0
        %v824 = vadd.f32 %v373, %v823
        %825 = vmatmul.bf16.gmra.mxu0 %v562
        %v826 = vpop.f32.mrf.mxu0
        %v827 = vadd.f32 %v373, %v826
        %v828 = vpop.f32.mrf.mxu0
        %v829 = vadd.f32 %v373, %v828
        %830 = vmatmul.bf16.gmra.mxu0 %v565
        %v831 = vpop.f32.mrf.mxu0
        %v832 = vadd.f32 %v373, %v831
        %v833 = vpop.f32.mrf.mxu0
        %v834 = vadd.f32 %v373, %v833
        %835 = vmatmul.bf16.gmra.mxu0 %v568
        %v836 = vpop.f32.mrf.mxu0
        %v837 = vadd.f32 %v373, %v836
        %v838 = vpop.f32.mrf.mxu0
        %v839 = vadd.f32 %v373, %v838
        %840 = vmatmul.bf16.gmra.mxu0 %v571
        %v841 = vpop.f32.mrf.mxu0
        %v842 = vadd.f32 %v373, %v841
        %v843 = vpop.f32.mrf.mxu0
        %v844 = vadd.f32 %v373, %v843
        %845 = vmatmul.bf16.gmra.mxu0 %v574
        %v846 = vpop.f32.mrf.mxu0
        %v847 = vadd.f32 %v373, %v846
        %v848 = vpop.f32.mrf.mxu0
        %v849 = vadd.f32 %v373, %v848
        %850 = vmatmul.bf16.gmra.mxu0 %v577
        %v851 = vpop.f32.mrf.mxu0
        %v852 = vadd.f32 %v373, %v851
        %v853 = vpop.f32.mrf.mxu0
        %v854 = vadd.f32 %v373, %v853
        %855 = vmatmul.bf16.gmra.mxu0 %v580
        %v856 = vpop.f32.mrf.mxu0
        %v857 = vadd.f32 %v373, %v856
        %v858 = vpop.f32.mrf.mxu0
        %v859 = vadd.f32 %v373, %v858
        %860 = vdwg.mxu0
        %861 = vmatpush.bf16.msra.mxu0 %v702
        %862 = vmatpush.bf16.msra.mxu0 %v701
        %863 = vmatpush.bf16.msra.mxu0 %v700
        %864 = vmatpush.bf16.msra.mxu0 %v699
        %865 = vmatpush.bf16.msra.mxu0 %v698
        %866 = vmatpush.bf16.msra.mxu0 %v697
        %867 = vmatpush.bf16.msra.mxu0 %v696
        %868 = vmatpush.bf16.msra.mxu0 %v695
        %869 = vmatmul.bf16.gmra.mxu0 %v536
        %v870 = vpop.f32.mrf.mxu0
        %v871 = vadd.f32 %v782, %v870
        %v872 = vpop.f32.mrf.mxu0
        %v873 = vadd.f32 %v784, %v872
        %874 = vmatmul.bf16.gmra.mxu0 %v539
        %v875 = vpop.f32.mrf.mxu0
        %v876 = vadd.f32 %v787, %v875
        %v877 = vpop.f32.mrf.mxu0
        %v878 = vadd.f32 %v789, %v877
        %879 = vmatmul.bf16.gmra.mxu0 %v542
        %v880 = vpop.f32.mrf.mxu0
        %v881 = vadd.f32 %v792, %v880
        %v882 = vpop.f32.mrf.mxu0
        %v883 = vadd.f32 %v794, %v882
        %884 = vmatmul.bf16.gmra.mxu0 %v545
        %v885 = vpop.f32.mrf.mxu0
        %v886 = vadd.f32 %v797, %v885
        %v887 = vpop.f32.mrf.mxu0
        %v888 = vadd.f32 %v799, %v887
        %889 = vmatmul.bf16.gmra.mxu0 %v548
        %v890 = vpop.f32.mrf.mxu0
        %v891 = vadd.f32 %v802, %v890
        %v892 = vpop.f32.mrf.mxu0
        %v893 = vadd.f32 %v804, %v892
        %894 = vmatmul.bf16.gmra.mxu0 %v551
        %v895 = vpop.f32.mrf.mxu0
        %v896 = vadd.f32 %v807, %v895
        %v897 = vpop.f32.mrf.mxu0
        %v898 = vadd.f32 %v809, %v897
        %899 = vmatmul.bf16.gmra.mxu0 %v554
        %v900 = vpop.f32.mrf.mxu0
        %v901 = vadd.f32 %v812, %v900
        %v902 = vpop.f32.mrf.mxu0
        %v903 = vadd.f32 %v814, %v902
        %904 = vmatmul.bf16.gmra.mxu0 %v557
        %v905 = vpop.f32.mrf.mxu0
        %v906 = vadd.f32 %v817, %v905
        %v907 = vpop.f32.mrf.mxu0
        %v908 = vadd.f32 %v819, %v907
        %909 = vmatmul.bf16.gmra.mxu0 %v560
        %v910 = vpop.f32.mrf.mxu0
        %v911 = vadd.f32 %v822, %v910
        %v912 = vpop.f32.mrf.mxu0
        %v913 = vadd.f32 %v824, %v912
        %914 = vmatmul.bf16.gmra.mxu0 %v563
        %v915 = vpop.f32.mrf.mxu0
        %v916 = vadd.f32 %v827, %v915
        %v917 = vpop.f32.mrf.mxu0
        %v918 = vadd.f32 %v829, %v917
        %919 = vmatmul.bf16.gmra.mxu0 %v566
        %v920 = vpop.f32.mrf.mxu0
        %v921 = vadd.f32 %v832, %v920
        %v922 = vpop.f32.mrf.mxu0
        %v923 = vadd.f32 %v834, %v922
        %924 = vmatmul.bf16.gmra.mxu0 %v569
        %v925 = vpop.f32.mrf.mxu0
        %v926 = vadd.f32 %v837, %v925
        %v927 = vpop.f32.mrf.mxu0
        %v928 = vadd.f32 %v839, %v927
        %929 = vmatmul.bf16.gmra.mxu0 %v572
        %v930 = vpop.f32.mrf.mxu0
        %v931 = vadd.f32 %v842, %v930
        %v932 = vpop.f32.mrf.mxu0
        %v933 = vadd.f32 %v844, %v932
        %934 = vmatmul.bf16.gmra.mxu0 %v575
        %v935 = vpop.f32.mrf.mxu0
        %v936 = vadd.f32 %v847, %v935
        %v937 = vpop.f32.mrf.mxu0
        %v938 = vadd.f32 %v849, %v937
        %939 = vmatmul.bf16.gmra.mxu0 %v578
        %v940 = vpop.f32.mrf.mxu0
        %v941 = vadd.f32 %v852, %v940
        %v942 = vpop.f32.mrf.mxu0
        %v943 = vadd.f32 %v854, %v942
        %944 = vmatmul.bf16.gmra.mxu0 %v581
        %v945 = vpop.f32.mrf.mxu0
        %v946 = vadd.f32 %v857, %v945
        %v947 = vpop.f32.mrf.mxu0
        %v948 = vadd.f32 %v859, %v947
        %949 = vdwg.mxu0
        %950 = vmatpush.bf16.msra.mxu0 0
        %951 = vmatpush.bf16.msra.mxu0 0
        %952 = vmatpush.bf16.msra.mxu0 0
        %953 = vmatpush.bf16.msra.mxu0 0
        %954 = vmatpush.bf16.msra.mxu0 0
        %955 = vmatpush.bf16.msra.mxu0 0
        %956 = vmatpush.bf16.msra.mxu0 %v704
        %957 = vmatpush.bf16.msra.mxu0 %v703
        %958 = vmatmul.bf16.gmra.mxu0 %v725
        %v959 = vpop.f32.mrf.mxu0
        %v960 = vadd.f32 %v871, %v959
        %v961 = vpop.f32.mrf.mxu0
        %v962 = vadd.f32 %v873, %v961
        %963 = vmatmul.bf16.gmra.mxu0 %v728
        %v964 = vpop.f32.mrf.mxu0
        %v965 = vadd.f32 %v876, %v964
        %v966 = vpop.f32.mrf.mxu0
        %v967 = vadd.f32 %v878, %v966
        %968 = vmatmul.bf16.gmra.mxu0 %v731
        %v969 = vpop.f32.mrf.mxu0
        %v970 = vadd.f32 %v881, %v969
        %v971 = vpop.f32.mrf.mxu0
        %v972 = vadd.f32 %v883, %v971
        %973 = vmatmul.bf16.gmra.mxu0 %v734
        %v974 = vpop.f32.mrf.mxu0
        %v975 = vadd.f32 %v886, %v974
        %v976 = vpop.f32.mrf.mxu0
        %v977 = vadd.f32 %v888, %v976
        %978 = vmatmul.bf16.gmra.mxu0 %v737
        %v979 = vpop.f32.mrf.mxu0
        %v980 = vadd.f32 %v891, %v979
        %v981 = vpop.f32.mrf.mxu0
        %v982 = vadd.f32 %v893, %v981
        %983 = vmatmul.bf16.gmra.mxu0 %v740
        %v984 = vpop.f32.mrf.mxu0
        %v985 = vadd.f32 %v896, %v984
        %v986 = vpop.f32.mrf.mxu0
        %v987 = vadd.f32 %v898, %v986
        %988 = vmatmul.bf16.gmra.mxu0 %v743
        %v989 = vpop.f32.mrf.mxu0
        %v990 = vadd.f32 %v901, %v989
        %v991 = vpop.f32.mrf.mxu0
        %v992 = vadd.f32 %v903, %v991
        %993 = vmatmul.bf16.gmra.mxu0 %v746
        %v994 = vpop.f32.mrf.mxu0
        %v995 = vadd.f32 %v906, %v994
        %v996 = vpop.f32.mrf.mxu0
        %v997 = vadd.f32 %v908, %v996
        %998 = vmatmul.bf16.gmra.mxu0 %v749
        %v999 = vpop.f32.mrf.mxu0
        %v1000 = vadd.f32 %v911, %v999
        %v1001 = vpop.f32.mrf.mxu0
        %v1002 = vadd.f32 %v913, %v1001
        %1003 = vmatmul.bf16.gmra.mxu0 %v752
        %v1004 = vpop.f32.mrf.mxu0
        %v1005 = vadd.f32 %v916, %v1004
        %v1006 = vpop.f32.mrf.mxu0
        %v1007 = vadd.f32 %v918, %v1006
        %1008 = vmatmul.bf16.gmra.mxu0 %v755
        %v1009 = vpop.f32.mrf.mxu0
        %v1010 = vadd.f32 %v921, %v1009
        %v1011 = vpop.f32.mrf.mxu0
        %v1012 = vadd.f32 %v923, %v1011
        %1013 = vmatmul.bf16.gmra.mxu0 %v758
        %v1014 = vpop.f32.mrf.mxu0
        %v1015 = vadd.f32 %v926, %v1014
        %v1016 = vpop.f32.mrf.mxu0
        %v1017 = vadd.f32 %v928, %v1016
        %1018 = vmatmul.bf16.gmra.mxu0 %v761
        %v1019 = vpop.f32.mrf.mxu0
        %v1020 = vadd.f32 %v931, %v1019
        %v1021 = vpop.f32.mrf.mxu0
        %v1022 = vadd.f32 %v933, %v1021
        %1023 = vmatmul.bf16.gmra.mxu0 %v764
        %v1024 = vpop.f32.mrf.mxu0
        %v1025 = vadd.f32 %v936, %v1024
        %v1026 = vpop.f32.mrf.mxu0
        %v1027 = vadd.f32 %v938, %v1026
        %1028 = vmatmul.bf16.gmra.mxu0 %v767
        %v1029 = vpop.f32.mrf.mxu0
        %v1030 = vadd.f32 %v941, %v1029
        %v1031 = vpop.f32.mrf.mxu0
        %v1032 = vadd.f32 %v943, %v1031
        %1033 = vmatmul.bf16.gmra.mxu0 %v770
        %v1034 = vpop.f32.mrf.mxu0
        %v1035 = vadd.f32 %v946, %v1034
        %v1036 = vpop.f32.mrf.mxu0
        %v1037 = vadd.f32 %v948, %v1036
        %1038 = vdwg.mxu0
        %vm1039 = vcmp.gt.f32.partialorder %v960, 0.0
        %vm1040 = vcmp.gt.f32.partialorder %v962, 0.0
        %vm1041 = vcmp.gt.f32.partialorder %v965, 0.0
        %vm1042 = vcmp.gt.f32.partialorder %v967, 0.0
        %vm1043 = vcmp.gt.f32.partialorder %v970, 0.0
        %vm1044 = vcmp.gt.f32.partialorder %v972, 0.0
        %vm1045 = vcmp.gt.f32.partialorder %v975, 0.0
        %vm1046 = vcmp.gt.f32.partialorder %v977, 0.0
        %vm1047 = vcmp.gt.f32.partialorder %v980, 0.0
        %vm1048 = vcmp.gt.f32.partialorder %v982, 0.0
        %vm1049 = vcmp.gt.f32.partialorder %v985, 0.0
        %vm1050 = vcmp.gt.f32.partialorder %v987, 0.0
        %vm1051 = vcmp.gt.f32.partialorder %v990, 0.0
        %vm1052 = vcmp.gt.f32.partialorder %v992, 0.0
        %vm1053 = vcmp.gt.f32.partialorder %v995, 0.0
        %vm1054 = vcmp.gt.f32.partialorder %v997, 0.0
        %vm1055 = vcmp.gt.f32.partialorder %v1000, 0.0
        %vm1056 = vcmp.gt.f32.partialorder %v1002, 0.0
        %vm1057 = vcmp.gt.f32.partialorder %v1005, 0.0
        %vm1058 = vcmp.gt.f32.partialorder %v1007, 0.0
        %vm1059 = vcmp.gt.f32.partialorder %v1010, 0.0
        %vm1060 = vcmp.gt.f32.partialorder %v1012, 0.0
        %vm1061 = vcmp.gt.f32.partialorder %v1015, 0.0
        %vm1062 = vcmp.gt.f32.partialorder %v1017, 0.0
        %vm1063 = vcmp.gt.f32.partialorder %v1020, 0.0
        %vm1064 = vcmp.gt.f32.partialorder %v1022, 0.0
        %vm1065 = vcmp.gt.f32.partialorder %v1025, 0.0
        %vm1066 = vcmp.gt.f32.partialorder %v1027, 0.0
        %vm1067 = vcmp.gt.f32.partialorder %v1030, 0.0
        %vm1068 = vcmp.gt.f32.partialorder %v1032, 0.0
        %vm1069 = vcmp.gt.f32.partialorder %v1035, 0.0
        %vm1070 = vcmp.gt.f32.partialorder %v1037, 0.0
        %v1071 = vmul.f32 %v960, 0.2
        %v1072 = vmul.f32 %v962, 0.2
        %v1073 = vmul.f32 %v965, 0.2
        %v1074 = vmul.f32 %v967, 0.2
        %v1075 = vmul.f32 %v970, 0.2
        %v1076 = vmul.f32 %v972, 0.2
        %v1077 = vmul.f32 %v975, 0.2
        %v1078 = vmul.f32 %v977, 0.2
        %v1079 = vmul.f32 %v980, 0.2
        %v1080 = vmul.f32 %v982, 0.2
        %v1081 = vmul.f32 %v985, 0.2
        %v1082 = vmul.f32 %v987, 0.2
        %v1083 = vmul.f32 %v990, 0.2
        %v1084 = vmul.f32 %v992, 0.2
        %v1085 = vmul.f32 %v995, 0.2
        %v1086 = vmul.f32 %v997, 0.2
        %v1087 = vmul.f32 %v1000, 0.2
        %v1088 = vmul.f32 %v1002, 0.2
        %v1089 = vmul.f32 %v1005, 0.2
        %v1090 = vmul.f32 %v1007, 0.2
        %v1091 = vmul.f32 %v1010, 0.2
        %v1092 = vmul.f32 %v1012, 0.2
        %v1093 = vmul.f32 %v1015, 0.2
        %v1094 = vmul.f32 %v1017, 0.2
        %v1095 = vmul.f32 %v1020, 0.2
        %v1096 = vmul.f32 %v1022, 0.2
        %v1097 = vmul.f32 %v1025, 0.2
        %v1098 = vmul.f32 %v1027, 0.2
        %v1099 = vmul.f32 %v1030, 0.2
        %v1100 = vmul.f32 %v1032, 0.2
        %v1101 = vmul.f32 %v1035, 0.2
        %v1102 = vmul.f32 %v1037, 0.2
        %v1103 = vsel %vm1039, %v960, %v1071
        %v1104 = vsel %vm1040, %v962, %v1072
        %v1105 = vsel %vm1041, %v965, %v1073
        %v1106 = vsel %vm1042, %v967, %v1074
        %v1107 = vsel %vm1043, %v970, %v1075
        %v1108 = vsel %vm1044, %v972, %v1076
        %v1109 = vsel %vm1045, %v975, %v1077
        %v1110 = vsel %vm1046, %v977, %v1078
        %v1111 = vsel %vm1047, %v980, %v1079
        %v1112 = vsel %vm1048, %v982, %v1080
        %v1113 = vsel %vm1049, %v985, %v1081
        %v1114 = vsel %vm1050, %v987, %v1082
        %v1115 = vsel %vm1051, %v990, %v1083
        %v1116 = vsel %vm1052, %v992, %v1084
        %v1117 = vsel %vm1053, %v995, %v1085
        %v1118 = vsel %vm1054, %v997, %v1086
        %v1119 = vsel %vm1055, %v1000, %v1087
        %v1120 = vsel %vm1056, %v1002, %v1088
        %v1121 = vsel %vm1057, %v1005, %v1089
        %v1122 = vsel %vm1058, %v1007, %v1090
        %v1123 = vsel %vm1059, %v1010, %v1091
        %v1124 = vsel %vm1060, %v1012, %v1092
        %v1125 = vsel %vm1061, %v1015, %v1093
        %v1126 = vsel %vm1062, %v1017, %v1094
        %v1127 = vsel %vm1063, %v1020, %v1095
        %v1128 = vsel %vm1064, %v1022, %v1096
        %v1129 = vsel %vm1065, %v1025, %v1097
        %v1130 = vsel %vm1066, %v1027, %v1098
        %v1131 = vsel %vm1067, %v1030, %v1099
        %v1132 = vsel %vm1068, %v1032, %v1100
        %v1133 = vsel %vm1069, %v1035, %v1101
        %v1134 = vsel %vm1070, %v1037, %v1102
        %1135 = vst.msk [vmem:[#allocation2] sm:$0xff] %vm723, 0.0
        %1136 = vst.msk [vmem:[#allocation2 + $0x8] sm:$0xff] %vm723, 0.0
        %vm1137 = vcmask 254976
        %1138 = vst.msk [vmem:[#allocation2 + $0x10] sm:$0x3] %vm1137, 0.0
        %s1139 = scalar_lea.vmem [#allocation2], 408
        %1140 = vst.msk [vmem:[%s1139] sm:$0xff] %vm723, 0.0
        %1141 = vst.msk [vmem:[%s1139 + $0x8] sm:$0xff] %vm723, 0.0
        %1142 = vst.msk [vmem:[%s1139 + $0x10] sm:$0x3] %vm1137, 0.0
        %s1143 = scalar_lea.vmem [#allocation2], 24
        %vm1144 = vcmask 253952
        %1145 = vst.msk [vmem:[%s1143] sm:$0x1] %vm1144, 0.0
        %1146 = vst.msk [vmem:[%s1143 + $0x18] sm:$0x1] %vm1144, 0.0
        %1147 = vst.msk [vmem:[%s1143 + $0x30] sm:$0x1] %vm1144, 0.0
        %1148 = vst.msk [vmem:[%s1143 + $0x48] sm:$0x1] %vm1144, 0.0
        %1149 = vst.msk [vmem:[%s1143 + $0x60] sm:$0x1] %vm1144, 0.0
        %1150 = vst.msk [vmem:[%s1143 + $0x78] sm:$0x1] %vm1144, 0.0
        %1151 = vst.msk [vmem:[%s1143 + $0x90] sm:$0x1] %vm1144, 0.0
        %1152 = vst.msk [vmem:[%s1143 + $0xa8] sm:$0x1] %vm1144, 0.0
        %1153 = vst.msk [vmem:[%s1143 + $0xc0] sm:$0x1] %vm1144, 0.0
        %1154 = vst.msk [vmem:[%s1143 + $0xd8] sm:$0x1] %vm1144, 0.0
        %1155 = vst.msk [vmem:[%s1143 + $0xf0] sm:$0x1] %vm1144, 0.0
        %1156 = vst.msk [vmem:[%s1143 + $0x108] sm:$0x1] %vm1144, 0.0
        %1157 = vst.msk [vmem:[%s1143 + $0x120] sm:$0x1] %vm1144, 0.0
        %1158 = vst.msk [vmem:[%s1143 + $0x138] sm:$0x1] %vm1144, 0.0
        %1159 = vst.msk [vmem:[%s1143 + $0x150] sm:$0x1] %vm1144, 0.0
        %1160 = vst.msk [vmem:[%s1143 + $0x168] sm:$0x1] %vm1144, 0.0
        %1161 = vst.msk [vmem:[%s1143 + $0x11] sm:$0x1] %vm1144, 0.0
        %1162 = vst.msk [vmem:[%s1143 + $0x29] sm:$0x1] %vm1144, 0.0
        %1163 = vst.msk [vmem:[%s1143 + $0x41] sm:$0x1] %vm1144, 0.0
        %1164 = vst.msk [vmem:[%s1143 + $0x59] sm:$0x1] %vm1144, 0.0
        %1165 = vst.msk [vmem:[%s1143 + $0x71] sm:$0x1] %vm1144, 0.0
        %1166 = vst.msk [vmem:[%s1143 + $0x89] sm:$0x1] %vm1144, 0.0
        %1167 = vst.msk [vmem:[%s1143 + $0xa1] sm:$0x1] %vm1144, 0.0
        %1168 = vst.msk [vmem:[%s1143 + $0xb9] sm:$0x1] %vm1144, 0.0
        %1169 = vst.msk [vmem:[%s1143 + $0xd1] sm:$0x1] %vm1144, 0.0
        %1170 = vst.msk [vmem:[%s1143 + $0xe9] sm:$0x1] %vm1144, 0.0
        %1171 = vst.msk [vmem:[%s1143 + $0x101] sm:$0x1] %vm1144, 0.0
        %1172 = vst.msk [vmem:[%s1143 + $0x119] sm:$0x1] %vm1144, 0.0
        %1173 = vst.msk [vmem:[%s1143 + $0x131] sm:$0x1] %vm1144, 0.0
        %1174 = vst.msk [vmem:[%s1143 + $0x149] sm:$0x1] %vm1144, 0.0
        %1175 = vst.msk [vmem:[%s1143 + $0x161] sm:$0x1] %vm1144, 0.0
        %1176 = vst.msk [vmem:[%s1143 + $0x179] sm:$0x1] %vm1144, 0.0
        %1177 = vst.msk [vmem:[%s1143 + $0x1] sm:$0xff] %vm723, %v1103
        %1178 = vst.msk [vmem:[%s1143 + $0x9] sm:$0xff] %vm723, %v1104
        %1179 = vst.msk [vmem:[%s1143 + $0x19] sm:$0xff] %vm723, %v1105
        %1180 = vst.msk [vmem:[%s1143 + $0x21] sm:$0xff] %vm723, %v1106
        %1181 = vst.msk [vmem:[%s1143 + $0x31] sm:$0xff] %vm723, %v1107
        %1182 = vst.msk [vmem:[%s1143 + $0x39] sm:$0xff] %vm723, %v1108
        %1183 = vst.msk [vmem:[%s1143 + $0x49] sm:$0xff] %vm723, %v1109
        %1184 = vst.msk [vmem:[%s1143 + $0x51] sm:$0xff] %vm723, %v1110
        %1185 = vst.msk [vmem:[%s1143 + $0x61] sm:$0xff] %vm723, %v1111
        %1186 = vst.msk [vmem:[%s1143 + $0x69] sm:$0xff] %vm723, %v1112
        %1187 = vst.msk [vmem:[%s1143 + $0x79] sm:$0xff] %vm723, %v1113
        %1188 = vst.msk [vmem:[%s1143 + $0x81] sm:$0xff] %vm723, %v1114
        %1189 = vst.msk [vmem:[%s1143 + $0x91] sm:$0xff] %vm723, %v1115
        %1190 = vst.msk [vmem:[%s1143 + $0x99] sm:$0xff] %vm723, %v1116
        %1191 = vst.msk [vmem:[%s1143 + $0xa9] sm:$0xff] %vm723, %v1117
        %1192 = vst.msk [vmem:[%s1143 + $0xb1] sm:$0xff] %vm723, %v1118
        %1193 = vst.msk [vmem:[%s1143 + $0xc1] sm:$0xff] %vm723, %v1119
        %1194 = vst.msk [vmem:[%s1143 + $0xc9] sm:$0xff] %vm723, %v1120
        %1195 = vst.msk [vmem:[%s1143 + $0xd9] sm:$0xff] %vm723, %v1121
        %1196 = vst.msk [vmem:[%s1143 + $0xe1] sm:$0xff] %vm723, %v1122
        %1197 = vst.msk [vmem:[%s1143 + $0xf1] sm:$0xff] %vm723, %v1123
        %1198 = vst.msk [vmem:[%s1143 + $0xf9] sm:$0xff] %vm723, %v1124
        %1199 = vst.msk [vmem:[%s1143 + $0x109] sm:$0xff] %vm723, %v1125
        %1200 = vst.msk [vmem:[%s1143 + $0x111] sm:$0xff] %vm723, %v1126
        %1201 = vst.msk [vmem:[%s1143 + $0x121] sm:$0xff] %vm723, %v1127
        %1202 = vst.msk [vmem:[%s1143 + $0x129] sm:$0xff] %vm723, %v1128
        %1203 = vst.msk [vmem:[%s1143 + $0x139] sm:$0xff] %vm723, %v1129
        %1204 = vst.msk [vmem:[%s1143 + $0x141] sm:$0xff] %vm723, %v1130
        %1205 = vst.msk [vmem:[%s1143 + $0x151] sm:$0xff] %vm723, %v1131
        %1206 = vst.msk [vmem:[%s1143 + $0x159] sm:$0xff] %vm723, %v1132
        %1207 = vst.msk [vmem:[%s1143 + $0x169] sm:$0xff] %vm723, %v1133
        %1208 = vst.msk [vmem:[%s1143 + $0x171] sm:$0xff] %vm723, %v1134
        %v1209 = vld [vmem:[%s269] sm:$0xff]
        %v1210 = vld [vmem:[%s269 + $0x8] sm:$0xff]
        %v1211 = vld [vmem:[%s269 + $0x10] sm:$0xff]
        %v1212 = vld [vmem:[%s269 + $0x18] sm:$0xff]
        %v1213 = vld [vmem:[%s269 + $0x20] sm:$0xff]
        %v1214 = vld [vmem:[%s269 + $0x28] sm:$0xff]
        %v1215 = vld [vmem:[%s269 + $0x30] sm:$0xff]
        %v1216 = vld [vmem:[%s269 + $0x38] sm:$0xff]
        %v1217 = vld [vmem:[%s269 + $0x40] sm:$0xff]
        %v1218 = vld [vmem:[%s269 + $0x48] sm:$0xff]
        %v1219 = vld [vmem:[%s269 + $0x50] sm:$0xff]
        %v1220 = vld [vmem:[%s269 + $0x58] sm:$0xff]
        %v1221 = vld [vmem:[%s269 + $0x60] sm:$0xff]
        %v1222 = vld [vmem:[%s269 + $0x68] sm:$0xff]
        %v1223 = vld [vmem:[%s269 + $0x70] sm:$0xff]
        %v1224 = vld [vmem:[%s269 + $0x78] sm:$0xff]
        %v1225 = vld [vmem:[%s269 + $0x80] sm:$0xff]
        %v1226 = vld [vmem:[%s269 + $0x88] sm:$0xff]
        %v1227 = vld [vmem:[%s269 + $0x90] sm:$0xff]
        %v1228 = vld [vmem:[%s269 + $0x98] sm:$0xff]
        %v1229 = vld [vmem:[%s269 + $0xa0] sm:$0xff]
        %v1230 = vld [vmem:[%s269 + $0xa8] sm:$0xff]
        %v1231 = vld [vmem:[%s269 + $0xb0] sm:$0xff]
        %v1232 = vld [vmem:[%s269 + $0xb8] sm:$0xff]
        %v1233 = vld [vmem:[%s269 + $0xc0] sm:$0xff]
        %v1234 = vld [vmem:[%s269 + $0xc8] sm:$0xff]
        %v1235 = vld [vmem:[%s269 + $0xd0] sm:$0xff]
        %v1236 = vld [vmem:[%s269 + $0xd8] sm:$0xff]
        %v1237 = vld [vmem:[%s269 + $0xe0] sm:$0xff]
        %v1238 = vld [vmem:[%s269 + $0xe8] sm:$0xff]
        %v1239 = vld [vmem:[%s269 + $0xf0] sm:$0xff]
        %v1240 = vld [vmem:[%s269 + $0xf8] sm:$0xff]
        %v1241 = vld [vmem:[%s4] sm:$0x1]
        %v1243 = vperm.slane %v1241, 0
        %v1245 = vadd.f32 %v1209, %v1243
        %v1246 = vadd.f32 %v1210, %v1243
        %v1247 = vadd.f32 %v1211, %v1243
        %v1248 = vadd.f32 %v1212, %v1243
        %v1249 = vadd.f32 %v1213, %v1243
        %v1250 = vadd.f32 %v1214, %v1243
        %v1251 = vadd.f32 %v1215, %v1243
        %v1252 = vadd.f32 %v1216, %v1243
        %v1253 = vadd.f32 %v1217, %v1243
        %v1254 = vadd.f32 %v1218, %v1243
        %v1255 = vadd.f32 %v1219, %v1243
        %v1256 = vadd.f32 %v1220, %v1243
        %v1257 = vadd.f32 %v1221, %v1243
        %v1258 = vadd.f32 %v1222, %v1243
        %v1259 = vadd.f32 %v1223, %v1243
        %v1260 = vadd.f32 %v1224, %v1243
        %v1261 = vadd.f32 %v1225, %v1243
        %v1262 = vadd.f32 %v1226, %v1243
        %v1263 = vadd.f32 %v1227, %v1243
        %v1264 = vadd.f32 %v1228, %v1243
        %v1265 = vadd.f32 %v1229, %v1243
        %v1266 = vadd.f32 %v1230, %v1243
        %v1267 = vadd.f32 %v1231, %v1243
        %v1268 = vadd.f32 %v1232, %v1243
        %v1269 = vadd.f32 %v1233, %v1243
        %v1270 = vadd.f32 %v1234, %v1243
        %v1271 = vadd.f32 %v1235, %v1243
        %v1272 = vadd.f32 %v1236, %v1243
        %v1273 = vadd.f32 %v1237, %v1243
        %v1274 = vadd.f32 %v1238, %v1243
        %v1275 = vadd.f32 %v1239, %v1243
        %v1276 = vadd.f32 %v1240, %v1243
        %v1277 = vld [vmem:[#allocation2] sm:$0xff]
        %v1278 = vld [vmem:[#allocation2 + $0x8] sm:$0xff]
        %v1279 = vld [vmem:[#allocation2 + $0x18] sm:$0xff]
        %v1280 = vld [vmem:[#allocation2 + $0x20] sm:$0xff]
        %v1281 = vld [vmem:[#allocation2 + $0x30] sm:$0xff]
        %v1282 = vld [vmem:[#allocation2 + $0x38] sm:$0xff]
        %v1283 = vld [vmem:[#allocation2 + $0x48] sm:$0xff]
        %v1284 = vld [vmem:[#allocation2 + $0x50] sm:$0xff]
        %v1285 = vld [vmem:[#allocation2 + $0x60] sm:$0xff]
        %v1286 = vld [vmem:[#allocation2 + $0x68] sm:$0xff]
        %v1287 = vld [vmem:[#allocation2 + $0x78] sm:$0xff]
        %v1288 = vld [vmem:[#allocation2 + $0x80] sm:$0xff]
        %v1289 = vld [vmem:[#allocation2 + $0x90] sm:$0xff]
        %v1290 = vld [vmem:[#allocation2 + $0x98] sm:$0xff]
        %v1291 = vld [vmem:[#allocation2 + $0xa8] sm:$0xff]
        %v1292 = vld [vmem:[#allocation2 + $0xb0] sm:$0xff]
        %v1293 = vld [vmem:[#allocation2 + $0xc0] sm:$0xff]
        %v1294 = vld [vmem:[#allocation2 + $0xc8] sm:$0xff]
        %v1295 = vld [vmem:[#allocation2 + $0xd8] sm:$0xff]
        %v1296 = vld [vmem:[#allocation2 + $0xe0] sm:$0xff]
        %v1297 = vld [vmem:[#allocation2 + $0xf0] sm:$0xff]
        %v1298 = vld [vmem:[#allocation2 + $0xf8] sm:$0xff]
        %v1299 = vld [vmem:[#allocation2 + $0x108] sm:$0xff]
        %v1300 = vld [vmem:[#allocation2 + $0x110] sm:$0xff]
        %v1301 = vld [vmem:[#allocation2 + $0x120] sm:$0xff]
        %v1302 = vld [vmem:[#allocation2 + $0x128] sm:$0xff]
        %v1303 = vld [vmem:[#allocation2 + $0x138] sm:$0xff]
        %v1304 = vld [vmem:[#allocation2 + $0x140] sm:$0xff]
        %v1305 = vld [vmem:[#allocation2 + $0x150] sm:$0xff]
        %v1306 = vld [vmem:[#allocation2 + $0x158] sm:$0xff]
        %v1307 = vld [vmem:[#allocation2 + $0x168] sm:$0xff]
        %v1308 = vld [vmem:[#allocation2 + $0x170] sm:$0xff]
        %v1309 = vpack.c.bf16 %v1277, %v1277
        %v1310 = vpack.c.bf16 %v1278, %v1278
        %v1311 = vpack.c.bf16 %v1279, %v1279
        %v1312 = vpack.c.bf16 %v1280, %v1280
        %v1313 = vpack.c.bf16 %v1281, %v1281
        %v1314 = vpack.c.bf16 %v1282, %v1282
        %v1315 = vpack.c.bf16 %v1283, %v1283
        %v1316 = vpack.c.bf16 %v1284, %v1284
        %v1317 = vpack.c.bf16 %v1285, %v1285
        %v1318 = vpack.c.bf16 %v1286, %v1286
        %v1319 = vpack.c.bf16 %v1287, %v1287
        %v1320 = vpack.c.bf16 %v1288, %v1288
        %v1321 = vpack.c.bf16 %v1289, %v1289
        %v1322 = vpack.c.bf16 %v1290, %v1290
        %v1323 = vpack.c.bf16 %v1291, %v1291
        %v1324 = vpack.c.bf16 %v1292, %v1292
        %v1325 = vpack.c.bf16 %v1293, %v1293
        %v1326 = vpack.c.bf16 %v1294, %v1294
        %v1327 = vpack.c.bf16 %v1295, %v1295
        %v1328 = vpack.c.bf16 %v1296, %v1296
        %v1329 = vpack.c.bf16 %v1297, %v1297
        %v1330 = vpack.c.bf16 %v1298, %v1298
        %v1331 = vpack.c.bf16 %v1299, %v1299
        %v1332 = vpack.c.bf16 %v1300, %v1300
        %v1333 = vpack.c.bf16 %v1301, %v1301
        %v1334 = vpack.c.bf16 %v1302, %v1302
        %v1335 = vpack.c.bf16 %v1303, %v1303
        %v1336 = vpack.c.bf16 %v1304, %v1304
        %v1337 = vpack.c.bf16 %v1305, %v1305
        %v1338 = vpack.c.bf16 %v1306, %v1306
        %v1339 = vpack.c.bf16 %v1307, %v1307
        %v1340 = vpack.c.bf16 %v1308, %v1308
        %v1341 = vld [vmem:[%s3] sm:$0xf]
        %v1342 = vld [vmem:[%s3 + $0x4] sm:$0xf]
        %v1343 = vld [vmem:[%s3 + $0x8] sm:$0xf]
        %v1344 = vld [vmem:[%s3 + $0xc] sm:$0xf]
        %v1377 = vunpack.c.l.b16 %v1309
        %v1378 = vunpack.c.l.b16 %v1310
        %v1379 = vunpack.c.l.b16 %v1311
        %v1380 = vunpack.c.l.b16 %v1312
        %v1381 = vunpack.c.l.b16 %v1313
        %v1382 = vunpack.c.l.b16 %v1314
        %v1383 = vunpack.c.l.b16 %v1315
        %v1384 = vunpack.c.l.b16 %v1316
        %v1385 = vunpack.c.l.b16 %v1317
        %v1386 = vunpack.c.l.b16 %v1318
        %v1387 = vunpack.c.l.b16 %v1319
        %v1388 = vunpack.c.l.b16 %v1320
        %v1389 = vunpack.c.l.b16 %v1321
        %v1390 = vunpack.c.l.b16 %v1322
        %v1391 = vunpack.c.l.b16 %v1323
        %v1392 = vunpack.c.l.b16 %v1324
        %v1393 = vunpack.c.l.b16 %v1325
        %v1394 = vunpack.c.l.b16 %v1326
        %v1395 = vunpack.c.l.b16 %v1327
        %v1396 = vunpack.c.l.b16 %v1328
        %v1397 = vunpack.c.l.b16 %v1329
        %v1398 = vunpack.c.l.b16 %v1330
        %v1399 = vunpack.c.l.b16 %v1331
        %v1400 = vunpack.c.l.b16 %v1332
        %v1401 = vunpack.c.l.b16 %v1333
        %v1402 = vunpack.c.l.b16 %v1334
        %v1403 = vunpack.c.l.b16 %v1335
        %v1404 = vunpack.c.l.b16 %v1336
        %v1405 = vunpack.c.l.b16 %v1337
        %v1406 = vunpack.c.l.b16 %v1338
        %v1407 = vunpack.c.l.b16 %v1339
        %v1408 = vunpack.c.l.b16 %v1340
        %v1409 = vpack.c.b16 %v1378, %v1377
        %v1410 = vpack.c.b16 %v1380, %v1379
        %v1411 = vpack.c.b16 %v1382, %v1381
        %v1412 = vpack.c.b16 %v1384, %v1383
        %v1413 = vpack.c.b16 %v1386, %v1385
        %v1414 = vpack.c.b16 %v1388, %v1387
        %v1415 = vpack.c.b16 %v1390, %v1389
        %v1416 = vpack.c.b16 %v1392, %v1391
        %v1417 = vpack.c.b16 %v1394, %v1393
        %v1418 = vpack.c.b16 %v1396, %v1395
        %v1419 = vpack.c.b16 %v1398, %v1397
        %v1420 = vpack.c.b16 %v1400, %v1399
        %v1421 = vpack.c.b16 %v1402, %v1401
        %v1422 = vpack.c.b16 %v1404, %v1403
        %v1423 = vpack.c.b16 %v1406, %v1405
        %v1424 = vpack.c.b16 %v1408, %v1407
        %v1429 = vunpack.c.l.b16 %v1341
        %v1430 = vunpack.c.l.b16 %v1342
        %v1431 = vunpack.c.l.b16 %v1343
        %v1432 = vunpack.c.l.b16 %v1344
        %v1433 = vpack.c.b16 %v1430, %v1429
        %v1434 = vpack.c.b16 %v1432, %v1431
        %v1438 = vsel %vm723, %v1409, 0
        %v1441 = vsel %vm723, %v1410, 0
        %v1444 = vsel %vm723, %v1411, 0
        %v1447 = vsel %vm723, %v1412, 0
        %v1450 = vsel %vm723, %v1413, 0
        %v1453 = vsel %vm723, %v1414, 0
        %v1456 = vsel %vm723, %v1415, 0
        %v1459 = vsel %vm723, %v1416, 0
        %v1462 = vsel %vm723, %v1417, 0
        %v1465 = vsel %vm723, %v1418, 0
        %v1468 = vsel %vm723, %v1419, 0
        %v1471 = vsel %vm723, %v1420, 0
        %v1474 = vsel %vm723, %v1421, 0
        %v1477 = vsel %vm723, %v1422, 0
        %v1480 = vsel %vm723, %v1423, 0
        %v1483 = vsel %vm723, %v1424, 0
        %1485 = vmatpush.bf16.msra.mxu0 0
        %1486 = vmatpush.bf16.msra.mxu0 0
        %1487 = vmatpush.bf16.msra.mxu0 0
        %1488 = vmatpush.bf16.msra.mxu0 0
        %1489 = vmatpush.bf16.msra.mxu0 0
        %1490 = vmatpush.bf16.msra.mxu0 0
        %1491 = vmatpush.bf16.msra.mxu0 %v1434
        %1492 = vmatpush.bf16.msra.mxu0 %v1433
        %1493 = vmatmul.bf16.gmra.mxu0 %v1438
        %v1494 = vpop.f32.mrf.mxu0
        %v1495 = vadd.f32 0.0, %v1494
        %v1496 = vpop.f32.mrf.mxu0
        %v1497 = vadd.f32 0.0, %v1496
        %1498 = vmatmul.bf16.gmra.mxu0 %v1441
        %v1499 = vpop.f32.mrf.mxu0
        %v1500 = vadd.f32 0.0, %v1499
        %v1501 = vpop.f32.mrf.mxu0
        %v1502 = vadd.f32 0.0, %v1501
        %1503 = vmatmul.bf16.gmra.mxu0 %v1444
        %v1504 = vpop.f32.mrf.mxu0
        %v1505 = vadd.f32 0.0, %v1504
        %v1506 = vpop.f32.mrf.mxu0
        %v1507 = vadd.f32 0.0, %v1506
        %1508 = vmatmul.bf16.gmra.mxu0 %v1447
        %v1509 = vpop.f32.mrf.mxu0
        %v1510 = vadd.f32 0.0, %v1509
        %v1511 = vpop.f32.mrf.mxu0
        %v1512 = vadd.f32 0.0, %v1511
        %1513 = vmatmul.bf16.gmra.mxu0 %v1450
        %v1514 = vpop.f32.mrf.mxu0
        %v1515 = vadd.f32 0.0, %v1514
        %v1516 = vpop.f32.mrf.mxu0
        %v1517 = vadd.f32 0.0, %v1516
        %1518 = vmatmul.bf16.gmra.mxu0 %v1453
        %v1519 = vpop.f32.mrf.mxu0
        %v1520 = vadd.f32 0.0, %v1519
        %v1521 = vpop.f32.mrf.mxu0
        %v1522 = vadd.f32 0.0, %v1521
        %1523 = vmatmul.bf16.gmra.mxu0 %v1456
        %v1524 = vpop.f32.mrf.mxu0
        %v1525 = vadd.f32 0.0, %v1524
        %v1526 = vpop.f32.mrf.mxu0
        %v1527 = vadd.f32 0.0, %v1526
        %1528 = vmatmul.bf16.gmra.mxu0 %v1459
        %v1529 = vpop.f32.mrf.mxu0
        %v1530 = vadd.f32 0.0, %v1529
        %v1531 = vpop.f32.mrf.mxu0
        %v1532 = vadd.f32 0.0, %v1531
        %1533 = vmatmul.bf16.gmra.mxu0 %v1462
        %v1534 = vpop.f32.mrf.mxu0
        %v1535 = vadd.f32 0.0, %v1534
        %v1536 = vpop.f32.mrf.mxu0
        %v1537 = vadd.f32 0.0, %v1536
        %1538 = vmatmul.bf16.gmra.mxu0 %v1465
        %v1539 = vpop.f32.mrf.mxu0
        %v1540 = vadd.f32 0.0, %v1539
        %v1541 = vpop.f32.mrf.mxu0
        %v1542 = vadd.f32 0.0, %v1541
        %1543 = vmatmul.bf16.gmra.mxu0 %v1468
        %v1544 = vpop.f32.mrf.mxu0
        %v1545 = vadd.f32 0.0, %v1544
        %v1546 = vpop.f32.mrf.mxu0
        %v1547 = vadd.f32 0.0, %v1546
        %1548 = vmatmul.bf16.gmra.mxu0 %v1471
        %v1549 = vpop.f32.mrf.mxu0
        %v1550 = vadd.f32 0.0, %v1549
        %v1551 = vpop.f32.mrf.mxu0
        %v1552 = vadd.f32 0.0, %v1551
        %1553 = vmatmul.bf16.gmra.mxu0 %v1474
        %v1554 = vpop.f32.mrf.mxu0
        %v1555 = vadd.f32 0.0, %v1554
        %v1556 = vpop.f32.mrf.mxu0
        %v1557 = vadd.f32 0.0, %v1556
        %1558 = vmatmul.bf16.gmra.mxu0 %v1477
        %v1559 = vpop.f32.mrf.mxu0
        %v1560 = vadd.f32 0.0, %v1559
        %v1561 = vpop.f32.mrf.mxu0
        %v1562 = vadd.f32 0.0, %v1561
        %1563 = vmatmul.bf16.gmra.mxu0 %v1480
        %v1564 = vpop.f32.mrf.mxu0
        %v1565 = vadd.f32 0.0, %v1564
        %v1566 = vpop.f32.mrf.mxu0
        %v1567 = vadd.f32 0.0, %v1566
        %1568 = vmatmul.bf16.gmra.mxu0 %v1483
        %v1569 = vpop.f32.mrf.mxu0
        %v1570 = vadd.f32 0.0, %v1569
        %v1571 = vpop.f32.mrf.mxu0
        %v1572 = vadd.f32 0.0, %v1571
        %1573 = vdwg.mxu0
        %v1574 = vadd.f32 %v1245, %v1495
        %v1575 = vadd.f32 %v1246, %v1497
        %v1576 = vadd.f32 %v1247, %v1500
        %v1577 = vadd.f32 %v1248, %v1502
        %v1578 = vadd.f32 %v1249, %v1505
        %v1579 = vadd.f32 %v1250, %v1507
        %v1580 = vadd.f32 %v1251, %v1510
        %v1581 = vadd.f32 %v1252, %v1512
        %v1582 = vadd.f32 %v1253, %v1515
        %v1583 = vadd.f32 %v1254, %v1517
        %v1584 = vadd.f32 %v1255, %v1520
        %v1585 = vadd.f32 %v1256, %v1522
        %v1586 = vadd.f32 %v1257, %v1525
        %v1587 = vadd.f32 %v1258, %v1527
        %v1588 = vadd.f32 %v1259, %v1530
        %v1589 = vadd.f32 %v1260, %v1532
        %v1590 = vadd.f32 %v1261, %v1535
        %v1591 = vadd.f32 %v1262, %v1537
        %v1592 = vadd.f32 %v1263, %v1540
        %v1593 = vadd.f32 %v1264, %v1542
        %v1594 = vadd.f32 %v1265, %v1545
        %v1595 = vadd.f32 %v1266, %v1547
        %v1596 = vadd.f32 %v1267, %v1550
        %v1597 = vadd.f32 %v1268, %v1552
        %v1598 = vadd.f32 %v1269, %v1555
        %v1599 = vadd.f32 %v1270, %v1557
        %v1600 = vadd.f32 %v1271, %v1560
        %v1601 = vadd.f32 %v1272, %v1562
        %v1602 = vadd.f32 %v1273, %v1565
        %v1603 = vadd.f32 %v1274, %v1567
        %v1604 = vadd.f32 %v1275, %v1570
        %v1605 = vadd.f32 %v1276, %v1572
        %v1606 = vld [vmem:[#allocation2 + $0x1] sm:$0xff]
        %v1607 = vld [vmem:[#allocation2 + $0x9] sm:$0xff]
        %v1608 = vld [vmem:[#allocation2 + $0x19] sm:$0xff]
        %v1609 = vld [vmem:[#allocation2 + $0x21] sm:$0xff]
        %v1610 = vld [vmem:[#allocation2 + $0x31] sm:$0xff]
        %v1611 = vld [vmem:[#allocation2 + $0x39] sm:$0xff]
        %v1612 = vld [vmem:[#allocation2 + $0x49] sm:$0xff]
        %v1613 = vld [vmem:[#allocation2 + $0x51] sm:$0xff]
        %v1614 = vld [vmem:[#allocation2 + $0x61] sm:$0xff]
        %v1615 = vld [vmem:[#allocation2 + $0x69] sm:$0xff]
        %v1616 = vld [vmem:[#allocation2 + $0x79] sm:$0xff]
        %v1617 = vld [vmem:[#allocation2 + $0x81] sm:$0xff]
        %v1618 = vld [vmem:[#allocation2 + $0x91] sm:$0xff]
        %v1619 = vld [vmem:[#allocation2 + $0x99] sm:$0xff]
        %v1620 = vld [vmem:[#allocation2 + $0xa9] sm:$0xff]
        %v1621 = vld [vmem:[#allocation2 + $0xb1] sm:$0xff]
        %v1622 = vld [vmem:[#allocation2 + $0xc1] sm:$0xff]
        %v1623 = vld [vmem:[#allocation2 + $0xc9] sm:$0xff]
        %v1624 = vld [vmem:[#allocation2 + $0xd9] sm:$0xff]
        %v1625 = vld [vmem:[#allocation2 + $0xe1] sm:$0xff]
        %v1626 = vld [vmem:[#allocation2 + $0xf1] sm:$0xff]
        %v1627 = vld [vmem:[#allocation2 + $0xf9] sm:$0xff]
        %v1628 = vld [vmem:[#allocation2 + $0x109] sm:$0xff]
        %v1629 = vld [vmem:[#allocation2 + $0x111] sm:$0xff]
        %v1630 = vld [vmem:[#allocation2 + $0x121] sm:$0xff]
        %v1631 = vld [vmem:[#allocation2 + $0x129] sm:$0xff]
        %v1632 = vld [vmem:[#allocation2 + $0x139] sm:$0xff]
        %v1633 = vld [vmem:[#allocation2 + $0x141] sm:$0xff]
        %v1634 = vld [vmem:[#allocation2 + $0x151] sm:$0xff]
        %v1635 = vld [vmem:[#allocation2 + $0x159] sm:$0xff]
        %v1636 = vld [vmem:[#allocation2 + $0x169] sm:$0xff]
        %v1637 = vld [vmem:[#allocation2 + $0x171] sm:$0xff]
        %v1638 = vpack.c.bf16 %v1606, %v1606
        %v1639 = vpack.c.bf16 %v1607, %v1607
        %v1640 = vpack.c.bf16 %v1608, %v1608
        %v1641 = vpack.c.bf16 %v1609, %v1609
        %v1642 = vpack.c.bf16 %v1610, %v1610
        %v1643 = vpack.c.bf16 %v1611, %v1611
        %v1644 = vpack.c.bf16 %v1612, %v1612
        %v1645 = vpack.c.bf16 %v1613, %v1613
        %v1646 = vpack.c.bf16 %v1614, %v1614
        %v1647 = vpack.c.bf16 %v1615, %v1615
        %v1648 = vpack.c.bf16 %v1616, %v1616
        %v1649 = vpack.c.bf16 %v1617, %v1617
        %v1650 = vpack.c.bf16 %v1618, %v1618
        %v1651 = vpack.c.bf16 %v1619, %v1619
        %v1652 = vpack.c.bf16 %v1620, %v1620
        %v1653 = vpack.c.bf16 %v1621, %v1621
        %v1654 = vpack.c.bf16 %v1622, %v1622
        %v1655 = vpack.c.bf16 %v1623, %v1623
        %v1656 = vpack.c.bf16 %v1624, %v1624
        %v1657 = vpack.c.bf16 %v1625, %v1625
        %v1658 = vpack.c.bf16 %v1626, %v1626
        %v1659 = vpack.c.bf16 %v1627, %v1627
        %v1660 = vpack.c.bf16 %v1628, %v1628
        %v1661 = vpack.c.bf16 %v1629, %v1629
        %v1662 = vpack.c.bf16 %v1630, %v1630
        %v1663 = vpack.c.bf16 %v1631, %v1631
        %v1664 = vpack.c.bf16 %v1632, %v1632
        %v1665 = vpack.c.bf16 %v1633, %v1633
        %v1666 = vpack.c.bf16 %v1634, %v1634
        %v1667 = vpack.c.bf16 %v1635, %v1635
        %v1668 = vpack.c.bf16 %v1636, %v1636
        %v1669 = vpack.c.bf16 %v1637, %v1637
        %s1670 = scalar_lea.vmem %s3, 16
        %v1671 = vld [vmem:[%s1670] sm:$0xf]
        %v1672 = vld [vmem:[%s1670 + $0x4] sm:$0xf]
        %v1673 = vld [vmem:[%s1670 + $0x8] sm:$0xf]
        %v1674 = vld [vmem:[%s1670 + $0xc] sm:$0xf]
        %v1707 = vunpack.c.l.b16 %v1638
        %v1708 = vunpack.c.l.b16 %v1639
        %v1709 = vunpack.c.l.b16 %v1640
        %v1710 = vunpack.c.l.b16 %v1641
        %v1711 = vunpack.c.l.b16 %v1642
        %v1712 = vunpack.c.l.b16 %v1643
        %v1713 = vunpack.c.l.b16 %v1644
        %v1714 = vunpack.c.l.b16 %v1645
        %v1715 = vunpack.c.l.b16 %v1646
        %v1716 = vunpack.c.l.b16 %v1647
        %v1717 = vunpack.c.l.b16 %v1648
        %v1718 = vunpack.c.l.b16 %v1649
        %v1719 = vunpack.c.l.b16 %v1650
        %v1720 = vunpack.c.l.b16 %v1651
        %v1721 = vunpack.c.l.b16 %v1652
        %v1722 = vunpack.c.l.b16 %v1653
        %v1723 = vunpack.c.l.b16 %v1654
        %v1724 = vunpack.c.l.b16 %v1655
        %v1725 = vunpack.c.l.b16 %v1656
        %v1726 = vunpack.c.l.b16 %v1657
        %v1727 = vunpack.c.l.b16 %v1658
        %v1728 = vunpack.c.l.b16 %v1659
        %v1729 = vunpack.c.l.b16 %v1660
        %v1730 = vunpack.c.l.b16 %v1661
        %v1731 = vunpack.c.l.b16 %v1662
        %v1732 = vunpack.c.l.b16 %v1663
        %v1733 = vunpack.c.l.b16 %v1664
        %v1734 = vunpack.c.l.b16 %v1665
        %v1735 = vunpack.c.l.b16 %v1666
        %v1736 = vunpack.c.l.b16 %v1667
        %v1737 = vunpack.c.l.b16 %v1668
        %v1738 = vunpack.c.l.b16 %v1669
        %v1739 = vpack.c.b16 %v1708, %v1707
        %v1740 = vpack.c.b16 %v1710, %v1709
        %v1741 = vpack.c.b16 %v1712, %v1711
        %v1742 = vpack.c.b16 %v1714, %v1713
        %v1743 = vpack.c.b16 %v1716, %v1715
        %v1744 = vpack.c.b16 %v1718, %v1717
        %v1745 = vpack.c.b16 %v1720, %v1719
        %v1746 = vpack.c.b16 %v1722, %v1721
        %v1747 = vpack.c.b16 %v1724, %v1723
        %v1748 = vpack.c.b16 %v1726, %v1725
        %v1749 = vpack.c.b16 %v1728, %v1727
        %v1750 = vpack.c.b16 %v1730, %v1729
        %v1751 = vpack.c.b16 %v1732, %v1731
        %v1752 = vpack.c.b16 %v1734, %v1733
        %v1753 = vpack.c.b16 %v1736, %v1735
        %v1754 = vpack.c.b16 %v1738, %v1737
        %v1759 = vunpack.c.l.b16 %v1671
        %v1760 = vunpack.c.l.b16 %v1672
        %v1761 = vunpack.c.l.b16 %v1673
        %v1762 = vunpack.c.l.b16 %v1674
        %v1763 = vpack.c.b16 %v1760, %v1759
        %v1764 = vpack.c.b16 %v1762, %v1761
        %v1768 = vsel %vm723, %v1739, 0
        %v1771 = vsel %vm723, %v1740, 0
        %v1774 = vsel %vm723, %v1741, 0
        %v1777 = vsel %vm723, %v1742, 0
        %v1780 = vsel %vm723, %v1743, 0
        %v1783 = vsel %vm723, %v1744, 0
        %v1786 = vsel %vm723, %v1745, 0
        %v1789 = vsel %vm723, %v1746, 0
        %v1792 = vsel %vm723, %v1747, 0
        %v1795 = vsel %vm723, %v1748, 0
        %v1798 = vsel %vm723, %v1749, 0
        %v1801 = vsel %vm723, %v1750, 0
        %v1804 = vsel %vm723, %v1751, 0
        %v1807 = vsel %vm723, %v1752, 0
        %v1810 = vsel %vm723, %v1753, 0
        %v1813 = vsel %vm723, %v1754, 0
        %1815 = vmatpush.bf16.msra.mxu0 0
        %1816 = vmatpush.bf16.msra.mxu0 0
        %1817 = vmatpush.bf16.msra.mxu0 0
        %1818 = vmatpush.bf16.msra.mxu0 0
        %1819 = vmatpush.bf16.msra.mxu0 0
        %1820 = vmatpush.bf16.msra.mxu0 0
        %1821 = vmatpush.bf16.msra.mxu0 %v1764
        %1822 = vmatpush.bf16.msra.mxu0 %v1763
        %1823 = vmatmul.bf16.gmra.mxu0 %v1768
        %v1824 = vpop.f32.mrf.mxu0
        %v1825 = vadd.f32 0.0, %v1824
        %v1826 = vpop.f32.mrf.mxu0
        %v1827 = vadd.f32 0.0, %v1826
        %1828 = vmatmul.bf16.gmra.mxu0 %v1771
        %v1829 = vpop.f32.mrf.mxu0
        %v1830 = vadd.f32 0.0, %v1829
        %v1831 = vpop.f32.mrf.mxu0
        %v1832 = vadd.f32 0.0, %v1831
        %1833 = vmatmul.bf16.gmra.mxu0 %v1774
        %v1834 = vpop.f32.mrf.mxu0
        %v1835 = vadd.f32 0.0, %v1834
        %v1836 = vpop.f32.mrf.mxu0
        %v1837 = vadd.f32 0.0, %v1836
        %1838 = vmatmul.bf16.gmra.mxu0 %v1777
        %v1839 = vpop.f32.mrf.mxu0
        %v1840 = vadd.f32 0.0, %v1839
        %v1841 = vpop.f32.mrf.mxu0
        %v1842 = vadd.f32 0.0, %v1841
        %1843 = vmatmul.bf16.gmra.mxu0 %v1780
        %v1844 = vpop.f32.mrf.mxu0
        %v1845 = vadd.f32 0.0, %v1844
        %v1846 = vpop.f32.mrf.mxu0
        %v1847 = vadd.f32 0.0, %v1846
        %1848 = vmatmul.bf16.gmra.mxu0 %v1783
        %v1849 = vpop.f32.mrf.mxu0
        %v1850 = vadd.f32 0.0, %v1849
        %v1851 = vpop.f32.mrf.mxu0
        %v1852 = vadd.f32 0.0, %v1851
        %1853 = vmatmul.bf16.gmra.mxu0 %v1786
        %v1854 = vpop.f32.mrf.mxu0
        %v1855 = vadd.f32 0.0, %v1854
        %v1856 = vpop.f32.mrf.mxu0
        %v1857 = vadd.f32 0.0, %v1856
        %1858 = vmatmul.bf16.gmra.mxu0 %v1789
        %v1859 = vpop.f32.mrf.mxu0
        %v1860 = vadd.f32 0.0, %v1859
        %v1861 = vpop.f32.mrf.mxu0
        %v1862 = vadd.f32 0.0, %v1861
        %1863 = vmatmul.bf16.gmra.mxu0 %v1792
        %v1864 = vpop.f32.mrf.mxu0
        %v1865 = vadd.f32 0.0, %v1864
        %v1866 = vpop.f32.mrf.mxu0
        %v1867 = vadd.f32 0.0, %v1866
        %1868 = vmatmul.bf16.gmra.mxu0 %v1795
        %v1869 = vpop.f32.mrf.mxu0
        %v1870 = vadd.f32 0.0, %v1869
        %v1871 = vpop.f32.mrf.mxu0
        %v1872 = vadd.f32 0.0, %v1871
        %1873 = vmatmul.bf16.gmra.mxu0 %v1798
        %v1874 = vpop.f32.mrf.mxu0
        %v1875 = vadd.f32 0.0, %v1874
        %v1876 = vpop.f32.mrf.mxu0
        %v1877 = vadd.f32 0.0, %v1876
        %1878 = vmatmul.bf16.gmra.mxu0 %v1801
        %v1879 = vpop.f32.mrf.mxu0
        %v1880 = vadd.f32 0.0, %v1879
        %v1881 = vpop.f32.mrf.mxu0
        %v1882 = vadd.f32 0.0, %v1881
        %1883 = vmatmul.bf16.gmra.mxu0 %v1804
        %v1884 = vpop.f32.mrf.mxu0
        %v1885 = vadd.f32 0.0, %v1884
        %v1886 = vpop.f32.mrf.mxu0
        %v1887 = vadd.f32 0.0, %v1886
        %1888 = vmatmul.bf16.gmra.mxu0 %v1807
        %v1889 = vpop.f32.mrf.mxu0
        %v1890 = vadd.f32 0.0, %v1889
        %v1891 = vpop.f32.mrf.mxu0
        %v1892 = vadd.f32 0.0, %v1891
        %1893 = vmatmul.bf16.gmra.mxu0 %v1810
        %v1894 = vpop.f32.mrf.mxu0
        %v1895 = vadd.f32 0.0, %v1894
        %v1896 = vpop.f32.mrf.mxu0
        %v1897 = vadd.f32 0.0, %v1896
        %1898 = vmatmul.bf16.gmra.mxu0 %v1813
        %v1899 = vpop.f32.mrf.mxu0
        %v1900 = vadd.f32 0.0, %v1899
        %v1901 = vpop.f32.mrf.mxu0
        %v1902 = vadd.f32 0.0, %v1901
        %1903 = vdwg.mxu0
        %v1904 = vadd.f32 %v1574, %v1825
        %v1905 = vadd.f32 %v1575, %v1827
        %v1906 = vadd.f32 %v1576, %v1830
        %v1907 = vadd.f32 %v1577, %v1832
        %v1908 = vadd.f32 %v1578, %v1835
        %v1909 = vadd.f32 %v1579, %v1837
        %v1910 = vadd.f32 %v1580, %v1840
        %v1911 = vadd.f32 %v1581, %v1842
        %v1912 = vadd.f32 %v1582, %v1845
        %v1913 = vadd.f32 %v1583, %v1847
        %v1914 = vadd.f32 %v1584, %v1850
        %v1915 = vadd.f32 %v1585, %v1852
        %v1916 = vadd.f32 %v1586, %v1855
        %v1917 = vadd.f32 %v1587, %v1857
        %v1918 = vadd.f32 %v1588, %v1860
        %v1919 = vadd.f32 %v1589, %v1862
        %v1920 = vadd.f32 %v1590, %v1865
        %v1921 = vadd.f32 %v1591, %v1867
        %v1922 = vadd.f32 %v1592, %v1870
        %v1923 = vadd.f32 %v1593, %v1872
        %v1924 = vadd.f32 %v1594, %v1875
        %v1925 = vadd.f32 %v1595, %v1877
        %v1926 = vadd.f32 %v1596, %v1880
        %v1927 = vadd.f32 %v1597, %v1882
        %v1928 = vadd.f32 %v1598, %v1885
        %v1929 = vadd.f32 %v1599, %v1887
        %v1930 = vadd.f32 %v1600, %v1890
        %v1931 = vadd.f32 %v1601, %v1892
        %v1932 = vadd.f32 %v1602, %v1895
        %v1933 = vadd.f32 %v1603, %v1897
        %v1934 = vadd.f32 %v1604, %v1900
        %v1935 = vadd.f32 %v1605, %v1902
        %v1936 = vld [vmem:[#allocation2 + $0x2] sm:$0xff]
        %v1937 = vld [vmem:[#allocation2 + $0xa] sm:$0xff]
        %v1938 = vld [vmem:[#allocation2 + $0x1a] sm:$0xff]
        %v1939 = vld [vmem:[#allocation2 + $0x22] sm:$0xff]
        %v1940 = vld [vmem:[#allocation2 + $0x32] sm:$0xff]
        %v1941 = vld [vmem:[#allocation2 + $0x3a] sm:$0xff]
        %v1942 = vld [vmem:[#allocation2 + $0x4a] sm:$0xff]
        %v1943 = vld [vmem:[#allocation2 + $0x52] sm:$0xff]
        %v1944 = vld [vmem:[#allocation2 + $0x62] sm:$0xff]
        %v1945 = vld [vmem:[#allocation2 + $0x6a] sm:$0xff]
        %v1946 = vld [vmem:[#allocation2 + $0x7a] sm:$0xff]
        %v1947 = vld [vmem:[#allocation2 + $0x82] sm:$0xff]
        %v1948 = vld [vmem:[#allocation2 + $0x92] sm:$0xff]
        %v1949 = vld [vmem:[#allocation2 + $0x9a] sm:$0xff]
        %v1950 = vld [vmem:[#allocation2 + $0xaa] sm:$0xff]
        %v1951 = vld [vmem:[#allocation2 + $0xb2] sm:$0xff]
        %v1952 = vld [vmem:[#allocation2 + $0xc2] sm:$0xff]
        %v1953 = vld [vmem:[#allocation2 + $0xca] sm:$0xff]
        %v1954 = vld [vmem:[#allocation2 + $0xda] sm:$0xff]
        %v1955 = vld [vmem:[#allocation2 + $0xe2] sm:$0xff]
        %v1956 = vld [vmem:[#allocation2 + $0xf2] sm:$0xff]
        %v1957 = vld [vmem:[#allocation2 + $0xfa] sm:$0xff]
        %v1958 = vld [vmem:[#allocation2 + $0x10a] sm:$0xff]
        %v1959 = vld [vmem:[#allocation2 + $0x112] sm:$0xff]
        %v1960 = vld [vmem:[#allocation2 + $0x122] sm:$0xff]
        %v1961 = vld [vmem:[#allocation2 + $0x12a] sm:$0xff]
        %v1962 = vld [vmem:[#allocation2 + $0x13a] sm:$0xff]
        %v1963 = vld [vmem:[#allocation2 + $0x142] sm:$0xff]
        %v1964 = vld [vmem:[#allocation2 + $0x152] sm:$0xff]
        %v1965 = vld [vmem:[#allocation2 + $0x15a] sm:$0xff]
        %v1966 = vld [vmem:[#allocation2 + $0x16a] sm:$0xff]
        %v1967 = vld [vmem:[#allocation2 + $0x172] sm:$0xff]
        %v1968 = vpack.c.bf16 %v1936, %v1936
        %v1969 = vpack.c.bf16 %v1937, %v1937
        %v1970 = vpack.c.bf16 %v1938, %v1938
        %v1971 = vpack.c.bf16 %v1939, %v1939
        %v1972 = vpack.c.bf16 %v1940, %v1940
        %v1973 = vpack.c.bf16 %v1941, %v1941
        %v1974 = vpack.c.bf16 %v1942, %v1942
        %v1975 = vpack.c.bf16 %v1943, %v1943
        %v1976 = vpack.c.bf16 %v1944, %v1944
        %v1977 = vpack.c.bf16 %v1945, %v1945
        %v1978 = vpack.c.bf16 %v1946, %v1946
        %v1979 = vpack.c.bf16 %v1947, %v1947
        %v1980 = vpack.c.bf16 %v1948, %v1948
        %v1981 = vpack.c.bf16 %v1949, %v1949
        %v1982 = vpack.c.bf16 %v1950, %v1950
        %v1983 = vpack.c.bf16 %v1951, %v1951
        %v1984 = vpack.c.bf16 %v1952, %v1952
        %v1985 = vpack.c.bf16 %v1953, %v1953
        %v1986 = vpack.c.bf16 %v1954, %v1954
        %v1987 = vpack.c.bf16 %v1955, %v1955
        %v1988 = vpack.c.bf16 %v1956, %v1956
        %v1989 = vpack.c.bf16 %v1957, %v1957
        %v1990 = vpack.c.bf16 %v1958, %v1958
        %v1991 = vpack.c.bf16 %v1959, %v1959
        %v1992 = vpack.c.bf16 %v1960, %v1960
        %v1993 = vpack.c.bf16 %v1961, %v1961
        %v1994 = vpack.c.bf16 %v1962, %v1962
        %v1995 = vpack.c.bf16 %v1963, %v1963
        %v1996 = vpack.c.bf16 %v1964, %v1964
        %v1997 = vpack.c.bf16 %v1965, %v1965
        %v1998 = vpack.c.bf16 %v1966, %v1966
        %v1999 = vpack.c.bf16 %v1967, %v1967
        %s2000 = scalar_lea.vmem %s3, 32
        %v2001 = vld [vmem:[%s2000] sm:$0xf]
        %v2002 = vld [vmem:[%s2000 + $0x4] sm:$0xf]
        %v2003 = vld [vmem:[%s2000 + $0x8] sm:$0xf]
        %v2004 = vld [vmem:[%s2000 + $0xc] sm:$0xf]
        %v2037 = vunpack.c.l.b16 %v1968
        %v2038 = vunpack.c.l.b16 %v1969
        %v2039 = vunpack.c.l.b16 %v1970
        %v2040 = vunpack.c.l.b16 %v1971
        %v2041 = vunpack.c.l.b16 %v1972
        %v2042 = vunpack.c.l.b16 %v1973
        %v2043 = vunpack.c.l.b16 %v1974
        %v2044 = vunpack.c.l.b16 %v1975
        %v2045 = vunpack.c.l.b16 %v1976
        %v2046 = vunpack.c.l.b16 %v1977
        %v2047 = vunpack.c.l.b16 %v1978
        %v2048 = vunpack.c.l.b16 %v1979
        %v2049 = vunpack.c.l.b16 %v1980
        %v2050 = vunpack.c.l.b16 %v1981
        %v2051 = vunpack.c.l.b16 %v1982
        %v2052 = vunpack.c.l.b16 %v1983
        %v2053 = vunpack.c.l.b16 %v1984
        %v2054 = vunpack.c.l.b16 %v1985
        %v2055 = vunpack.c.l.b16 %v1986
        %v2056 = vunpack.c.l.b16 %v1987
        %v2057 = vunpack.c.l.b16 %v1988
        %v2058 = vunpack.c.l.b16 %v1989
        %v2059 = vunpack.c.l.b16 %v1990
        %v2060 = vunpack.c.l.b16 %v1991
        %v2061 = vunpack.c.l.b16 %v1992
        %v2062 = vunpack.c.l.b16 %v1993
        %v2063 = vunpack.c.l.b16 %v1994
        %v2064 = vunpack.c.l.b16 %v1995
        %v2065 = vunpack.c.l.b16 %v1996
        %v2066 = vunpack.c.l.b16 %v1997
        %v2067 = vunpack.c.l.b16 %v1998
        %v2068 = vunpack.c.l.b16 %v1999
        %v2069 = vpack.c.b16 %v2038, %v2037
        %v2070 = vpack.c.b16 %v2040, %v2039
        %v2071 = vpack.c.b16 %v2042, %v2041
        %v2072 = vpack.c.b16 %v2044, %v2043
        %v2073 = vpack.c.b16 %v2046, %v2045
        %v2074 = vpack.c.b16 %v2048, %v2047
        %v2075 = vpack.c.b16 %v2050, %v2049
        %v2076 = vpack.c.b16 %v2052, %v2051
        %v2077 = vpack.c.b16 %v2054, %v2053
        %v2078 = vpack.c.b16 %v2056, %v2055
        %v2079 = vpack.c.b16 %v2058, %v2057
        %v2080 = vpack.c.b16 %v2060, %v2059
        %v2081 = vpack.c.b16 %v2062, %v2061
        %v2082 = vpack.c.b16 %v2064, %v2063
        %v2083 = vpack.c.b16 %v2066, %v2065
        %v2084 = vpack.c.b16 %v2068, %v2067
        %v2089 = vunpack.c.l.b16 %v2001
        %v2090 = vunpack.c.l.b16 %v2002
        %v2091 = vunpack.c.l.b16 %v2003
        %v2092 = vunpack.c.l.b16 %v2004
        %v2093 = vpack.c.b16 %v2090, %v2089
        %v2094 = vpack.c.b16 %v2092, %v2091
        %v2098 = vsel %vm723, %v2069, 0
        %v2101 = vsel %vm723, %v2070, 0
        %v2104 = vsel %vm723, %v2071, 0
        %v2107 = vsel %vm723, %v2072, 0
        %v2110 = vsel %vm723, %v2073, 0
        %v2113 = vsel %vm723, %v2074, 0
        %v2116 = vsel %vm723, %v2075, 0
        %v2119 = vsel %vm723, %v2076, 0
        %v2122 = vsel %vm723, %v2077, 0
        %v2125 = vsel %vm723, %v2078, 0
        %v2128 = vsel %vm723, %v2079, 0
        %v2131 = vsel %vm723, %v2080, 0
        %v2134 = vsel %vm723, %v2081, 0
        %v2137 = vsel %vm723, %v2082, 0
        %v2140 = vsel %vm723, %v2083, 0
        %v2143 = vsel %vm723, %v2084, 0
        %2145 = vmatpush.bf16.msra.mxu0 0
        %2146 = vmatpush.bf16.msra.mxu0 0
        %2147 = vmatpush.bf16.msra.mxu0 0
        %2148 = vmatpush.bf16.msra.mxu0 0
        %2149 = vmatpush.bf16.msra.mxu0 0
        %2150 = vmatpush.bf16.msra.mxu0 0
        %2151 = vmatpush.bf16.msra.mxu0 %v2094
        %2152 = vmatpush.bf16.msra.mxu0 %v2093
        %2153 = vmatmul.bf16.gmra.mxu0 %v2098
        %v2154 = vpop.f32.mrf.mxu0
        %v2155 = vadd.f32 0.0, %v2154
        %v2156 = vpop.f32.mrf.mxu0
        %v2157 = vadd.f32 0.0, %v2156
        %2158 = vmatmul.bf16.gmra.mxu0 %v2101
        %v2159 = vpop.f32.mrf.mxu0
        %v2160 = vadd.f32 0.0, %v2159
        %v2161 = vpop.f32.mrf.mxu0
        %v2162 = vadd.f32 0.0, %v2161
        %2163 = vmatmul.bf16.gmra.mxu0 %v2104
        %v2164 = vpop.f32.mrf.mxu0
        %v2165 = vadd.f32 0.0, %v2164
        %v2166 = vpop.f32.mrf.mxu0
        %v2167 = vadd.f32 0.0, %v2166
        %2168 = vmatmul.bf16.gmra.mxu0 %v2107
        %v2169 = vpop.f32.mrf.mxu0
        %v2170 = vadd.f32 0.0, %v2169
        %v2171 = vpop.f32.mrf.mxu0
        %v2172 = vadd.f32 0.0, %v2171
        %2173 = vmatmul.bf16.gmra.mxu0 %v2110
        %v2174 = vpop.f32.mrf.mxu0
        %v2175 = vadd.f32 0.0, %v2174
        %v2176 = vpop.f32.mrf.mxu0
        %v2177 = vadd.f32 0.0, %v2176
        %2178 = vmatmul.bf16.gmra.mxu0 %v2113
        %v2179 = vpop.f32.mrf.mxu0
        %v2180 = vadd.f32 0.0, %v2179
        %v2181 = vpop.f32.mrf.mxu0
        %v2182 = vadd.f32 0.0, %v2181
        %2183 = vmatmul.bf16.gmra.mxu0 %v2116
        %v2184 = vpop.f32.mrf.mxu0
        %v2185 = vadd.f32 0.0, %v2184
        %v2186 = vpop.f32.mrf.mxu0
        %v2187 = vadd.f32 0.0, %v2186
        %2188 = vmatmul.bf16.gmra.mxu0 %v2119
        %v2189 = vpop.f32.mrf.mxu0
        %v2190 = vadd.f32 0.0, %v2189
        %v2191 = vpop.f32.mrf.mxu0
        %v2192 = vadd.f32 0.0, %v2191
        %2193 = vmatmul.bf16.gmra.mxu0 %v2122
        %v2194 = vpop.f32.mrf.mxu0
        %v2195 = vadd.f32 0.0, %v2194
        %v2196 = vpop.f32.mrf.mxu0
        %v2197 = vadd.f32 0.0, %v2196
        %2198 = vmatmul.bf16.gmra.mxu0 %v2125
        %v2199 = vpop.f32.mrf.mxu0
        %v2200 = vadd.f32 0.0, %v2199
        %v2201 = vpop.f32.mrf.mxu0
        %v2202 = vadd.f32 0.0, %v2201
        %2203 = vmatmul.bf16.gmra.mxu0 %v2128
        %v2204 = vpop.f32.mrf.mxu0
        %v2205 = vadd.f32 0.0, %v2204
        %v2206 = vpop.f32.mrf.mxu0
        %v2207 = vadd.f32 0.0, %v2206
        %2208 = vmatmul.bf16.gmra.mxu0 %v2131
        %v2209 = vpop.f32.mrf.mxu0
        %v2210 = vadd.f32 0.0, %v2209
        %v2211 = vpop.f32.mrf.mxu0
        %v2212 = vadd.f32 0.0, %v2211
        %2213 = vmatmul.bf16.gmra.mxu0 %v2134
        %v2214 = vpop.f32.mrf.mxu0
        %v2215 = vadd.f32 0.0, %v2214
        %v2216 = vpop.f32.mrf.mxu0
        %v2217 = vadd.f32 0.0, %v2216
        %2218 = vmatmul.bf16.gmra.mxu0 %v2137
        %v2219 = vpop.f32.mrf.mxu0
        %v2220 = vadd.f32 0.0, %v2219
        %v2221 = vpop.f32.mrf.mxu0
        %v2222 = vadd.f32 0.0, %v2221
        %2223 = vmatmul.bf16.gmra.mxu0 %v2140
        %v2224 = vpop.f32.mrf.mxu0
        %v2225 = vadd.f32 0.0, %v2224
        %v2226 = vpop.f32.mrf.mxu0
        %v2227 = vadd.f32 0.0, %v2226
        %2228 = vmatmul.bf16.gmra.mxu0 %v2143
        %v2229 = vpop.f32.mrf.mxu0
        %v2230 = vadd.f32 0.0, %v2229
        %v2231 = vpop.f32.mrf.mxu0
        %v2232 = vadd.f32 0.0, %v2231
        %2233 = vdwg.mxu0
        %v2234 = vadd.f32 %v1904, %v2155
        %v2235 = vadd.f32 %v1905, %v2157
        %v2236 = vadd.f32 %v1906, %v2160
        %v2237 = vadd.f32 %v1907, %v2162
        %v2238 = vadd.f32 %v1908, %v2165
        %v2239 = vadd.f32 %v1909, %v2167
        %v2240 = vadd.f32 %v1910, %v2170
        %v2241 = vadd.f32 %v1911, %v2172
        %v2242 = vadd.f32 %v1912, %v2175
        %v2243 = vadd.f32 %v1913, %v2177
        %v2244 = vadd.f32 %v1914, %v2180
        %v2245 = vadd.f32 %v1915, %v2182
        %v2246 = vadd.f32 %v1916, %v2185
        %v2247 = vadd.f32 %v1917, %v2187
        %v2248 = vadd.f32 %v1918, %v2190
        %v2249 = vadd.f32 %v1919, %v2192
        %v2250 = vadd.f32 %v1920, %v2195
        %v2251 = vadd.f32 %v1921, %v2197
        %v2252 = vadd.f32 %v1922, %v2200
        %v2253 = vadd.f32 %v1923, %v2202
        %v2254 = vadd.f32 %v1924, %v2205
        %v2255 = vadd.f32 %v1925, %v2207
        %v2256 = vadd.f32 %v1926, %v2210
        %v2257 = vadd.f32 %v1927, %v2212
        %v2258 = vadd.f32 %v1928, %v2215
        %v2259 = vadd.f32 %v1929, %v2217
        %v2260 = vadd.f32 %v1930, %v2220
        %v2261 = vadd.f32 %v1931, %v2222
        %v2262 = vadd.f32 %v1932, %v2225
        %v2263 = vadd.f32 %v1933, %v2227
        %v2264 = vadd.f32 %v1934, %v2230
        %v2265 = vadd.f32 %v1935, %v2232
        %v2266 = vld [vmem:[%s1143] sm:$0xff]
        %v2267 = vld [vmem:[%s1143 + $0x8] sm:$0xff]
        %v2268 = vld [vmem:[%s1143 + $0x18] sm:$0xff]
        %v2269 = vld [vmem:[%s1143 + $0x20] sm:$0xff]
        %v2270 = vld [vmem:[%s1143 + $0x30] sm:$0xff]
        %v2271 = vld [vmem:[%s1143 + $0x38] sm:$0xff]
        %v2272 = vld [vmem:[%s1143 + $0x48] sm:$0xff]
        %v2273 = vld [vmem:[%s1143 + $0x50] sm:$0xff]
        %v2274 = vld [vmem:[%s1143 + $0x60] sm:$0xff]
        %v2275 = vld [vmem:[%s1143 + $0x68] sm:$0xff]
        %v2276 = vld [vmem:[%s1143 + $0x78] sm:$0xff]
        %v2277 = vld [vmem:[%s1143 + $0x80] sm:$0xff]
        %v2278 = vld [vmem:[%s1143 + $0x90] sm:$0xff]
        %v2279 = vld [vmem:[%s1143 + $0x98] sm:$0xff]
        %v2280 = vld [vmem:[%s1143 + $0xa8] sm:$0xff]
        %v2281 = vld [vmem:[%s1143 + $0xb0] sm:$0xff]
        %v2282 = vld [vmem:[%s1143 + $0xc0] sm:$0xff]
        %v2283 = vld [vmem:[%s1143 + $0xc8] sm:$0xff]
        %v2284 = vld [vmem:[%s1143 + $0xd8] sm:$0xff]
        %v2285 = vld [vmem:[%s1143 + $0xe0] sm:$0xff]
        %v2286 = vld [vmem:[%s1143 + $0xf0] sm:$0xff]
        %v2287 = vld [vmem:[%s1143 + $0xf8] sm:$0xff]
        %v2288 = vld [vmem:[%s1143 + $0x108] sm:$0xff]
        %v2289 = vld [vmem:[%s1143 + $0x110] sm:$0xff]
        %v2290 = vld [vmem:[%s1143 + $0x120] sm:$0xff]
        %v2291 = vld [vmem:[%s1143 + $0x128] sm:$0xff]
        %v2292 = vld [vmem:[%s1143 + $0x138] sm:$0xff]
        %v2293 = vld [vmem:[%s1143 + $0x140] sm:$0xff]
        %v2294 = vld [vmem:[%s1143 + $0x150] sm:$0xff]
        %v2295 = vld [vmem:[%s1143 + $0x158] sm:$0xff]
        %v2296 = vld [vmem:[%s1143 + $0x168] sm:$0xff]
        %v2297 = vld [vmem:[%s1143 + $0x170] sm:$0xff]
        %v2298 = vpack.c.bf16 %v2266, %v2266
        %v2299 = vpack.c.bf16 %v2267, %v2267
        %v2300 = vpack.c.bf16 %v2268, %v2268
        %v2301 = vpack.c.bf16 %v2269, %v2269
        %v2302 = vpack.c.bf16 %v2270, %v2270
        %v2303 = vpack.c.bf16 %v2271, %v2271
        %v2304 = vpack.c.bf16 %v2272, %v2272
        %v2305 = vpack.c.bf16 %v2273, %v2273
        %v2306 = vpack.c.bf16 %v2274, %v2274
        %v2307 = vpack.c.bf16 %v2275, %v2275
        %v2308 = vpack.c.bf16 %v2276, %v2276
        %v2309 = vpack.c.bf16 %v2277, %v2277
        %v2310 = vpack.c.bf16 %v2278, %v2278
        %v2311 = vpack.c.bf16 %v2279, %v2279
        %v2312 = vpack.c.bf16 %v2280, %v2280
        %v2313 = vpack.c.bf16 %v2281, %v2281
        %v2314 = vpack.c.bf16 %v2282, %v2282
        %v2315 = vpack.c.bf16 %v2283, %v2283
        %v2316 = vpack.c.bf16 %v2284, %v2284
        %v2317 = vpack.c.bf16 %v2285, %v2285
        %v2318 = vpack.c.bf16 %v2286, %v2286
        %v2319 = vpack.c.bf16 %v2287, %v2287
        %v2320 = vpack.c.bf16 %v2288, %v2288
        %v2321 = vpack.c.bf16 %v2289, %v2289
        %v2322 = vpack.c.bf16 %v2290, %v2290
        %v2323 = vpack.c.bf16 %v2291, %v2291
        %v2324 = vpack.c.bf16 %v2292, %v2292
        %v2325 = vpack.c.bf16 %v2293, %v2293
        %v2326 = vpack.c.bf16 %v2294, %v2294
        %v2327 = vpack.c.bf16 %v2295, %v2295
        %v2328 = vpack.c.bf16 %v2296, %v2296
        %v2329 = vpack.c.bf16 %v2297, %v2297
        %s2330 = scalar_lea.vmem %s3, 48
        %v2331 = vld [vmem:[%s2330] sm:$0xf]
        %v2332 = vld [vmem:[%s2330 + $0x4] sm:$0xf]
        %v2333 = vld [vmem:[%s2330 + $0x8] sm:$0xf]
        %v2334 = vld [vmem:[%s2330 + $0xc] sm:$0xf]
        %v2367 = vunpack.c.l.b16 %v2298
        %v2368 = vunpack.c.l.b16 %v2299
        %v2369 = vunpack.c.l.b16 %v2300
        %v2370 = vunpack.c.l.b16 %v2301
        %v2371 = vunpack.c.l.b16 %v2302
        %v2372 = vunpack.c.l.b16 %v2303
        %v2373 = vunpack.c.l.b16 %v2304
        %v2374 = vunpack.c.l.b16 %v2305
        %v2375 = vunpack.c.l.b16 %v2306
        %v2376 = vunpack.c.l.b16 %v2307
        %v2377 = vunpack.c.l.b16 %v2308
        %v2378 = vunpack.c.l.b16 %v2309
        %v2379 = vunpack.c.l.b16 %v2310
        %v2380 = vunpack.c.l.b16 %v2311
        %v2381 = vunpack.c.l.b16 %v2312
        %v2382 = vunpack.c.l.b16 %v2313
        %v2383 = vunpack.c.l.b16 %v2314
        %v2384 = vunpack.c.l.b16 %v2315
        %v2385 = vunpack.c.l.b16 %v2316
        %v2386 = vunpack.c.l.b16 %v2317
        %v2387 = vunpack.c.l.b16 %v2318
        %v2388 = vunpack.c.l.b16 %v2319
        %v2389 = vunpack.c.l.b16 %v2320
        %v2390 = vunpack.c.l.b16 %v2321
        %v2391 = vunpack.c.l.b16 %v2322
        %v2392 = vunpack.c.l.b16 %v2323
        %v2393 = vunpack.c.l.b16 %v2324
        %v2394 = vunpack.c.l.b16 %v2325
        %v2395 = vunpack.c.l.b16 %v2326
        %v2396 = vunpack.c.l.b16 %v2327
        %v2397 = vunpack.c.l.b16 %v2328
        %v2398 = vunpack.c.l.b16 %v2329
        %v2399 = vpack.c.b16 %v2368, %v2367
        %v2400 = vpack.c.b16 %v2370, %v2369
        %v2401 = vpack.c.b16 %v2372, %v2371
        %v2402 = vpack.c.b16 %v2374, %v2373
        %v2403 = vpack.c.b16 %v2376, %v2375
        %v2404 = vpack.c.b16 %v2378, %v2377
        %v2405 = vpack.c.b16 %v2380, %v2379
        %v2406 = vpack.c.b16 %v2382, %v2381
        %v2407 = vpack.c.b16 %v2384, %v2383
        %v2408 = vpack.c.b16 %v2386, %v2385
        %v2409 = vpack.c.b16 %v2388, %v2387
        %v2410 = vpack.c.b16 %v2390, %v2389
        %v2411 = vpack.c.b16 %v2392, %v2391
        %v2412 = vpack.c.b16 %v2394, %v2393
        %v2413 = vpack.c.b16 %v2396, %v2395
        %v2414 = vpack.c.b16 %v2398, %v2397
        %v2419 = vunpack.c.l.b16 %v2331
        %v2420 = vunpack.c.l.b16 %v2332
        %v2421 = vunpack.c.l.b16 %v2333
        %v2422 = vunpack.c.l.b16 %v2334
        %v2423 = vpack.c.b16 %v2420, %v2419
        %v2424 = vpack.c.b16 %v2422, %v2421
        %v2428 = vsel %vm723, %v2399, 0
        %v2431 = vsel %vm723, %v2400, 0
        %v2434 = vsel %vm723, %v2401, 0
        %v2437 = vsel %vm723, %v2402, 0
        %v2440 = vsel %vm723, %v2403, 0
        %v2443 = vsel %vm723, %v2404, 0
        %v2446 = vsel %vm723, %v2405, 0
        %v2449 = vsel %vm723, %v2406, 0
        %v2452 = vsel %vm723, %v2407, 0
        %v2455 = vsel %vm723, %v2408, 0
        %v2458 = vsel %vm723, %v2409, 0
        %v2461 = vsel %vm723, %v2410, 0
        %v2464 = vsel %vm723, %v2411, 0
        %v2467 = vsel %vm723, %v2412, 0
        %v2470 = vsel %vm723, %v2413, 0
        %v2473 = vsel %vm723, %v2414, 0
        %2475 = vmatpush.bf16.msra.mxu0 0
        %2476 = vmatpush.bf16.msra.mxu0 0
        %2477 = vmatpush.bf16.msra.mxu0 0
        %2478 = vmatpush.bf16.msra.mxu0 0
        %2479 = vmatpush.bf16.msra.mxu0 0
        %2480 = vmatpush.bf16.msra.mxu0 0
        %2481 = vmatpush.bf16.msra.mxu0 %v2424
        %2482 = vmatpush.bf16.msra.mxu0 %v2423
        %2483 = vmatmul.bf16.gmra.mxu0 %v2428
        %v2484 = vpop.f32.mrf.mxu0
        %v2485 = vadd.f32 0.0, %v2484
        %v2486 = vpop.f32.mrf.mxu0
        %v2487 = vadd.f32 0.0, %v2486
        %2488 = vmatmul.bf16.gmra.mxu0 %v2431
        %v2489 = vpop.f32.mrf.mxu0
        %v2490 = vadd.f32 0.0, %v2489
        %v2491 = vpop.f32.mrf.mxu0
        %v2492 = vadd.f32 0.0, %v2491
        %2493 = vmatmul.bf16.gmra.mxu0 %v2434
        %v2494 = vpop.f32.mrf.mxu0
        %v2495 = vadd.f32 0.0, %v2494
        %v2496 = vpop.f32.mrf.mxu0
        %v2497 = vadd.f32 0.0, %v2496
        %2498 = vmatmul.bf16.gmra.mxu0 %v2437
        %v2499 = vpop.f32.mrf.mxu0
        %v2500 = vadd.f32 0.0, %v2499
        %v2501 = vpop.f32.mrf.mxu0
        %v2502 = vadd.f32 0.0, %v2501
        %2503 = vmatmul.bf16.gmra.mxu0 %v2440
        %v2504 = vpop.f32.mrf.mxu0
        %v2505 = vadd.f32 0.0, %v2504
        %v2506 = vpop.f32.mrf.mxu0
        %v2507 = vadd.f32 0.0, %v2506
        %2508 = vmatmul.bf16.gmra.mxu0 %v2443
        %v2509 = vpop.f32.mrf.mxu0
        %v2510 = vadd.f32 0.0, %v2509
        %v2511 = vpop.f32.mrf.mxu0
        %v2512 = vadd.f32 0.0, %v2511
        %2513 = vmatmul.bf16.gmra.mxu0 %v2446
        %v2514 = vpop.f32.mrf.mxu0
        %v2515 = vadd.f32 0.0, %v2514
        %v2516 = vpop.f32.mrf.mxu0
        %v2517 = vadd.f32 0.0, %v2516
        %2518 = vmatmul.bf16.gmra.mxu0 %v2449
        %v2519 = vpop.f32.mrf.mxu0
        %v2520 = vadd.f32 0.0, %v2519
        %v2521 = vpop.f32.mrf.mxu0
        %v2522 = vadd.f32 0.0, %v2521
        %2523 = vmatmul.bf16.gmra.mxu0 %v2452
        %v2524 = vpop.f32.mrf.mxu0
        %v2525 = vadd.f32 0.0, %v2524
        %v2526 = vpop.f32.mrf.mxu0
        %v2527 = vadd.f32 0.0, %v2526
        %2528 = vmatmul.bf16.gmra.mxu0 %v2455
        %v2529 = vpop.f32.mrf.mxu0
        %v2530 = vadd.f32 0.0, %v2529
        %v2531 = vpop.f32.mrf.mxu0
        %v2532 = vadd.f32 0.0, %v2531
        %2533 = vmatmul.bf16.gmra.mxu0 %v2458
        %v2534 = vpop.f32.mrf.mxu0
        %v2535 = vadd.f32 0.0, %v2534
        %v2536 = vpop.f32.mrf.mxu0
        %v2537 = vadd.f32 0.0, %v2536
        %2538 = vmatmul.bf16.gmra.mxu0 %v2461
        %v2539 = vpop.f32.mrf.mxu0
        %v2540 = vadd.f32 0.0, %v2539
        %v2541 = vpop.f32.mrf.mxu0
        %v2542 = vadd.f32 0.0, %v2541
        %2543 = vmatmul.bf16.gmra.mxu0 %v2464
        %v2544 = vpop.f32.mrf.mxu0
        %v2545 = vadd.f32 0.0, %v2544
        %v2546 = vpop.f32.mrf.mxu0
        %v2547 = vadd.f32 0.0, %v2546
        %2548 = vmatmul.bf16.gmra.mxu0 %v2467
        %v2549 = vpop.f32.mrf.mxu0
        %v2550 = vadd.f32 0.0, %v2549
        %v2551 = vpop.f32.mrf.mxu0
        %v2552 = vadd.f32 0.0, %v2551
        %2553 = vmatmul.bf16.gmra.mxu0 %v2470
        %v2554 = vpop.f32.mrf.mxu0
        %v2555 = vadd.f32 0.0, %v2554
        %v2556 = vpop.f32.mrf.mxu0
        %v2557 = vadd.f32 0.0, %v2556
        %2558 = vmatmul.bf16.gmra.mxu0 %v2473
        %v2559 = vpop.f32.mrf.mxu0
        %v2560 = vadd.f32 0.0, %v2559
        %v2561 = vpop.f32.mrf.mxu0
        %v2562 = vadd.f32 0.0, %v2561
        %2563 = vdwg.mxu0
        %v2564 = vadd.f32 %v2234, %v2485
        %v2565 = vadd.f32 %v2235, %v2487
        %v2566 = vadd.f32 %v2236, %v2490
        %v2567 = vadd.f32 %v2237, %v2492
        %v2568 = vadd.f32 %v2238, %v2495
        %v2569 = vadd.f32 %v2239, %v2497
        %v2570 = vadd.f32 %v2240, %v2500
        %v2571 = vadd.f32 %v2241, %v2502
        %v2572 = vadd.f32 %v2242, %v2505
        %v2573 = vadd.f32 %v2243, %v2507
        %v2574 = vadd.f32 %v2244, %v2510
        %v2575 = vadd.f32 %v2245, %v2512
        %v2576 = vadd.f32 %v2246, %v2515
        %v2577 = vadd.f32 %v2247, %v2517
        %v2578 = vadd.f32 %v2248, %v2520
        %v2579 = vadd.f32 %v2249, %v2522
        %v2580 = vadd.f32 %v2250, %v2525
        %v2581 = vadd.f32 %v2251, %v2527
        %v2582 = vadd.f32 %v2252, %v2530
        %v2583 = vadd.f32 %v2253, %v2532
        %v2584 = vadd.f32 %v2254, %v2535
        %v2585 = vadd.f32 %v2255, %v2537
        %v2586 = vadd.f32 %v2256, %v2540
        %v2587 = vadd.f32 %v2257, %v2542
        %v2588 = vadd.f32 %v2258, %v2545
        %v2589 = vadd.f32 %v2259, %v2547
        %v2590 = vadd.f32 %v2260, %v2550
        %v2591 = vadd.f32 %v2261, %v2552
        %v2592 = vadd.f32 %v2262, %v2555
        %v2593 = vadd.f32 %v2263, %v2557
        %v2594 = vadd.f32 %v2264, %v2560
        %v2595 = vadd.f32 %v2265, %v2562
        %v2596 = vld [vmem:[%s1143 + $0x1] sm:$0xff]
        %v2597 = vld [vmem:[%s1143 + $0x9] sm:$0xff]
        %v2598 = vld [vmem:[%s1143 + $0x19] sm:$0xff]
        %v2599 = vld [vmem:[%s1143 + $0x21] sm:$0xff]
        %v2600 = vld [vmem:[%s1143 + $0x31] sm:$0xff]
        %v2601 = vld [vmem:[%s1143 + $0x39] sm:$0xff]
        %v2602 = vld [vmem:[%s1143 + $0x49] sm:$0xff]
        %v2603 = vld [vmem:[%s1143 + $0x51] sm:$0xff]
        %v2604 = vld [vmem:[%s1143 + $0x61] sm:$0xff]
        %v2605 = vld [vmem:[%s1143 + $0x69] sm:$0xff]
        %v2606 = vld [vmem:[%s1143 + $0x79] sm:$0xff]
        %v2607 = vld [vmem:[%s1143 + $0x81] sm:$0xff]
        %v2608 = vld [vmem:[%s1143 + $0x91] sm:$0xff]
        %v2609 = vld [vmem:[%s1143 + $0x99] sm:$0xff]
        %v2610 = vld [vmem:[%s1143 + $0xa9] sm:$0xff]
        %v2611 = vld [vmem:[%s1143 + $0xb1] sm:$0xff]
        %v2612 = vld [vmem:[%s1143 + $0xc1] sm:$0xff]
        %v2613 = vld [vmem:[%s1143 + $0xc9] sm:$0xff]
        %v2614 = vld [vmem:[%s1143 + $0xd9] sm:$0xff]
        %v2615 = vld [vmem:[%s1143 + $0xe1] sm:$0xff]
        %v2616 = vld [vmem:[%s1143 + $0xf1] sm:$0xff]
        %v2617 = vld [vmem:[%s1143 + $0xf9] sm:$0xff]
        %v2618 = vld [vmem:[%s1143 + $0x109] sm:$0xff]
        %v2619 = vld [vmem:[%s1143 + $0x111] sm:$0xff]
        %v2620 = vld [vmem:[%s1143 + $0x121] sm:$0xff]
        %v2621 = vld [vmem:[%s1143 + $0x129] sm:$0xff]
        %v2622 = vld [vmem:[%s1143 + $0x139] sm:$0xff]
        %v2623 = vld [vmem:[%s1143 + $0x141] sm:$0xff]
        %v2624 = vld [vmem:[%s1143 + $0x151] sm:$0xff]
        %v2625 = vld [vmem:[%s1143 + $0x159] sm:$0xff]
        %v2626 = vld [vmem:[%s1143 + $0x169] sm:$0xff]
        %v2627 = vld [vmem:[%s1143 + $0x171] sm:$0xff]
        %v2628 = vpack.c.bf16 %v2596, %v2596
        %v2629 = vpack.c.bf16 %v2597, %v2597
        %v2630 = vpack.c.bf16 %v2598, %v2598
        %v2631 = vpack.c.bf16 %v2599, %v2599
        %v2632 = vpack.c.bf16 %v2600, %v2600
        %v2633 = vpack.c.bf16 %v2601, %v2601
        %v2634 = vpack.c.bf16 %v2602, %v2602
        %v2635 = vpack.c.bf16 %v2603, %v2603
        %v2636 = vpack.c.bf16 %v2604, %v2604
        %v2637 = vpack.c.bf16 %v2605, %v2605
        %v2638 = vpack.c.bf16 %v2606, %v2606
        %v2639 = vpack.c.bf16 %v2607, %v2607
        %v2640 = vpack.c.bf16 %v2608, %v2608
        %v2641 = vpack.c.bf16 %v2609, %v2609
        %v2642 = vpack.c.bf16 %v2610, %v2610
        %v2643 = vpack.c.bf16 %v2611, %v2611
        %v2644 = vpack.c.bf16 %v2612, %v2612
        %v2645 = vpack.c.bf16 %v2613, %v2613
        %v2646 = vpack.c.bf16 %v2614, %v2614
        %v2647 = vpack.c.bf16 %v2615, %v2615
        %v2648 = vpack.c.bf16 %v2616, %v2616
        %v2649 = vpack.c.bf16 %v2617, %v2617
        %v2650 = vpack.c.bf16 %v2618, %v2618
        %v2651 = vpack.c.bf16 %v2619, %v2619
        %v2652 = vpack.c.bf16 %v2620, %v2620
        %v2653 = vpack.c.bf16 %v2621, %v2621
        %v2654 = vpack.c.bf16 %v2622, %v2622
        %v2655 = vpack.c.bf16 %v2623, %v2623
        %v2656 = vpack.c.bf16 %v2624, %v2624
        %v2657 = vpack.c.bf16 %v2625, %v2625
        %v2658 = vpack.c.bf16 %v2626, %v2626
        %v2659 = vpack.c.bf16 %v2627, %v2627
        %s2660 = scalar_lea.vmem %s3, 64
        %v2661 = vld [vmem:[%s2660] sm:$0xf]
        %v2662 = vld [vmem:[%s2660 + $0x4] sm:$0xf]
        %v2663 = vld [vmem:[%s2660 + $0x8] sm:$0xf]
        %v2664 = vld [vmem:[%s2660 + $0xc] sm:$0xf]
        %v2697 = vunpack.c.l.b16 %v2628
        %v2698 = vunpack.c.l.b16 %v2629
        %v2699 = vunpack.c.l.b16 %v2630
        %v2700 = vunpack.c.l.b16 %v2631
        %v2701 = vunpack.c.l.b16 %v2632
        %v2702 = vunpack.c.l.b16 %v2633
        %v2703 = vunpack.c.l.b16 %v2634
        %v2704 = vunpack.c.l.b16 %v2635
        %v2705 = vunpack.c.l.b16 %v2636
        %v2706 = vunpack.c.l.b16 %v2637
        %v2707 = vunpack.c.l.b16 %v2638
        %v2708 = vunpack.c.l.b16 %v2639
        %v2709 = vunpack.c.l.b16 %v2640
        %v2710 = vunpack.c.l.b16 %v2641
        %v2711 = vunpack.c.l.b16 %v2642
        %v2712 = vunpack.c.l.b16 %v2643
        %v2713 = vunpack.c.l.b16 %v2644
        %v2714 = vunpack.c.l.b16 %v2645
        %v2715 = vunpack.c.l.b16 %v2646
        %v2716 = vunpack.c.l.b16 %v2647
        %v2717 = vunpack.c.l.b16 %v2648
        %v2718 = vunpack.c.l.b16 %v2649
        %v2719 = vunpack.c.l.b16 %v2650
        %v2720 = vunpack.c.l.b16 %v2651
        %v2721 = vunpack.c.l.b16 %v2652
        %v2722 = vunpack.c.l.b16 %v2653
        %v2723 = vunpack.c.l.b16 %v2654
        %v2724 = vunpack.c.l.b16 %v2655
        %v2725 = vunpack.c.l.b16 %v2656
        %v2726 = vunpack.c.l.b16 %v2657
        %v2727 = vunpack.c.l.b16 %v2658
        %v2728 = vunpack.c.l.b16 %v2659
        %v2729 = vpack.c.b16 %v2698, %v2697
        %v2730 = vpack.c.b16 %v2700, %v2699
        %v2731 = vpack.c.b16 %v2702, %v2701
        %v2732 = vpack.c.b16 %v2704, %v2703
        %v2733 = vpack.c.b16 %v2706, %v2705
        %v2734 = vpack.c.b16 %v2708, %v2707
        %v2735 = vpack.c.b16 %v2710, %v2709
        %v2736 = vpack.c.b16 %v2712, %v2711
        %v2737 = vpack.c.b16 %v2714, %v2713
        %v2738 = vpack.c.b16 %v2716, %v2715
        %v2739 = vpack.c.b16 %v2718, %v2717
        %v2740 = vpack.c.b16 %v2720, %v2719
        %v2741 = vpack.c.b16 %v2722, %v2721
        %v2742 = vpack.c.b16 %v2724, %v2723
        %v2743 = vpack.c.b16 %v2726, %v2725
        %v2744 = vpack.c.b16 %v2728, %v2727
        %v2749 = vunpack.c.l.b16 %v2661
        %v2750 = vunpack.c.l.b16 %v2662
        %v2751 = vunpack.c.l.b16 %v2663
        %v2752 = vunpack.c.l.b16 %v2664
        %v2753 = vpack.c.b16 %v2750, %v2749
        %v2754 = vpack.c.b16 %v2752, %v2751
        %v2758 = vsel %vm723, %v2729, 0
        %v2761 = vsel %vm723, %v2730, 0
        %v2764 = vsel %vm723, %v2731, 0
        %v2767 = vsel %vm723, %v2732, 0
        %v2770 = vsel %vm723, %v2733, 0
        %v2773 = vsel %vm723, %v2734, 0
        %v2776 = vsel %vm723, %v2735, 0
        %v2779 = vsel %vm723, %v2736, 0
        %v2782 = vsel %vm723, %v2737, 0
        %v2785 = vsel %vm723, %v2738, 0
        %v2788 = vsel %vm723, %v2739, 0
        %v2791 = vsel %vm723, %v2740, 0
        %v2794 = vsel %vm723, %v2741, 0
        %v2797 = vsel %vm723, %v2742, 0
        %v2800 = vsel %vm723, %v2743, 0
        %v2803 = vsel %vm723, %v2744, 0
        %2805 = vmatpush.bf16.msra.mxu0 0
        %2806 = vmatpush.bf16.msra.mxu0 0
        %2807 = vmatpush.bf16.msra.mxu0 0
        %2808 = vmatpush.bf16.msra.mxu0 0
        %2809 = vmatpush.bf16.msra.mxu0 0
        %2810 = vmatpush.bf16.msra.mxu0 0
        %2811 = vmatpush.bf16.msra.mxu0 %v2754
        %2812 = vmatpush.bf16.msra.mxu0 %v2753
        %2813 = vmatmul.bf16.gmra.mxu0 %v2758
        %v2814 = vpop.f32.mrf.mxu0
        %v2815 = vadd.f32 0.0, %v2814
        %v2816 = vpop.f32.mrf.mxu0
        %v2817 = vadd.f32 0.0, %v2816
        %2818 = vmatmul.bf16.gmra.mxu0 %v2761
        %v2819 = vpop.f32.mrf.mxu0
        %v2820 = vadd.f32 0.0, %v2819
        %v2821 = vpop.f32.mrf.mxu0
        %v2822 = vadd.f32 0.0, %v2821
        %2823 = vmatmul.bf16.gmra.mxu0 %v2764
        %v2824 = vpop.f32.mrf.mxu0
        %v2825 = vadd.f32 0.0, %v2824
        %v2826 = vpop.f32.mrf.mxu0
        %v2827 = vadd.f32 0.0, %v2826
        %2828 = vmatmul.bf16.gmra.mxu0 %v2767
        %v2829 = vpop.f32.mrf.mxu0
        %v2830 = vadd.f32 0.0, %v2829
        %v2831 = vpop.f32.mrf.mxu0
        %v2832 = vadd.f32 0.0, %v2831
        %2833 = vmatmul.bf16.gmra.mxu0 %v2770
        %v2834 = vpop.f32.mrf.mxu0
        %v2835 = vadd.f32 0.0, %v2834
        %v2836 = vpop.f32.mrf.mxu0
        %v2837 = vadd.f32 0.0, %v2836
        %2838 = vmatmul.bf16.gmra.mxu0 %v2773
        %v2839 = vpop.f32.mrf.mxu0
        %v2840 = vadd.f32 0.0, %v2839
        %v2841 = vpop.f32.mrf.mxu0
        %v2842 = vadd.f32 0.0, %v2841
        %2843 = vmatmul.bf16.gmra.mxu0 %v2776
        %v2844 = vpop.f32.mrf.mxu0
        %v2845 = vadd.f32 0.0, %v2844
        %v2846 = vpop.f32.mrf.mxu0
        %v2847 = vadd.f32 0.0, %v2846
        %2848 = vmatmul.bf16.gmra.mxu0 %v2779
        %v2849 = vpop.f32.mrf.mxu0
        %v2850 = vadd.f32 0.0, %v2849
        %v2851 = vpop.f32.mrf.mxu0
        %v2852 = vadd.f32 0.0, %v2851
        %2853 = vmatmul.bf16.gmra.mxu0 %v2782
        %v2854 = vpop.f32.mrf.mxu0
        %v2855 = vadd.f32 0.0, %v2854
        %v2856 = vpop.f32.mrf.mxu0
        %v2857 = vadd.f32 0.0, %v2856
        %2858 = vmatmul.bf16.gmra.mxu0 %v2785
        %v2859 = vpop.f32.mrf.mxu0
        %v2860 = vadd.f32 0.0, %v2859
        %v2861 = vpop.f32.mrf.mxu0
        %v2862 = vadd.f32 0.0, %v2861
        %2863 = vmatmul.bf16.gmra.mxu0 %v2788
        %v2864 = vpop.f32.mrf.mxu0
        %v2865 = vadd.f32 0.0, %v2864
        %v2866 = vpop.f32.mrf.mxu0
        %v2867 = vadd.f32 0.0, %v2866
        %2868 = vmatmul.bf16.gmra.mxu0 %v2791
        %v2869 = vpop.f32.mrf.mxu0
        %v2870 = vadd.f32 0.0, %v2869
        %v2871 = vpop.f32.mrf.mxu0
        %v2872 = vadd.f32 0.0, %v2871
        %2873 = vmatmul.bf16.gmra.mxu0 %v2794
        %v2874 = vpop.f32.mrf.mxu0
        %v2875 = vadd.f32 0.0, %v2874
        %v2876 = vpop.f32.mrf.mxu0
        %v2877 = vadd.f32 0.0, %v2876
        %2878 = vmatmul.bf16.gmra.mxu0 %v2797
        %v2879 = vpop.f32.mrf.mxu0
        %v2880 = vadd.f32 0.0, %v2879
        %v2881 = vpop.f32.mrf.mxu0
        %v2882 = vadd.f32 0.0, %v2881
        %2883 = vmatmul.bf16.gmra.mxu0 %v2800
        %v2884 = vpop.f32.mrf.mxu0
        %v2885 = vadd.f32 0.0, %v2884
        %v2886 = vpop.f32.mrf.mxu0
        %v2887 = vadd.f32 0.0, %v2886
        %2888 = vmatmul.bf16.gmra.mxu0 %v2803
        %v2889 = vpop.f32.mrf.mxu0
        %v2890 = vadd.f32 0.0, %v2889
        %v2891 = vpop.f32.mrf.mxu0
        %v2892 = vadd.f32 0.0, %v2891
        %2893 = vdwg.mxu0
        %v2894 = vadd.f32 %v2564, %v2815
        %v2895 = vadd.f32 %v2565, %v2817
        %v2896 = vadd.f32 %v2566, %v2820
        %v2897 = vadd.f32 %v2567, %v2822
        %v2898 = vadd.f32 %v2568, %v2825
        %v2899 = vadd.f32 %v2569, %v2827
        %v2900 = vadd.f32 %v2570, %v2830
        %v2901 = vadd.f32 %v2571, %v2832
        %v2902 = vadd.f32 %v2572, %v2835
        %v2903 = vadd.f32 %v2573, %v2837
        %v2904 = vadd.f32 %v2574, %v2840
        %v2905 = vadd.f32 %v2575, %v2842
        %v2906 = vadd.f32 %v2576, %v2845
        %v2907 = vadd.f32 %v2577, %v2847
        %v2908 = vadd.f32 %v2578, %v2850
        %v2909 = vadd.f32 %v2579, %v2852
        %v2910 = vadd.f32 %v2580, %v2855
        %v2911 = vadd.f32 %v2581, %v2857
        %v2912 = vadd.f32 %v2582, %v2860
        %v2913 = vadd.f32 %v2583, %v2862
        %v2914 = vadd.f32 %v2584, %v2865
        %v2915 = vadd.f32 %v2585, %v2867
        %v2916 = vadd.f32 %v2586, %v2870
        %v2917 = vadd.f32 %v2587, %v2872
        %v2918 = vadd.f32 %v2588, %v2875
        %v2919 = vadd.f32 %v2589, %v2877
        %v2920 = vadd.f32 %v2590, %v2880
        %v2921 = vadd.f32 %v2591, %v2882
        %v2922 = vadd.f32 %v2592, %v2885
        %v2923 = vadd.f32 %v2593, %v2887
        %v2924 = vadd.f32 %v2594, %v2890
        %v2925 = vadd.f32 %v2595, %v2892
        %v2926 = vld [vmem:[%s1143 + $0x2] sm:$0xff]
        %v2927 = vld [vmem:[%s1143 + $0xa] sm:$0xff]
        %v2928 = vld [vmem:[%s1143 + $0x1a] sm:$0xff]
        %v2929 = vld [vmem:[%s1143 + $0x22] sm:$0xff]
        %v2930 = vld [vmem:[%s1143 + $0x32] sm:$0xff]
        %v2931 = vld [vmem:[%s1143 + $0x3a] sm:$0xff]
        %v2932 = vld [vmem:[%s1143 + $0x4a] sm:$0xff]
        %v2933 = vld [vmem:[%s1143 + $0x52] sm:$0xff]
        %v2934 = vld [vmem:[%s1143 + $0x62] sm:$0xff]
        %v2935 = vld [vmem:[%s1143 + $0x6a] sm:$0xff]
        %v2936 = vld [vmem:[%s1143 + $0x7a] sm:$0xff]
        %v2937 = vld [vmem:[%s1143 + $0x82] sm:$0xff]
        %v2938 = vld [vmem:[%s1143 + $0x92] sm:$0xff]
        %v2939 = vld [vmem:[%s1143 + $0x9a] sm:$0xff]
        %v2940 = vld [vmem:[%s1143 + $0xaa] sm:$0xff]
        %v2941 = vld [vmem:[%s1143 + $0xb2] sm:$0xff]
        %v2942 = vld [vmem:[%s1143 + $0xc2] sm:$0xff]
        %v2943 = vld [vmem:[%s1143 + $0xca] sm:$0xff]
        %v2944 = vld [vmem:[%s1143 + $0xda] sm:$0xff]
        %v2945 = vld [vmem:[%s1143 + $0xe2] sm:$0xff]
        %v2946 = vld [vmem:[%s1143 + $0xf2] sm:$0xff]
        %v2947 = vld [vmem:[%s1143 + $0xfa] sm:$0xff]
        %v2948 = vld [vmem:[%s1143 + $0x10a] sm:$0xff]
        %v2949 = vld [vmem:[%s1143 + $0x112] sm:$0xff]
        %v2950 = vld [vmem:[%s1143 + $0x122] sm:$0xff]
        %v2951 = vld [vmem:[%s1143 + $0x12a] sm:$0xff]
        %v2952 = vld [vmem:[%s1143 + $0x13a] sm:$0xff]
        %v2953 = vld [vmem:[%s1143 + $0x142] sm:$0xff]
        %v2954 = vld [vmem:[%s1143 + $0x152] sm:$0xff]
        %v2955 = vld [vmem:[%s1143 + $0x15a] sm:$0xff]
        %v2956 = vld [vmem:[%s1143 + $0x16a] sm:$0xff]
        %v2957 = vld [vmem:[%s1143 + $0x172] sm:$0xff]
        %v2958 = vpack.c.bf16 %v2926, %v2926
        %v2959 = vpack.c.bf16 %v2927, %v2927
        %v2960 = vpack.c.bf16 %v2928, %v2928
        %v2961 = vpack.c.bf16 %v2929, %v2929
        %v2962 = vpack.c.bf16 %v2930, %v2930
        %v2963 = vpack.c.bf16 %v2931, %v2931
        %v2964 = vpack.c.bf16 %v2932, %v2932
        %v2965 = vpack.c.bf16 %v2933, %v2933
        %v2966 = vpack.c.bf16 %v2934, %v2934
        %v2967 = vpack.c.bf16 %v2935, %v2935
        %v2968 = vpack.c.bf16 %v2936, %v2936
        %v2969 = vpack.c.bf16 %v2937, %v2937
        %v2970 = vpack.c.bf16 %v2938, %v2938
        %v2971 = vpack.c.bf16 %v2939, %v2939
        %v2972 = vpack.c.bf16 %v2940, %v2940
        %v2973 = vpack.c.bf16 %v2941, %v2941
        %v2974 = vpack.c.bf16 %v2942, %v2942
        %v2975 = vpack.c.bf16 %v2943, %v2943
        %v2976 = vpack.c.bf16 %v2944, %v2944
        %v2977 = vpack.c.bf16 %v2945, %v2945
        %v2978 = vpack.c.bf16 %v2946, %v2946
        %v2979 = vpack.c.bf16 %v2947, %v2947
        %v2980 = vpack.c.bf16 %v2948, %v2948
        %v2981 = vpack.c.bf16 %v2949, %v2949
        %v2982 = vpack.c.bf16 %v2950, %v2950
        %v2983 = vpack.c.bf16 %v2951, %v2951
        %v2984 = vpack.c.bf16 %v2952, %v2952
        %v2985 = vpack.c.bf16 %v2953, %v2953
        %v2986 = vpack.c.bf16 %v2954, %v2954
        %v2987 = vpack.c.bf16 %v2955, %v2955
        %v2988 = vpack.c.bf16 %v2956, %v2956
        %v2989 = vpack.c.bf16 %v2957, %v2957
        %s2990 = scalar_lea.vmem %s3, 80
        %v2991 = vld [vmem:[%s2990] sm:$0xf]
        %v2992 = vld [vmem:[%s2990 + $0x4] sm:$0xf]
        %v2993 = vld [vmem:[%s2990 + $0x8] sm:$0xf]
        %v2994 = vld [vmem:[%s2990 + $0xc] sm:$0xf]
        %v3027 = vunpack.c.l.b16 %v2958
        %v3028 = vunpack.c.l.b16 %v2959
        %v3029 = vunpack.c.l.b16 %v2960
        %v3030 = vunpack.c.l.b16 %v2961
        %v3031 = vunpack.c.l.b16 %v2962
        %v3032 = vunpack.c.l.b16 %v2963
        %v3033 = vunpack.c.l.b16 %v2964
        %v3034 = vunpack.c.l.b16 %v2965
        %v3035 = vunpack.c.l.b16 %v2966
        %v3036 = vunpack.c.l.b16 %v2967
        %v3037 = vunpack.c.l.b16 %v2968
        %v3038 = vunpack.c.l.b16 %v2969
        %v3039 = vunpack.c.l.b16 %v2970
        %v3040 = vunpack.c.l.b16 %v2971
        %v3041 = vunpack.c.l.b16 %v2972
        %v3042 = vunpack.c.l.b16 %v2973
        %v3043 = vunpack.c.l.b16 %v2974
        %v3044 = vunpack.c.l.b16 %v2975
        %v3045 = vunpack.c.l.b16 %v2976
        %v3046 = vunpack.c.l.b16 %v2977
        %v3047 = vunpack.c.l.b16 %v2978
        %v3048 = vunpack.c.l.b16 %v2979
        %v3049 = vunpack.c.l.b16 %v2980
        %v3050 = vunpack.c.l.b16 %v2981
        %v3051 = vunpack.c.l.b16 %v2982
        %v3052 = vunpack.c.l.b16 %v2983
        %v3053 = vunpack.c.l.b16 %v2984
        %v3054 = vunpack.c.l.b16 %v2985
        %v3055 = vunpack.c.l.b16 %v2986
        %v3056 = vunpack.c.l.b16 %v2987
        %v3057 = vunpack.c.l.b16 %v2988
        %v3058 = vunpack.c.l.b16 %v2989
        %v3059 = vpack.c.b16 %v3028, %v3027
        %v3060 = vpack.c.b16 %v3030, %v3029
        %v3061 = vpack.c.b16 %v3032, %v3031
        %v3062 = vpack.c.b16 %v3034, %v3033
        %v3063 = vpack.c.b16 %v3036, %v3035
        %v3064 = vpack.c.b16 %v3038, %v3037
        %v3065 = vpack.c.b16 %v3040, %v3039
        %v3066 = vpack.c.b16 %v3042, %v3041
        %v3067 = vpack.c.b16 %v3044, %v3043
        %v3068 = vpack.c.b16 %v3046, %v3045
        %v3069 = vpack.c.b16 %v3048, %v3047
        %v3070 = vpack.c.b16 %v3050, %v3049
        %v3071 = vpack.c.b16 %v3052, %v3051
        %v3072 = vpack.c.b16 %v3054, %v3053
        %v3073 = vpack.c.b16 %v3056, %v3055
        %v3074 = vpack.c.b16 %v3058, %v3057
        %v3079 = vunpack.c.l.b16 %v2991
        %v3080 = vunpack.c.l.b16 %v2992
        %v3081 = vunpack.c.l.b16 %v2993
        %v3082 = vunpack.c.l.b16 %v2994
        %v3083 = vpack.c.b16 %v3080, %v3079
        %v3084 = vpack.c.b16 %v3082, %v3081
        %v3088 = vsel %vm723, %v3059, 0
        %v3091 = vsel %vm723, %v3060, 0
        %v3094 = vsel %vm723, %v3061, 0
        %v3097 = vsel %vm723, %v3062, 0
        %v3100 = vsel %vm723, %v3063, 0
        %v3103 = vsel %vm723, %v3064, 0
        %v3106 = vsel %vm723, %v3065, 0
        %v3109 = vsel %vm723, %v3066, 0
        %v3112 = vsel %vm723, %v3067, 0
        %v3115 = vsel %vm723, %v3068, 0
        %v3118 = vsel %vm723, %v3069, 0
        %v3121 = vsel %vm723, %v3070, 0
        %v3124 = vsel %vm723, %v3071, 0
        %v3127 = vsel %vm723, %v3072, 0
        %v3130 = vsel %vm723, %v3073, 0
        %v3133 = vsel %vm723, %v3074, 0
        %3135 = vmatpush.bf16.msra.mxu0 0
        %3136 = vmatpush.bf16.msra.mxu0 0
        %3137 = vmatpush.bf16.msra.mxu0 0
        %3138 = vmatpush.bf16.msra.mxu0 0
        %3139 = vmatpush.bf16.msra.mxu0 0
        %3140 = vmatpush.bf16.msra.mxu0 0
        %3141 = vmatpush.bf16.msra.mxu0 %v3084
        %3142 = vmatpush.bf16.msra.mxu0 %v3083
        %3143 = vmatmul.bf16.gmra.mxu0 %v3088
        %v3144 = vpop.f32.mrf.mxu0
        %v3145 = vadd.f32 0.0, %v3144
        %v3146 = vpop.f32.mrf.mxu0
        %v3147 = vadd.f32 0.0, %v3146
        %3148 = vmatmul.bf16.gmra.mxu0 %v3091
        %v3149 = vpop.f32.mrf.mxu0
        %v3150 = vadd.f32 0.0, %v3149
        %v3151 = vpop.f32.mrf.mxu0
        %v3152 = vadd.f32 0.0, %v3151
        %3153 = vmatmul.bf16.gmra.mxu0 %v3094
        %v3154 = vpop.f32.mrf.mxu0
        %v3155 = vadd.f32 0.0, %v3154
        %v3156 = vpop.f32.mrf.mxu0
        %v3157 = vadd.f32 0.0, %v3156
        %3158 = vmatmul.bf16.gmra.mxu0 %v3097
        %v3159 = vpop.f32.mrf.mxu0
        %v3160 = vadd.f32 0.0, %v3159
        %v3161 = vpop.f32.mrf.mxu0
        %v3162 = vadd.f32 0.0, %v3161
        %3163 = vmatmul.bf16.gmra.mxu0 %v3100
        %v3164 = vpop.f32.mrf.mxu0
        %v3165 = vadd.f32 0.0, %v3164
        %v3166 = vpop.f32.mrf.mxu0
        %v3167 = vadd.f32 0.0, %v3166
        %3168 = vmatmul.bf16.gmra.mxu0 %v3103
        %v3169 = vpop.f32.mrf.mxu0
        %v3170 = vadd.f32 0.0, %v3169
        %v3171 = vpop.f32.mrf.mxu0
        %v3172 = vadd.f32 0.0, %v3171
        %3173 = vmatmul.bf16.gmra.mxu0 %v3106
        %v3174 = vpop.f32.mrf.mxu0
        %v3175 = vadd.f32 0.0, %v3174
        %v3176 = vpop.f32.mrf.mxu0
        %v3177 = vadd.f32 0.0, %v3176
        %3178 = vmatmul.bf16.gmra.mxu0 %v3109
        %v3179 = vpop.f32.mrf.mxu0
        %v3180 = vadd.f32 0.0, %v3179
        %v3181 = vpop.f32.mrf.mxu0
        %v3182 = vadd.f32 0.0, %v3181
        %3183 = vmatmul.bf16.gmra.mxu0 %v3112
        %v3184 = vpop.f32.mrf.mxu0
        %v3185 = vadd.f32 0.0, %v3184
        %v3186 = vpop.f32.mrf.mxu0
        %v3187 = vadd.f32 0.0, %v3186
        %3188 = vmatmul.bf16.gmra.mxu0 %v3115
        %v3189 = vpop.f32.mrf.mxu0
        %v3190 = vadd.f32 0.0, %v3189
        %v3191 = vpop.f32.mrf.mxu0
        %v3192 = vadd.f32 0.0, %v3191
        %3193 = vmatmul.bf16.gmra.mxu0 %v3118
        %v3194 = vpop.f32.mrf.mxu0
        %v3195 = vadd.f32 0.0, %v3194
        %v3196 = vpop.f32.mrf.mxu0
        %v3197 = vadd.f32 0.0, %v3196
        %3198 = vmatmul.bf16.gmra.mxu0 %v3121
        %v3199 = vpop.f32.mrf.mxu0
        %v3200 = vadd.f32 0.0, %v3199
        %v3201 = vpop.f32.mrf.mxu0
        %v3202 = vadd.f32 0.0, %v3201
        %3203 = vmatmul.bf16.gmra.mxu0 %v3124
        %v3204 = vpop.f32.mrf.mxu0
        %v3205 = vadd.f32 0.0, %v3204
        %v3206 = vpop.f32.mrf.mxu0
        %v3207 = vadd.f32 0.0, %v3206
        %3208 = vmatmul.bf16.gmra.mxu0 %v3127
        %v3209 = vpop.f32.mrf.mxu0
        %v3210 = vadd.f32 0.0, %v3209
        %v3211 = vpop.f32.mrf.mxu0
        %v3212 = vadd.f32 0.0, %v3211
        %3213 = vmatmul.bf16.gmra.mxu0 %v3130
        %v3214 = vpop.f32.mrf.mxu0
        %v3215 = vadd.f32 0.0, %v3214
        %v3216 = vpop.f32.mrf.mxu0
        %v3217 = vadd.f32 0.0, %v3216
        %3218 = vmatmul.bf16.gmra.mxu0 %v3133
        %v3219 = vpop.f32.mrf.mxu0
        %v3220 = vadd.f32 0.0, %v3219
        %v3221 = vpop.f32.mrf.mxu0
        %v3222 = vadd.f32 0.0, %v3221
        %3223 = vdwg.mxu0
        %v3224 = vadd.f32 %v2894, %v3145
        %v3225 = vadd.f32 %v2895, %v3147
        %v3226 = vadd.f32 %v2896, %v3150
        %v3227 = vadd.f32 %v2897, %v3152
        %v3228 = vadd.f32 %v2898, %v3155
        %v3229 = vadd.f32 %v2899, %v3157
        %v3230 = vadd.f32 %v2900, %v3160
        %v3231 = vadd.f32 %v2901, %v3162
        %v3232 = vadd.f32 %v2902, %v3165
        %v3233 = vadd.f32 %v2903, %v3167
        %v3234 = vadd.f32 %v2904, %v3170
        %v3235 = vadd.f32 %v2905, %v3172
        %v3236 = vadd.f32 %v2906, %v3175
        %v3237 = vadd.f32 %v2907, %v3177
        %v3238 = vadd.f32 %v2908, %v3180
        %v3239 = vadd.f32 %v2909, %v3182
        %v3240 = vadd.f32 %v2910, %v3185
        %v3241 = vadd.f32 %v2911, %v3187
        %v3242 = vadd.f32 %v2912, %v3190
        %v3243 = vadd.f32 %v2913, %v3192
        %v3244 = vadd.f32 %v2914, %v3195
        %v3245 = vadd.f32 %v2915, %v3197
        %v3246 = vadd.f32 %v2916, %v3200
        %v3247 = vadd.f32 %v2917, %v3202
        %v3248 = vadd.f32 %v2918, %v3205
        %v3249 = vadd.f32 %v2919, %v3207
        %v3250 = vadd.f32 %v2920, %v3210
        %v3251 = vadd.f32 %v2921, %v3212
        %v3252 = vadd.f32 %v2922, %v3215
        %v3253 = vadd.f32 %v2923, %v3217
        %v3254 = vadd.f32 %v2924, %v3220
        %v3255 = vadd.f32 %v2925, %v3222
        %s3256 = scalar_lea.vmem [#allocation2], 48
        %v3257 = vld [vmem:[%s3256] sm:$0xff]
        %v3258 = vld [vmem:[%s3256 + $0x8] sm:$0xff]
        %v3259 = vld [vmem:[%s3256 + $0x18] sm:$0xff]
        %v3260 = vld [vmem:[%s3256 + $0x20] sm:$0xff]
        %v3261 = vld [vmem:[%s3256 + $0x30] sm:$0xff]
        %v3262 = vld [vmem:[%s3256 + $0x38] sm:$0xff]
        %v3263 = vld [vmem:[%s3256 + $0x48] sm:$0xff]
        %v3264 = vld [vmem:[%s3256 + $0x50] sm:$0xff]
        %v3265 = vld [vmem:[%s3256 + $0x60] sm:$0xff]
        %v3266 = vld [vmem:[%s3256 + $0x68] sm:$0xff]
        %v3267 = vld [vmem:[%s3256 + $0x78] sm:$0xff]
        %v3268 = vld [vmem:[%s3256 + $0x80] sm:$0xff]
        %v3269 = vld [vmem:[%s3256 + $0x90] sm:$0xff]
        %v3270 = vld [vmem:[%s3256 + $0x98] sm:$0xff]
        %v3271 = vld [vmem:[%s3256 + $0xa8] sm:$0xff]
        %v3272 = vld [vmem:[%s3256 + $0xb0] sm:$0xff]
        %v3273 = vld [vmem:[%s3256 + $0xc0] sm:$0xff]
        %v3274 = vld [vmem:[%s3256 + $0xc8] sm:$0xff]
        %v3275 = vld [vmem:[%s3256 + $0xd8] sm:$0xff]
        %v3276 = vld [vmem:[%s3256 + $0xe0] sm:$0xff]
        %v3277 = vld [vmem:[%s3256 + $0xf0] sm:$0xff]
        %v3278 = vld [vmem:[%s3256 + $0xf8] sm:$0xff]
        %v3279 = vld [vmem:[%s3256 + $0x108] sm:$0xff]
        %v3280 = vld [vmem:[%s3256 + $0x110] sm:$0xff]
        %v3281 = vld [vmem:[%s3256 + $0x120] sm:$0xff]
        %v3282 = vld [vmem:[%s3256 + $0x128] sm:$0xff]
        %v3283 = vld [vmem:[%s3256 + $0x138] sm:$0xff]
        %v3284 = vld [vmem:[%s3256 + $0x140] sm:$0xff]
        %v3285 = vld [vmem:[%s3256 + $0x150] sm:$0xff]
        %v3286 = vld [vmem:[%s3256 + $0x158] sm:$0xff]
        %v3287 = vld [vmem:[%s3256 + $0x168] sm:$0xff]
        %v3288 = vld [vmem:[%s3256 + $0x170] sm:$0xff]
        %v3289 = vpack.c.bf16 %v3257, %v3257
        %v3290 = vpack.c.bf16 %v3258, %v3258
        %v3291 = vpack.c.bf16 %v3259, %v3259
        %v3292 = vpack.c.bf16 %v3260, %v3260
        %v3293 = vpack.c.bf16 %v3261, %v3261
        %v3294 = vpack.c.bf16 %v3262, %v3262
        %v3295 = vpack.c.bf16 %v3263, %v3263
        %v3296 = vpack.c.bf16 %v3264, %v3264
        %v3297 = vpack.c.bf16 %v3265, %v3265
        %v3298 = vpack.c.bf16 %v3266, %v3266
        %v3299 = vpack.c.bf16 %v3267, %v3267
        %v3300 = vpack.c.bf16 %v3268, %v3268
        %v3301 = vpack.c.bf16 %v3269, %v3269
        %v3302 = vpack.c.bf16 %v3270, %v3270
        %v3303 = vpack.c.bf16 %v3271, %v3271
        %v3304 = vpack.c.bf16 %v3272, %v3272
        %v3305 = vpack.c.bf16 %v3273, %v3273
        %v3306 = vpack.c.bf16 %v3274, %v3274
        %v3307 = vpack.c.bf16 %v3275, %v3275
        %v3308 = vpack.c.bf16 %v3276, %v3276
        %v3309 = vpack.c.bf16 %v3277, %v3277
        %v3310 = vpack.c.bf16 %v3278, %v3278
        %v3311 = vpack.c.bf16 %v3279, %v3279
        %v3312 = vpack.c.bf16 %v3280, %v3280
        %v3313 = vpack.c.bf16 %v3281, %v3281
        %v3314 = vpack.c.bf16 %v3282, %v3282
        %v3315 = vpack.c.bf16 %v3283, %v3283
        %v3316 = vpack.c.bf16 %v3284, %v3284
        %v3317 = vpack.c.bf16 %v3285, %v3285
        %v3318 = vpack.c.bf16 %v3286, %v3286
        %v3319 = vpack.c.bf16 %v3287, %v3287
        %v3320 = vpack.c.bf16 %v3288, %v3288
        %s3321 = scalar_lea.vmem %s3, 96
        %v3322 = vld [vmem:[%s3321] sm:$0xf]
        %v3323 = vld [vmem:[%s3321 + $0x4] sm:$0xf]
        %v3324 = vld [vmem:[%s3321 + $0x8] sm:$0xf]
        %v3325 = vld [vmem:[%s3321 + $0xc] sm:$0xf]
        %v3358 = vunpack.c.l.b16 %v3289
        %v3359 = vunpack.c.l.b16 %v3290
        %v3360 = vunpack.c.l.b16 %v3291
        %v3361 = vunpack.c.l.b16 %v3292
        %v3362 = vunpack.c.l.b16 %v3293
        %v3363 = vunpack.c.l.b16 %v3294
        %v3364 = vunpack.c.l.b16 %v3295
        %v3365 = vunpack.c.l.b16 %v3296
        %v3366 = vunpack.c.l.b16 %v3297
        %v3367 = vunpack.c.l.b16 %v3298
        %v3368 = vunpack.c.l.b16 %v3299
        %v3369 = vunpack.c.l.b16 %v3300
        %v3370 = vunpack.c.l.b16 %v3301
        %v3371 = vunpack.c.l.b16 %v3302
        %v3372 = vunpack.c.l.b16 %v3303
        %v3373 = vunpack.c.l.b16 %v3304
        %v3374 = vunpack.c.l.b16 %v3305
        %v3375 = vunpack.c.l.b16 %v3306
        %v3376 = vunpack.c.l.b16 %v3307
        %v3377 = vunpack.c.l.b16 %v3308
        %v3378 = vunpack.c.l.b16 %v3309
        %v3379 = vunpack.c.l.b16 %v3310
        %v3380 = vunpack.c.l.b16 %v3311
        %v3381 = vunpack.c.l.b16 %v3312
        %v3382 = vunpack.c.l.b16 %v3313
        %v3383 = vunpack.c.l.b16 %v3314
        %v3384 = vunpack.c.l.b16 %v3315
        %v3385 = vunpack.c.l.b16 %v3316
        %v3386 = vunpack.c.l.b16 %v3317
        %v3387 = vunpack.c.l.b16 %v3318
        %v3388 = vunpack.c.l.b16 %v3319
        %v3389 = vunpack.c.l.b16 %v3320
        %v3390 = vpack.c.b16 %v3359, %v3358
        %v3391 = vpack.c.b16 %v3361, %v3360
        %v3392 = vpack.c.b16 %v3363, %v3362
        %v3393 = vpack.c.b16 %v3365, %v3364
        %v3394 = vpack.c.b16 %v3367, %v3366
        %v3395 = vpack.c.b16 %v3369, %v3368
        %v3396 = vpack.c.b16 %v3371, %v3370
        %v3397 = vpack.c.b16 %v3373, %v3372
        %v3398 = vpack.c.b16 %v3375, %v3374
        %v3399 = vpack.c.b16 %v3377, %v3376
        %v3400 = vpack.c.b16 %v3379, %v3378
        %v3401 = vpack.c.b16 %v3381, %v3380
        %v3402 = vpack.c.b16 %v3383, %v3382
        %v3403 = vpack.c.b16 %v3385, %v3384
        %v3404 = vpack.c.b16 %v3387, %v3386
        %v3405 = vpack.c.b16 %v3389, %v3388
        %v3410 = vunpack.c.l.b16 %v3322
        %v3411 = vunpack.c.l.b16 %v3323
        %v3412 = vunpack.c.l.b16 %v3324
        %v3413 = vunpack.c.l.b16 %v3325
        %v3414 = vpack.c.b16 %v3411, %v3410
        %v3415 = vpack.c.b16 %v3413, %v3412
        %v3419 = vsel %vm723, %v3390, 0
        %v3422 = vsel %vm723, %v3391, 0
        %v3425 = vsel %vm723, %v3392, 0
        %v3428 = vsel %vm723, %v3393, 0
        %v3431 = vsel %vm723, %v3394, 0
        %v3434 = vsel %vm723, %v3395, 0
        %v3437 = vsel %vm723, %v3396, 0
        %v3440 = vsel %vm723, %v3397, 0
        %v3443 = vsel %vm723, %v3398, 0
        %v3446 = vsel %vm723, %v3399, 0
        %v3449 = vsel %vm723, %v3400, 0
        %v3452 = vsel %vm723, %v3401, 0
        %v3455 = vsel %vm723, %v3402, 0
        %v3458 = vsel %vm723, %v3403, 0
        %v3461 = vsel %vm723, %v3404, 0
        %v3464 = vsel %vm723, %v3405, 0
        %3466 = vmatpush.bf16.msra.mxu0 0
        %3467 = vmatpush.bf16.msra.mxu0 0
        %3468 = vmatpush.bf16.msra.mxu0 0
        %3469 = vmatpush.bf16.msra.mxu0 0
        %3470 = vmatpush.bf16.msra.mxu0 0
        %3471 = vmatpush.bf16.msra.mxu0 0
        %3472 = vmatpush.bf16.msra.mxu0 %v3415
        %3473 = vmatpush.bf16.msra.mxu0 %v3414
        %3474 = vmatmul.bf16.gmra.mxu0 %v3419
        %v3475 = vpop.f32.mrf.mxu0
        %v3476 = vadd.f32 0.0, %v3475
        %v3477 = vpop.f32.mrf.mxu0
        %v3478 = vadd.f32 0.0, %v3477
        %3479 = vmatmul.bf16.gmra.mxu0 %v3422
        %v3480 = vpop.f32.mrf.mxu0
        %v3481 = vadd.f32 0.0, %v3480
        %v3482 = vpop.f32.mrf.mxu0
        %v3483 = vadd.f32 0.0, %v3482
        %3484 = vmatmul.bf16.gmra.mxu0 %v3425
        %v3485 = vpop.f32.mrf.mxu0
        %v3486 = vadd.f32 0.0, %v3485
        %v3487 = vpop.f32.mrf.mxu0
        %v3488 = vadd.f32 0.0, %v3487
        %3489 = vmatmul.bf16.gmra.mxu0 %v3428
        %v3490 = vpop.f32.mrf.mxu0
        %v3491 = vadd.f32 0.0, %v3490
        %v3492 = vpop.f32.mrf.mxu0
        %v3493 = vadd.f32 0.0, %v3492
        %3494 = vmatmul.bf16.gmra.mxu0 %v3431
        %v3495 = vpop.f32.mrf.mxu0
        %v3496 = vadd.f32 0.0, %v3495
        %v3497 = vpop.f32.mrf.mxu0
        %v3498 = vadd.f32 0.0, %v3497
        %3499 = vmatmul.bf16.gmra.mxu0 %v3434
        %v3500 = vpop.f32.mrf.mxu0
        %v3501 = vadd.f32 0.0, %v3500
        %v3502 = vpop.f32.mrf.mxu0
        %v3503 = vadd.f32 0.0, %v3502
        %3504 = vmatmul.bf16.gmra.mxu0 %v3437
        %v3505 = vpop.f32.mrf.mxu0
        %v3506 = vadd.f32 0.0, %v3505
        %v3507 = vpop.f32.mrf.mxu0
        %v3508 = vadd.f32 0.0, %v3507
        %3509 = vmatmul.bf16.gmra.mxu0 %v3440
        %v3510 = vpop.f32.mrf.mxu0
        %v3511 = vadd.f32 0.0, %v3510
        %v3512 = vpop.f32.mrf.mxu0
        %v3513 = vadd.f32 0.0, %v3512
        %3514 = vmatmul.bf16.gmra.mxu0 %v3443
        %v3515 = vpop.f32.mrf.mxu0
        %v3516 = vadd.f32 0.0, %v3515
        %v3517 = vpop.f32.mrf.mxu0
        %v3518 = vadd.f32 0.0, %v3517
        %3519 = vmatmul.bf16.gmra.mxu0 %v3446
        %v3520 = vpop.f32.mrf.mxu0
        %v3521 = vadd.f32 0.0, %v3520
        %v3522 = vpop.f32.mrf.mxu0
        %v3523 = vadd.f32 0.0, %v3522
        %3524 = vmatmul.bf16.gmra.mxu0 %v3449
        %v3525 = vpop.f32.mrf.mxu0
        %v3526 = vadd.f32 0.0, %v3525
        %v3527 = vpop.f32.mrf.mxu0
        %v3528 = vadd.f32 0.0, %v3527
        %3529 = vmatmul.bf16.gmra.mxu0 %v3452
        %v3530 = vpop.f32.mrf.mxu0
        %v3531 = vadd.f32 0.0, %v3530
        %v3532 = vpop.f32.mrf.mxu0
        %v3533 = vadd.f32 0.0, %v3532
        %3534 = vmatmul.bf16.gmra.mxu0 %v3455
        %v3535 = vpop.f32.mrf.mxu0
        %v3536 = vadd.f32 0.0, %v3535
        %v3537 = vpop.f32.mrf.mxu0
        %v3538 = vadd.f32 0.0, %v3537
        %3539 = vmatmul.bf16.gmra.mxu0 %v3458
        %v3540 = vpop.f32.mrf.mxu0
        %v3541 = vadd.f32 0.0, %v3540
        %v3542 = vpop.f32.mrf.mxu0
        %v3543 = vadd.f32 0.0, %v3542
        %3544 = vmatmul.bf16.gmra.mxu0 %v3461
        %v3545 = vpop.f32.mrf.mxu0
        %v3546 = vadd.f32 0.0, %v3545
        %v3547 = vpop.f32.mrf.mxu0
        %v3548 = vadd.f32 0.0, %v3547
        %3549 = vmatmul.bf16.gmra.mxu0 %v3464
        %v3550 = vpop.f32.mrf.mxu0
        %v3551 = vadd.f32 0.0, %v3550
        %v3552 = vpop.f32.mrf.mxu0
        %v3553 = vadd.f32 0.0, %v3552
        %3554 = vdwg.mxu0
        %v3555 = vadd.f32 %v3224, %v3476
        %v3556 = vadd.f32 %v3225, %v3478
        %v3557 = vadd.f32 %v3226, %v3481
        %v3558 = vadd.f32 %v3227, %v3483
        %v3559 = vadd.f32 %v3228, %v3486
        %v3560 = vadd.f32 %v3229, %v3488
        %v3561 = vadd.f32 %v3230, %v3491
        %v3562 = vadd.f32 %v3231, %v3493
        %v3563 = vadd.f32 %v3232, %v3496
        %v3564 = vadd.f32 %v3233, %v3498
        %v3565 = vadd.f32 %v3234, %v3501
        %v3566 = vadd.f32 %v3235, %v3503
        %v3567 = vadd.f32 %v3236, %v3506
        %v3568 = vadd.f32 %v3237, %v3508
        %v3569 = vadd.f32 %v3238, %v3511
        %v3570 = vadd.f32 %v3239, %v3513
        %v3571 = vadd.f32 %v3240, %v3516
        %v3572 = vadd.f32 %v3241, %v3518
        %v3573 = vadd.f32 %v3242, %v3521
        %v3574 = vadd.f32 %v3243, %v3523
        %v3575 = vadd.f32 %v3244, %v3526
        %v3576 = vadd.f32 %v3245, %v3528
        %v3577 = vadd.f32 %v3246, %v3531
        %v3578 = vadd.f32 %v3247, %v3533
        %v3579 = vadd.f32 %v3248, %v3536
        %v3580 = vadd.f32 %v3249, %v3538
        %v3581 = vadd.f32 %v3250, %v3541
        %v3582 = vadd.f32 %v3251, %v3543
        %v3583 = vadd.f32 %v3252, %v3546
        %v3584 = vadd.f32 %v3253, %v3548
        %v3585 = vadd.f32 %v3254, %v3551
        %v3586 = vadd.f32 %v3255, %v3553
        %v3587 = vld [vmem:[%s3256 + $0x1] sm:$0xff]
        %v3588 = vld [vmem:[%s3256 + $0x9] sm:$0xff]
        %v3589 = vld [vmem:[%s3256 + $0x19] sm:$0xff]
        %v3590 = vld [vmem:[%s3256 + $0x21] sm:$0xff]
        %v3591 = vld [vmem:[%s3256 + $0x31] sm:$0xff]
        %v3592 = vld [vmem:[%s3256 + $0x39] sm:$0xff]
        %v3593 = vld [vmem:[%s3256 + $0x49] sm:$0xff]
        %v3594 = vld [vmem:[%s3256 + $0x51] sm:$0xff]
        %v3595 = vld [vmem:[%s3256 + $0x61] sm:$0xff]
        %v3596 = vld [vmem:[%s3256 + $0x69] sm:$0xff]
        %v3597 = vld [vmem:[%s3256 + $0x79] sm:$0xff]
        %v3598 = vld [vmem:[%s3256 + $0x81] sm:$0xff]
        %v3599 = vld [vmem:[%s3256 + $0x91] sm:$0xff]
        %v3600 = vld [vmem:[%s3256 + $0x99] sm:$0xff]
        %v3601 = vld [vmem:[%s3256 + $0xa9] sm:$0xff]
        %v3602 = vld [vmem:[%s3256 + $0xb1] sm:$0xff]
        %v3603 = vld [vmem:[%s3256 + $0xc1] sm:$0xff]
        %v3604 = vld [vmem:[%s3256 + $0xc9] sm:$0xff]
        %v3605 = vld [vmem:[%s3256 + $0xd9] sm:$0xff]
        %v3606 = vld [vmem:[%s3256 + $0xe1] sm:$0xff]
        %v3607 = vld [vmem:[%s3256 + $0xf1] sm:$0xff]
        %v3608 = vld [vmem:[%s3256 + $0xf9] sm:$0xff]
        %v3609 = vld [vmem:[%s3256 + $0x109] sm:$0xff]
        %v3610 = vld [vmem:[%s3256 + $0x111] sm:$0xff]
        %v3611 = vld [vmem:[%s3256 + $0x121] sm:$0xff]
        %v3612 = vld [vmem:[%s3256 + $0x129] sm:$0xff]
        %v3613 = vld [vmem:[%s3256 + $0x139] sm:$0xff]
        %v3614 = vld [vmem:[%s3256 + $0x141] sm:$0xff]
        %v3615 = vld [vmem:[%s3256 + $0x151] sm:$0xff]
        %v3616 = vld [vmem:[%s3256 + $0x159] sm:$0xff]
        %v3617 = vld [vmem:[%s3256 + $0x169] sm:$0xff]
        %v3618 = vld [vmem:[%s3256 + $0x171] sm:$0xff]
        %v3619 = vpack.c.bf16 %v3587, %v3587
        %v3620 = vpack.c.bf16 %v3588, %v3588
        %v3621 = vpack.c.bf16 %v3589, %v3589
        %v3622 = vpack.c.bf16 %v3590, %v3590
        %v3623 = vpack.c.bf16 %v3591, %v3591
        %v3624 = vpack.c.bf16 %v3592, %v3592
        %v3625 = vpack.c.bf16 %v3593, %v3593
        %v3626 = vpack.c.bf16 %v3594, %v3594
        %v3627 = vpack.c.bf16 %v3595, %v3595
        %v3628 = vpack.c.bf16 %v3596, %v3596
        %v3629 = vpack.c.bf16 %v3597, %v3597
        %v3630 = vpack.c.bf16 %v3598, %v3598
        %v3631 = vpack.c.bf16 %v3599, %v3599
        %v3632 = vpack.c.bf16 %v3600, %v3600
        %v3633 = vpack.c.bf16 %v3601, %v3601
        %v3634 = vpack.c.bf16 %v3602, %v3602
        %v3635 = vpack.c.bf16 %v3603, %v3603
        %v3636 = vpack.c.bf16 %v3604, %v3604
        %v3637 = vpack.c.bf16 %v3605, %v3605
        %v3638 = vpack.c.bf16 %v3606, %v3606
        %v3639 = vpack.c.bf16 %v3607, %v3607
        %v3640 = vpack.c.bf16 %v3608, %v3608
        %v3641 = vpack.c.bf16 %v3609, %v3609
        %v3642 = vpack.c.bf16 %v3610, %v3610
        %v3643 = vpack.c.bf16 %v3611, %v3611
        %v3644 = vpack.c.bf16 %v3612, %v3612
        %v3645 = vpack.c.bf16 %v3613, %v3613
        %v3646 = vpack.c.bf16 %v3614, %v3614
        %v3647 = vpack.c.bf16 %v3615, %v3615
        %v3648 = vpack.c.bf16 %v3616, %v3616
        %v3649 = vpack.c.bf16 %v3617, %v3617
        %v3650 = vpack.c.bf16 %v3618, %v3618
        %s3651 = scalar_lea.vmem %s3, 112
        %v3652 = vld [vmem:[%s3651] sm:$0xf]
        %v3653 = vld [vmem:[%s3651 + $0x4] sm:$0xf]
        %v3654 = vld [vmem:[%s3651 + $0x8] sm:$0xf]
        %v3655 = vld [vmem:[%s3651 + $0xc] sm:$0xf]
        %v3688 = vunpack.c.l.b16 %v3619
        %v3689 = vunpack.c.l.b16 %v3620
        %v3690 = vunpack.c.l.b16 %v3621
        %v3691 = vunpack.c.l.b16 %v3622
        %v3692 = vunpack.c.l.b16 %v3623
        %v3693 = vunpack.c.l.b16 %v3624
        %v3694 = vunpack.c.l.b16 %v3625
        %v3695 = vunpack.c.l.b16 %v3626
        %v3696 = vunpack.c.l.b16 %v3627
        %v3697 = vunpack.c.l.b16 %v3628
        %v3698 = vunpack.c.l.b16 %v3629
        %v3699 = vunpack.c.l.b16 %v3630
        %v3700 = vunpack.c.l.b16 %v3631
        %v3701 = vunpack.c.l.b16 %v3632
        %v3702 = vunpack.c.l.b16 %v3633
        %v3703 = vunpack.c.l.b16 %v3634
        %v3704 = vunpack.c.l.b16 %v3635
        %v3705 = vunpack.c.l.b16 %v3636
        %v3706 = vunpack.c.l.b16 %v3637
        %v3707 = vunpack.c.l.b16 %v3638
        %v3708 = vunpack.c.l.b16 %v3639
        %v3709 = vunpack.c.l.b16 %v3640
        %v3710 = vunpack.c.l.b16 %v3641
        %v3711 = vunpack.c.l.b16 %v3642
        %v3712 = vunpack.c.l.b16 %v3643
        %v3713 = vunpack.c.l.b16 %v3644
        %v3714 = vunpack.c.l.b16 %v3645
        %v3715 = vunpack.c.l.b16 %v3646
        %v3716 = vunpack.c.l.b16 %v3647
        %v3717 = vunpack.c.l.b16 %v3648
        %v3718 = vunpack.c.l.b16 %v3649
        %v3719 = vunpack.c.l.b16 %v3650
        %v3720 = vpack.c.b16 %v3689, %v3688
        %v3721 = vpack.c.b16 %v3691, %v3690
        %v3722 = vpack.c.b16 %v3693, %v3692
        %v3723 = vpack.c.b16 %v3695, %v3694
        %v3724 = vpack.c.b16 %v3697, %v3696
        %v3725 = vpack.c.b16 %v3699, %v3698
        %v3726 = vpack.c.b16 %v3701, %v3700
        %v3727 = vpack.c.b16 %v3703, %v3702
        %v3728 = vpack.c.b16 %v3705, %v3704
        %v3729 = vpack.c.b16 %v3707, %v3706
        %v3730 = vpack.c.b16 %v3709, %v3708
        %v3731 = vpack.c.b16 %v3711, %v3710
        %v3732 = vpack.c.b16 %v3713, %v3712
        %v3733 = vpack.c.b16 %v3715, %v3714
        %v3734 = vpack.c.b16 %v3717, %v3716
        %v3735 = vpack.c.b16 %v3719, %v3718
        %v3740 = vunpack.c.l.b16 %v3652
        %v3741 = vunpack.c.l.b16 %v3653
        %v3742 = vunpack.c.l.b16 %v3654
        %v3743 = vunpack.c.l.b16 %v3655
        %v3744 = vpack.c.b16 %v3741, %v3740
        %v3745 = vpack.c.b16 %v3743, %v3742
        %v3749 = vsel %vm723, %v3720, 0
        %v3752 = vsel %vm723, %v3721, 0
        %v3755 = vsel %vm723, %v3722, 0
        %v3758 = vsel %vm723, %v3723, 0
        %v3761 = vsel %vm723, %v3724, 0
        %v3764 = vsel %vm723, %v3725, 0
        %v3767 = vsel %vm723, %v3726, 0
        %v3770 = vsel %vm723, %v3727, 0
        %v3773 = vsel %vm723, %v3728, 0
        %v3776 = vsel %vm723, %v3729, 0
        %v3779 = vsel %vm723, %v3730, 0
        %v3782 = vsel %vm723, %v3731, 0
        %v3785 = vsel %vm723, %v3732, 0
        %v3788 = vsel %vm723, %v3733, 0
        %v3791 = vsel %vm723, %v3734, 0
        %v3794 = vsel %vm723, %v3735, 0
        %3796 = vmatpush.bf16.msra.mxu0 0
        %3797 = vmatpush.bf16.msra.mxu0 0
        %3798 = vmatpush.bf16.msra.mxu0 0
        %3799 = vmatpush.bf16.msra.mxu0 0
        %3800 = vmatpush.bf16.msra.mxu0 0
        %3801 = vmatpush.bf16.msra.mxu0 0
        %3802 = vmatpush.bf16.msra.mxu0 %v3745
        %3803 = vmatpush.bf16.msra.mxu0 %v3744
        %3804 = vmatmul.bf16.gmra.mxu0 %v3749
        %v3805 = vpop.f32.mrf.mxu0
        %v3806 = vadd.f32 0.0, %v3805
        %v3807 = vpop.f32.mrf.mxu0
        %v3808 = vadd.f32 0.0, %v3807
        %3809 = vmatmul.bf16.gmra.mxu0 %v3752
        %v3810 = vpop.f32.mrf.mxu0
        %v3811 = vadd.f32 0.0, %v3810
        %v3812 = vpop.f32.mrf.mxu0
        %v3813 = vadd.f32 0.0, %v3812
        %3814 = vmatmul.bf16.gmra.mxu0 %v3755
        %v3815 = vpop.f32.mrf.mxu0
        %v3816 = vadd.f32 0.0, %v3815
        %v3817 = vpop.f32.mrf.mxu0
        %v3818 = vadd.f32 0.0, %v3817
        %3819 = vmatmul.bf16.gmra.mxu0 %v3758
        %v3820 = vpop.f32.mrf.mxu0
        %v3821 = vadd.f32 0.0, %v3820
        %v3822 = vpop.f32.mrf.mxu0
        %v3823 = vadd.f32 0.0, %v3822
        %3824 = vmatmul.bf16.gmra.mxu0 %v3761
        %v3825 = vpop.f32.mrf.mxu0
        %v3826 = vadd.f32 0.0, %v3825
        %v3827 = vpop.f32.mrf.mxu0
        %v3828 = vadd.f32 0.0, %v3827
        %3829 = vmatmul.bf16.gmra.mxu0 %v3764
        %v3830 = vpop.f32.mrf.mxu0
        %v3831 = vadd.f32 0.0, %v3830
        %v3832 = vpop.f32.mrf.mxu0
        %v3833 = vadd.f32 0.0, %v3832
        %3834 = vmatmul.bf16.gmra.mxu0 %v3767
        %v3835 = vpop.f32.mrf.mxu0
        %v3836 = vadd.f32 0.0, %v3835
        %v3837 = vpop.f32.mrf.mxu0
        %v3838 = vadd.f32 0.0, %v3837
        %3839 = vmatmul.bf16.gmra.mxu0 %v3770
        %v3840 = vpop.f32.mrf.mxu0
        %v3841 = vadd.f32 0.0, %v3840
        %v3842 = vpop.f32.mrf.mxu0
        %v3843 = vadd.f32 0.0, %v3842
        %3844 = vmatmul.bf16.gmra.mxu0 %v3773
        %v3845 = vpop.f32.mrf.mxu0
        %v3846 = vadd.f32 0.0, %v3845
        %v3847 = vpop.f32.mrf.mxu0
        %v3848 = vadd.f32 0.0, %v3847
        %3849 = vmatmul.bf16.gmra.mxu0 %v3776
        %v3850 = vpop.f32.mrf.mxu0
        %v3851 = vadd.f32 0.0, %v3850
        %v3852 = vpop.f32.mrf.mxu0
        %v3853 = vadd.f32 0.0, %v3852
        %3854 = vmatmul.bf16.gmra.mxu0 %v3779
        %v3855 = vpop.f32.mrf.mxu0
        %v3856 = vadd.f32 0.0, %v3855
        %v3857 = vpop.f32.mrf.mxu0
        %v3858 = vadd.f32 0.0, %v3857
        %3859 = vmatmul.bf16.gmra.mxu0 %v3782
        %v3860 = vpop.f32.mrf.mxu0
        %v3861 = vadd.f32 0.0, %v3860
        %v3862 = vpop.f32.mrf.mxu0
        %v3863 = vadd.f32 0.0, %v3862
        %3864 = vmatmul.bf16.gmra.mxu0 %v3785
        %v3865 = vpop.f32.mrf.mxu0
        %v3866 = vadd.f32 0.0, %v3865
        %v3867 = vpop.f32.mrf.mxu0
        %v3868 = vadd.f32 0.0, %v3867
        %3869 = vmatmul.bf16.gmra.mxu0 %v3788
        %v3870 = vpop.f32.mrf.mxu0
        %v3871 = vadd.f32 0.0, %v3870
        %v3872 = vpop.f32.mrf.mxu0
        %v3873 = vadd.f32 0.0, %v3872
        %3874 = vmatmul.bf16.gmra.mxu0 %v3791
        %v3875 = vpop.f32.mrf.mxu0
        %v3876 = vadd.f32 0.0, %v3875
        %v3877 = vpop.f32.mrf.mxu0
        %v3878 = vadd.f32 0.0, %v3877
        %3879 = vmatmul.bf16.gmra.mxu0 %v3794
        %v3880 = vpop.f32.mrf.mxu0
        %v3881 = vadd.f32 0.0, %v3880
        %v3882 = vpop.f32.mrf.mxu0
        %v3883 = vadd.f32 0.0, %v3882
        %3884 = vdwg.mxu0
        %v3885 = vadd.f32 %v3555, %v3806
        %v3886 = vadd.f32 %v3556, %v3808
        %v3887 = vadd.f32 %v3557, %v3811
        %v3888 = vadd.f32 %v3558, %v3813
        %v3889 = vadd.f32 %v3559, %v3816
        %v3890 = vadd.f32 %v3560, %v3818
        %v3891 = vadd.f32 %v3561, %v3821
        %v3892 = vadd.f32 %v3562, %v3823
        %v3893 = vadd.f32 %v3563, %v3826
        %v3894 = vadd.f32 %v3564, %v3828
        %v3895 = vadd.f32 %v3565, %v3831
        %v3896 = vadd.f32 %v3566, %v3833
        %v3897 = vadd.f32 %v3567, %v3836
        %v3898 = vadd.f32 %v3568, %v3838
        %v3899 = vadd.f32 %v3569, %v3841
        %v3900 = vadd.f32 %v3570, %v3843
        %v3901 = vadd.f32 %v3571, %v3846
        %v3902 = vadd.f32 %v3572, %v3848
        %v3903 = vadd.f32 %v3573, %v3851
        %v3904 = vadd.f32 %v3574, %v3853
        %v3905 = vadd.f32 %v3575, %v3856
        %v3906 = vadd.f32 %v3576, %v3858
        %v3907 = vadd.f32 %v3577, %v3861
        %v3908 = vadd.f32 %v3578, %v3863
        %v3909 = vadd.f32 %v3579, %v3866
        %v3910 = vadd.f32 %v3580, %v3868
        %v3911 = vadd.f32 %v3581, %v3871
        %v3912 = vadd.f32 %v3582, %v3873
        %v3913 = vadd.f32 %v3583, %v3876
        %v3914 = vadd.f32 %v3584, %v3878
        %v3915 = vadd.f32 %v3585, %v3881
        %v3916 = vadd.f32 %v3586, %v3883
        %v3917 = vld [vmem:[%s3256 + $0x2] sm:$0xff]
        %v3918 = vld [vmem:[%s3256 + $0xa] sm:$0xff]
        %v3919 = vld [vmem:[%s3256 + $0x1a] sm:$0xff]
        %v3920 = vld [vmem:[%s3256 + $0x22] sm:$0xff]
        %v3921 = vld [vmem:[%s3256 + $0x32] sm:$0xff]
        %v3922 = vld [vmem:[%s3256 + $0x3a] sm:$0xff]
        %v3923 = vld [vmem:[%s3256 + $0x4a] sm:$0xff]
        %v3924 = vld [vmem:[%s3256 + $0x52] sm:$0xff]
        %v3925 = vld [vmem:[%s3256 + $0x62] sm:$0xff]
        %v3926 = vld [vmem:[%s3256 + $0x6a] sm:$0xff]
        %v3927 = vld [vmem:[%s3256 + $0x7a] sm:$0xff]
        %v3928 = vld [vmem:[%s3256 + $0x82] sm:$0xff]
        %v3929 = vld [vmem:[%s3256 + $0x92] sm:$0xff]
        %v3930 = vld [vmem:[%s3256 + $0x9a] sm:$0xff]
        %v3931 = vld [vmem:[%s3256 + $0xaa] sm:$0xff]
        %v3932 = vld [vmem:[%s3256 + $0xb2] sm:$0xff]
        %v3933 = vld [vmem:[%s3256 + $0xc2] sm:$0xff]
        %v3934 = vld [vmem:[%s3256 + $0xca] sm:$0xff]
        %v3935 = vld [vmem:[%s3256 + $0xda] sm:$0xff]
        %v3936 = vld [vmem:[%s3256 + $0xe2] sm:$0xff]
        %v3937 = vld [vmem:[%s3256 + $0xf2] sm:$0xff]
        %v3938 = vld [vmem:[%s3256 + $0xfa] sm:$0xff]
        %v3939 = vld [vmem:[%s3256 + $0x10a] sm:$0xff]
        %v3940 = vld [vmem:[%s3256 + $0x112] sm:$0xff]
        %v3941 = vld [vmem:[%s3256 + $0x122] sm:$0xff]
        %v3942 = vld [vmem:[%s3256 + $0x12a] sm:$0xff]
        %v3943 = vld [vmem:[%s3256 + $0x13a] sm:$0xff]
        %v3944 = vld [vmem:[%s3256 + $0x142] sm:$0xff]
        %v3945 = vld [vmem:[%s3256 + $0x152] sm:$0xff]
        %v3946 = vld [vmem:[%s3256 + $0x15a] sm:$0xff]
        %v3947 = vld [vmem:[%s3256 + $0x16a] sm:$0xff]
        %v3948 = vld [vmem:[%s3256 + $0x172] sm:$0xff]
        %v3949 = vpack.c.bf16 %v3917, %v3917
        %v3950 = vpack.c.bf16 %v3918, %v3918
        %v3951 = vpack.c.bf16 %v3919, %v3919
        %v3952 = vpack.c.bf16 %v3920, %v3920
        %v3953 = vpack.c.bf16 %v3921, %v3921
        %v3954 = vpack.c.bf16 %v3922, %v3922
        %v3955 = vpack.c.bf16 %v3923, %v3923
        %v3956 = vpack.c.bf16 %v3924, %v3924
        %v3957 = vpack.c.bf16 %v3925, %v3925
        %v3958 = vpack.c.bf16 %v3926, %v3926
        %v3959 = vpack.c.bf16 %v3927, %v3927
        %v3960 = vpack.c.bf16 %v3928, %v3928
        %v3961 = vpack.c.bf16 %v3929, %v3929
        %v3962 = vpack.c.bf16 %v3930, %v3930
        %v3963 = vpack.c.bf16 %v3931, %v3931
        %v3964 = vpack.c.bf16 %v3932, %v3932
        %v3965 = vpack.c.bf16 %v3933, %v3933
        %v3966 = vpack.c.bf16 %v3934, %v3934
        %v3967 = vpack.c.bf16 %v3935, %v3935
        %v3968 = vpack.c.bf16 %v3936, %v3936
        %v3969 = vpack.c.bf16 %v3937, %v3937
        %v3970 = vpack.c.bf16 %v3938, %v3938
        %v3971 = vpack.c.bf16 %v3939, %v3939
        %v3972 = vpack.c.bf16 %v3940, %v3940
        %v3973 = vpack.c.bf16 %v3941, %v3941
        %v3974 = vpack.c.bf16 %v3942, %v3942
        %v3975 = vpack.c.bf16 %v3943, %v3943
        %v3976 = vpack.c.bf16 %v3944, %v3944
        %v3977 = vpack.c.bf16 %v3945, %v3945
        %v3978 = vpack.c.bf16 %v3946, %v3946
        %v3979 = vpack.c.bf16 %v3947, %v3947
        %v3980 = vpack.c.bf16 %v3948, %v3948
        %s3981 = scalar_lea.vmem %s3, 128
        %v3982 = vld [vmem:[%s3981] sm:$0xf]
        %v3983 = vld [vmem:[%s3981 + $0x4] sm:$0xf]
        %v3984 = vld [vmem:[%s3981 + $0x8] sm:$0xf]
        %v3985 = vld [vmem:[%s3981 + $0xc] sm:$0xf]
        %v4018 = vunpack.c.l.b16 %v3949
        %v4019 = vunpack.c.l.b16 %v3950
        %v4020 = vunpack.c.l.b16 %v3951
        %v4021 = vunpack.c.l.b16 %v3952
        %v4022 = vunpack.c.l.b16 %v3953
        %v4023 = vunpack.c.l.b16 %v3954
        %v4024 = vunpack.c.l.b16 %v3955
        %v4025 = vunpack.c.l.b16 %v3956
        %v4026 = vunpack.c.l.b16 %v3957
        %v4027 = vunpack.c.l.b16 %v3958
        %v4028 = vunpack.c.l.b16 %v3959
        %v4029 = vunpack.c.l.b16 %v3960
        %v4030 = vunpack.c.l.b16 %v3961
        %v4031 = vunpack.c.l.b16 %v3962
        %v4032 = vunpack.c.l.b16 %v3963
        %v4033 = vunpack.c.l.b16 %v3964
        %v4034 = vunpack.c.l.b16 %v3965
        %v4035 = vunpack.c.l.b16 %v3966
        %v4036 = vunpack.c.l.b16 %v3967
        %v4037 = vunpack.c.l.b16 %v3968
        %v4038 = vunpack.c.l.b16 %v3969
        %v4039 = vunpack.c.l.b16 %v3970
        %v4040 = vunpack.c.l.b16 %v3971
        %v4041 = vunpack.c.l.b16 %v3972
        %v4042 = vunpack.c.l.b16 %v3973
        %v4043 = vunpack.c.l.b16 %v3974
        %v4044 = vunpack.c.l.b16 %v3975
        %v4045 = vunpack.c.l.b16 %v3976
        %v4046 = vunpack.c.l.b16 %v3977
        %v4047 = vunpack.c.l.b16 %v3978
        %v4048 = vunpack.c.l.b16 %v3979
        %v4049 = vunpack.c.l.b16 %v3980
        %v4050 = vpack.c.b16 %v4019, %v4018
        %v4051 = vpack.c.b16 %v4021, %v4020
        %v4052 = vpack.c.b16 %v4023, %v4022
        %v4053 = vpack.c.b16 %v4025, %v4024
        %v4054 = vpack.c.b16 %v4027, %v4026
        %v4055 = vpack.c.b16 %v4029, %v4028
        %v4056 = vpack.c.b16 %v4031, %v4030
        %v4057 = vpack.c.b16 %v4033, %v4032
        %v4058 = vpack.c.b16 %v4035, %v4034
        %v4059 = vpack.c.b16 %v4037, %v4036
        %v4060 = vpack.c.b16 %v4039, %v4038
        %v4061 = vpack.c.b16 %v4041, %v4040
        %v4062 = vpack.c.b16 %v4043, %v4042
        %v4063 = vpack.c.b16 %v4045, %v4044
        %v4064 = vpack.c.b16 %v4047, %v4046
        %v4065 = vpack.c.b16 %v4049, %v4048
        %v4070 = vunpack.c.l.b16 %v3982
        %v4071 = vunpack.c.l.b16 %v3983
        %v4072 = vunpack.c.l.b16 %v3984
        %v4073 = vunpack.c.l.b16 %v3985
        %v4074 = vpack.c.b16 %v4071, %v4070
        %v4075 = vpack.c.b16 %v4073, %v4072
        %v4079 = vsel %vm723, %v4050, 0
        %v4082 = vsel %vm723, %v4051, 0
        %v4085 = vsel %vm723, %v4052, 0
        %v4088 = vsel %vm723, %v4053, 0
        %v4091 = vsel %vm723, %v4054, 0
        %v4094 = vsel %vm723, %v4055, 0
        %v4097 = vsel %vm723, %v4056, 0
        %v4100 = vsel %vm723, %v4057, 0
        %v4103 = vsel %vm723, %v4058, 0
        %v4106 = vsel %vm723, %v4059, 0
        %v4109 = vsel %vm723, %v4060, 0
        %v4112 = vsel %vm723, %v4061, 0
        %v4115 = vsel %vm723, %v4062, 0
        %v4118 = vsel %vm723, %v4063, 0
        %v4121 = vsel %vm723, %v4064, 0
        %v4124 = vsel %vm723, %v4065, 0
        %4126 = vmatpush.bf16.msra.mxu0 0
        %4127 = vmatpush.bf16.msra.mxu0 0
        %4128 = vmatpush.bf16.msra.mxu0 0
        %4129 = vmatpush.bf16.msra.mxu0 0
        %4130 = vmatpush.bf16.msra.mxu0 0
        %4131 = vmatpush.bf16.msra.mxu0 0
        %4132 = vmatpush.bf16.msra.mxu0 %v4075
        %4133 = vmatpush.bf16.msra.mxu0 %v4074
        %4134 = vmatmul.bf16.gmra.mxu0 %v4079
        %v4135 = vpop.f32.mrf.mxu0
        %v4136 = vadd.f32 0.0, %v4135
        %v4137 = vpop.f32.mrf.mxu0
        %v4138 = vadd.f32 0.0, %v4137
        %4139 = vmatmul.bf16.gmra.mxu0 %v4082
        %v4140 = vpop.f32.mrf.mxu0
        %v4141 = vadd.f32 0.0, %v4140
        %v4142 = vpop.f32.mrf.mxu0
        %v4143 = vadd.f32 0.0, %v4142
        %4144 = vmatmul.bf16.gmra.mxu0 %v4085
        %v4145 = vpop.f32.mrf.mxu0
        %v4146 = vadd.f32 0.0, %v4145
        %v4147 = vpop.f32.mrf.mxu0
        %v4148 = vadd.f32 0.0, %v4147
        %4149 = vmatmul.bf16.gmra.mxu0 %v4088
        %v4150 = vpop.f32.mrf.mxu0
        %v4151 = vadd.f32 0.0, %v4150
        %v4152 = vpop.f32.mrf.mxu0
        %v4153 = vadd.f32 0.0, %v4152
        %4154 = vmatmul.bf16.gmra.mxu0 %v4091
        %v4155 = vpop.f32.mrf.mxu0
        %v4156 = vadd.f32 0.0, %v4155
        %v4157 = vpop.f32.mrf.mxu0
        %v4158 = vadd.f32 0.0, %v4157
        %4159 = vmatmul.bf16.gmra.mxu0 %v4094
        %v4160 = vpop.f32.mrf.mxu0
        %v4161 = vadd.f32 0.0, %v4160
        %v4162 = vpop.f32.mrf.mxu0
        %v4163 = vadd.f32 0.0, %v4162
        %4164 = vmatmul.bf16.gmra.mxu0 %v4097
        %v4165 = vpop.f32.mrf.mxu0
        %v4166 = vadd.f32 0.0, %v4165
        %v4167 = vpop.f32.mrf.mxu0
        %v4168 = vadd.f32 0.0, %v4167
        %4169 = vmatmul.bf16.gmra.mxu0 %v4100
        %v4170 = vpop.f32.mrf.mxu0
        %v4171 = vadd.f32 0.0, %v4170
        %v4172 = vpop.f32.mrf.mxu0
        %v4173 = vadd.f32 0.0, %v4172
        %4174 = vmatmul.bf16.gmra.mxu0 %v4103
        %v4175 = vpop.f32.mrf.mxu0
        %v4176 = vadd.f32 0.0, %v4175
        %v4177 = vpop.f32.mrf.mxu0
        %v4178 = vadd.f32 0.0, %v4177
        %4179 = vmatmul.bf16.gmra.mxu0 %v4106
        %v4180 = vpop.f32.mrf.mxu0
        %v4181 = vadd.f32 0.0, %v4180
        %v4182 = vpop.f32.mrf.mxu0
        %v4183 = vadd.f32 0.0, %v4182
        %4184 = vmatmul.bf16.gmra.mxu0 %v4109
        %v4185 = vpop.f32.mrf.mxu0
        %v4186 = vadd.f32 0.0, %v4185
        %v4187 = vpop.f32.mrf.mxu0
        %v4188 = vadd.f32 0.0, %v4187
        %4189 = vmatmul.bf16.gmra.mxu0 %v4112
        %v4190 = vpop.f32.mrf.mxu0
        %v4191 = vadd.f32 0.0, %v4190
        %v4192 = vpop.f32.mrf.mxu0
        %v4193 = vadd.f32 0.0, %v4192
        %4194 = vmatmul.bf16.gmra.mxu0 %v4115
        %v4195 = vpop.f32.mrf.mxu0
        %v4196 = vadd.f32 0.0, %v4195
        %v4197 = vpop.f32.mrf.mxu0
        %v4198 = vadd.f32 0.0, %v4197
        %4199 = vmatmul.bf16.gmra.mxu0 %v4118
        %v4200 = vpop.f32.mrf.mxu0
        %v4201 = vadd.f32 0.0, %v4200
        %v4202 = vpop.f32.mrf.mxu0
        %v4203 = vadd.f32 0.0, %v4202
        %4204 = vmatmul.bf16.gmra.mxu0 %v4121
        %v4205 = vpop.f32.mrf.mxu0
        %v4206 = vadd.f32 0.0, %v4205
        %v4207 = vpop.f32.mrf.mxu0
        %v4208 = vadd.f32 0.0, %v4207
        %4209 = vmatmul.bf16.gmra.mxu0 %v4124
        %v4210 = vpop.f32.mrf.mxu0
        %v4211 = vadd.f32 0.0, %v4210
        %v4212 = vpop.f32.mrf.mxu0
        %v4213 = vadd.f32 0.0, %v4212
        %4214 = vdwg.mxu0
        %v4215 = vadd.f32 %v3885, %v4136
        %v4216 = vadd.f32 %v3886, %v4138
        %v4217 = vadd.f32 %v3887, %v4141
        %v4218 = vadd.f32 %v3888, %v4143
        %v4219 = vadd.f32 %v3889, %v4146
        %v4220 = vadd.f32 %v3890, %v4148
        %v4221 = vadd.f32 %v3891, %v4151
        %v4222 = vadd.f32 %v3892, %v4153
        %v4223 = vadd.f32 %v3893, %v4156
        %v4224 = vadd.f32 %v3894, %v4158
        %v4225 = vadd.f32 %v3895, %v4161
        %v4226 = vadd.f32 %v3896, %v4163
        %v4227 = vadd.f32 %v3897, %v4166
        %v4228 = vadd.f32 %v3898, %v4168
        %v4229 = vadd.f32 %v3899, %v4171
        %v4230 = vadd.f32 %v3900, %v4173
        %v4231 = vadd.f32 %v3901, %v4176
        %v4232 = vadd.f32 %v3902, %v4178
        %v4233 = vadd.f32 %v3903, %v4181
        %v4234 = vadd.f32 %v3904, %v4183
        %v4235 = vadd.f32 %v3905, %v4186
        %v4236 = vadd.f32 %v3906, %v4188
        %v4237 = vadd.f32 %v3907, %v4191
        %v4238 = vadd.f32 %v3908, %v4193
        %v4239 = vadd.f32 %v3909, %v4196
        %v4240 = vadd.f32 %v3910, %v4198
        %v4241 = vadd.f32 %v3911, %v4201
        %v4242 = vadd.f32 %v3912, %v4203
        %v4243 = vadd.f32 %v3913, %v4206
        %v4244 = vadd.f32 %v3914, %v4208
        %v4245 = vadd.f32 %v3915, %v4211
        %v4246 = vadd.f32 %v3916, %v4213
        %4247 = vst.msk [vmem:[%s259] sm:$0xff] %vm723, %v4215
        %4248 = vst.msk [vmem:[%s259 + $0x8] sm:$0xff] %vm723, %v4216
        %4249 = vst.msk [vmem:[%s259 + $0x10] sm:$0xff] %vm723, %v4217
        %4250 = vst.msk [vmem:[%s259 + $0x18] sm:$0xff] %vm723, %v4218
        %4251 = vst.msk [vmem:[%s259 + $0x20] sm:$0xff] %vm723, %v4219
        %4252 = vst.msk [vmem:[%s259 + $0x28] sm:$0xff] %vm723, %v4220
        %4253 = vst.msk [vmem:[%s259 + $0x30] sm:$0xff] %vm723, %v4221
        %4254 = vst.msk [vmem:[%s259 + $0x38] sm:$0xff] %vm723, %v4222
        %4255 = vst.msk [vmem:[%s259 + $0x40] sm:$0xff] %vm723, %v4223
        %4256 = vst.msk [vmem:[%s259 + $0x48] sm:$0xff] %vm723, %v4224
        %4257 = vst.msk [vmem:[%s259 + $0x50] sm:$0xff] %vm723, %v4225
        %4258 = vst.msk [vmem:[%s259 + $0x58] sm:$0xff] %vm723, %v4226
        %4259 = vst.msk [vmem:[%s259 + $0x60] sm:$0xff] %vm723, %v4227
        %4260 = vst.msk [vmem:[%s259 + $0x68] sm:$0xff] %vm723, %v4228
        %4261 = vst.msk [vmem:[%s259 + $0x70] sm:$0xff] %vm723, %v4229
        %4262 = vst.msk [vmem:[%s259 + $0x78] sm:$0xff] %vm723, %v4230
        %4263 = vst.msk [vmem:[%s259 + $0x80] sm:$0xff] %vm723, %v4231
        %4264 = vst.msk [vmem:[%s259 + $0x88] sm:$0xff] %vm723, %v4232
        %4265 = vst.msk [vmem:[%s259 + $0x90] sm:$0xff] %vm723, %v4233
        %4266 = vst.msk [vmem:[%s259 + $0x98] sm:$0xff] %vm723, %v4234
        %4267 = vst.msk [vmem:[%s259 + $0xa0] sm:$0xff] %vm723, %v4235
        %4268 = vst.msk [vmem:[%s259 + $0xa8] sm:$0xff] %vm723, %v4236
        %4269 = vst.msk [vmem:[%s259 + $0xb0] sm:$0xff] %vm723, %v4237
        %4270 = vst.msk [vmem:[%s259 + $0xb8] sm:$0xff] %vm723, %v4238
        %4271 = vst.msk [vmem:[%s259 + $0xc0] sm:$0xff] %vm723, %v4239
        %4272 = vst.msk [vmem:[%s259 + $0xc8] sm:$0xff] %vm723, %v4240
        %4273 = vst.msk [vmem:[%s259 + $0xd0] sm:$0xff] %vm723, %v4241
        %4274 = vst.msk [vmem:[%s259 + $0xd8] sm:$0xff] %vm723, %v4242
        %4275 = vst.msk [vmem:[%s259 + $0xe0] sm:$0xff] %vm723, %v4243
        %4276 = vst.msk [vmem:[%s259 + $0xe8] sm:$0xff] %vm723, %v4244
        %4277 = vst.msk [vmem:[%s259 + $0xf0] sm:$0xff] %vm723, %v4245
        %4278 = vst.msk [vmem:[%s259 + $0xf8] sm:$0xff] %vm723, %v4246
        %s4279 = sand.u32 %s164, 1
        %s4280 = scalar_lea.sflag [#allocation4], %s4279
        %s4281 = sand.u32 %s164, 1
        %s4282 = smul.addr %s4281, 256
        %s4283 = scalar_lea.vmem [#allocation3], %s4282
        // Predicated region
        $region45: #{rsa_block_forward.3} parent=43 // pred_check
          %p4284 = pneg %p174
        $region46: #{rsa_block_forward.3} parent=43 // pred_check_branch
          %4286 = sbr.rel (%p4284) target = $region48
        $region47: #{rsa_block_forward.3} parent=43 // pred_region
          %4288 = vsyncadd %s4280, 0
          %s4289 = smul.addr %s20, 32
          %s4290 = smul.addr %s4289, 8
          %s4291 = scalar_lea.hbm %s6, %s4290
          %s4292 = sshll.u32 %s4283, 4
          %s4293 = int_to_ptr.vmem [resolvable:$true] %s4292
          %s4294 = sshll.u32 %s4291, 4
          %s4295 = int_to_ptr.hbm [resolvable:$true] %s4294
          %4300 = dma.vmem_to_hbm [thread:$0]  %s4293, 4096, %s4295, %s4280, 128, 128, 8
        $region48: #{rsa_block_forward.3} parent=43 // pred_fallthru
          _
      $region44: #{rsa_block_forward.3} parent=5 // pred_fallthru
        _
      %p4301 = scmp.le.s32.totalorder 2, %s15
      // Predicated region
      $region49: #{rsa_block_forward.3} parent=5 // pred_check
        %p4302 = pneg %p4301
      $region50: #{rsa_block_forward.3} parent=5 // pred_check_branch
        %4304 = sbr.rel (%p4302) target = $region52
      $region51: #{rsa_block_forward.3} parent=5 // pred_region
        %s4305 = ssub.s32 %s15, 2
        // Predicated region
        $region53: #{rsa_block_forward.3} parent=51 // pred_check
          %p4306 = pneg %p180
        $region54: #{rsa_block_forward.3} parent=51 // pred_check_branch
          %4308 = sbr.rel (%p4306) target = $region56
        $region55: #{rsa_block_forward.3} parent=51 // pred_region
          %s4309 = sand.u32 %s165, 1
          %s4310 = scalar_lea.sflag [#allocation4], %s4309
          %s4311 = sand.u32 %s165, 1
          %s4312 = smul.addr %s4311, 256
          %s4313 = scalar_lea.vmem [#allocation3], %s4312
          %4315 = dma.done %s4310, 4096
        $region56: #{rsa_block_forward.3} parent=51 // pred_fallthru
          _
      $region52: #{rsa_block_forward.3} parent=5 // pred_fallthru
        _
    $region6: #{rsa_block_forward.3} parent=1 // loop_footer
      %s19 = sadd.s32 1, %s15
    $region7: #{rsa_block_forward.3} parent=1 // loop_footer_branch
      %14 = sbr.rel target = $region3
    $region8: #{rsa_block_forward.3} parent=1 // loop_exit
      _
    %4316 = vsyncpa [#allocation4], 1
    %s4317 = scalar_lea.sflag [#allocation4], 1
    %4318 = vsyncpa %s4317, 1

</llo_original>
